<compile_context>
chip_gen: v7x
topology: tpu7x:2x2x1
jax: 0.10.0
libtpu: 0.0.40
codegen_flags: <defaults>
</compile_context>

<pallas_src>
import functools

import jax
import jax.numpy as jnp
from jax import lax
from jax.experimental import pallas as pl
from jax.experimental.pallas import tpu as pltpu

_BN_EPS = 1e-5          # PyTorch BatchNorm2d default eps
_LANE = 128             # TPU lane width -> lane-dense channel padding
_VMEM_LIMIT = 48 * 1024 * 1024   # <= v7x 64MiB physical, > v5e's 16MiB scoped default


def _cparams(n_axes):
    return pltpu.CompilerParams(
        dimension_semantics=("parallel",) * n_axes,
        vmem_limit_bytes=_VMEM_LIMIT)


def _round_up(x, m):
    return (x + m - 1) // m * m


def _pick_strip(ho, wo, target_rows=256):
    """Largest divisor th of ho with th*wo <= target_rows (>= 1)."""
    cap = max(1, target_rows // max(wo, 1))
    best = 1
    for t in range(1, min(ho, cap) + 1):
        if ho % t == 0:
            best = t
    return best


def _run_strips(nstrips, body, init):
    """Static unroll for few strips (scheduler visibility), fori_loop for many
    (bounds live ranges of the per-strip accumulator)."""
    if nstrips <= 8:
        carry = init
        for si in range(nstrips):
            carry = body(si, carry)
        return carry
    return lax.fori_loop(0, nstrips, body, init)


# ----------------------------- in-kernel helpers -----------------------------
def _zero_halo(xp_ref):
    """Zero the 1-px halo of the padded scratch (interior is overwritten later).

    Done every grid step (cheap thin stores) so it stays correct when the batch
    axis is megacore-sharded and each core owns its own scratch buffer.
    """
    hp, wp, cin = xp_ref.shape
    zrow = jnp.zeros((1, wp, cin), xp_ref.dtype)
    xp_ref[0:1] = zrow
    xp_ref[hp - 1:hp] = zrow
    zcol = jnp.zeros((hp, 1, cin), xp_ref.dtype)
    xp_ref[:, 0:1] = zcol
    xp_ref[:, wp - 1:wp] = zcol


def _stats_rows(psum, psqr):
    return jnp.concatenate([psum, psqr], axis=0)      # (2, cout)


# --------------------------------- kernels -----------------------------------
def _conv3x3_s1_kernel(*refs, preact, th):
    """3x3 stride-1 conv of one image: in-VMEM zero-halo pad, bf16 output, BN partials.

    preact=True additionally applies relu(x*scale + shift) while filling the padded
    scratch (fuses bn1 + ReLU + padding into conv2's input load).
    Row-striped 9-tap accumulation: acc += dot chain with no VMEM accumulator.
    """
    if preact:
        x_ref, w_ref, sc_ref, sh_ref, y_ref, s_ref, xp_ref = refs
    else:
        x_ref, w_ref, y_ref, s_ref, xp_ref = refs
        sc_ref = sh_ref = None
    _, ho, wo, cin = x_ref.shape
    cout = y_ref.shape[-1]

    _zero_halo(xp_ref)
    xin = x_ref[0]                                   # (ho, wo, cin) bf16
    if preact:
        xf = (xin.astype(jnp.float32) * sc_ref[...].reshape(1, 1, cin)
              + sh_ref[...].reshape(1, 1, cin))
        xin = jnp.maximum(xf, 0.0).astype(xp_ref.dtype)
    xp_ref[1:1 + ho, 1:1 + wo, :] = xin              # interior of padded image

    def strip(si, carry):
        psum, psqr = carry
        r0 = si * th
        acc = jnp.zeros((th * wo, cout), jnp.float32)
        for dy in range(3):                          # 9 accumulating MXU dots over
            for dx in range(3):                      # shifted VMEM slices
                patch = xp_ref[pl.ds(r0 + dy, th), pl.ds(dx, wo), :]
                wtap = w_ref[pl.ds((dy * 3 + dx) * cin, cin), :]
                acc = acc + jnp.dot(patch.reshape(th * wo, cin), wtap,
                                    preferred_element_type=jnp.float32)
        y_ref[0, pl.ds(r0, th)] = acc.reshape(th, wo, cout).astype(y_ref.dtype)
        return (psum + jnp.sum(acc, axis=0, keepdims=True),
                psqr + jnp.sum(acc * acc, axis=0, keepdims=True))

    z = jnp.zeros((1, cout), jnp.float32)
    psum, psqr = _run_strips(ho // th, strip, (z, z))
    s_ref[0] = _stats_rows(psum, psqr)


def _conv3x3_s2_proj_kernel(x_ref, w_ref, wsc_ref, y_ref, s_ref, r_ref, rs_ref,
                            xp_ref, *, th):
    """3x3 stride-2 conv + fused 1x1 stride-2 projection of one image.

    Strided taps are read straight from the VMEM padded scratch (no HBM im2col).
    The centre tap (dy=1, dx=1) patch IS the projection input x[::2, ::2], so the
    1x1 shortcut is one extra MXU dot under the conv.
    """
    _, h, w, cin = x_ref.shape
    _, ho, wo, cout = y_ref.shape

    _zero_halo(xp_ref)
    xp_ref[1:1 + h, 1:1 + w, :] = x_ref[0]

    def strip(si, carry):
        psum, psqr, rsum, rsqr = carry
        r0 = si * th
        acc = jnp.zeros((th * wo, cout), jnp.float32)
        racc = None
        for dy in range(3):
            for dx in range(3):
                patch = xp_ref[pl.ds(2 * r0 + dy, th, stride=2),
                               pl.ds(dx, wo, stride=2), :]
                patch = patch.reshape(th * wo, cin)
                wtap = w_ref[pl.ds((dy * 3 + dx) * cin, cin), :]
                acc = acc + jnp.dot(patch, wtap, preferred_element_type=jnp.float32)
                if dy == 1 and dx == 1:              # centre tap == x[::2, ::2]
                    racc = jnp.dot(patch, wsc_ref[...],
                                   preferred_element_type=jnp.float32)
        y_ref[0, pl.ds(r0, th)] = acc.reshape(th, wo, cout).astype(y_ref.dtype)
        r_ref[0, pl.ds(r0, th)] = racc.reshape(th, wo, cout).astype(r_ref.dtype)
        return (psum + jnp.sum(acc, axis=0, keepdims=True),
                psqr + jnp.sum(acc * acc, axis=0, keepdims=True),
                rsum + jnp.sum(racc, axis=0, keepdims=True),
                rsqr + jnp.sum(racc * racc, axis=0, keepdims=True))

    z = jnp.zeros((1, cout), jnp.float32)
    psum, psqr, rsum, rsqr = _run_strips(ho // th, strip, (z, z, z, z))
    s_ref[0] = _stats_rows(psum, psqr)
    rs_ref[0] = _stats_rows(rsum, rsqr)


def _bn_add_relu_proj_kernel(y_ref, r_ref, sy_ref, ty_ref, sr_ref, tr_ref, o_ref):
    """relu((y*sy+ty) + (r*sr+tr)) — bn2 + shortcut-BN + residual (bf16 inputs)."""
    c = o_ref.shape[-1]
    y = (y_ref[0].astype(jnp.float32) * sy_ref[...].reshape(1, 1, c)
         + ty_ref[...].reshape(1, 1, c))
    r = (r_ref[0].astype(jnp.float32) * sr_ref[...].reshape(1, 1, c)
         + tr_ref[...].reshape(1, 1, c))
    o_ref[0] = jnp.maximum(y + r, 0.0).astype(o_ref.dtype)


def _bn_add_relu_id_kernel(y_ref, r_ref, sy_ref, ty_ref, o_ref):
    """relu((y*sy+ty) + r) — bn2 + identity residual (bf16 inputs, no dead FMA)."""
    c = o_ref.shape[-1]
    y = (y_ref[0].astype(jnp.float32) * sy_ref[...].reshape(1, 1, c)
         + ty_ref[...].reshape(1, 1, c))
    o_ref[0] = jnp.maximum(y + r_ref[0].astype(jnp.float32), 0.0).astype(o_ref.dtype)


# ------------------------------ pallas wrappers -------------------------------
def _conv3x3_s1(x, w_mat, preact=None):
    """x: (n, h, w, cin) bf16; w_mat: (9*cin, cout) bf16; preact=(scale, shift) or None."""
    n, hi, wi, cin = x.shape
    cout = w_mat.shape[1]
    th = _pick_strip(hi, wi)
    kern = functools.partial(_conv3x3_s1_kernel, preact=preact is not None, th=th)
    in_specs = [pl.BlockSpec((1, hi, wi, cin), lambda i: (i, 0, 0, 0)),
                pl.BlockSpec((9 * cin, cout), lambda i: (0, 0))]   # weight VMEM-resident
    args = [x, w_mat]
    if preact is not None:
        vec = pl.BlockSpec((1, cin), lambda i: (0, 0))
        in_specs += [vec, vec]
        args += [preact[0], preact[1]]
    return pl.pallas_call(
        kern, grid=(n,),
        in_specs=in_specs,
        out_specs=(pl.BlockSpec((1, hi, wi, cout), lambda i: (i, 0, 0, 0)),
                   pl.BlockSpec((1, 2, cout), lambda i: (i, 0, 0))),
        out_shape=(jax.ShapeDtypeStruct((n, hi, wi, cout), jnp.bfloat16),
                   jax.ShapeDtypeStruct((n, 2, cout), jnp.float32)),
        scratch_shapes=[pltpu.VMEM((hi + 2, wi + 2, cin), jnp.bfloat16)],
        compiler_params=_cparams(1),
    )(*args)


def _conv3x3_s2_proj(x, w_mat, wsc_mat):
    n, h, w, cin = x.shape
    cout = w_mat.shape[1]
    ho = (h - 1) // 2 + 1
    wo = (w - 1) // 2 + 1
    th = _pick_strip(ho, wo)
    kern = functools.partial(_conv3x3_s2_proj_kernel, th=th)
    return pl.pallas_call(
        kern, grid=(n,),
        in_specs=[pl.BlockSpec((1, h, w, cin), lambda i: (i, 0, 0, 0)),
                  pl.BlockSpec((9 * cin, cout), lambda i: (0, 0)),
                  pl.BlockSpec((cin, cout), lambda i: (0, 0))],
        out_specs=(pl.BlockSpec((1, ho, wo, cout), lambda i: (i, 0, 0, 0)),
                   pl.BlockSpec((1, 2, cout), lambda i: (i, 0, 0)),
                   pl.BlockSpec((1, ho, wo, cout), lambda i: (i, 0, 0, 0)),
                   pl.BlockSpec((1, 2, cout), lambda i: (i, 0, 0))),
        out_shape=(jax.ShapeDtypeStruct((n, ho, wo, cout), jnp.bfloat16),
                   jax.ShapeDtypeStruct((n, 2, cout), jnp.float32),
                   jax.ShapeDtypeStruct((n, ho, wo, cout), jnp.bfloat16),
                   jax.ShapeDtypeStruct((n, 2, cout), jnp.float32)),
        scratch_shapes=[pltpu.VMEM((h + 2, w + 2, cin), jnp.bfloat16)],
        compiler_params=_cparams(1),
    )(x, w_mat, wsc_mat)


def _bn_add_relu(y, res, sy, ty, proj=None):
    """Final epilogue. y, res: (n, ho, wo, c) bf16. proj=(scale_r, shift_r) or None."""
    n, ho, wo, c = y.shape
    te = _pick_strip(ho, wo, target_rows=2048)
    grid = (n, ho // te)
    big = pl.BlockSpec((1, te, wo, c), lambda i, j: (i, j, 0, 0))
    vec = pl.BlockSpec((1, c), lambda i, j: (0, 0))
    if proj is None:
        kern, in_specs, args = (_bn_add_relu_id_kernel,
                                [big, big, vec, vec], [y, res, sy, ty])
    else:
        kern, in_specs, args = (_bn_add_relu_proj_kernel,
                                [big, big, vec, vec, vec, vec],
                                [y, res, sy, ty, proj[0], proj[1]])
    return pl.pallas_call(
        kern, grid=grid, in_specs=in_specs, out_specs=big,
        out_shape=jax.ShapeDtypeStruct((n, ho, wo, c), jnp.float32),
        compiler_params=_cparams(2),
    )(*args)


# ------------------------------- JAX-side glue --------------------------------
def _pad_channels(x, c_to):
    c = x.shape[-1]
    if c == c_to:
        return x
    pad = [(0, 0)] * (x.ndim - 1) + [(0, c_to - c)]
    return jnp.pad(x, pad)


def _prep_w3x3(w_torch, cin_p, cout_p):
    """(f_out, f_in, 3, 3) -> tap-major (9*cin_p, cout_p) bf16, zero-padded channels."""
    w = jnp.transpose(w_torch, (2, 3, 1, 0))                      # (3,3,f_in,f_out)
    w = jnp.pad(w, ((0, 0), (0, 0),
                    (0, cin_p - w.shape[2]), (0, cout_p - w.shape[3])))
    return w.reshape(9 * cin_p, cout_p).astype(jnp.bfloat16)


def _prep_w1x1(w_torch, cin_p, cout_p):
    w = jnp.transpose(w_torch[:, :, 0, 0], (1, 0))                # (f_in, f_out)
    w = jnp.pad(w, ((0, cin_p - w.shape[0]), (0, cout_p - w.shape[1])))
    return w.astype(jnp.bfloat16)


def _bn_scale_shift(stats, gamma, beta, count, c_pad):
    """Reduce per-image (sum, sum^2) partials; fold batch BN + affine into (scale, shift)."""
    total = jnp.sum(stats[:, 0, :], axis=0)
    total_sq = jnp.sum(stats[:, 1, :], axis=0)
    mean = total / count
    var = jnp.maximum(total_sq / count - mean * mean, 0.0)        # biased variance
    # TODO(synk): single-pass E[x^2]-E[x]^2 can cancel for mean-dominated activations;
    # switch to centered per-block partials if tighter parity is ever required.
    g = _pad_channels(gamma, c_pad)
    b = _pad_channels(beta, c_pad)
    scale = g * lax.rsqrt(var + _BN_EPS)
    shift = b - mean * scale
    return (scale.reshape(1, c_pad).astype(jnp.float32),
            shift.reshape(1, c_pad).astype(jnp.float32))


def init_pt_block_params(key, f_in, f_out, downsample=False):
    """Deterministic synthetic parameters with the same tensor shapes as PTBlock."""
    ks = jax.random.split(key, 9)
    p = {
        "w1": 0.1 * jax.random.normal(ks[0], (f_out, f_in, 3, 3), jnp.float32),
        "g1": 1.0 + 0.1 * jax.random.normal(ks[1], (f_out,), jnp.float32),
        "b1": 0.1 * jax.random.normal(ks[2], (f_out,), jnp.float32),
        "w2": 0.1 * jax.random.normal(ks[3], (f_out, f_out, 3, 3), jnp.float32),
        "g2": 1.0 + 0.1 * jax.random.normal(ks[4], (f_out,), jnp.float32),
        "b2": 0.1 * jax.random.normal(ks[5], (f_out,), jnp.float32),
    }
    if downsample or f_in != f_out:
        p["w_sc"] = 0.1 * jax.random.normal(ks[6], (f_out, f_in, 1, 1), jnp.float32)
        p["g_sc"] = 1.0 + 0.1 * jax.random.normal(ks[7], (f_out,), jnp.float32)
        p["b_sc"] = 0.1 * jax.random.normal(ks[8], (f_out,), jnp.float32)
    return p


def pt_block_forward(x_nchw, params, downsample=False):
    """PTBlock.forward: relu(bn2(conv2(relu(bn1(conv1(x))))) + shortcut(x))."""
    f_out, f_in = params["w1"].shape[0], params["w1"].shape[1]
    has_proj = downsample or (f_in != f_out)
    if has_proj and not downsample:
        # The PyTorch module hard-codes stride 2 in the projection shortcut, which
        # is only shape-consistent with a stride-2 conv1 (i.e. downsample=True).
        raise ValueError("PTBlock with f_in != f_out requires downsample=True.")

    cin_p = _round_up(f_in, _LANE)
    cout_p = _round_up(f_out, _LANE)

    n = x_nchw.shape[0]
    x = jnp.transpose(x_nchw, (0, 2, 3, 1))                       # NCHW -> NHWC
    x = _pad_channels(x, cin_p).astype(jnp.bfloat16)              # single bf16 copy

    w1 = _prep_w3x3(params["w1"], cin_p, cout_p)
    w2 = _prep_w3x3(params["w2"], cout_p, cout_p)

    # ---- conv1 (+ fused 1x1 projection when downsampling) + BN partials -------
    if downsample:
        w_sc = _prep_w1x1(params["w_sc"], cin_p, cout_p)
        y1_raw, stats1, sc_raw, stats_sc = _conv3x3_s2_proj(x, w1, w_sc)
    else:
        y1_raw, stats1 = _conv3x3_s1(x, w1)
    _, ho, wo, _ = y1_raw.shape
    count = n * ho * wo
    s1, t1 = _bn_scale_shift(stats1, params["g1"], params["b1"], count, cout_p)

    # ---- conv2 with bn1 + ReLU + zero-halo fused into its input load ----------
    y2_raw, stats2 = _conv3x3_s1(y1_raw, w2, preact=(s1, t1))
    s2, t2 = _bn_scale_shift(stats2, params["g2"], params["b2"], count, cout_p)

    # ---- bn2 + shortcut + ReLU epilogue ---------------------------------------
    if downsample:
        rs, rt = _bn_scale_shift(stats_sc, params["g_sc"], params["b_sc"],
                                 count, cout_p)
        out = _bn_add_relu(y2_raw, sc_raw, s2, t2, proj=(rs, rt))
    else:
        out = _bn_add_relu(y2_raw, x, s2, t2)     # identity residual reuses bf16 x

    out = out[..., :f_out]
    return jnp.transpose(out, (0, 3, 1, 2))                       # NHWC -> NCHW


# ------------------------------ pure-JAX reference -----------------------------
def _reference_forward(x_nchw, params, downsample=False):
    stride = 2 if downsample else 1
    hi = jax.lax.Precision.HIGHEST

    def conv(x, wt, s, pad):
        return jax.lax.conv_general_dilated(
            x, wt, window_strides=(s, s), padding=pad,
            dimension_numbers=("NCHW", "OIHW", "NCHW"), precision=hi)

    def bn(x, g, b):
        mean = jnp.mean(x, axis=(0, 2, 3), keepdims=True)
        var = jnp.mean(jnp.square(x - mean), axis=(0, 2, 3), keepdims=True)
        xn = (x - mean) * jax.lax.rsqrt(var + _BN_EPS)
        return xn * g.reshape(1, -1, 1, 1) + b.reshape(1, -1, 1, 1)

    y = jax.nn.relu(bn(conv(x_nchw, params["w1"], stride, ((1, 1), (1, 1))),
                       params["g1"], params["b1"]))
    y = bn(conv(y, params["w2"], 1, ((1, 1), (1, 1))), params["g2"], params["b2"])
    f_out, f_in = params["w1"].shape[0], params["w1"].shape[1]
    if downsample or f_in != f_out:
        sc = bn(conv(x_nchw, params["w_sc"], 2, ((0, 0), (0, 0))),
                params["g_sc"], params["b_sc"])
    else:
        sc = x_nchw
    return jax.nn.relu(y + sc)


def _rel_l2(a, b):
    return float(jnp.linalg.norm((a - b).ravel()) / (jnp.linalg.norm(b.ravel()) + 1e-6))


if __name__ == "__main__":
    key = jax.random.PRNGKey(0)
    kx1, kp1, kx2, kp2 = jax.random.split(key, 4)

    # ---- identity-shortcut configuration --------------------------------------
    f_in = f_out = 4
    x1 = jax.random.normal(kx1, (2, f_in, 16, 16), jnp.float32)
    params1 = init_pt_block_params(kp1, f_in, f_out, downsample=False)
    fwd1 = jax.jit(functools.partial(pt_block_forward, downsample=False))
    out1 = fwd1(x1, params1)
    jax.block_until_ready(out1)
    assert out1.shape == (2, f_out, 16, 16)
    assert bool(jnp.all(jnp.isfinite(out1)))
    assert bool(jnp.all(out1 >= 0.0))                       # final ReLU
    ref1 = _reference_forward(x1, params1, downsample=False)
    assert _rel_l2(out1, ref1) < 0.05, _rel_l2(out1, ref1)  # bf16-level agreement

    # ---- projection-shortcut (downsample) configuration ------------------------
    f_in2, f_out2 = 4, 8
    x2 = jax.random.normal(kx2, (2, f_in2, 16, 16), jnp.float32)
    params2 = init_pt_block_params(kp2, f_in2, f_out2, downsample=True)
    fwd2 = jax.jit(functools.partial(pt_block_forward, downsample=True))
    out2 = fwd2(x2, params2)
    jax.block_until_ready(out2)
    assert out2.shape == (2, f_out2, 8, 8)
    assert bool(jnp.all(jnp.isfinite(out2)))
    assert bool(jnp.all(out2 >= 0.0))
    ref2 = _reference_forward(x2, params2, downsample=True)
    assert _rel_l2(out2, ref2) < 0.05, _rel_l2(out2, ref2)

    print("KERNEL_OK")
</pallas_src>

<mosaic_0001>
module attributes {stable_mosaic.version = 11 : i64} {
  func.func @_conv3x3_s1_kernel(%arg0: i32, %arg1: memref<1x16x16x128xbf16, #tpu.memory_space<vmem>>, %arg2: memref<1152x128xbf16, #tpu.memory_space<vmem>>, %arg3: memref<1x16x16x128xbf16, #tpu.memory_space<vmem>>, %arg4: memref<1x2x128xf32, #tpu.memory_space<vmem>>, %arg5: memref<18x18x128xbf16, #tpu.memory_space<vmem>>) attributes {dimension_semantics = [#tpu.dimension_semantics<parallel>], iteration_bounds = array<i64: 2>, scalar_prefetch = 0 : i64, scratch_operands = 1 : i64, tpu.core_type = #tpu.core_type<tc>, window_params = [{transform_indices = @transform_0, window_bounds = array<i64: 1, 16, 16, 128>}, {pipeline_mode = #tpu.pipeline_mode<synchronous>, transform_indices = @transform_1, window_bounds = array<i64: 1152, 128>}, {transform_indices = @transform_2, window_bounds = array<i64: 1, 16, 16, 128>}, {transform_indices = @transform_3, window_bounds = array<i64: 1, 2, 128>}]} {
    %cst = arith.constant 0.000000e+00 : bf16
    %0 = vector.broadcast %cst : bf16 to vector<1x18x128xbf16>
    %c0 = arith.constant 0 : index
    %c0_0 = arith.constant 0 : index
    %c0_1 = arith.constant 0 : index
    %1 = vector.load %arg5[%c0, %c0_0, %c0_1] : memref<18x18x128xbf16, #tpu.memory_space<vmem>>, vector<1x18x128xbf16>
    tpu.vector_store %arg5[%c0, %c0_0, %c0_1], %0 {strides = array<i32>} : memref<18x18x128xbf16, #tpu.memory_space<vmem>>, vector<1x18x128xbf16>,
    %c17 = arith.constant 17 : index
    %c0_2 = arith.constant 0 : index
    %c0_3 = arith.constant 0 : index
    %2 = vector.load %arg5[%c17, %c0_2, %c0_3] : memref<18x18x128xbf16, #tpu.memory_space<vmem>>, vector<1x18x128xbf16>
    tpu.vector_store %arg5[%c17, %c0_2, %c0_3], %0 {strides = array<i32>} : memref<18x18x128xbf16, #tpu.memory_space<vmem>>, vector<1x18x128xbf16>,
    %cst_4 = arith.constant 0.000000e+00 : bf16
    %3 = vector.broadcast %cst_4 : bf16 to vector<18x1x128xbf16>
    %c0_5 = arith.constant 0 : index
    %c0_6 = arith.constant 0 : index
    %c0_7 = arith.constant 0 : index
    %4 = vector.load %arg5[%c0_5, %c0_6, %c0_7] : memref<18x18x128xbf16, #tpu.memory_space<vmem>>, vector<18x1x128xbf16>
    tpu.vector_store %arg5[%c0_5, %c0_6, %c0_7], %3 {strides = array<i32>} : memref<18x18x128xbf16, #tpu.memory_space<vmem>>, vector<18x1x128xbf16>,
    %c0_8 = arith.constant 0 : index
    %c17_9 = arith.constant 17 : index
    %c0_10 = arith.constant 0 : index
    %5 = vector.load %arg5[%c0_8, %c17_9, %c0_10] : memref<18x18x128xbf16, #tpu.memory_space<vmem>>, vector<18x1x128xbf16>
    tpu.vector_store %arg5[%c0_8, %c17_9, %c0_10], %3 {strides = array<i32>} : memref<18x18x128xbf16, #tpu.memory_space<vmem>>, vector<18x1x128xbf16>,
    %c0_11 = arith.constant 0 : index
    %c0_12 = arith.constant 0 : index
    %c0_13 = arith.constant 0 : index
    %c0_14 = arith.constant 0 : index
    %6 = vector.load %arg1[%c0_11, %c0_12, %c0_13, %c0_14] : memref<1x16x16x128xbf16, #tpu.memory_space<vmem>>, vector<1x16x16x128xbf16>
    %7 = vector.shape_cast %6 : vector<1x16x16x128xbf16> to vector<16x16x128xbf16>
    %c1 = arith.constant 1 : index
    %c1_15 = arith.constant 1 : index
    %c0_16 = arith.constant 0 : index
    %8 = vector.load %arg5[%c1, %c1_15, %c0_16] : memref<18x18x128xbf16, #tpu.memory_space<vmem>>, vector<16x16x128xbf16>
    tpu.vector_store %arg5[%c1, %c1_15, %c0_16], %7 {strides = array<i32>} : memref<18x18x128xbf16, #tpu.memory_space<vmem>>, vector<16x16x128xbf16>,
    %cst_17 = arith.constant 0.000000e+00 : f32
    %9 = vector.broadcast %cst_17 : f32 to vector<1x128xf32>
    %cst_18 = arith.constant 0.000000e+00 : f32
    %10 = vector.broadcast %cst_18 : f32 to vector<256x128xf32>
    %c0_19 = arith.constant 0 : index
    %c0_20 = arith.constant 0 : index
    %c0_21 = arith.constant 0 : index
    %11 = vector.load %arg5[%c0_19, %c0_20, %c0_21] : memref<18x18x128xbf16, #tpu.memory_space<vmem>>, vector<16x16x128xbf16>
    %c0_22 = arith.constant 0 : index
    %c0_23 = arith.constant 0 : index
    %12 = vector.load %arg2[%c0_22, %c0_23] : memref<1152x128xbf16, #tpu.memory_space<vmem>>, vector<128x128xbf16>
    %13 = vector.shape_cast %11 : vector<16x16x128xbf16> to vector<256x128xbf16>
    %cst_24 = arith.constant dense<0.000000e+00> : vector<256x128xf32>
    %14 = tpu.matmul %13, %12, %cst_24 {dimension_numbers = #tpu.dot_dimension_numbers<[1], [0], [0], [1], [0, 0, 1, 1], [], []>} : vector<256x128xbf16>, vector<128x128xbf16>, vector<256x128xf32> -> vector<256x128xf32>
    %15 = arith.addf %10, %14 : vector<256x128xf32>
    %c0_25 = arith.constant 0 : index
    %c1_26 = arith.constant 1 : index
    %c0_27 = arith.constant 0 : index
    %16 = vector.load %arg5[%c0_25, %c1_26, %c0_27] : memref<18x18x128xbf16, #tpu.memory_space<vmem>>, vector<16x16x128xbf16>
    %c128 = arith.constant 128 : index
    %c0_28 = arith.constant 0 : index
    %17 = vector.load %arg2[%c128, %c0_28] : memref<1152x128xbf16, #tpu.memory_space<vmem>>, vector<128x128xbf16>
    %18 = vector.shape_cast %16 : vector<16x16x128xbf16> to vector<256x128xbf16>
    %cst_29 = arith.constant dense<0.000000e+00> : vector<256x128xf32>
    %19 = tpu.matmul %18, %17, %cst_29 {dimension_numbers = #tpu.dot_dimension_numbers<[1], [0], [0], [1], [0, 0, 1, 1], [], []>} : vector<256x128xbf16>, vector<128x128xbf16>, vector<256x128xf32> -> vector<256x128xf32>
    %20 = arith.addf %15, %19 : vector<256x128xf32>
    %c0_30 = arith.constant 0 : index
    %c2 = arith.constant 2 : index
    %c0_31 = arith.constant 0 : index
    %21 = vector.load %arg5[%c0_30, %c2, %c0_31] : memref<18x18x128xbf16, #tpu.memory_space<vmem>>, vector<16x16x128xbf16>
    %c256 = arith.constant 256 : index
    %c0_32 = arith.constant 0 : index
    %22 = vector.load %arg2[%c256, %c0_32] : memref<1152x128xbf16, #tpu.memory_space<vmem>>, vector<128x128xbf16>
    %23 = vector.shape_cast %21 : vector<16x16x128xbf16> to vector<256x128xbf16>
    %cst_33 = arith.constant dense<0.000000e+00> : vector<256x128xf32>
    %24 = tpu.matmul %23, %22, %cst_33 {dimension_numbers = #tpu.dot_dimension_numbers<[1], [0], [0], [1], [0, 0, 1, 1], [], []>} : vector<256x128xbf16>, vector<128x128xbf16>, vector<256x128xf32> -> vector<256x128xf32>
    %25 = arith.addf %20, %24 : vector<256x128xf32>
    %c1_34 = arith.constant 1 : index
    %c0_35 = arith.constant 0 : index
    %c0_36 = arith.constant 0 : index
    %26 = vector.load %arg5[%c1_34, %c0_35, %c0_36] : memref<18x18x128xbf16, #tpu.memory_space<vmem>>, vector<16x16x128xbf16>
    %c384 = arith.constant 384 : index
    %c0_37 = arith.constant 0 : index
    %27 = vector.load %arg2[%c384, %c0_37] : memref<1152x128xbf16, #tpu.memory_space<vmem>>, vector<128x128xbf16>
    %28 = vector.shape_cast %26 : vector<16x16x128xbf16> to vector<256x128xbf16>
    %cst_38 = arith.constant dense<0.000000e+00> : vector<256x128xf32>
    %29 = tpu.matmul %28, %27, %cst_38 {dimension_numbers = #tpu.dot_dimension_numbers<[1], [0], [0], [1], [0, 0, 1, 1], [], []>} : vector<256x128xbf16>, vector<128x128xbf16>, vector<256x128xf32> -> vector<256x128xf32>
    %30 = arith.addf %25, %29 : vector<256x128xf32>
    %c1_39 = arith.constant 1 : index
    %c1_40 = arith.constant 1 : index
    %c0_41 = arith.constant 0 : index
    %31 = vector.load %arg5[%c1_39, %c1_40, %c0_41] : memref<18x18x128xbf16, #tpu.memory_space<vmem>>, vector<16x16x128xbf16>
    %c512 = arith.constant 512 : index
    %c0_42 = arith.constant 0 : index
    %32 = vector.load %arg2[%c512, %c0_42] : memref<1152x128xbf16, #tpu.memory_space<vmem>>, vector<128x128xbf16>
    %33 = vector.shape_cast %31 : vector<16x16x128xbf16> to vector<256x128xbf16>
    %cst_43 = arith.constant dense<0.000000e+00> : vector<256x128xf32>
    %34 = tpu.matmul %33, %32, %cst_43 {dimension_numbers = #tpu.dot_dimension_numbers<[1], [0], [0], [1], [0, 0, 1, 1], [], []>} : vector<256x128xbf16>, vector<128x128xbf16>, vector<256x128xf32> -> vector<256x128xf32>
    %35 = arith.addf %30, %34 : vector<256x128xf32>
    %c1_44 = arith.constant 1 : index
    %c2_45 = arith.constant 2 : index
    %c0_46 = arith.constant 0 : index
    %36 = vector.load %arg5[%c1_44, %c2_45, %c0_46] : memref<18x18x128xbf16, #tpu.memory_space<vmem>>, vector<16x16x128xbf16>
    %c640 = arith.constant 640 : index
    %c0_47 = arith.constant 0 : index
    %37 = vector.load %arg2[%c640, %c0_47] : memref<1152x128xbf16, #tpu.memory_space<vmem>>, vector<128x128xbf16>
    %38 = vector.shape_cast %36 : vector<16x16x128xbf16> to vector<256x128xbf16>
    %cst_48 = arith.constant dense<0.000000e+00> : vector<256x128xf32>
    %39 = tpu.matmul %38, %37, %cst_48 {dimension_numbers = #tpu.dot_dimension_numbers<[1], [0], [0], [1], [0, 0, 1, 1], [], []>} : vector<256x128xbf16>, vector<128x128xbf16>, vector<256x128xf32> -> vector<256x128xf32>
    %40 = arith.addf %35, %39 : vector<256x128xf32>
    %c2_49 = arith.constant 2 : index
    %c0_50 = arith.constant 0 : index
    %c0_51 = arith.constant 0 : index
    %41 = vector.load %arg5[%c2_49, %c0_50, %c0_51] : memref<18x18x128xbf16, #tpu.memory_space<vmem>>, vector<16x16x128xbf16>
    %c768 = arith.constant 768 : index
    %c0_52 = arith.constant 0 : index
    %42 = vector.load %arg2[%c768, %c0_52] : memref<1152x128xbf16, #tpu.memory_space<vmem>>, vector<128x128xbf16>
    %43 = vector.shape_cast %41 : vector<16x16x128xbf16> to vector<256x128xbf16>
    %cst_53 = arith.constant dense<0.000000e+00> : vector<256x128xf32>
    %44 = tpu.matmul %43, %42, %cst_53 {dimension_numbers = #tpu.dot_dimension_numbers<[1], [0], [0], [1], [0, 0, 1, 1], [], []>} : vector<256x128xbf16>, vector<128x128xbf16>, vector<256x128xf32> -> vector<256x128xf32>
    %45 = arith.addf %40, %44 : vector<256x128xf32>
    %c2_54 = arith.constant 2 : index
    %c1_55 = arith.constant 1 : index
    %c0_56 = arith.constant 0 : index
    %46 = vector.load %arg5[%c2_54, %c1_55, %c0_56] : memref<18x18x128xbf16, #tpu.memory_space<vmem>>, vector<16x16x128xbf16>
    %c896 = arith.constant 896 : index
    %c0_57 = arith.constant 0 : index
    %47 = vector.load %arg2[%c896, %c0_57] : memref<1152x128xbf16, #tpu.memory_space<vmem>>, vector<128x128xbf16>
    %48 = vector.shape_cast %46 : vector<16x16x128xbf16> to vector<256x128xbf16>
    %cst_58 = arith.constant dense<0.000000e+00> : vector<256x128xf32>
    %49 = tpu.matmul %48, %47, %cst_58 {dimension_numbers = #tpu.dot_dimension_numbers<[1], [0], [0], [1], [0, 0, 1, 1], [], []>} : vector<256x128xbf16>, vector<128x128xbf16>, vector<256x128xf32> -> vector<256x128xf32>
    %50 = arith.addf %45, %49 : vector<256x128xf32>
    %c2_59 = arith.constant 2 : index
    %c2_60 = arith.constant 2 : index
    %c0_61 = arith.constant 0 : index
    %51 = vector.load %arg5[%c2_59, %c2_60, %c0_61] : memref<18x18x128xbf16, #tpu.memory_space<vmem>>, vector<16x16x128xbf16>
    %c1024 = arith.constant 1024 : index
    %c0_62 = arith.constant 0 : index
    %52 = vector.load %arg2[%c1024, %c0_62] : memref<1152x128xbf16, #tpu.memory_space<vmem>>, vector<128x128xbf16>
    %53 = vector.shape_cast %51 : vector<16x16x128xbf16> to vector<256x128xbf16>
    %cst_63 = arith.constant dense<0.000000e+00> : vector<256x128xf32>
    %54 = tpu.matmul %53, %52, %cst_63 {dimension_numbers = #tpu.dot_dimension_numbers<[1], [0], [0], [1], [0, 0, 1, 1], [], []>} : vector<256x128xbf16>, vector<128x128xbf16>, vector<256x128xf32> -> vector<256x128xf32>
    %55 = arith.addf %50, %54 : vector<256x128xf32>
    %56 = vector.shape_cast %55 : vector<256x128xf32> to vector<16x16x128xf32>
    %57 = arith.truncf %56 : vector<16x16x128xf32> to vector<16x16x128xbf16>
    %c0_64 = arith.constant 0 : index
    %c0_65 = arith.constant 0 : index
    %c0_66 = arith.constant 0 : index
    %c0_67 = arith.constant 0 : index
    %58 = vector.load %arg3[%c0_64, %c0_65, %c0_66, %c0_67] : memref<1x16x16x128xbf16, #tpu.memory_space<vmem>>, vector<1x16x16x128xbf16>
    %59 = vector.shape_cast %58 : vector<1x16x16x128xbf16> to vector<16x16x128xbf16>
    %60 = vector.shape_cast %57 : vector<16x16x128xbf16> to vector<1x16x16x128xbf16>
    tpu.vector_store %arg3[%c0_64, %c0_65, %c0_66, %c0_67], %60 {strides = array<i32>} : memref<1x16x16x128xbf16, #tpu.memory_space<vmem>>, vector<1x16x16x128xbf16>,
    %cst_68 = arith.constant dense<0.000000e+00> : vector<128xf32>
    %61 = vector.multi_reduction <add>, %55, %cst_68 [0] : vector<256x128xf32> to vector<128xf32>
    %62 = vector.shape_cast %61 : vector<128xf32> to vector<1x128xf32>
    %63 = arith.addf %9, %62 : vector<1x128xf32>
    %64 = arith.mulf %55, %55 : vector<256x128xf32>
    %cst_69 = arith.constant dense<0.000000e+00> : vector<128xf32>
    %65 = vector.multi_reduction <add>, %64, %cst_69 [0] : vector<256x128xf32> to vector<128xf32>
    %66 = vector.shape_cast %65 : vector<128xf32> to vector<1x128xf32>
    %67 = arith.addf %9, %66 : vector<1x128xf32>
    %68 = tpu.concatenate %63, %67 in 0 : vector<1x128xf32>, vector<1x128xf32> -> vector<2x128xf32>
    %c0_70 = arith.constant 0 : index
    %c0_71 = arith.constant 0 : index
    %c0_72 = arith.constant 0 : index
    %69 = vector.load %arg4[%c0_70, %c0_71, %c0_72] : memref<1x2x128xf32, #tpu.memory_space<vmem>>, vector<1x2x128xf32>
    %70 = vector.shape_cast %69 : vector<1x2x128xf32> to vector<2x128xf32>
    %71 = vector.shape_cast %68 : vector<2x128xf32> to vector<1x2x128xf32>
    tpu.vector_store %arg4[%c0_70, %c0_71, %c0_72], %71 {strides = array<i32>} : memref<1x2x128xf32, #tpu.memory_space<vmem>>, vector<1x2x128xf32>,
    return
  }
  func.func @transform_0(%arg0: i32) -> (i32, i32, i32, i32) {
    %c0_i32 = arith.constant 0 : i32
    %c0_i32_0 = arith.constant 0 : i32
    %c0_i32_1 = arith.constant 0 : i32
    %c0_i32_2 = arith.constant 0 : i32
    return %arg0, %c0_i32, %c0_i32_0, %c0_i32_1 : i32, i32, i32, i32
  }
  func.func @transform_1(%arg0: i32) -> (i32, i32) {
    %c0_i32 = arith.constant 0 : i32
    %c0_i32_0 = arith.constant 0 : i32
    %c0_i32_1 = arith.constant 0 : i32
    return %c0_i32, %c0_i32_0 : i32, i32
  }
  func.func @transform_2(%arg0: i32) -> (i32, i32, i32, i32) {
    %c0_i32 = arith.constant 0 : i32
    %c0_i32_0 = arith.constant 0 : i32
    %c0_i32_1 = arith.constant 0 : i32
    %c0_i32_2 = arith.constant 0 : i32
    return %arg0, %c0_i32, %c0_i32_0, %c0_i32_1 : i32, i32, i32, i32
  }
  func.func @transform_3(%arg0: i32) -> (i32, i32, i32) {
    %c0_i32 = arith.constant 0 : i32
    %c0_i32_0 = arith.constant 0 : i32
    %c0_i32_1 = arith.constant 0 : i32
    return %arg0, %c0_i32, %c0_i32_0 : i32, i32, i32
  }
}

module attributes {stable_mosaic.version = 11 : i64} {
  func.func @_conv3x3_s1_kernel(%arg0: i32, %arg1: memref<1x16x16x128xbf16, #tpu.memory_space<vmem>>, %arg2: memref<1152x128xbf16, #tpu.memory_space<vmem>>, %arg3: memref<1x128xf32, #tpu.memory_space<vmem>>, %arg4: memref<1x128xf32, #tpu.memory_space<vmem>>, %arg5: memref<1x16x16x128xbf16, #tpu.memory_space<vmem>>, %arg6: memref<1x2x128xf32, #tpu.memory_space<vmem>>, %arg7: memref<18x18x128xbf16, #tpu.memory_space<vmem>>) attributes {dimension_semantics = [#tpu.dimension_semantics<parallel>], iteration_bounds = array<i64: 2>, scalar_prefetch = 0 : i64, scratch_operands = 1 : i64, tpu.core_type = #tpu.core_type<tc>, window_params = [{transform_indices = @transform_0, window_bounds = array<i64: 1, 16, 16, 128>}, {pipeline_mode = #tpu.pipeline_mode<synchronous>, transform_indices = @transform_1, window_bounds = array<i64: 1152, 128>}, {pipeline_mode = #tpu.pipeline_mode<synchronous>, transform_indices = @transform_2, window_bounds = array<i64: 1, 128>}, {pipeline_mode = #tpu.pipeline_mode<synchronous>, transform_indices = @transform_3, window_bounds = array<i64: 1, 128>}, {transform_indices = @transform_4, window_bounds = array<i64: 1, 16, 16, 128>}, {transform_indices = @transform_5, window_bounds = array<i64: 1, 2, 128>}]} {
    %cst = arith.constant 0.000000e+00 : bf16
    %0 = vector.broadcast %cst : bf16 to vector<1x18x128xbf16>
    %c0 = arith.constant 0 : index
    %c0_0 = arith.constant 0 : index
    %c0_1 = arith.constant 0 : index
    %1 = vector.load %arg7[%c0, %c0_0, %c0_1] : memref<18x18x128xbf16, #tpu.memory_space<vmem>>, vector<1x18x128xbf16>
    tpu.vector_store %arg7[%c0, %c0_0, %c0_1], %0 {strides = array<i32>} : memref<18x18x128xbf16, #tpu.memory_space<vmem>>, vector<1x18x128xbf16>,
    %c17 = arith.constant 17 : index
    %c0_2 = arith.constant 0 : index
    %c0_3 = arith.constant 0 : index
    %2 = vector.load %arg7[%c17, %c0_2, %c0_3] : memref<18x18x128xbf16, #tpu.memory_space<vmem>>, vector<1x18x128xbf16>
    tpu.vector_store %arg7[%c17, %c0_2, %c0_3], %0 {strides = array<i32>} : memref<18x18x128xbf16, #tpu.memory_space<vmem>>, vector<1x18x128xbf16>,
    %cst_4 = arith.constant 0.000000e+00 : bf16
    %3 = vector.broadcast %cst_4 : bf16 to vector<18x1x128xbf16>
    %c0_5 = arith.constant 0 : index
    %c0_6 = arith.constant 0 : index
    %c0_7 = arith.constant 0 : index
    %4 = vector.load %arg7[%c0_5, %c0_6, %c0_7] : memref<18x18x128xbf16, #tpu.memory_space<vmem>>, vector<18x1x128xbf16>
    tpu.vector_store %arg7[%c0_5, %c0_6, %c0_7], %3 {strides = array<i32>} : memref<18x18x128xbf16, #tpu.memory_space<vmem>>, vector<18x1x128xbf16>,
    %c0_8 = arith.constant 0 : index
    %c17_9 = arith.constant 17 : index
    %c0_10 = arith.constant 0 : index
    %5 = vector.load %arg7[%c0_8, %c17_9, %c0_10] : memref<18x18x128xbf16, #tpu.memory_space<vmem>>, vector<18x1x128xbf16>
    tpu.vector_store %arg7[%c0_8, %c17_9, %c0_10], %3 {strides = array<i32>} : memref<18x18x128xbf16, #tpu.memory_space<vmem>>, vector<18x1x128xbf16>,
    %c0_11 = arith.constant 0 : index
    %c0_12 = arith.constant 0 : index
    %c0_13 = arith.constant 0 : index
    %c0_14 = arith.constant 0 : index
    %6 = vector.load %arg1[%c0_11, %c0_12, %c0_13, %c0_14] : memref<1x16x16x128xbf16, #tpu.memory_space<vmem>>, vector<1x16x16x128xbf16>
    %7 = vector.shape_cast %6 : vector<1x16x16x128xbf16> to vector<16x16x128xbf16>
    %8 = arith.extf %7 : vector<16x16x128xbf16> to vector<16x16x128xf32>
    %c0_15 = arith.constant 0 : index
    %c0_16 = arith.constant 0 : index
    %9 = vector.load %arg3[%c0_15, %c0_16] : memref<1x128xf32, #tpu.memory_space<vmem>>, vector<1x128xf32>
    %10 = vector.shape_cast %9 : vector<1x128xf32> to vector<1x1x128xf32>
    %11 = vector.broadcast %10 : vector<1x1x128xf32> to vector<16x16x128xf32>
    %12 = arith.mulf %8, %11 : vector<16x16x128xf32>
    %c0_17 = arith.constant 0 : index
    %c0_18 = arith.constant 0 : index
    %13 = vector.load %arg4[%c0_17, %c0_18] : memref<1x128xf32, #tpu.memory_space<vmem>>, vector<1x128xf32>
    %14 = vector.shape_cast %13 : vector<1x128xf32> to vector<1x1x128xf32>
    %15 = vector.broadcast %14 : vector<1x1x128xf32> to vector<16x16x128xf32>
    %16 = arith.addf %12, %15 : vector<16x16x128xf32>
    %cst_19 = arith.constant 0.000000e+00 : f32
    %17 = vector.broadcast %cst_19 : f32 to vector<16x16x128xf32>
    %18 = arith.maximumf %16, %17 : vector<16x16x128xf32>
    %19 = arith.truncf %18 : vector<16x16x128xf32> to vector<16x16x128xbf16>
    %c1 = arith.constant 1 : index
    %c1_20 = arith.constant 1 : index
    %c0_21 = arith.constant 0 : index
    %20 = vector.load %arg7[%c1, %c1_20, %c0_21] : memref<18x18x128xbf16, #tpu.memory_space<vmem>>, vector<16x16x128xbf16>
    tpu.vector_store %arg7[%c1, %c1_20, %c0_21], %19 {strides = array<i32>} : memref<18x18x128xbf16, #tpu.memory_space<vmem>>, vector<16x16x128xbf16>,
    %cst_22 = arith.constant 0.000000e+00 : f32
    %21 = vector.broadcast %cst_22 : f32 to vector<1x128xf32>
    %cst_23 = arith.constant 0.000000e+00 : f32
    %22 = vector.broadcast %cst_23 : f32 to vector<256x128xf32>
    %c0_24 = arith.constant 0 : index
    %c0_25 = arith.constant 0 : index
    %c0_26 = arith.constant 0 : index
    %23 = vector.load %arg7[%c0_24, %c0_25, %c0_26] : memref<18x18x128xbf16, #tpu.memory_space<vmem>>, vector<16x16x128xbf16>
    %c0_27 = arith.constant 0 : index
    %c0_28 = arith.constant 0 : index
    %24 = vector.load %arg2[%c0_27, %c0_28] : memref<1152x128xbf16, #tpu.memory_space<vmem>>, vector<128x128xbf16>
    %25 = vector.shape_cast %23 : vector<16x16x128xbf16> to vector<256x128xbf16>
    %cst_29 = arith.constant dense<0.000000e+00> : vector<256x128xf32>
    %26 = tpu.matmul %25, %24, %cst_29 {dimension_numbers = #tpu.dot_dimension_numbers<[1], [0], [0], [1], [0, 0, 1, 1], [], []>} : vector<256x128xbf16>, vector<128x128xbf16>, vector<256x128xf32> -> vector<256x128xf32>
    %27 = arith.addf %22, %26 : vector<256x128xf32>
    %c0_30 = arith.constant 0 : index
    %c1_31 = arith.constant 1 : index
    %c0_32 = arith.constant 0 : index
    %28 = vector.load %arg7[%c0_30, %c1_31, %c0_32] : memref<18x18x128xbf16, #tpu.memory_space<vmem>>, vector<16x16x128xbf16>
    %c128 = arith.constant 128 : index
    %c0_33 = arith.constant 0 : index
    %29 = vector.load %arg2[%c128, %c0_33] : memref<1152x128xbf16, #tpu.memory_space<vmem>>, vector<128x128xbf16>
    %30 = vector.shape_cast %28 : vector<16x16x128xbf16> to vector<256x128xbf16>
    %cst_34 = arith.constant dense<0.000000e+00> : vector<256x128xf32>
    %31 = tpu.matmul %30, %29, %cst_34 {dimension_numbers = #tpu.dot_dimension_numbers<[1], [0], [0], [1], [0, 0, 1, 1], [], []>} : vector<256x128xbf16>, vector<128x128xbf16>, vector<256x128xf32> -> vector<256x128xf32>
    %32 = arith.addf %27, %31 : vector<256x128xf32>
    %c0_35 = arith.constant 0 : index
    %c2 = arith.constant 2 : index
    %c0_36 = arith.constant 0 : index
    %33 = vector.load %arg7[%c0_35, %c2, %c0_36] : memref<18x18x128xbf16, #tpu.memory_space<vmem>>, vector<16x16x128xbf16>
    %c256 = arith.constant 256 : index
    %c0_37 = arith.constant 0 : index
    %34 = vector.load %arg2[%c256, %c0_37] : memref<1152x128xbf16, #tpu.memory_space<vmem>>, vector<128x128xbf16>
    %35 = vector.shape_cast %33 : vector<16x16x128xbf16> to vector<256x128xbf16>
    %cst_38 = arith.constant dense<0.000000e+00> : vector<256x128xf32>
    %36 = tpu.matmul %35, %34, %cst_38 {dimension_numbers = #tpu.dot_dimension_numbers<[1], [0], [0], [1], [0, 0, 1, 1], [], []>} : vector<256x128xbf16>, vector<128x128xbf16>, vector<256x128xf32> -> vector<256x128xf32>
    %37 = arith.addf %32, %36 : vector<256x128xf32>
    %c1_39 = arith.constant 1 : index
    %c0_40 = arith.constant 0 : index
    %c0_41 = arith.constant 0 : index
    %38 = vector.load %arg7[%c1_39, %c0_40, %c0_41] : memref<18x18x128xbf16, #tpu.memory_space<vmem>>, vector<16x16x128xbf16>
    %c384 = arith.constant 384 : index
    %c0_42 = arith.constant 0 : index
    %39 = vector.load %arg2[%c384, %c0_42] : memref<1152x128xbf16, #tpu.memory_space<vmem>>, vector<128x128xbf16>
    %40 = vector.shape_cast %38 : vector<16x16x128xbf16> to vector<256x128xbf16>
    %cst_43 = arith.constant dense<0.000000e+00> : vector<256x128xf32>
    %41 = tpu.matmul %40, %39, %cst_43 {dimension_numbers = #tpu.dot_dimension_numbers<[1], [0], [0], [1], [0, 0, 1, 1], [], []>} : vector<256x128xbf16>, vector<128x128xbf16>, vector<256x128xf32> -> vector<256x128xf32>
    %42 = arith.addf %37, %41 : vector<256x128xf32>
    %c1_44 = arith.constant 1 : index
    %c1_45 = arith.constant 1 : index
    %c0_46 = arith.constant 0 : index
    %43 = vector.load %arg7[%c1_44, %c1_45, %c0_46] : memref<18x18x128xbf16, #tpu.memory_space<vmem>>, vector<16x16x128xbf16>
    %c512 = arith.constant 512 : index
    %c0_47 = arith.constant 0 : index
    %44 = vector.load %arg2[%c512, %c0_47] : memref<1152x128xbf16, #tpu.memory_space<vmem>>, vector<128x128xbf16>
    %45 = vector.shape_cast %43 : vector<16x16x128xbf16> to vector<256x128xbf16>
    %cst_48 = arith.constant dense<0.000000e+00> : vector<256x128xf32>
    %46 = tpu.matmul %45, %44, %cst_48 {dimension_numbers = #tpu.dot_dimension_numbers<[1], [0], [0], [1], [0, 0, 1, 1], [], []>} : vector<256x128xbf16>, vector<128x128xbf16>, vector<256x128xf32> -> vector<256x128xf32>
    %47 = arith.addf %42, %46 : vector<256x128xf32>
    %c1_49 = arith.constant 1 : index
    %c2_50 = arith.constant 2 : index
    %c0_51 = arith.constant 0 : index
    %48 = vector.load %arg7[%c1_49, %c2_50, %c0_51] : memref<18x18x128xbf16, #tpu.memory_space<vmem>>, vector<16x16x128xbf16>
    %c640 = arith.constant 640 : index
    %c0_52 = arith.constant 0 : index
    %49 = vector.load %arg2[%c640, %c0_52] : memref<1152x128xbf16, #tpu.memory_space<vmem>>, vector<128x128xbf16>
    %50 = vector.shape_cast %48 : vector<16x16x128xbf16> to vector<256x128xbf16>
    %cst_53 = arith.constant dense<0.000000e+00> : vector<256x128xf32>
    %51 = tpu.matmul %50, %49, %cst_53 {dimension_numbers = #tpu.dot_dimension_numbers<[1], [0], [0], [1], [0, 0, 1, 1], [], []>} : vector<256x128xbf16>, vector<128x128xbf16>, vector<256x128xf32> -> vector<256x128xf32>
    %52 = arith.addf %47, %51 : vector<256x128xf32>
    %c2_54 = arith.constant 2 : index
    %c0_55 = arith.constant 0 : index
    %c0_56 = arith.constant 0 : index
    %53 = vector.load %arg7[%c2_54, %c0_55, %c0_56] : memref<18x18x128xbf16, #tpu.memory_space<vmem>>, vector<16x16x128xbf16>
    %c768 = arith.constant 768 : index
    %c0_57 = arith.constant 0 : index
    %54 = vector.load %arg2[%c768, %c0_57] : memref<1152x128xbf16, #tpu.memory_space<vmem>>, vector<128x128xbf16>
    %55 = vector.shape_cast %53 : vector<16x16x128xbf16> to vector<256x128xbf16>
    %cst_58 = arith.constant dense<0.000000e+00> : vector<256x128xf32>
    %56 = tpu.matmul %55, %54, %cst_58 {dimension_numbers = #tpu.dot_dimension_numbers<[1], [0], [0], [1], [0, 0, 1, 1], [], []>} : vector<256x128xbf16>, vector<128x128xbf16>, vector<256x128xf32> -> vector<256x128xf32>
    %57 = arith.addf %52, %56 : vector<256x128xf32>
    %c2_59 = arith.constant 2 : index
    %c1_60 = arith.constant 1 : index
    %c0_61 = arith.constant 0 : index
    %58 = vector.load %arg7[%c2_59, %c1_60, %c0_61] : memref<18x18x128xbf16, #tpu.memory_space<vmem>>, vector<16x16x128xbf16>
    %c896 = arith.constant 896 : index
    %c0_62 = arith.constant 0 : index
    %59 = vector.load %arg2[%c896, %c0_62] : memref<1152x128xbf16, #tpu.memory_space<vmem>>, vector<128x128xbf16>
    %60 = vector.shape_cast %58 : vector<16x16x128xbf16> to vector<256x128xbf16>
    %cst_63 = arith.constant dense<0.000000e+00> : vector<256x128xf32>
    %61 = tpu.matmul %60, %59, %cst_63 {dimension_numbers = #tpu.dot_dimension_numbers<[1], [0], [0], [1], [0, 0, 1, 1], [], []>} : vector<256x128xbf16>, vector<128x128xbf16>, vector<256x128xf32> -> vector<256x128xf32>
    %62 = arith.addf %57, %61 : vector<256x128xf32>
    %c2_64 = arith.constant 2 : index
    %c2_65 = arith.constant 2 : index
    %c0_66 = arith.constant 0 : index
    %63 = vector.load %arg7[%c2_64, %c2_65, %c0_66] : memref<18x18x128xbf16, #tpu.memory_space<vmem>>, vector<16x16x128xbf16>
    %c1024 = arith.constant 1024 : index
    %c0_67 = arith.constant 0 : index
    %64 = vector.load %arg2[%c1024, %c0_67] : memref<1152x128xbf16, #tpu.memory_space<vmem>>, vector<128x128xbf16>
    %65 = vector.shape_cast %63 : vector<16x16x128xbf16> to vector<256x128xbf16>
    %cst_68 = arith.constant dense<0.000000e+00> : vector<256x128xf32>
    %66 = tpu.matmul %65, %64, %cst_68 {dimension_numbers = #tpu.dot_dimension_numbers<[1], [0], [0], [1], [0, 0, 1, 1], [], []>} : vector<256x128xbf16>, vector<128x128xbf16>, vector<256x128xf32> -> vector<256x128xf32>
    %67 = arith.addf %62, %66 : vector<256x128xf32>
    %68 = vector.shape_cast %67 : vector<256x128xf32> to vector<16x16x128xf32>
    %69 = arith.truncf %68 : vector<16x16x128xf32> to vector<16x16x128xbf16>
    %c0_69 = arith.constant 0 : index
    %c0_70 = arith.constant 0 : index
    %c0_71 = arith.constant 0 : index
    %c0_72 = arith.constant 0 : index
    %70 = vector.load %arg5[%c0_69, %c0_70, %c0_71, %c0_72] : memref<1x16x16x128xbf16, #tpu.memory_space<vmem>>, vector<1x16x16x128xbf16>
    %71 = vector.shape_cast %70 : vector<1x16x16x128xbf16> to vector<16x16x128xbf16>
    %72 = vector.shape_cast %69 : vector<16x16x128xbf16> to vector<1x16x16x128xbf16>
    tpu.vector_store %arg5[%c0_69, %c0_70, %c0_71, %c0_72], %72 {strides = array<i32>} : memref<1x16x16x128xbf16, #tpu.memory_space<vmem>>, vector<1x16x16x128xbf16>,
    %cst_73 = arith.constant dense<0.000000e+00> : vector<128xf32>
    %73 = vector.multi_reduction <add>, %67, %cst_73 [0] : vector<256x128xf32> to vector<128xf32>
    %74 = vector.shape_cast %73 : vector<128xf32> to vector<1x128xf32>
    %75 = arith.addf %21, %74 : vector<1x128xf32>
    %76 = arith.mulf %67, %67 : vector<256x128xf32>
    %cst_74 = arith.constant dense<0.000000e+00> : vector<128xf32>
    %77 = vector.multi_reduction <add>, %76, %cst_74 [0] : vector<256x128xf32> to vector<128xf32>
    %78 = vector.shape_cast %77 : vector<128xf32> to vector<1x128xf32>
    %79 = arith.addf %21, %78 : vector<1x128xf32>
    %80 = tpu.concatenate %75, %79 in 0 : vector<1x128xf32>, vector<1x128xf32> -> vector<2x128xf32>
    %c0_75 = arith.constant 0 : index
    %c0_76 = arith.constant 0 : index
    %c0_77 = arith.constant 0 : index
    %81 = vector.load %arg6[%c0_75, %c0_76, %c0_77] : memref<1x2x128xf32, #tpu.memory_space<vmem>>, vector<1x2x128xf32>
    %82 = vector.shape_cast %81 : vector<1x2x128xf32> to vector<2x128xf32>
    %83 = vector.shape_cast %80 : vector<2x128xf32> to vector<1x2x128xf32>
    tpu.vector_store %arg6[%c0_75, %c0_76, %c0_77], %83 {strides = array<i32>} : memref<1x2x128xf32, #tpu.memory_space<vmem>>, vector<1x2x128xf32>,
    return
  }
  func.func @transform_0(%arg0: i32) -> (i32, i32, i32, i32) {
    %c0_i32 = arith.constant 0 : i32
    %c0_i32_0 = arith.constant 0 : i32
    %c0_i32_1 = arith.constant 0 : i32
    %c0_i32_2 = arith.constant 0 : i32
    return %arg0, %c0_i32, %c0_i32_0, %c0_i32_1 : i32, i32, i32, i32
  }
  func.func @transform_1(%arg0: i32) -> (i32, i32) {
    %c0_i32 = arith.constant 0 : i32
    %c0_i32_0 = arith.constant 0 : i32
    %c0_i32_1 = arith.constant 0 : i32
    return %c0_i32, %c0_i32_0 : i32, i32
  }
  func.func @transform_2(%arg0: i32) -> (i32, i32) {
    %c0_i32 = arith.constant 0 : i32
    %c0_i32_0 = arith.constant 0 : i32
    %c0_i32_1 = arith.constant 0 : i32
    return %c0_i32, %c0_i32_0 : i32, i32
  }
  func.func @transform_3(%arg0: i32) -> (i32, i32) {
    %c0_i32 = arith.constant 0 : i32
    %c0_i32_0 = arith.constant 0 : i32
    %c0_i32_1 = arith.constant 0 : i32
    return %c0_i32, %c0_i32_0 : i32, i32
  }
  func.func @transform_4(%arg0: i32) -> (i32, i32, i32, i32) {
    %c0_i32 = arith.constant 0 : i32
    %c0_i32_0 = arith.constant 0 : i32
    %c0_i32_1 = arith.constant 0 : i32
    %c0_i32_2 = arith.constant 0 : i32
    return %arg0, %c0_i32, %c0_i32_0, %c0_i32_1 : i32, i32, i32, i32
  }
  func.func @transform_5(%arg0: i32) -> (i32, i32, i32) {
    %c0_i32 = arith.constant 0 : i32
    %c0_i32_0 = arith.constant 0 : i32
    %c0_i32_1 = arith.constant 0 : i32
    return %arg0, %c0_i32, %c0_i32_0 : i32, i32, i32
  }
}

module attributes {stable_mosaic.version = 11 : i64} {
  func.func @_bn_add_relu_id_kernel(%arg0: i32, %arg1: i32, %arg2: memref<1x16x16x128xbf16, #tpu.memory_space<vmem>>, %arg3: memref<1x16x16x128xbf16, #tpu.memory_space<vmem>>, %arg4: memref<1x128xf32, #tpu.memory_space<vmem>>, %arg5: memref<1x128xf32, #tpu.memory_space<vmem>>, %arg6: memref<1x16x16x128xf32, #tpu.memory_space<vmem>>) attributes {dimension_semantics = [#tpu.dimension_semantics<parallel>, #tpu.dimension_semantics<parallel>], iteration_bounds = array<i64: 2, 1>, scalar_prefetch = 0 : i64, scratch_operands = 0 : i64, tpu.core_type = #tpu.core_type<tc>, window_params = [{transform_indices = @transform_0, window_bounds = array<i64: 1, 16, 16, 128>}, {transform_indices = @transform_1, window_bounds = array<i64: 1, 16, 16, 128>}, {pipeline_mode = #tpu.pipeline_mode<synchronous>, transform_indices = @transform_2, window_bounds = array<i64: 1, 128>}, {pipeline_mode = #tpu.pipeline_mode<synchronous>, transform_indices = @transform_3, window_bounds = array<i64: 1, 128>}, {transform_indices = @transform_4, window_bounds = array<i64: 1, 16, 16, 128>}]} {
    %c0 = arith.constant 0 : index
    %c0_0 = arith.constant 0 : index
    %c0_1 = arith.constant 0 : index
    %c0_2 = arith.constant 0 : index
    %0 = vector.load %arg2[%c0, %c0_0, %c0_1, %c0_2] : memref<1x16x16x128xbf16, #tpu.memory_space<vmem>>, vector<1x16x16x128xbf16>
    %1 = vector.shape_cast %0 : vector<1x16x16x128xbf16> to vector<16x16x128xbf16>
    %2 = arith.extf %1 : vector<16x16x128xbf16> to vector<16x16x128xf32>
    %c0_3 = arith.constant 0 : index
    %c0_4 = arith.constant 0 : index
    %3 = vector.load %arg4[%c0_3, %c0_4] : memref<1x128xf32, #tpu.memory_space<vmem>>, vector<1x128xf32>
    %4 = vector.shape_cast %3 : vector<1x128xf32> to vector<1x1x128xf32>
    %5 = vector.broadcast %4 : vector<1x1x128xf32> to vector<16x16x128xf32>
    %6 = arith.mulf %2, %5 : vector<16x16x128xf32>
    %c0_5 = arith.constant 0 : index
    %c0_6 = arith.constant 0 : index
    %7 = vector.load %arg5[%c0_5, %c0_6] : memref<1x128xf32, #tpu.memory_space<vmem>>, vector<1x128xf32>
    %8 = vector.shape_cast %7 : vector<1x128xf32> to vector<1x1x128xf32>
    %9 = vector.broadcast %8 : vector<1x1x128xf32> to vector<16x16x128xf32>
    %10 = arith.addf %6, %9 : vector<16x16x128xf32>
    %c0_7 = arith.constant 0 : index
    %c0_8 = arith.constant 0 : index
    %c0_9 = arith.constant 0 : index
    %c0_10 = arith.constant 0 : index
    %11 = vector.load %arg3[%c0_7, %c0_8, %c0_9, %c0_10] : memref<1x16x16x128xbf16, #tpu.memory_space<vmem>>, vector<1x16x16x128xbf16>
    %12 = vector.shape_cast %11 : vector<1x16x16x128xbf16> to vector<16x16x128xbf16>
    %13 = arith.extf %12 : vector<16x16x128xbf16> to vector<16x16x128xf32>
    %14 = arith.addf %10, %13 : vector<16x16x128xf32>
    %cst = arith.constant 0.000000e+00 : f32
    %15 = vector.broadcast %cst : f32 to vector<16x16x128xf32>
    %16 = arith.maximumf %14, %15 : vector<16x16x128xf32>
    %c0_11 = arith.constant 0 : index
    %c0_12 = arith.constant 0 : index
    %c0_13 = arith.constant 0 : index
    %c0_14 = arith.constant 0 : index
    %17 = vector.load %arg6[%c0_11, %c0_12, %c0_13, %c0_14] : memref<1x16x16x128xf32, #tpu.memory_space<vmem>>, vector<1x16x16x128xf32>
    %18 = vector.shape_cast %17 : vector<1x16x16x128xf32> to vector<16x16x128xf32>
    %19 = vector.shape_cast %16 : vector<16x16x128xf32> to vector<1x16x16x128xf32>
    tpu.vector_store %arg6[%c0_11, %c0_12, %c0_13, %c0_14], %19 {strides = array<i32>} : memref<1x16x16x128xf32, #tpu.memory_space<vmem>>, vector<1x16x16x128xf32>,
    return
  }
  func.func @transform_0(%arg0: i32, %arg1: i32) -> (i32, i32, i32, i32) {
    %c0_i32 = arith.constant 0 : i32
    %c0_i32_0 = arith.constant 0 : i32
    %c0_i32_1 = arith.constant 0 : i32
    return %arg0, %arg1, %c0_i32, %c0_i32_0 : i32, i32, i32, i32
  }
  func.func @transform_1(%arg0: i32, %arg1: i32) -> (i32, i32, i32, i32) {
    %c0_i32 = arith.constant 0 : i32
    %c0_i32_0 = arith.constant 0 : i32
    %c0_i32_1 = arith.constant 0 : i32
    return %arg0, %arg1, %c0_i32, %c0_i32_0 : i32, i32, i32, i32
  }
  func.func @transform_2(%arg0: i32, %arg1: i32) -> (i32, i32) {
    %c0_i32 = arith.constant 0 : i32
    %c0_i32_0 = arith.constant 0 : i32
    %c0_i32_1 = arith.constant 0 : i32
    return %c0_i32, %c0_i32_0 : i32, i32
  }
  func.func @transform_3(%arg0: i32, %arg1: i32) -> (i32, i32) {
    %c0_i32 = arith.constant 0 : i32
    %c0_i32_0 = arith.constant 0 : i32
    %c0_i32_1 = arith.constant 0 : i32
    return %c0_i32, %c0_i32_0 : i32, i32
  }
  func.func @transform_4(%arg0: i32, %arg1: i32) -> (i32, i32, i32, i32) {
    %c0_i32 = arith.constant 0 : i32
    %c0_i32_0 = arith.constant 0 : i32
    %c0_i32_1 = arith.constant 0 : i32
    return %arg0, %arg1, %c0_i32, %c0_i32_0 : i32, i32, i32, i32
  }
}

</mosaic_0001>

<llo_original>
// kernel: pt_block_forward.5
$region0: #{pt_block_forward.5}
  #allocation0 [shape = 'u32[]', space=smem, size = 0x4, offset = 0x4, fixed_abs, tag = 'smem constant byte address 0x4 - core index']
  #allocation1 [shape = 'u32[144,128]{1,0:T(1,128)}', space=vmem, size = 0x12000, scoped, tag = 'internal scratch']
  %s0 = inlined_call_operand.vmem [shape: bf16[2,16,16,128], index: 0, kind: input, shape index: {}]
  %s1 = inlined_call_operand.vmem [shape: bf16[2,16,16,128], index: 1, kind: input, shape index: {}]
  %s2 = inlined_call_operand.vmem [shape: f32[1,128], index: 2, kind: input, shape index: {}]
  %s3 = inlined_call_operand.vmem [shape: f32[1,128], index: 3, kind: input, shape index: {}]
  %s4 = inlined_call_operand.vmem [shape: f32[2,16,16,128], index: 4, kind: output, shape index: {}]
  %s5 = sld [smem:[#allocation0]]
  $region49: #{pt_block_forward.5} parent=0
    _
  %s7 = ssub.s32 1, %s5
  %s8 = scalar_select 0, %s7, %s5
  loop: start=0, step=1, limit=4
  $region2: #{pt_block_forward.5} parent=0 // loop_pre_header
    _
  $region3: #{pt_block_forward.5} parent=0 // loop_header
    %s10 = sphi 0, %s14
    %p11 = scmp.ge.s32.totalorder %s10, 4
    %s17 = sphi 0, %s29
    %s18 = sphi 0, %s25
    %s19 = sphi 0, %s17
    %s20 = sphi 0, %s18
    %s21 = sphi 0, %s19
    %s22 = sphi 0, %s20
    %s34 = sphi 0, %s36
    %s37 = sphi 0, %s34
    %s38 = sphi 0, %s37
    %s54 = sphi 0, %s38
    %s62 = sphi 0, %s64
    %s65 = sphi 0, %s62
    %s66 = sphi 0, %s65
    %s82 = sphi 0, %s66
    %s86 = sphi 0, %s86
    %s88 = sphi 0, %s86
    %s89 = sphi 0, %s88
    %s103 = sphi 0, %s89
    %s107 = sphi 0, %s107
    %s109 = sphi 0, %s107
    %s110 = sphi 0, %s109
    %s124 = sphi 0, %s110
    %s132 = sphi 0, %s134
    %s135 = sphi 0, %s132
    %s136 = sphi 0, %s135
    %s152 = sphi 0, %s136
  $region4: #{pt_block_forward.5} parent=0 // loop_header_branch
    %13 = sbr.rel (%p11) target = $region8
  $region5: #{pt_block_forward.5} parent=0 // loop_body
    %s15 = ssub.s32 %s10, 1
    %s16 = ssub.s32 %s10, 2
    %s23 = sadd.s32 1, %s18
    %p24 = scmp.ge.s32.totalorder %s23, 1
    %s25 = scalar_select %p24, 0, %s23
    %s26 = sadd.s32 1, %s17
    %s27 = scalar_select %p24, %s26, %s17
    %p28 = scmp.ge.s32.totalorder %s27, 2
    %s29 = scalar_select %p28, 0, %s27
    %s30 = ssub.s32 %s17, %s29
    %s31 = ssub.s32 %s18, %s25
    %s32 = sor.u32 %s30, %s31
    %p33 = scmp.eq.s32.totalorder %s32, 0
    %s35 = sadd.s32 %s34, 1
    %s36 = scalar_select %p33, %s34, %s35
    %p39 = pneg %p33
    %p40 = scmp.eq.s32.totalorder %s10, 1
    %p41 = por %p39, %p40
    %p42 = scmp.ne.s32.totalorder %s34, %s37
    %p43 = scmp.eq.s32.totalorder %s10, 0
    %p44 = por %p42, %p43
    %p45 = scmp.ne.s32.totalorder %s34, %s37
    %p46 = scmp.eq.s32.totalorder %s15, 1
    %p47 = por %p45, %p46
    %p48 = scmp.ne.s32.totalorder %s37, %s38
    %p49 = scmp.eq.s32.totalorder %s15, 0
    %p50 = por %p48, %p49
    %p51 = scmp.ne.s32.totalorder %s37, %s38
    %p52 = scmp.eq.s32.totalorder %s16, 1
    %p53 = por %p51, %p52
    %p55 = scmp.ne.s32.totalorder %s38, %s54
    %p56 = scmp.eq.s32.totalorder %s16, 0
    %p57 = por %p55, %p56
    %s58 = ssub.s32 %s17, %s29
    %s59 = ssub.s32 %s18, %s25
    %s60 = sor.u32 %s58, %s59
    %p61 = scmp.eq.s32.totalorder %s60, 0
    %s63 = sadd.s32 %s62, 1
    %s64 = scalar_select %p61, %s62, %s63
    %p67 = pneg %p61
    %p68 = scmp.eq.s32.totalorder %s10, 1
    %p69 = por %p67, %p68
    %p70 = scmp.ne.s32.totalorder %s62, %s65
    %p71 = scmp.eq.s32.totalorder %s10, 0
    %p72 = por %p70, %p71
    %p73 = scmp.ne.s32.totalorder %s62, %s65
    %p74 = scmp.eq.s32.totalorder %s15, 1
    %p75 = por %p73, %p74
    %p76 = scmp.ne.s32.totalorder %s65, %s66
    %p77 = scmp.eq.s32.totalorder %s15, 0
    %p78 = por %p76, %p77
    %p79 = scmp.ne.s32.totalorder %s65, %s66
    %p80 = scmp.eq.s32.totalorder %s16, 1
    %p81 = por %p79, %p80
    %p83 = scmp.ne.s32.totalorder %s66, %s82
    %p84 = scmp.eq.s32.totalorder %s16, 0
    %p85 = por %p83, %p84
    %s87 = sadd.s32 %s86, 1
    %p90 = scmp.eq.s32.totalorder %s10, 1
    %p91 = scmp.ne.s32.totalorder %s86, %s88
    %p92 = scmp.eq.s32.totalorder %s10, 0
    %p93 = por %p91, %p92
    %p94 = scmp.ne.s32.totalorder %s86, %s88
    %p95 = scmp.eq.s32.totalorder %s15, 1
    %p96 = por %p94, %p95
    %p97 = scmp.ne.s32.totalorder %s88, %s89
    %p98 = scmp.eq.s32.totalorder %s15, 0
    %p99 = por %p97, %p98
    %p100 = scmp.ne.s32.totalorder %s88, %s89
    %p101 = scmp.eq.s32.totalorder %s16, 1
    %p102 = por %p100, %p101
    %p104 = scmp.ne.s32.totalorder %s89, %s103
    %p105 = scmp.eq.s32.totalorder %s16, 0
    %p106 = por %p104, %p105
    %s108 = sadd.s32 %s107, 1
    %p111 = scmp.eq.s32.totalorder %s10, 1
    %p112 = scmp.ne.s32.totalorder %s107, %s109
    %p113 = scmp.eq.s32.totalorder %s10, 0
    %p114 = por %p112, %p113
    %p115 = scmp.ne.s32.totalorder %s107, %s109
    %p116 = scmp.eq.s32.totalorder %s15, 1
    %p117 = por %p115, %p116
    %p118 = scmp.ne.s32.totalorder %s109, %s110
    %p119 = scmp.eq.s32.totalorder %s15, 0
    %p120 = por %p118, %p119
    %p121 = scmp.ne.s32.totalorder %s109, %s110
    %p122 = scmp.eq.s32.totalorder %s16, 1
    %p123 = por %p121, %p122
    %p125 = scmp.ne.s32.totalorder %s110, %s124
    %p126 = scmp.eq.s32.totalorder %s16, 0
    %p127 = por %p125, %p126
    %s128 = ssub.s32 %s17, %s29
    %s129 = ssub.s32 %s18, %s25
    %s130 = sor.u32 %s128, %s129
    %p131 = scmp.eq.s32.totalorder %s130, 0
    %s133 = sadd.s32 %s132, 1
    %s134 = scalar_select %p131, %s132, %s133
    %p137 = pneg %p131
    %p138 = scmp.eq.s32.totalorder %s10, 1
    %p139 = por %p137, %p138
    %p140 = scmp.ne.s32.totalorder %s132, %s135
    %p141 = scmp.eq.s32.totalorder %s10, 0
    %p142 = por %p140, %p141
    %p143 = scmp.ne.s32.totalorder %s132, %s135
    %p144 = scmp.eq.s32.totalorder %s15, 1
    %p145 = por %p143, %p144
    %p146 = scmp.ne.s32.totalorder %s135, %s136
    %p147 = scmp.eq.s32.totalorder %s15, 0
    %p148 = por %p146, %p147
    %p149 = scmp.ne.s32.totalorder %s135, %s136
    %p150 = scmp.eq.s32.totalorder %s16, 1
    %p151 = por %p149, %p150
    %p153 = scmp.ne.s32.totalorder %s136, %s152
    %p154 = scmp.eq.s32.totalorder %s16, 0
    %p155 = por %p153, %p154
    %p156 = scmp.le.s32.totalorder 1, %s10
    %p157 = scmp.lt.s32.totalorder %s10, 3
    %p158 = pnand %p156, %p157
    %p159 = pneg %p158
    // Predicated region
    $region9: #{pt_block_forward.5} parent=5 // pred_check
      _
    $region10: #{pt_block_forward.5} parent=5 // pred_check_branch
      %161 = sbr.rel (%p158) target = $region12
    $region11: #{pt_block_forward.5} parent=5 // pred_region
      %s162 = ssub.s32 %s10, 1
      // Predicated region
      $region13: #{pt_block_forward.5} parent=11 // pred_check
        %p163 = pneg %p99
      $region14: #{pt_block_forward.5} parent=11 // pred_check_branch
        %165 = sbr.rel (%p163) target = $region16
      $region15: #{pt_block_forward.5} parent=11 // pred_region
        _
      $region16: #{pt_block_forward.5} parent=11 // pred_fallthru
        _
      // Predicated region
      $region17: #{pt_block_forward.5} parent=11 // pred_check
        %p166 = pneg %p120
      $region18: #{pt_block_forward.5} parent=11 // pred_check_branch
        %168 = sbr.rel (%p166) target = $region20
      $region19: #{pt_block_forward.5} parent=11 // pred_region
        _
      $region20: #{pt_block_forward.5} parent=11 // pred_fallthru
        _
    $region12: #{pt_block_forward.5} parent=5 // pred_fallthru
      _
    %p169 = scmp.lt.s32.totalorder %s10, 2
    // Predicated region
    $region21: #{pt_block_forward.5} parent=5 // pred_check
      %p170 = pneg %p169
    $region22: #{pt_block_forward.5} parent=5 // pred_check_branch
      %172 = sbr.rel (%p170) target = $region24
    $region23: #{pt_block_forward.5} parent=5 // pred_region
      // Predicated region
      $region25: #{pt_block_forward.5} parent=23 // pred_check
        %p173 = pneg %p44
      $region26: #{pt_block_forward.5} parent=23 // pred_check_branch
        %175 = sbr.rel (%p173) target = $region28
      $region27: #{pt_block_forward.5} parent=23 // pred_region
        %s176 = smul.u32 16, %s18
        %p177 = scmp.lt.s32.totalorder %s17, 1
        %s178 = scalar_select %p177, %s17, 1
        %p179 = scmp.lt.s32.totalorder %s176, 15
        %s180 = scalar_select %p179, %s176, 15
        %s181 = smul.addr %s180, 2
        %s182 = smul.addr %s178, 32
        %s183 = sadd.s32 %s181, %s182
        %s184 = smul.addr %s183, 4
        %s185 = scalar_lea.vmem %s0, %s184
        %s186 = smul.u32 16, %s18
      $region28: #{pt_block_forward.5} parent=23 // pred_fallthru
        _
      // Predicated region
      $region29: #{pt_block_forward.5} parent=23 // pred_check
        %p187 = pneg %p72
      $region30: #{pt_block_forward.5} parent=23 // pred_check_branch
        %189 = sbr.rel (%p187) target = $region32
      $region31: #{pt_block_forward.5} parent=23 // pred_region
        %s190 = smul.u32 16, %s18
        %p191 = scmp.lt.s32.totalorder %s17, 1
        %s192 = scalar_select %p191, %s17, 1
        %p193 = scmp.lt.s32.totalorder %s190, 15
        %s194 = scalar_select %p193, %s190, 15
        %s195 = smul.addr %s194, 2
        %s196 = smul.addr %s192, 32
        %s197 = sadd.s32 %s195, %s196
        %s198 = smul.addr %s197, 4
        %s199 = scalar_lea.vmem %s1, %s198
        %s200 = smul.u32 16, %s18
      $region32: #{pt_block_forward.5} parent=23 // pred_fallthru
        _
    $region24: #{pt_block_forward.5} parent=5 // pred_fallthru
      _
    %p201 = scmp.le.s32.totalorder 1, %s10
    %p202 = scmp.lt.s32.totalorder %s10, 3
    %p203 = pnand %p201, %p202
    %p204 = pneg %p203
    // Predicated region
    $region33: #{pt_block_forward.5} parent=5 // pred_check
      _
    $region34: #{pt_block_forward.5} parent=5 // pred_check_branch
      %206 = sbr.rel (%p203) target = $region36
    $region35: #{pt_block_forward.5} parent=5 // pred_region
      %s207 = ssub.s32 %s10, 1
      %s208 = smul.u32 16, %s20
      %p209 = scmp.lt.s32.totalorder %s19, 1
      %s210 = scalar_select %p209, %s19, 1
      %p211 = scmp.lt.s32.totalorder %s208, 15
      %s212 = scalar_select %p211, %s208, 15
      %s213 = smul.addr %s212, 2
      %s214 = smul.addr %s210, 32
      %s215 = sadd.s32 %s213, %s214
      %s216 = smul.addr %s215, 4
      %s217 = scalar_lea.vmem %s0, %s216
      %p218 = pneg %p50
      %p219 = pneg %p47
      %s220 = smul.u32 16, %s20
      %p221 = scmp.lt.s32.totalorder %s19, 1
      %s222 = scalar_select %p221, %s19, 1
      %p223 = scmp.lt.s32.totalorder %s220, 15
      %s224 = scalar_select %p223, %s220, 15
      %s225 = smul.addr %s224, 2
      %s226 = smul.addr %s222, 32
      %s227 = sadd.s32 %s225, %s226
      %s228 = smul.addr %s227, 4
      %s229 = scalar_lea.vmem %s1, %s228
      %p230 = pneg %p78
      %p231 = pneg %p75
      %p232 = pneg %p99
      %p233 = pneg %p96
      %p234 = pneg %p120
      %p235 = pneg %p117
      %p236 = pneg %p148
      %p237 = pneg %p145
      %s238 = smul.u32 16, %s20
      %p239 = scmp.lt.s32.totalorder %s19, 1
      %s240 = scalar_select %p239, %s19, 1
      %p241 = scmp.lt.s32.totalorder %s238, 15
      %s242 = scalar_select %p241, %s238, 15
      %s243 = smul.addr %s242, 2
      %s244 = smul.addr %s240, 32
      %s245 = sadd.s32 %s243, %s244
      %s246 = smul.addr %s245, 8
      %s247 = scalar_lea.vmem %s4, %s246
      %s248 = smul.u32 16, %s20
      %p249 = scmp.lt.s32.totalorder %s19, 1
      %s250 = scalar_select %p249, %s19, 1
      %p251 = scmp.lt.s32.totalorder %s248, 15
      %s252 = scalar_select %p251, %s248, 15
      %s253 = smul.addr %s252, 2
      %s254 = smul.addr %s250, 32
      %s255 = sadd.s32 %s253, %s254
      %s256 = smul.addr %s255, 4
      %s257 = scalar_lea.vmem %s0, %s256
      %s258 = smul.u32 16, %s20
      %s259 = smul.u32 16, %s20
      %p260 = scmp.lt.s32.totalorder %s19, 1
      %s261 = scalar_select %p260, %s19, 1
      %p262 = scmp.lt.s32.totalorder %s259, 15
      %s263 = scalar_select %p262, %s259, 15
      %s264 = smul.addr %s263, 2
      %s265 = smul.addr %s261, 32
      %s266 = sadd.s32 %s264, %s265
      %s267 = smul.addr %s266, 4
      %s268 = scalar_lea.vmem %s1, %s267
      %s269 = smul.u32 16, %s20
      %s270 = smul.u32 16, %s20
      %p271 = scmp.lt.s32.totalorder %s19, 1
      %s272 = scalar_select %p271, %s19, 1
      %p273 = scmp.lt.s32.totalorder %s270, 15
      %s274 = scalar_select %p273, %s270, 15
      %s275 = smul.addr %s274, 2
      %s276 = smul.addr %s272, 32
      %s277 = sadd.s32 %s275, %s276
      %s278 = smul.addr %s277, 8
      %s279 = scalar_lea.vmem %s4, %s278
      %s280 = smul.u32 16, %s20
      %v281 = vld [vmem:[%s257] sm:$0xf]
      %v282 = vld [vmem:[%s257 + $0x4] sm:$0xf]
      %v283 = vld [vmem:[%s257 + $0x8] sm:$0xf]
      %v284 = vld [vmem:[%s257 + $0xc] sm:$0xf]
      %v285 = vld [vmem:[%s257 + $0x10] sm:$0xf]
      %v286 = vld [vmem:[%s257 + $0x14] sm:$0xf]
      %v287 = vld [vmem:[%s257 + $0x18] sm:$0xf]
      %v288 = vld [vmem:[%s257 + $0x1c] sm:$0xf]
      %v289 = vld [vmem:[%s257 + $0x20] sm:$0xf]
      %v290 = vld [vmem:[%s257 + $0x24] sm:$0xf]
      %v291 = vld [vmem:[%s257 + $0x28] sm:$0xf]
      %v292 = vld [vmem:[%s257 + $0x2c] sm:$0xf]
      %v293 = vld [vmem:[%s257 + $0x30] sm:$0xf]
      %v294 = vld [vmem:[%s257 + $0x34] sm:$0xf]
      %v295 = vld [vmem:[%s257 + $0x38] sm:$0xf]
      %v296 = vld [vmem:[%s257 + $0x3c] sm:$0xf]
      %v297 = vld [vmem:[%s257 + $0x40] sm:$0xf]
      %v298 = vld [vmem:[%s257 + $0x44] sm:$0xf]
      %v299 = vld [vmem:[%s257 + $0x48] sm:$0xf]
      %v300 = vld [vmem:[%s257 + $0x4c] sm:$0xf]
      %v301 = vld [vmem:[%s257 + $0x50] sm:$0xf]
      %v302 = vld [vmem:[%s257 + $0x54] sm:$0xf]
      %v303 = vld [vmem:[%s257 + $0x58] sm:$0xf]
      %v304 = vld [vmem:[%s257 + $0x5c] sm:$0xf]
      %v305 = vld [vmem:[%s257 + $0x60] sm:$0xf]
      %v306 = vld [vmem:[%s257 + $0x64] sm:$0xf]
      %v307 = vld [vmem:[%s257 + $0x68] sm:$0xf]
      %v308 = vld [vmem:[%s257 + $0x6c] sm:$0xf]
      %v309 = vld [vmem:[%s257 + $0x70] sm:$0xf]
      %v310 = vld [vmem:[%s257 + $0x74] sm:$0xf]
      %v311 = vld [vmem:[%s257 + $0x78] sm:$0xf]
      %v312 = vld [vmem:[%s257 + $0x7c] sm:$0xf]
      %v313 = vunpack.c.l.bf16 %v281
      %v314 = vunpack.c.l.bf16 %v282
      %v315 = vunpack.c.l.bf16 %v283
      %v316 = vunpack.c.l.bf16 %v284
      %v317 = vunpack.c.l.bf16 %v285
      %v318 = vunpack.c.l.bf16 %v286
      %v319 = vunpack.c.l.bf16 %v287
      %v320 = vunpack.c.l.bf16 %v288
      %v321 = vunpack.c.l.bf16 %v289
      %v322 = vunpack.c.l.bf16 %v290
      %v323 = vunpack.c.l.bf16 %v291
      %v324 = vunpack.c.l.bf16 %v292
      %v325 = vunpack.c.l.bf16 %v293
      %v326 = vunpack.c.l.bf16 %v294
      %v327 = vunpack.c.l.bf16 %v295
      %v328 = vunpack.c.l.bf16 %v296
      %v329 = vunpack.c.l.bf16 %v297
      %v330 = vunpack.c.l.bf16 %v298
      %v331 = vunpack.c.l.bf16 %v299
      %v332 = vunpack.c.l.bf16 %v300
      %v333 = vunpack.c.l.bf16 %v301
      %v334 = vunpack.c.l.bf16 %v302
      %v335 = vunpack.c.l.bf16 %v303
      %v336 = vunpack.c.l.bf16 %v304
      %v337 = vunpack.c.l.bf16 %v305
      %v338 = vunpack.c.l.bf16 %v306
      %v339 = vunpack.c.l.bf16 %v307
      %v340 = vunpack.c.l.bf16 %v308
      %v341 = vunpack.c.l.bf16 %v309
      %v342 = vunpack.c.l.bf16 %v310
      %v343 = vunpack.c.l.bf16 %v311
      %v344 = vunpack.c.l.bf16 %v312
      %v345 = vld [vmem:[%s2] sm:$0x1]
      %v347 = vlaneseq
      %v348 = vshrl.u32 %v347, 7
      %v349 = vsub.s32 0, %v348
      %v350 = vrot.slane %v345, %v349
      %v352 = vmul.f32 %v313, %v350
      %v353 = vmul.f32 %v314, %v350
      %v354 = vmul.f32 %v315, %v350
      %v355 = vmul.f32 %v316, %v350
      %v356 = vmul.f32 %v317, %v350
      %v357 = vmul.f32 %v318, %v350
      %v358 = vmul.f32 %v319, %v350
      %v359 = vmul.f32 %v320, %v350
      %v360 = vmul.f32 %v321, %v350
      %v361 = vmul.f32 %v322, %v350
      %v362 = vmul.f32 %v323, %v350
      %v363 = vmul.f32 %v324, %v350
      %v364 = vmul.f32 %v325, %v350
      %v365 = vmul.f32 %v326, %v350
      %v366 = vmul.f32 %v327, %v350
      %v367 = vmul.f32 %v328, %v350
      %v368 = vmul.f32 %v329, %v350
      %v369 = vmul.f32 %v330, %v350
      %v370 = vmul.f32 %v331, %v350
      %v371 = vmul.f32 %v332, %v350
      %v372 = vmul.f32 %v333, %v350
      %v373 = vmul.f32 %v334, %v350
      %v374 = vmul.f32 %v335, %v350
      %v375 = vmul.f32 %v336, %v350
      %v376 = vmul.f32 %v337, %v350
      %v377 = vmul.f32 %v338, %v350
      %v378 = vmul.f32 %v339, %v350
      %v379 = vmul.f32 %v340, %v350
      %v380 = vmul.f32 %v341, %v350
      %v381 = vmul.f32 %v342, %v350
      %v382 = vmul.f32 %v343, %v350
      %v383 = vmul.f32 %v344, %v350
      %v384 = vld [vmem:[%s3] sm:$0x1]
      %v386 = vlaneseq
      %v387 = vshrl.u32 %v386, 7
      %v388 = vsub.s32 0, %v387
      %v389 = vrot.slane %v384, %v388
      %v391 = vadd.f32 %v352, %v389
      %v392 = vadd.f32 %v353, %v389
      %v393 = vadd.f32 %v354, %v389
      %v394 = vadd.f32 %v355, %v389
      %v395 = vadd.f32 %v356, %v389
      %v396 = vadd.f32 %v357, %v389
      %v397 = vadd.f32 %v358, %v389
      %v398 = vadd.f32 %v359, %v389
      %v399 = vadd.f32 %v360, %v389
      %v400 = vadd.f32 %v361, %v389
      %v401 = vadd.f32 %v362, %v389
      %v402 = vadd.f32 %v363, %v389
      %v403 = vadd.f32 %v364, %v389
      %v404 = vadd.f32 %v365, %v389
      %v405 = vadd.f32 %v366, %v389
      %v406 = vadd.f32 %v367, %v389
      %v407 = vadd.f32 %v368, %v389
      %v408 = vadd.f32 %v369, %v389
      %v409 = vadd.f32 %v370, %v389
      %v410 = vadd.f32 %v371, %v389
      %v411 = vadd.f32 %v372, %v389
      %v412 = vadd.f32 %v373, %v389
      %v413 = vadd.f32 %v374, %v389
      %v414 = vadd.f32 %v375, %v389
      %v415 = vadd.f32 %v376, %v389
      %v416 = vadd.f32 %v377, %v389
      %v417 = vadd.f32 %v378, %v389
      %v418 = vadd.f32 %v379, %v389
      %v419 = vadd.f32 %v380, %v389
      %v420 = vadd.f32 %v381, %v389
      %v421 = vadd.f32 %v382, %v389
      %v422 = vadd.f32 %v383, %v389
      %v423 = vld [vmem:[%s268] sm:$0xf]
      %v424 = vld [vmem:[%s268 + $0x4] sm:$0xf]
      %v425 = vld [vmem:[%s268 + $0x8] sm:$0xf]
      %v426 = vld [vmem:[%s268 + $0xc] sm:$0xf]
      %v427 = vld [vmem:[%s268 + $0x10] sm:$0xf]
      %v428 = vld [vmem:[%s268 + $0x14] sm:$0xf]
      %v429 = vld [vmem:[%s268 + $0x18] sm:$0xf]
      %v430 = vld [vmem:[%s268 + $0x1c] sm:$0xf]
      %v431 = vld [vmem:[%s268 + $0x20] sm:$0xf]
      %v432 = vld [vmem:[%s268 + $0x24] sm:$0xf]
      %v433 = vld [vmem:[%s268 + $0x28] sm:$0xf]
      %v434 = vld [vmem:[%s268 + $0x2c] sm:$0xf]
      %v435 = vld [vmem:[%s268 + $0x30] sm:$0xf]
      %v436 = vld [vmem:[%s268 + $0x34] sm:$0xf]
      %v437 = vld [vmem:[%s268 + $0x38] sm:$0xf]
      %v438 = vld [vmem:[%s268 + $0x3c] sm:$0xf]
      %v439 = vld [vmem:[%s268 + $0x40] sm:$0xf]
      %v440 = vld [vmem:[%s268 + $0x44] sm:$0xf]
      %v441 = vld [vmem:[%s268 + $0x48] sm:$0xf]
      %v442 = vld [vmem:[%s268 + $0x4c] sm:$0xf]
      %v443 = vld [vmem:[%s268 + $0x50] sm:$0xf]
      %v444 = vld [vmem:[%s268 + $0x54] sm:$0xf]
      %v445 = vld [vmem:[%s268 + $0x58] sm:$0xf]
      %v446 = vld [vmem:[%s268 + $0x5c] sm:$0xf]
      %v447 = vld [vmem:[%s268 + $0x60] sm:$0xf]
      %v448 = vld [vmem:[%s268 + $0x64] sm:$0xf]
      %v449 = vld [vmem:[%s268 + $0x68] sm:$0xf]
      %v450 = vld [vmem:[%s268 + $0x6c] sm:$0xf]
      %v451 = vld [vmem:[%s268 + $0x70] sm:$0xf]
      %v452 = vld [vmem:[%s268 + $0x74] sm:$0xf]
      %v453 = vld [vmem:[%s268 + $0x78] sm:$0xf]
      %v454 = vld [vmem:[%s268 + $0x7c] sm:$0xf]
      %v455 = vunpack.c.l.bf16 %v423
      %v456 = vunpack.c.l.bf16 %v424
      %v457 = vunpack.c.l.bf16 %v425
      %v458 = vunpack.c.l.bf16 %v426
      %v459 = vunpack.c.l.bf16 %v427
      %v460 = vunpack.c.l.bf16 %v428
      %v461 = vunpack.c.l.bf16 %v429
      %v462 = vunpack.c.l.bf16 %v430
      %v463 = vunpack.c.l.bf16 %v431
      %v464 = vunpack.c.l.bf16 %v432
      %v465 = vunpack.c.l.bf16 %v433
      %v466 = vunpack.c.l.bf16 %v434
      %v467 = vunpack.c.l.bf16 %v435
      %v468 = vunpack.c.l.bf16 %v436
      %v469 = vunpack.c.l.bf16 %v437
      %v470 = vunpack.c.l.bf16 %v438
      %v471 = vunpack.c.l.bf16 %v439
      %v472 = vunpack.c.l.bf16 %v440
      %v473 = vunpack.c.l.bf16 %v441
      %v474 = vunpack.c.l.bf16 %v442
      %v475 = vunpack.c.l.bf16 %v443
      %v476 = vunpack.c.l.bf16 %v444
      %v477 = vunpack.c.l.bf16 %v445
      %v478 = vunpack.c.l.bf16 %v446
      %v479 = vunpack.c.l.bf16 %v447
      %v480 = vunpack.c.l.bf16 %v448
      %v481 = vunpack.c.l.bf16 %v449
      %v482 = vunpack.c.l.bf16 %v450
      %v483 = vunpack.c.l.bf16 %v451
      %v484 = vunpack.c.l.bf16 %v452
      %v485 = vunpack.c.l.bf16 %v453
      %v486 = vunpack.c.l.bf16 %v454
      %v487 = vadd.f32 %v391, %v455
      %v488 = vadd.f32 %v392, %v456
      %v489 = vadd.f32 %v393, %v457
      %v490 = vadd.f32 %v394, %v458
      %v491 = vadd.f32 %v395, %v459
      %v492 = vadd.f32 %v396, %v460
      %v493 = vadd.f32 %v397, %v461
      %v494 = vadd.f32 %v398, %v462
      %v495 = vadd.f32 %v399, %v463
      %v496 = vadd.f32 %v400, %v464
      %v497 = vadd.f32 %v401, %v465
      %v498 = vadd.f32 %v402, %v466
      %v499 = vadd.f32 %v403, %v467
      %v500 = vadd.f32 %v404, %v468
      %v501 = vadd.f32 %v405, %v469
      %v502 = vadd.f32 %v406, %v470
      %v503 = vadd.f32 %v407, %v471
      %v504 = vadd.f32 %v408, %v472
      %v505 = vadd.f32 %v409, %v473
      %v506 = vadd.f32 %v410, %v474
      %v507 = vadd.f32 %v411, %v475
      %v508 = vadd.f32 %v412, %v476
      %v509 = vadd.f32 %v413, %v477
      %v510 = vadd.f32 %v414, %v478
      %v511 = vadd.f32 %v415, %v479
      %v512 = vadd.f32 %v416, %v480
      %v513 = vadd.f32 %v417, %v481
      %v514 = vadd.f32 %v418, %v482
      %v515 = vadd.f32 %v419, %v483
      %v516 = vadd.f32 %v420, %v484
      %v517 = vadd.f32 %v421, %v485
      %v518 = vadd.f32 %v422, %v486
      %v519 = vmax.f32 %v487, 0.0
      %v520 = vmax.f32 %v488, 0.0
      %v521 = vmax.f32 %v489, 0.0
      %v522 = vmax.f32 %v490, 0.0
      %v523 = vmax.f32 %v491, 0.0
      %v524 = vmax.f32 %v492, 0.0
      %v525 = vmax.f32 %v493, 0.0
      %v526 = vmax.f32 %v494, 0.0
      %v527 = vmax.f32 %v495, 0.0
      %v528 = vmax.f32 %v496, 0.0
      %v529 = vmax.f32 %v497, 0.0
      %v530 = vmax.f32 %v498, 0.0
      %v531 = vmax.f32 %v499, 0.0
      %v532 = vmax.f32 %v500, 0.0
      %v533 = vmax.f32 %v501, 0.0
      %v534 = vmax.f32 %v502, 0.0
      %v535 = vmax.f32 %v503, 0.0
      %v536 = vmax.f32 %v504, 0.0
      %v537 = vmax.f32 %v505, 0.0
      %v538 = vmax.f32 %v506, 0.0
      %v539 = vmax.f32 %v507, 0.0
      %v540 = vmax.f32 %v508, 0.0
      %v541 = vmax.f32 %v509, 0.0
      %v542 = vmax.f32 %v510, 0.0
      %v543 = vmax.f32 %v511, 0.0
      %v544 = vmax.f32 %v512, 0.0
      %v545 = vmax.f32 %v513, 0.0
      %v546 = vmax.f32 %v514, 0.0
      %v547 = vmax.f32 %v515, 0.0
      %v548 = vmax.f32 %v516, 0.0
      %v549 = vmax.f32 %v517, 0.0
      %v550 = vmax.f32 %v518, 0.0
      %551 = vst [vmem:[%s279] sm:$0xff] %v519
      %552 = vst [vmem:[%s279 + $0x8] sm:$0xff] %v520
      %553 = vst [vmem:[%s279 + $0x10] sm:$0xff] %v521
      %554 = vst [vmem:[%s279 + $0x18] sm:$0xff] %v522
      %555 = vst [vmem:[%s279 + $0x20] sm:$0xff] %v523
      %556 = vst [vmem:[%s279 + $0x28] sm:$0xff] %v524
      %557 = vst [vmem:[%s279 + $0x30] sm:$0xff] %v525
      %558 = vst [vmem:[%s279 + $0x38] sm:$0xff] %v526
      %559 = vst [vmem:[%s279 + $0x40] sm:$0xff] %v527
      %560 = vst [vmem:[%s279 + $0x48] sm:$0xff] %v528
      %561 = vst [vmem:[%s279 + $0x50] sm:$0xff] %v529
      %562 = vst [vmem:[%s279 + $0x58] sm:$0xff] %v530
      %563 = vst [vmem:[%s279 + $0x60] sm:$0xff] %v531
      %564 = vst [vmem:[%s279 + $0x68] sm:$0xff] %v532
      %565 = vst [vmem:[%s279 + $0x70] sm:$0xff] %v533
      %566 = vst [vmem:[%s279 + $0x78] sm:$0xff] %v534
      %567 = vst [vmem:[%s279 + $0x80] sm:$0xff] %v535
      %568 = vst [vmem:[%s279 + $0x88] sm:$0xff] %v536
      %569 = vst [vmem:[%s279 + $0x90] sm:$0xff] %v537
      %570 = vst [vmem:[%s279 + $0x98] sm:$0xff] %v538
      %571 = vst [vmem:[%s279 + $0xa0] sm:$0xff] %v539
      %572 = vst [vmem:[%s279 + $0xa8] sm:$0xff] %v540
      %573 = vst [vmem:[%s279 + $0xb0] sm:$0xff] %v541
      %574 = vst [vmem:[%s279 + $0xb8] sm:$0xff] %v542
      %575 = vst [vmem:[%s279 + $0xc0] sm:$0xff] %v543
      %576 = vst [vmem:[%s279 + $0xc8] sm:$0xff] %v544
      %577 = vst [vmem:[%s279 + $0xd0] sm:$0xff] %v545
      %578 = vst [vmem:[%s279 + $0xd8] sm:$0xff] %v546
      %579 = vst [vmem:[%s279 + $0xe0] sm:$0xff] %v547
      %580 = vst [vmem:[%s279 + $0xe8] sm:$0xff] %v548
      %581 = vst [vmem:[%s279 + $0xf0] sm:$0xff] %v549
      %582 = vst [vmem:[%s279 + $0xf8] sm:$0xff] %v550
      %s583 = smul.u32 16, %s20
      %p584 = scmp.lt.s32.totalorder %s19, 1
      %s585 = scalar_select %p584, %s19, 1
      %p586 = scmp.lt.s32.totalorder %s583, 15
      %s587 = scalar_select %p586, %s583, 15
      %s588 = smul.addr %s587, 2
      %s589 = smul.addr %s585, 32
      %s590 = sadd.s32 %s588, %s589
      %s591 = smul.addr %s590, 8
      %s592 = scalar_lea.vmem %s4, %s591
      // Predicated region
      $region37: #{pt_block_forward.5} parent=35 // pred_check
        %p593 = pneg %p145
      $region38: #{pt_block_forward.5} parent=35 // pred_check_branch
        %595 = sbr.rel (%p593) target = $region40
      $region39: #{pt_block_forward.5} parent=35 // pred_region
        %s596 = smul.u32 16, %s20
      $region40: #{pt_block_forward.5} parent=35 // pred_fallthru
        _
    $region36: #{pt_block_forward.5} parent=5 // pred_fallthru
      _
    %p597 = scmp.le.s32.totalorder 2, %s10
    // Predicated region
    $region41: #{pt_block_forward.5} parent=5 // pred_check
      %p598 = pneg %p597
    $region42: #{pt_block_forward.5} parent=5 // pred_check_branch
      %600 = sbr.rel (%p598) target = $region44
    $region43: #{pt_block_forward.5} parent=5 // pred_region
      %s601 = ssub.s32 %s10, 2
      // Predicated region
      $region45: #{pt_block_forward.5} parent=43 // pred_check
        %p602 = pneg %p151
      $region46: #{pt_block_forward.5} parent=43 // pred_check_branch
        %604 = sbr.rel (%p602) target = $region48
      $region47: #{pt_block_forward.5} parent=43 // pred_region
        %s605 = smul.u32 16, %s22
        %p606 = scmp.lt.s32.totalorder %s21, 1
        %s607 = scalar_select %p606, %s21, 1
        %p608 = scmp.lt.s32.totalorder %s605, 15
        %s609 = scalar_select %p608, %s605, 15
        %s610 = smul.addr %s609, 2
        %s611 = smul.addr %s607, 32
        %s612 = sadd.s32 %s610, %s611
        %s613 = smul.addr %s612, 8
        %s614 = scalar_lea.vmem %s4, %s613
      $region48: #{pt_block_forward.5} parent=43 // pred_fallthru
        _
    $region44: #{pt_block_forward.5} parent=5 // pred_fallthru
      _
  $region6: #{pt_block_forward.5} parent=0 // loop_footer
    %s14 = sadd.s32 1, %s10
  $region7: #{pt_block_forward.5} parent=0 // loop_footer_branch
    %9 = sbr.rel target = $region3
  $region8: #{pt_block_forward.5} parent=0 // loop_exit
    _

// kernel: pt_block_forward.3
$region0: #{pt_block_forward.3}
  #allocation0 [shape = 'u32[]', space=smem, size = 0x4, offset = 0x4, fixed_abs, tag = 'smem constant byte address 0x4 - core index']
  #allocation1 [shape = 'u32[144,128]{1,0:T(1,128)}', space=vmem, size = 0x12000, scoped, tag = 'internal scratch']
  #allocation2 [shape = 'bf16[18,18,128]{2,1,0:T(8,128)(2,1)}', space=vmem, size = 0x1b000, scoped, tag = 'scratch operand']
  %s0 = inlined_call_operand.vmem [shape: bf16[2,16,16,128], index: 0, kind: input, shape index: {}]
  %s1 = inlined_call_operand.vmem [shape: bf16[1152,128], index: 1, kind: input, shape index: {}]
  %s2 = inlined_call_operand.vmem [shape: bf16[2,16,16,128], index: 2, kind: output, shape index: {0}]
  %s3 = inlined_call_operand.vmem [shape: f32[2,2,128], index: 3, kind: output, shape index: {1}]
  %4 = xla_tuple %s2, %s3
  %s5 = sld [smem:[#allocation0]]
  $region49: #{pt_block_forward.3} parent=0
    _
  %s7 = ssub.s32 1, %s5
  %s8 = scalar_select 0, %s7, %s5
  loop: start=0, step=1, limit=4
  $region2: #{pt_block_forward.3} parent=0 // loop_pre_header
    _
  $region3: #{pt_block_forward.3} parent=0 // loop_header
    %s10 = sphi 0, %s14
    %p11 = scmp.ge.s32.totalorder %s10, 4
    %s20 = sphi 0, %s22
    %s23 = sphi 0, %s20
    %s24 = sphi 0, %s23
    %s40 = sphi 0, %s24
    %s44 = sphi 0, %s44
    %s46 = sphi 0, %s44
    %s47 = sphi 0, %s46
    %s61 = sphi 0, %s47
    %s67 = sphi 0, %s69
    %s70 = sphi 0, %s67
    %s71 = sphi 0, %s70
    %s87 = sphi 0, %s71
    %s93 = sphi 0, %s95
    %s96 = sphi 0, %s93
    %s97 = sphi 0, %s96
    %s113 = sphi 0, %s97
  $region4: #{pt_block_forward.3} parent=0 // loop_header_branch
    %13 = sbr.rel (%p11) target = $region8
  $region5: #{pt_block_forward.3} parent=0 // loop_body
    %s15 = ssub.s32 %s10, 1
    %s16 = ssub.s32 %s10, 2
    %s17 = sadd.s32 %s10, 1
    %s18 = ssub.s32 %s10, %s17
    %p19 = scmp.eq.s32.totalorder %s18, 0
    %s21 = sadd.s32 %s20, 1
    %s22 = scalar_select %p19, %s20, %s21
    %p25 = pneg %p19
    %p26 = scmp.eq.s32.totalorder %s10, 1
    %p27 = por %p25, %p26
    %p28 = scmp.ne.s32.totalorder %s20, %s23
    %p29 = scmp.eq.s32.totalorder %s10, 0
    %p30 = por %p28, %p29
    %p31 = scmp.ne.s32.totalorder %s20, %s23
    %p32 = scmp.eq.s32.totalorder %s15, 1
    %p33 = por %p31, %p32
    %p34 = scmp.ne.s32.totalorder %s23, %s24
    %p35 = scmp.eq.s32.totalorder %s15, 0
    %p36 = por %p34, %p35
    %p37 = scmp.ne.s32.totalorder %s23, %s24
    %p38 = scmp.eq.s32.totalorder %s16, 1
    %p39 = por %p37, %p38
    %p41 = scmp.ne.s32.totalorder %s24, %s40
    %p42 = scmp.eq.s32.totalorder %s16, 0
    %p43 = por %p41, %p42
    %s45 = sadd.s32 %s44, 1
    %p48 = scmp.eq.s32.totalorder %s10, 1
    %p49 = scmp.ne.s32.totalorder %s44, %s46
    %p50 = scmp.eq.s32.totalorder %s10, 0
    %p51 = por %p49, %p50
    %p52 = scmp.ne.s32.totalorder %s44, %s46
    %p53 = scmp.eq.s32.totalorder %s15, 1
    %p54 = por %p52, %p53
    %p55 = scmp.ne.s32.totalorder %s46, %s47
    %p56 = scmp.eq.s32.totalorder %s15, 0
    %p57 = por %p55, %p56
    %p58 = scmp.ne.s32.totalorder %s46, %s47
    %p59 = scmp.eq.s32.totalorder %s16, 1
    %p60 = por %p58, %p59
    %p62 = scmp.ne.s32.totalorder %s47, %s61
    %p63 = scmp.eq.s32.totalorder %s16, 0
    %p64 = por %p62, %p63
    %s65 = ssub.s32 %s10, %s17
    %p66 = scmp.eq.s32.totalorder %s65, 0
    %s68 = sadd.s32 %s67, 1
    %s69 = scalar_select %p66, %s67, %s68
    %p72 = pneg %p66
    %p73 = scmp.eq.s32.totalorder %s10, 1
    %p74 = por %p72, %p73
    %p75 = scmp.ne.s32.totalorder %s67, %s70
    %p76 = scmp.eq.s32.totalorder %s10, 0
    %p77 = por %p75, %p76
    %p78 = scmp.ne.s32.totalorder %s67, %s70
    %p79 = scmp.eq.s32.totalorder %s15, 1
    %p80 = por %p78, %p79
    %p81 = scmp.ne.s32.totalorder %s70, %s71
    %p82 = scmp.eq.s32.totalorder %s15, 0
    %p83 = por %p81, %p82
    %p84 = scmp.ne.s32.totalorder %s70, %s71
    %p85 = scmp.eq.s32.totalorder %s16, 1
    %p86 = por %p84, %p85
    %p88 = scmp.ne.s32.totalorder %s71, %s87
    %p89 = scmp.eq.s32.totalorder %s16, 0
    %p90 = por %p88, %p89
    %s91 = ssub.s32 %s10, %s17
    %p92 = scmp.eq.s32.totalorder %s91, 0
    %s94 = sadd.s32 %s93, 1
    %s95 = scalar_select %p92, %s93, %s94
    %p98 = pneg %p92
    %p99 = scmp.eq.s32.totalorder %s10, 1
    %p100 = por %p98, %p99
    %p101 = scmp.ne.s32.totalorder %s93, %s96
    %p102 = scmp.eq.s32.totalorder %s10, 0
    %p103 = por %p101, %p102
    %p104 = scmp.ne.s32.totalorder %s93, %s96
    %p105 = scmp.eq.s32.totalorder %s15, 1
    %p106 = por %p104, %p105
    %p107 = scmp.ne.s32.totalorder %s96, %s97
    %p108 = scmp.eq.s32.totalorder %s15, 0
    %p109 = por %p107, %p108
    %p110 = scmp.ne.s32.totalorder %s96, %s97
    %p111 = scmp.eq.s32.totalorder %s16, 1
    %p112 = por %p110, %p111
    %p114 = scmp.ne.s32.totalorder %s97, %s113
    %p115 = scmp.eq.s32.totalorder %s16, 0
    %p116 = por %p114, %p115
    %p117 = scmp.le.s32.totalorder 1, %s10
    %p118 = scmp.lt.s32.totalorder %s10, 3
    %p119 = pnand %p117, %p118
    %p120 = pneg %p119
    // Predicated region
    $region9: #{pt_block_forward.3} parent=5 // pred_check
      _
    $region10: #{pt_block_forward.3} parent=5 // pred_check_branch
      %122 = sbr.rel (%p119) target = $region12
    $region11: #{pt_block_forward.3} parent=5 // pred_region
      %s123 = ssub.s32 %s10, 1
      // Predicated region
      $region13: #{pt_block_forward.3} parent=11 // pred_check
        %p124 = pneg %p57
      $region14: #{pt_block_forward.3} parent=11 // pred_check_branch
        %126 = sbr.rel (%p124) target = $region16
      $region15: #{pt_block_forward.3} parent=11 // pred_region
        _
      $region16: #{pt_block_forward.3} parent=11 // pred_fallthru
        _
    $region12: #{pt_block_forward.3} parent=5 // pred_fallthru
      _
    %p127 = scmp.lt.s32.totalorder %s10, 2
    // Predicated region
    $region17: #{pt_block_forward.3} parent=5 // pred_check
      %p128 = pneg %p127
    $region18: #{pt_block_forward.3} parent=5 // pred_check_branch
      %130 = sbr.rel (%p128) target = $region20
    $region19: #{pt_block_forward.3} parent=5 // pred_region
      // Predicated region
      $region21: #{pt_block_forward.3} parent=19 // pred_check
        %p131 = pneg %p30
      $region22: #{pt_block_forward.3} parent=19 // pred_check_branch
        %133 = sbr.rel (%p131) target = $region24
      $region23: #{pt_block_forward.3} parent=19 // pred_region
        %p134 = scmp.lt.s32.totalorder %s10, 1
        %s135 = scalar_select %p134, %s10, 1
        %s136 = smul.addr %s135, 32
        %s137 = smul.addr %s136, 4
        %s138 = scalar_lea.vmem %s0, %s137
      $region24: #{pt_block_forward.3} parent=19 // pred_fallthru
        _
    $region20: #{pt_block_forward.3} parent=5 // pred_fallthru
      _
    %p139 = scmp.le.s32.totalorder 1, %s10
    %p140 = scmp.lt.s32.totalorder %s10, 3
    %p141 = pnand %p139, %p140
    %p142 = pneg %p141
    // Predicated region
    $region25: #{pt_block_forward.3} parent=5 // pred_check
      _
    $region26: #{pt_block_forward.3} parent=5 // pred_check_branch
      %144 = sbr.rel (%p141) target = $region28
    $region27: #{pt_block_forward.3} parent=5 // pred_region
      %s145 = ssub.s32 %s10, 1
      %p146 = scmp.lt.s32.totalorder %s15, 1
      %s147 = scalar_select %p146, %s15, 1
      %s148 = smul.addr %s147, 32
      %s149 = smul.addr %s148, 4
      %s150 = scalar_lea.vmem %s0, %s149
      %p151 = pneg %p36
      %p152 = pneg %p33
      %p153 = pneg %p57
      %p154 = pneg %p54
      %p155 = pneg %p83
      %p156 = pneg %p80
      %p157 = scmp.lt.s32.totalorder %s15, 1
      %s158 = scalar_select %p157, %s15, 1
      %s159 = smul.addr %s158, 32
      %s160 = smul.addr %s159, 4
      %s161 = scalar_lea.vmem %s2, %s160
      %p162 = pneg %p109
      %p163 = pneg %p106
      %p164 = scmp.lt.s32.totalorder %s15, 1
      %s165 = scalar_select %p164, %s15, 1
      %s166 = smul.addr %s165, 2
      %s167 = scalar_lea.vmem %s3, %s166
      %p168 = scmp.lt.s32.totalorder %s15, 1
      %s169 = scalar_select %p168, %s15, 1
      %s170 = smul.addr %s169, 32
      %s171 = smul.addr %s170, 4
      %s172 = scalar_lea.vmem %s0, %s171
      %p173 = scmp.lt.s32.totalorder %s15, 1
      %s174 = scalar_select %p173, %s15, 1
      %s175 = smul.addr %s174, 32
      %s176 = smul.addr %s175, 4
      %s177 = scalar_lea.vmem %s2, %s176
      %p178 = scmp.lt.s32.totalorder %s15, 1
      %s179 = scalar_select %p178, %s15, 1
      %s180 = smul.addr %s179, 2
      %s181 = scalar_lea.vmem %s3, %s180
      %183 = vst [vmem:[#allocation2] sm:$0xf] 0
      %184 = vst [vmem:[#allocation2 + $0x4] sm:$0xf] 0
      %185 = vst [vmem:[#allocation2 + $0x8] sm:$0x1] 0
      %s186 = scalar_lea.vmem [#allocation2], 204
      %187 = vst [vmem:[%s186] sm:$0xf] 0
      %188 = vst [vmem:[%s186 + $0x4] sm:$0xf] 0
      %189 = vst [vmem:[%s186 + $0x8] sm:$0x1] 0
      %vm190 = vcmask 1040384
      %vm191 = vsmask.f32 256
      %vm192 = vmand %vm190, %vm191
      %v193 = vld [vmem:[#allocation2] sm:$0x1]
      %v194 = vsel %vm192, 0, %v193
      %195 = vst [vmem:[#allocation2] sm:$0x1] %v194
      %v196 = vld [vmem:[#allocation2 + $0xc] sm:$0x1]
      %v197 = vsel %vm192, 0, %v196
      %198 = vst [vmem:[#allocation2 + $0xc] sm:$0x1] %v197
      %v199 = vld [vmem:[#allocation2 + $0x18] sm:$0x1]
      %v200 = vsel %vm192, 0, %v199
      %201 = vst [vmem:[#allocation2 + $0x18] sm:$0x1] %v200
      %v202 = vld [vmem:[#allocation2 + $0x24] sm:$0x1]
      %v203 = vsel %vm192, 0, %v202
      %204 = vst [vmem:[#allocation2 + $0x24] sm:$0x1] %v203
      %v205 = vld [vmem:[#allocation2 + $0x30] sm:$0x1]
      %v206 = vsel %vm192, 0, %v205
      %207 = vst [vmem:[#allocation2 + $0x30] sm:$0x1] %v206
      %v208 = vld [vmem:[#allocation2 + $0x3c] sm:$0x1]
      %v209 = vsel %vm192, 0, %v208
      %210 = vst [vmem:[#allocation2 + $0x3c] sm:$0x1] %v209
      %v211 = vld [vmem:[#allocation2 + $0x48] sm:$0x1]
      %v212 = vsel %vm192, 0, %v211
      %213 = vst [vmem:[#allocation2 + $0x48] sm:$0x1] %v212
      %v214 = vld [vmem:[#allocation2 + $0x54] sm:$0x1]
      %v215 = vsel %vm192, 0, %v214
      %216 = vst [vmem:[#allocation2 + $0x54] sm:$0x1] %v215
      %v217 = vld [vmem:[#allocation2 + $0x60] sm:$0x1]
      %v218 = vsel %vm192, 0, %v217
      %219 = vst [vmem:[#allocation2 + $0x60] sm:$0x1] %v218
      %v220 = vld [vmem:[#allocation2 + $0x6c] sm:$0x1]
      %v221 = vsel %vm192, 0, %v220
      %222 = vst [vmem:[#allocation2 + $0x6c] sm:$0x1] %v221
      %v223 = vld [vmem:[#allocation2 + $0x78] sm:$0x1]
      %v224 = vsel %vm192, 0, %v223
      %225 = vst [vmem:[#allocation2 + $0x78] sm:$0x1] %v224
      %v226 = vld [vmem:[#allocation2 + $0x84] sm:$0x1]
      %v227 = vsel %vm192, 0, %v226
      %228 = vst [vmem:[#allocation2 + $0x84] sm:$0x1] %v227
      %v229 = vld [vmem:[#allocation2 + $0x90] sm:$0x1]
      %v230 = vsel %vm192, 0, %v229
      %231 = vst [vmem:[#allocation2 + $0x90] sm:$0x1] %v230
      %v232 = vld [vmem:[#allocation2 + $0x9c] sm:$0x1]
      %v233 = vsel %vm192, 0, %v232
      %234 = vst [vmem:[#allocation2 + $0x9c] sm:$0x1] %v233
      %v235 = vld [vmem:[#allocation2 + $0xa8] sm:$0x1]
      %v236 = vsel %vm192, 0, %v235
      %237 = vst [vmem:[#allocation2 + $0xa8] sm:$0x1] %v236
      %v238 = vld [vmem:[#allocation2 + $0xb4] sm:$0x1]
      %v239 = vsel %vm192, 0, %v238
      %240 = vst [vmem:[#allocation2 + $0xb4] sm:$0x1] %v239
      %v241 = vld [vmem:[#allocation2 + $0xc0] sm:$0x1]
      %v242 = vsel %vm192, 0, %v241
      %243 = vst [vmem:[#allocation2 + $0xc0] sm:$0x1] %v242
      %v244 = vld [vmem:[#allocation2 + $0xcc] sm:$0x1]
      %v245 = vsel %vm192, 0, %v244
      %246 = vst [vmem:[#allocation2 + $0xcc] sm:$0x1] %v245
      %vm247 = vsmask.f32 7938
      %vm248 = vmand %vm190, %vm247
      %v249 = vld [vmem:[#allocation2 + $0x8] sm:$0x1]
      %v250 = vsel %vm248, 0, %v249
      %251 = vst [vmem:[#allocation2 + $0x8] sm:$0x1] %v250
      %v252 = vld [vmem:[#allocation2 + $0x14] sm:$0x1]
      %v253 = vsel %vm248, 0, %v252
      %254 = vst [vmem:[#allocation2 + $0x14] sm:$0x1] %v253
      %v255 = vld [vmem:[#allocation2 + $0x20] sm:$0x1]
      %v256 = vsel %vm248, 0, %v255
      %257 = vst [vmem:[#allocation2 + $0x20] sm:$0x1] %v256
      %v258 = vld [vmem:[#allocation2 + $0x2c] sm:$0x1]
      %v259 = vsel %vm248, 0, %v258
      %260 = vst [vmem:[#allocation2 + $0x2c] sm:$0x1] %v259
      %v261 = vld [vmem:[#allocation2 + $0x38] sm:$0x1]
      %v262 = vsel %vm248, 0, %v261
      %263 = vst [vmem:[#allocation2 + $0x38] sm:$0x1] %v262
      %v264 = vld [vmem:[#allocation2 + $0x44] sm:$0x1]
      %v265 = vsel %vm248, 0, %v264
      %266 = vst [vmem:[#allocation2 + $0x44] sm:$0x1] %v265
      %v267 = vld [vmem:[#allocation2 + $0x50] sm:$0x1]
      %v268 = vsel %vm248, 0, %v267
      %269 = vst [vmem:[#allocation2 + $0x50] sm:$0x1] %v268
      %v270 = vld [vmem:[#allocation2 + $0x5c] sm:$0x1]
      %v271 = vsel %vm248, 0, %v270
      %272 = vst [vmem:[#allocation2 + $0x5c] sm:$0x1] %v271
      %v273 = vld [vmem:[#allocation2 + $0x68] sm:$0x1]
      %v274 = vsel %vm248, 0, %v273
      %275 = vst [vmem:[#allocation2 + $0x68] sm:$0x1] %v274
      %v276 = vld [vmem:[#allocation2 + $0x74] sm:$0x1]
      %v277 = vsel %vm248, 0, %v276
      %278 = vst [vmem:[#allocation2 + $0x74] sm:$0x1] %v277
      %v279 = vld [vmem:[#allocation2 + $0x80] sm:$0x1]
      %v280 = vsel %vm248, 0, %v279
      %281 = vst [vmem:[#allocation2 + $0x80] sm:$0x1] %v280
      %v282 = vld [vmem:[#allocation2 + $0x8c] sm:$0x1]
      %v283 = vsel %vm248, 0, %v282
      %284 = vst [vmem:[#allocation2 + $0x8c] sm:$0x1] %v283
      %v285 = vld [vmem:[#allocation2 + $0x98] sm:$0x1]
      %v286 = vsel %vm248, 0, %v285
      %287 = vst [vmem:[#allocation2 + $0x98] sm:$0x1] %v286
      %v288 = vld [vmem:[#allocation2 + $0xa4] sm:$0x1]
      %v289 = vsel %vm248, 0, %v288
      %290 = vst [vmem:[#allocation2 + $0xa4] sm:$0x1] %v289
      %v291 = vld [vmem:[#allocation2 + $0xb0] sm:$0x1]
      %v292 = vsel %vm248, 0, %v291
      %293 = vst [vmem:[#allocation2 + $0xb0] sm:$0x1] %v292
      %v294 = vld [vmem:[#allocation2 + $0xbc] sm:$0x1]
      %v295 = vsel %vm248, 0, %v294
      %296 = vst [vmem:[#allocation2 + $0xbc] sm:$0x1] %v295
      %v297 = vld [vmem:[#allocation2 + $0xc8] sm:$0x1]
      %v298 = vsel %vm248, 0, %v297
      %299 = vst [vmem:[#allocation2 + $0xc8] sm:$0x1] %v298
      %v300 = vld [vmem:[#allocation2 + $0xd4] sm:$0x1]
      %v301 = vsel %vm248, 0, %v300
      %302 = vst [vmem:[#allocation2 + $0xd4] sm:$0x1] %v301
      %v303 = vld [vmem:[%s172] sm:$0xf]
      %v304 = vld [vmem:[%s172 + $0x4] sm:$0xf]
      %v305 = vld [vmem:[%s172 + $0x8] sm:$0xf]
      %v306 = vld [vmem:[%s172 + $0xc] sm:$0xf]
      %v307 = vld [vmem:[%s172 + $0x10] sm:$0xf]
      %v308 = vld [vmem:[%s172 + $0x14] sm:$0xf]
      %v309 = vld [vmem:[%s172 + $0x18] sm:$0xf]
      %v310 = vld [vmem:[%s172 + $0x1c] sm:$0xf]
      %v311 = vld [vmem:[%s172 + $0x20] sm:$0xf]
      %v312 = vld [vmem:[%s172 + $0x24] sm:$0xf]
      %v313 = vld [vmem:[%s172 + $0x28] sm:$0xf]
      %v314 = vld [vmem:[%s172 + $0x2c] sm:$0xf]
      %v315 = vld [vmem:[%s172 + $0x30] sm:$0xf]
      %v316 = vld [vmem:[%s172 + $0x34] sm:$0xf]
      %v317 = vld [vmem:[%s172 + $0x38] sm:$0xf]
      %v318 = vld [vmem:[%s172 + $0x3c] sm:$0xf]
      %v319 = vld [vmem:[%s172 + $0x40] sm:$0xf]
      %v320 = vld [vmem:[%s172 + $0x44] sm:$0xf]
      %v321 = vld [vmem:[%s172 + $0x48] sm:$0xf]
      %v322 = vld [vmem:[%s172 + $0x4c] sm:$0xf]
      %v323 = vld [vmem:[%s172 + $0x50] sm:$0xf]
      %v324 = vld [vmem:[%s172 + $0x54] sm:$0xf]
      %v325 = vld [vmem:[%s172 + $0x58] sm:$0xf]
      %v326 = vld [vmem:[%s172 + $0x5c] sm:$0xf]
      %v327 = vld [vmem:[%s172 + $0x60] sm:$0xf]
      %v328 = vld [vmem:[%s172 + $0x64] sm:$0xf]
      %v329 = vld [vmem:[%s172 + $0x68] sm:$0xf]
      %v330 = vld [vmem:[%s172 + $0x6c] sm:$0xf]
      %v331 = vld [vmem:[%s172 + $0x70] sm:$0xf]
      %v332 = vld [vmem:[%s172 + $0x74] sm:$0xf]
      %v333 = vld [vmem:[%s172 + $0x78] sm:$0xf]
      %v334 = vld [vmem:[%s172 + $0x7c] sm:$0xf]
      %vm335 = vsmask.f32 4368
      %vm336 = vmor %vm191, %vm335
      %v338 = vshrl.u32 %v303, 16
      %v340 = vrot.slane %v338, 7
      %v341 = vshll.u32 %v303, 16
      %v343 = vor.u32 %v340, %v341
      %v344 = vrot.slane %v340, 4
      %v346 = vshrl.u32 %v304, 16
      %v348 = vrot.slane %v346, 7
      %v349 = vshll.u32 %v304, 16
      %v351 = vor.u32 %v348, %v349
      %v352 = vsel %vm336, %v344, %v351
      %v353 = vrot.slane %v348, 4
      %v355 = vshrl.u32 %v305, 16
      %v357 = vrot.slane %v355, 7
      %v358 = vshll.u32 %v305, 16
      %v360 = vor.u32 %v357, %v358
      %v361 = vrot.slane %v357, 4
      %v363 = vshrl.u32 %v306, 16
      %v365 = vrot.slane %v363, 7
      %v366 = vshll.u32 %v306, 16
      %v368 = vor.u32 %v365, %v366
      %v369 = vsel %vm336, %v361, %v368
      %v370 = vrot.slane %v365, 4
      %v372 = vshrl.u32 %v307, 16
      %v374 = vrot.slane %v372, 7
      %v375 = vshll.u32 %v307, 16
      %v377 = vor.u32 %v374, %v375
      %v378 = vrot.slane %v374, 4
      %v380 = vshrl.u32 %v308, 16
      %v382 = vrot.slane %v380, 7
      %v383 = vshll.u32 %v308, 16
      %v385 = vor.u32 %v382, %v383
      %v386 = vsel %vm336, %v378, %v385
      %v387 = vrot.slane %v382, 4
      %v389 = vshrl.u32 %v309, 16
      %v391 = vrot.slane %v389, 7
      %v392 = vshll.u32 %v309, 16
      %v394 = vor.u32 %v391, %v392
      %v395 = vrot.slane %v391, 4
      %v397 = vshrl.u32 %v310, 16
      %v399 = vrot.slane %v397, 7
      %v400 = vshll.u32 %v310, 16
      %v402 = vor.u32 %v399, %v400
      %v403 = vsel %vm336, %v395, %v402
      %v404 = vrot.slane %v399, 4
      %v406 = vshrl.u32 %v311, 16
      %v408 = vrot.slane %v406, 7
      %v409 = vshll.u32 %v311, 16
      %v411 = vor.u32 %v408, %v409
      %v412 = vrot.slane %v408, 4
      %v414 = vshrl.u32 %v312, 16
      %v416 = vrot.slane %v414, 7
      %v417 = vshll.u32 %v312, 16
      %v419 = vor.u32 %v416, %v417
      %v420 = vsel %vm336, %v412, %v419
      %v421 = vrot.slane %v416, 4
      %v423 = vshrl.u32 %v313, 16
      %v425 = vrot.slane %v423, 7
      %v426 = vshll.u32 %v313, 16
      %v428 = vor.u32 %v425, %v426
      %v429 = vrot.slane %v425, 4
      %v431 = vshrl.u32 %v314, 16
      %v433 = vrot.slane %v431, 7
      %v434 = vshll.u32 %v314, 16
      %v436 = vor.u32 %v433, %v434
      %v437 = vsel %vm336, %v429, %v436
      %v438 = vrot.slane %v433, 4
      %v440 = vshrl.u32 %v315, 16
      %v442 = vrot.slane %v440, 7
      %v443 = vshll.u32 %v315, 16
      %v445 = vor.u32 %v442, %v443
      %v446 = vrot.slane %v442, 4
      %v448 = vshrl.u32 %v316, 16
      %v450 = vrot.slane %v448, 7
      %v451 = vshll.u32 %v316, 16
      %v453 = vor.u32 %v450, %v451
      %v454 = vsel %vm336, %v446, %v453
      %v455 = vrot.slane %v450, 4
      %v457 = vshrl.u32 %v317, 16
      %v459 = vrot.slane %v457, 7
      %v460 = vshll.u32 %v317, 16
      %v462 = vor.u32 %v459, %v460
      %v463 = vrot.slane %v459, 4
      %v465 = vshrl.u32 %v318, 16
      %v467 = vrot.slane %v465, 7
      %v468 = vshll.u32 %v318, 16
      %v470 = vor.u32 %v467, %v468
      %v471 = vsel %vm336, %v463, %v470
      %v472 = vrot.slane %v467, 4
      %v474 = vshrl.u32 %v319, 16
      %v476 = vrot.slane %v474, 7
      %v477 = vshll.u32 %v319, 16
      %v479 = vor.u32 %v476, %v477
      %v480 = vrot.slane %v476, 4
      %v482 = vshrl.u32 %v320, 16
      %v484 = vrot.slane %v482, 7
      %v485 = vshll.u32 %v320, 16
      %v487 = vor.u32 %v484, %v485
      %v488 = vsel %vm336, %v480, %v487
      %v489 = vrot.slane %v484, 4
      %v491 = vshrl.u32 %v321, 16
      %v493 = vrot.slane %v491, 7
      %v494 = vshll.u32 %v321, 16
      %v496 = vor.u32 %v493, %v494
      %v497 = vrot.slane %v493, 4
      %v499 = vshrl.u32 %v322, 16
      %v501 = vrot.slane %v499, 7
      %v502 = vshll.u32 %v322, 16
      %v504 = vor.u32 %v501, %v502
      %v505 = vsel %vm336, %v497, %v504
      %v506 = vrot.slane %v501, 4
      %v508 = vshrl.u32 %v323, 16
      %v510 = vrot.slane %v508, 7
      %v511 = vshll.u32 %v323, 16
      %v513 = vor.u32 %v510, %v511
      %v514 = vrot.slane %v510, 4
      %v516 = vshrl.u32 %v324, 16
      %v518 = vrot.slane %v516, 7
      %v519 = vshll.u32 %v324, 16
      %v521 = vor.u32 %v518, %v519
      %v522 = vsel %vm336, %v514, %v521
      %v523 = vrot.slane %v518, 4
      %v525 = vshrl.u32 %v325, 16
      %v527 = vrot.slane %v525, 7
      %v528 = vshll.u32 %v325, 16
      %v530 = vor.u32 %v527, %v528
      %v531 = vrot.slane %v527, 4
      %v533 = vshrl.u32 %v326, 16
      %v535 = vrot.slane %v533, 7
      %v536 = vshll.u32 %v326, 16
      %v538 = vor.u32 %v535, %v536
      %v539 = vsel %vm336, %v531, %v538
      %v540 = vrot.slane %v535, 4
      %v542 = vshrl.u32 %v327, 16
      %v544 = vrot.slane %v542, 7
      %v545 = vshll.u32 %v327, 16
      %v547 = vor.u32 %v544, %v545
      %v548 = vrot.slane %v544, 4
      %v550 = vshrl.u32 %v328, 16
      %v552 = vrot.slane %v550, 7
      %v553 = vshll.u32 %v328, 16
      %v555 = vor.u32 %v552, %v553
      %v556 = vsel %vm336, %v548, %v555
      %v557 = vrot.slane %v552, 4
      %v559 = vshrl.u32 %v329, 16
      %v561 = vrot.slane %v559, 7
      %v562 = vshll.u32 %v329, 16
      %v564 = vor.u32 %v561, %v562
      %v565 = vrot.slane %v561, 4
      %v567 = vshrl.u32 %v330, 16
      %v569 = vrot.slane %v567, 7
      %v570 = vshll.u32 %v330, 16
      %v572 = vor.u32 %v569, %v570
      %v573 = vsel %vm336, %v565, %v572
      %v574 = vrot.slane %v569, 4
      %v576 = vshrl.u32 %v331, 16
      %v578 = vrot.slane %v576, 7
      %v579 = vshll.u32 %v331, 16
      %v581 = vor.u32 %v578, %v579
      %v582 = vrot.slane %v578, 4
      %v584 = vshrl.u32 %v332, 16
      %v586 = vrot.slane %v584, 7
      %v587 = vshll.u32 %v332, 16
      %v589 = vor.u32 %v586, %v587
      %v590 = vsel %vm336, %v582, %v589
      %v591 = vrot.slane %v586, 4
      %v593 = vshrl.u32 %v333, 16
      %v595 = vrot.slane %v593, 7
      %v596 = vshll.u32 %v333, 16
      %v598 = vor.u32 %v595, %v596
      %v599 = vrot.slane %v595, 4
      %v601 = vshrl.u32 %v334, 16
      %v603 = vrot.slane %v601, 7
      %v604 = vshll.u32 %v334, 16
      %v606 = vor.u32 %v603, %v604
      %v607 = vsel %vm336, %v599, %v606
      %v608 = vrot.slane %v603, 4
      %s657 = scalar_lea.vmem [#allocation2], 12
      %vm658 = vcmask 1043456
      %vm659 = vmand %vm658, %vm247
      %v660 = vld [vmem:[%s657] sm:$0xf]
      %v661 = vsel %vm659, %v343, %v660
      %662 = vst [vmem:[%s657] sm:$0xf] %v661
      %663 = vst [vmem:[%s657 + $0x4] sm:$0xf] %v352
      %v664 = vld [vmem:[%s657 + $0x8] sm:$0x1]
      %v665 = vsel %vm192, %v353, %v664
      %666 = vst [vmem:[%s657 + $0x8] sm:$0x1] %v665
      %v667 = vld [vmem:[%s657 + $0xc] sm:$0xf]
      %v668 = vsel %vm659, %v360, %v667
      %669 = vst [vmem:[%s657 + $0xc] sm:$0xf] %v668
      %670 = vst [vmem:[%s657 + $0x10] sm:$0xf] %v369
      %v671 = vld [vmem:[%s657 + $0x14] sm:$0x1]
      %v672 = vsel %vm192, %v370, %v671
      %673 = vst [vmem:[%s657 + $0x14] sm:$0x1] %v672
      %v674 = vld [vmem:[%s657 + $0x18] sm:$0xf]
      %v675 = vsel %vm659, %v377, %v674
      %676 = vst [vmem:[%s657 + $0x18] sm:$0xf] %v675
      %677 = vst [vmem:[%s657 + $0x1c] sm:$0xf] %v386
      %v678 = vld [vmem:[%s657 + $0x20] sm:$0x1]
      %v679 = vsel %vm192, %v387, %v678
      %680 = vst [vmem:[%s657 + $0x20] sm:$0x1] %v679
      %v681 = vld [vmem:[%s657 + $0x24] sm:$0xf]
      %v682 = vsel %vm659, %v394, %v681
      %683 = vst [vmem:[%s657 + $0x24] sm:$0xf] %v682
      %684 = vst [vmem:[%s657 + $0x28] sm:$0xf] %v403
      %v685 = vld [vmem:[%s657 + $0x2c] sm:$0x1]
      %v686 = vsel %vm192, %v404, %v685
      %687 = vst [vmem:[%s657 + $0x2c] sm:$0x1] %v686
      %v688 = vld [vmem:[%s657 + $0x30] sm:$0xf]
      %v689 = vsel %vm659, %v411, %v688
      %690 = vst [vmem:[%s657 + $0x30] sm:$0xf] %v689
      %691 = vst [vmem:[%s657 + $0x34] sm:$0xf] %v420
      %v692 = vld [vmem:[%s657 + $0x38] sm:$0x1]
      %v693 = vsel %vm192, %v421, %v692
      %694 = vst [vmem:[%s657 + $0x38] sm:$0x1] %v693
      %v695 = vld [vmem:[%s657 + $0x3c] sm:$0xf]
      %v696 = vsel %vm659, %v428, %v695
      %697 = vst [vmem:[%s657 + $0x3c] sm:$0xf] %v696
      %698 = vst [vmem:[%s657 + $0x40] sm:$0xf] %v437
      %v699 = vld [vmem:[%s657 + $0x44] sm:$0x1]
      %v700 = vsel %vm192, %v438, %v699
      %701 = vst [vmem:[%s657 + $0x44] sm:$0x1] %v700
      %v702 = vld [vmem:[%s657 + $0x48] sm:$0xf]
      %v703 = vsel %vm659, %v445, %v702
      %704 = vst [vmem:[%s657 + $0x48] sm:$0xf] %v703
      %705 = vst [vmem:[%s657 + $0x4c] sm:$0xf] %v454
      %v706 = vld [vmem:[%s657 + $0x50] sm:$0x1]
      %v707 = vsel %vm192, %v455, %v706
      %708 = vst [vmem:[%s657 + $0x50] sm:$0x1] %v707
      %v709 = vld [vmem:[%s657 + $0x54] sm:$0xf]
      %v710 = vsel %vm659, %v462, %v709
      %711 = vst [vmem:[%s657 + $0x54] sm:$0xf] %v710
      %712 = vst [vmem:[%s657 + $0x58] sm:$0xf] %v471
      %v713 = vld [vmem:[%s657 + $0x5c] sm:$0x1]
      %v714 = vsel %vm192, %v472, %v713
      %715 = vst [vmem:[%s657 + $0x5c] sm:$0x1] %v714
      %v716 = vld [vmem:[%s657 + $0x60] sm:$0xf]
      %v717 = vsel %vm659, %v479, %v716
      %718 = vst [vmem:[%s657 + $0x60] sm:$0xf] %v717
      %719 = vst [vmem:[%s657 + $0x64] sm:$0xf] %v488
      %v720 = vld [vmem:[%s657 + $0x68] sm:$0x1]
      %v721 = vsel %vm192, %v489, %v720
      %722 = vst [vmem:[%s657 + $0x68] sm:$0x1] %v721
      %v723 = vld [vmem:[%s657 + $0x6c] sm:$0xf]
      %v724 = vsel %vm659, %v496, %v723
      %725 = vst [vmem:[%s657 + $0x6c] sm:$0xf] %v724
      %726 = vst [vmem:[%s657 + $0x70] sm:$0xf] %v505
      %v727 = vld [vmem:[%s657 + $0x74] sm:$0x1]
      %v728 = vsel %vm192, %v506, %v727
      %729 = vst [vmem:[%s657 + $0x74] sm:$0x1] %v728
      %v730 = vld [vmem:[%s657 + $0x78] sm:$0xf]
      %v731 = vsel %vm659, %v513, %v730
      %732 = vst [vmem:[%s657 + $0x78] sm:$0xf] %v731
      %733 = vst [vmem:[%s657 + $0x7c] sm:$0xf] %v522
      %v734 = vld [vmem:[%s657 + $0x80] sm:$0x1]
      %v735 = vsel %vm192, %v523, %v734
      %736 = vst [vmem:[%s657 + $0x80] sm:$0x1] %v735
      %v737 = vld [vmem:[%s657 + $0x84] sm:$0xf]
      %v738 = vsel %vm659, %v530, %v737
      %739 = vst [vmem:[%s657 + $0x84] sm:$0xf] %v738
      %740 = vst [vmem:[%s657 + $0x88] sm:$0xf] %v539
      %v741 = vld [vmem:[%s657 + $0x8c] sm:$0x1]
      %v742 = vsel %vm192, %v540, %v741
      %743 = vst [vmem:[%s657 + $0x8c] sm:$0x1] %v742
      %v744 = vld [vmem:[%s657 + $0x90] sm:$0xf]
      %v745 = vsel %vm659, %v547, %v744
      %746 = vst [vmem:[%s657 + $0x90] sm:$0xf] %v745
      %747 = vst [vmem:[%s657 + $0x94] sm:$0xf] %v556
      %v748 = vld [vmem:[%s657 + $0x98] sm:$0x1]
      %v749 = vsel %vm192, %v557, %v748
      %750 = vst [vmem:[%s657 + $0x98] sm:$0x1] %v749
      %v751 = vld [vmem:[%s657 + $0x9c] sm:$0xf]
      %v752 = vsel %vm659, %v564, %v751
      %753 = vst [vmem:[%s657 + $0x9c] sm:$0xf] %v752
      %754 = vst [vmem:[%s657 + $0xa0] sm:$0xf] %v573
      %v755 = vld [vmem:[%s657 + $0xa4] sm:$0x1]
      %v756 = vsel %vm192, %v574, %v755
      %757 = vst [vmem:[%s657 + $0xa4] sm:$0x1] %v756
      %v758 = vld [vmem:[%s657 + $0xa8] sm:$0xf]
      %v759 = vsel %vm659, %v581, %v758
      %760 = vst [vmem:[%s657 + $0xa8] sm:$0xf] %v759
      %761 = vst [vmem:[%s657 + $0xac] sm:$0xf] %v590
      %v762 = vld [vmem:[%s657 + $0xb0] sm:$0x1]
      %v763 = vsel %vm192, %v591, %v762
      %764 = vst [vmem:[%s657 + $0xb0] sm:$0x1] %v763
      %v765 = vld [vmem:[%s657 + $0xb4] sm:$0xf]
      %v766 = vsel %vm659, %v598, %v765
      %767 = vst [vmem:[%s657 + $0xb4] sm:$0xf] %v766
      %768 = vst [vmem:[%s657 + $0xb8] sm:$0xf] %v607
      %v769 = vld [vmem:[%s657 + $0xbc] sm:$0x1]
      %v770 = vsel %vm192, %v608, %v769
      %771 = vst [vmem:[%s657 + $0xbc] sm:$0x1] %v770
      %v772 = vld [vmem:[#allocation2] sm:$0xf]
      %v773 = vld [vmem:[#allocation2 + $0x4] sm:$0xf]
      %v774 = vld [vmem:[#allocation2 + $0xc] sm:$0xf]
      %v775 = vld [vmem:[#allocation2 + $0x10] sm:$0xf]
      %v776 = vld [vmem:[#allocation2 + $0x18] sm:$0xf]
      %v777 = vld [vmem:[#allocation2 + $0x1c] sm:$0xf]
      %v778 = vld [vmem:[#allocation2 + $0x24] sm:$0xf]
      %v779 = vld [vmem:[#allocation2 + $0x28] sm:$0xf]
      %v780 = vld [vmem:[#allocation2 + $0x30] sm:$0xf]
      %v781 = vld [vmem:[#allocation2 + $0x34] sm:$0xf]
      %v782 = vld [vmem:[#allocation2 + $0x3c] sm:$0xf]
      %v783 = vld [vmem:[#allocation2 + $0x40] sm:$0xf]
      %v784 = vld [vmem:[#allocation2 + $0x48] sm:$0xf]
      %v785 = vld [vmem:[#allocation2 + $0x4c] sm:$0xf]
      %v786 = vld [vmem:[#allocation2 + $0x54] sm:$0xf]
      %v787 = vld [vmem:[#allocation2 + $0x58] sm:$0xf]
      %v788 = vld [vmem:[#allocation2 + $0x60] sm:$0xf]
      %v789 = vld [vmem:[#allocation2 + $0x64] sm:$0xf]
      %v790 = vld [vmem:[#allocation2 + $0x6c] sm:$0xf]
      %v791 = vld [vmem:[#allocation2 + $0x70] sm:$0xf]
      %v792 = vld [vmem:[#allocation2 + $0x78] sm:$0xf]
      %v793 = vld [vmem:[#allocation2 + $0x7c] sm:$0xf]
      %v794 = vld [vmem:[#allocation2 + $0x84] sm:$0xf]
      %v795 = vld [vmem:[#allocation2 + $0x88] sm:$0xf]
      %v796 = vld [vmem:[#allocation2 + $0x90] sm:$0xf]
      %v797 = vld [vmem:[#allocation2 + $0x94] sm:$0xf]
      %v798 = vld [vmem:[#allocation2 + $0x9c] sm:$0xf]
      %v799 = vld [vmem:[#allocation2 + $0xa0] sm:$0xf]
      %v800 = vld [vmem:[#allocation2 + $0xa8] sm:$0xf]
      %v801 = vld [vmem:[#allocation2 + $0xac] sm:$0xf]
      %v802 = vld [vmem:[#allocation2 + $0xb4] sm:$0xf]
      %v803 = vld [vmem:[#allocation2 + $0xb8] sm:$0xf]
      %v804 = vld [vmem:[%s1] sm:$0xf]
      %v805 = vld [vmem:[%s1 + $0x4] sm:$0xf]
      %v806 = vld [vmem:[%s1 + $0x8] sm:$0xf]
      %v807 = vld [vmem:[%s1 + $0xc] sm:$0xf]
      %v808 = vld [vmem:[%s1 + $0x10] sm:$0xf]
      %v809 = vld [vmem:[%s1 + $0x14] sm:$0xf]
      %v810 = vld [vmem:[%s1 + $0x18] sm:$0xf]
      %v811 = vld [vmem:[%s1 + $0x1c] sm:$0xf]
      %v812 = vld [vmem:[%s1 + $0x20] sm:$0xf]
      %v813 = vld [vmem:[%s1 + $0x24] sm:$0xf]
      %v814 = vld [vmem:[%s1 + $0x28] sm:$0xf]
      %v815 = vld [vmem:[%s1 + $0x2c] sm:$0xf]
      %v816 = vld [vmem:[%s1 + $0x30] sm:$0xf]
      %v817 = vld [vmem:[%s1 + $0x34] sm:$0xf]
      %v818 = vld [vmem:[%s1 + $0x38] sm:$0xf]
      %v819 = vld [vmem:[%s1 + $0x3c] sm:$0xf]
      %v820 = vld [vmem:[#allocation2 + $0x8] sm:$0x1]
      %v821 = vld [vmem:[#allocation2 + $0x14] sm:$0x1]
      %v822 = vld [vmem:[#allocation2 + $0x20] sm:$0x1]
      %v823 = vld [vmem:[#allocation2 + $0x2c] sm:$0x1]
      %v824 = vld [vmem:[#allocation2 + $0x38] sm:$0x1]
      %v825 = vld [vmem:[#allocation2 + $0x44] sm:$0x1]
      %v826 = vld [vmem:[#allocation2 + $0x50] sm:$0x1]
      %v827 = vld [vmem:[#allocation2 + $0x5c] sm:$0x1]
      %v828 = vld [vmem:[#allocation2 + $0x68] sm:$0x1]
      %v829 = vld [vmem:[#allocation2 + $0x74] sm:$0x1]
      %v830 = vld [vmem:[#allocation2 + $0x80] sm:$0x1]
      %v831 = vld [vmem:[#allocation2 + $0x8c] sm:$0x1]
      %v832 = vld [vmem:[#allocation2 + $0x98] sm:$0x1]
      %v833 = vld [vmem:[#allocation2 + $0xa4] sm:$0x1]
      %v834 = vld [vmem:[#allocation2 + $0xb0] sm:$0x1]
      %v835 = vld [vmem:[#allocation2 + $0xbc] sm:$0x1]
      %v836 = vld [vmem:[%s1 + $0x40] sm:$0xf]
      %v837 = vld [vmem:[%s1 + $0x44] sm:$0xf]
      %v838 = vld [vmem:[%s1 + $0x48] sm:$0xf]
      %v839 = vld [vmem:[%s1 + $0x4c] sm:$0xf]
      %v840 = vld [vmem:[%s1 + $0x50] sm:$0xf]
      %v841 = vld [vmem:[%s1 + $0x54] sm:$0xf]
      %v842 = vld [vmem:[%s1 + $0x58] sm:$0xf]
      %v843 = vld [vmem:[%s1 + $0x5c] sm:$0xf]
      %v844 = vld [vmem:[%s1 + $0x60] sm:$0xf]
      %v845 = vld [vmem:[%s1 + $0x64] sm:$0xf]
      %v846 = vld [vmem:[%s1 + $0x68] sm:$0xf]
      %v847 = vld [vmem:[%s1 + $0x6c] sm:$0xf]
      %v848 = vld [vmem:[%s1 + $0x70] sm:$0xf]
      %v849 = vld [vmem:[%s1 + $0x74] sm:$0xf]
      %v850 = vld [vmem:[%s1 + $0x78] sm:$0xf]
      %v851 = vld [vmem:[%s1 + $0x7c] sm:$0xf]
      %vm852 = vsmask.f32 3328
      %vm853 = vsmask.f32 7440
      %vm854 = vmor %vm852, %vm853
      %v856 = vshrl.u32 %v772, 16
      %v858 = vrot.slane %v856, 4
      %v859 = vshll.u32 %v772, 16
      %v861 = vrot.slane %v859, 5
      %v862 = vor.u32 %v858, %v861
      %v863 = vrot.slane %v862, 4
      %v865 = vshll.u32 %v773, 16
      %v867 = vrot.slane %v865, 5
      %v868 = vsel %vm854, %v863, %v867
      %v869 = vshrl.u32 %v773, 16
      %v871 = vrot.slane %v869, 4
      %v872 = vor.u32 %v871, %v867
      %v873 = vrot.slane %v872, 4
      %v875 = vshll.u32 %v820, 16
      %v877 = vrot.slane %v875, 5
      %v878 = vsel %vm854, %v873, %v877
      %v880 = vshrl.u32 %v774, 16
      %v882 = vrot.slane %v880, 4
      %v883 = vshll.u32 %v774, 16
      %v885 = vrot.slane %v883, 5
      %v886 = vor.u32 %v882, %v885
      %v887 = vrot.slane %v886, 4
      %v889 = vshll.u32 %v775, 16
      %v891 = vrot.slane %v889, 5
      %v892 = vsel %vm854, %v887, %v891
      %v893 = vshrl.u32 %v775, 16
      %v895 = vrot.slane %v893, 4
      %v896 = vor.u32 %v895, %v891
      %v897 = vrot.slane %v896, 4
      %v899 = vshll.u32 %v821, 16
      %v901 = vrot.slane %v899, 5
      %v902 = vsel %vm854, %v897, %v901
      %v904 = vshrl.u32 %v776, 16
      %v906 = vrot.slane %v904, 4
      %v907 = vshll.u32 %v776, 16
      %v909 = vrot.slane %v907, 5
      %v910 = vor.u32 %v906, %v909
      %v911 = vrot.slane %v910, 4
      %v913 = vshll.u32 %v777, 16
      %v915 = vrot.slane %v913, 5
      %v916 = vsel %vm854, %v911, %v915
      %v917 = vshrl.u32 %v777, 16
      %v919 = vrot.slane %v917, 4
      %v920 = vor.u32 %v919, %v915
      %v921 = vrot.slane %v920, 4
      %v923 = vshll.u32 %v822, 16
      %v925 = vrot.slane %v923, 5
      %v926 = vsel %vm854, %v921, %v925
      %v928 = vshrl.u32 %v778, 16
      %v930 = vrot.slane %v928, 4
      %v931 = vshll.u32 %v778, 16
      %v933 = vrot.slane %v931, 5
      %v934 = vor.u32 %v930, %v933
      %v935 = vrot.slane %v934, 4
      %v937 = vshll.u32 %v779, 16
      %v939 = vrot.slane %v937, 5
      %v940 = vsel %vm854, %v935, %v939
      %v941 = vshrl.u32 %v779, 16
      %v943 = vrot.slane %v941, 4
      %v944 = vor.u32 %v943, %v939
      %v945 = vrot.slane %v944, 4
      %v947 = vshll.u32 %v823, 16
      %v949 = vrot.slane %v947, 5
      %v950 = vsel %vm854, %v945, %v949
      %v952 = vshrl.u32 %v780, 16
      %v954 = vrot.slane %v952, 4
      %v955 = vshll.u32 %v780, 16
      %v957 = vrot.slane %v955, 5
      %v958 = vor.u32 %v954, %v957
      %v959 = vrot.slane %v958, 4
      %v961 = vshll.u32 %v781, 16
      %v963 = vrot.slane %v961, 5
      %v964 = vsel %vm854, %v959, %v963
      %v965 = vshrl.u32 %v781, 16
      %v967 = vrot.slane %v965, 4
      %v968 = vor.u32 %v967, %v963
      %v969 = vrot.slane %v968, 4
      %v971 = vshll.u32 %v824, 16
      %v973 = vrot.slane %v971, 5
      %v974 = vsel %vm854, %v969, %v973
      %v976 = vshrl.u32 %v782, 16
      %v978 = vrot.slane %v976, 4
      %v979 = vshll.u32 %v782, 16
      %v981 = vrot.slane %v979, 5
      %v982 = vor.u32 %v978, %v981
      %v983 = vrot.slane %v982, 4
      %v985 = vshll.u32 %v783, 16
      %v987 = vrot.slane %v985, 5
      %v988 = vsel %vm854, %v983, %v987
      %v989 = vshrl.u32 %v783, 16
      %v991 = vrot.slane %v989, 4
      %v992 = vor.u32 %v991, %v987
      %v993 = vrot.slane %v992, 4
      %v995 = vshll.u32 %v825, 16
      %v997 = vrot.slane %v995, 5
      %v998 = vsel %vm854, %v993, %v997
      %v1000 = vshrl.u32 %v784, 16
      %v1002 = vrot.slane %v1000, 4
      %v1003 = vshll.u32 %v784, 16
      %v1005 = vrot.slane %v1003, 5
      %v1006 = vor.u32 %v1002, %v1005
      %v1007 = vrot.slane %v1006, 4
      %v1009 = vshll.u32 %v785, 16
      %v1011 = vrot.slane %v1009, 5
      %v1012 = vsel %vm854, %v1007, %v1011
      %v1013 = vshrl.u32 %v785, 16
      %v1015 = vrot.slane %v1013, 4
      %v1016 = vor.u32 %v1015, %v1011
      %v1017 = vrot.slane %v1016, 4
      %v1019 = vshll.u32 %v826, 16
      %v1021 = vrot.slane %v1019, 5
      %v1022 = vsel %vm854, %v1017, %v1021
      %v1024 = vshrl.u32 %v786, 16
      %v1026 = vrot.slane %v1024, 4
      %v1027 = vshll.u32 %v786, 16
      %v1029 = vrot.slane %v1027, 5
      %v1030 = vor.u32 %v1026, %v1029
      %v1031 = vrot.slane %v1030, 4
      %v1033 = vshll.u32 %v787, 16
      %v1035 = vrot.slane %v1033, 5
      %v1036 = vsel %vm854, %v1031, %v1035
      %v1037 = vshrl.u32 %v787, 16
      %v1039 = vrot.slane %v1037, 4
      %v1040 = vor.u32 %v1039, %v1035
      %v1041 = vrot.slane %v1040, 4
      %v1043 = vshll.u32 %v827, 16
      %v1045 = vrot.slane %v1043, 5
      %v1046 = vsel %vm854, %v1041, %v1045
      %v1048 = vshrl.u32 %v788, 16
      %v1050 = vrot.slane %v1048, 4
      %v1051 = vshll.u32 %v788, 16
      %v1053 = vrot.slane %v1051, 5
      %v1054 = vor.u32 %v1050, %v1053
      %v1055 = vrot.slane %v1054, 4
      %v1057 = vshll.u32 %v789, 16
      %v1059 = vrot.slane %v1057, 5
      %v1060 = vsel %vm854, %v1055, %v1059
      %v1061 = vshrl.u32 %v789, 16
      %v1063 = vrot.slane %v1061, 4
      %v1064 = vor.u32 %v1063, %v1059
      %v1065 = vrot.slane %v1064, 4
      %v1067 = vshll.u32 %v828, 16
      %v1069 = vrot.slane %v1067, 5
      %v1070 = vsel %vm854, %v1065, %v1069
      %v1072 = vshrl.u32 %v790, 16
      %v1074 = vrot.slane %v1072, 4
      %v1075 = vshll.u32 %v790, 16
      %v1077 = vrot.slane %v1075, 5
      %v1078 = vor.u32 %v1074, %v1077
      %v1079 = vrot.slane %v1078, 4
      %v1081 = vshll.u32 %v791, 16
      %v1083 = vrot.slane %v1081, 5
      %v1084 = vsel %vm854, %v1079, %v1083
      %v1085 = vshrl.u32 %v791, 16
      %v1087 = vrot.slane %v1085, 4
      %v1088 = vor.u32 %v1087, %v1083
      %v1089 = vrot.slane %v1088, 4
      %v1091 = vshll.u32 %v829, 16
      %v1093 = vrot.slane %v1091, 5
      %v1094 = vsel %vm854, %v1089, %v1093
      %v1096 = vshrl.u32 %v792, 16
      %v1098 = vrot.slane %v1096, 4
      %v1099 = vshll.u32 %v792, 16
      %v1101 = vrot.slane %v1099, 5
      %v1102 = vor.u32 %v1098, %v1101
      %v1103 = vrot.slane %v1102, 4
      %v1105 = vshll.u32 %v793, 16
      %v1107 = vrot.slane %v1105, 5
      %v1108 = vsel %vm854, %v1103, %v1107
      %v1109 = vshrl.u32 %v793, 16
      %v1111 = vrot.slane %v1109, 4
      %v1112 = vor.u32 %v1111, %v1107
      %v1113 = vrot.slane %v1112, 4
      %v1115 = vshll.u32 %v830, 16
      %v1117 = vrot.slane %v1115, 5
      %v1118 = vsel %vm854, %v1113, %v1117
      %v1120 = vshrl.u32 %v794, 16
      %v1122 = vrot.slane %v1120, 4
      %v1123 = vshll.u32 %v794, 16
      %v1125 = vrot.slane %v1123, 5
      %v1126 = vor.u32 %v1122, %v1125
      %v1127 = vrot.slane %v1126, 4
      %v1129 = vshll.u32 %v795, 16
      %v1131 = vrot.slane %v1129, 5
      %v1132 = vsel %vm854, %v1127, %v1131
      %v1133 = vshrl.u32 %v795, 16
      %v1135 = vrot.slane %v1133, 4
      %v1136 = vor.u32 %v1135, %v1131
      %v1137 = vrot.slane %v1136, 4
      %v1139 = vshll.u32 %v831, 16
      %v1141 = vrot.slane %v1139, 5
      %v1142 = vsel %vm854, %v1137, %v1141
      %v1144 = vshrl.u32 %v796, 16
      %v1146 = vrot.slane %v1144, 4
      %v1147 = vshll.u32 %v796, 16
      %v1149 = vrot.slane %v1147, 5
      %v1150 = vor.u32 %v1146, %v1149
      %v1151 = vrot.slane %v1150, 4
      %v1153 = vshll.u32 %v797, 16
      %v1155 = vrot.slane %v1153, 5
      %v1156 = vsel %vm854, %v1151, %v1155
      %v1157 = vshrl.u32 %v797, 16
      %v1159 = vrot.slane %v1157, 4
      %v1160 = vor.u32 %v1159, %v1155
      %v1161 = vrot.slane %v1160, 4
      %v1163 = vshll.u32 %v832, 16
      %v1165 = vrot.slane %v1163, 5
      %v1166 = vsel %vm854, %v1161, %v1165
      %v1168 = vshrl.u32 %v798, 16
      %v1170 = vrot.slane %v1168, 4
      %v1171 = vshll.u32 %v798, 16
      %v1173 = vrot.slane %v1171, 5
      %v1174 = vor.u32 %v1170, %v1173
      %v1175 = vrot.slane %v1174, 4
      %v1177 = vshll.u32 %v799, 16
      %v1179 = vrot.slane %v1177, 5
      %v1180 = vsel %vm854, %v1175, %v1179
      %v1181 = vshrl.u32 %v799, 16
      %v1183 = vrot.slane %v1181, 4
      %v1184 = vor.u32 %v1183, %v1179
      %v1185 = vrot.slane %v1184, 4
      %v1187 = vshll.u32 %v833, 16
      %v1189 = vrot.slane %v1187, 5
      %v1190 = vsel %vm854, %v1185, %v1189
      %v1192 = vshrl.u32 %v800, 16
      %v1194 = vrot.slane %v1192, 4
      %v1195 = vshll.u32 %v800, 16
      %v1197 = vrot.slane %v1195, 5
      %v1198 = vor.u32 %v1194, %v1197
      %v1199 = vrot.slane %v1198, 4
      %v1201 = vshll.u32 %v801, 16
      %v1203 = vrot.slane %v1201, 5
      %v1204 = vsel %vm854, %v1199, %v1203
      %v1205 = vshrl.u32 %v801, 16
      %v1207 = vrot.slane %v1205, 4
      %v1208 = vor.u32 %v1207, %v1203
      %v1209 = vrot.slane %v1208, 4
      %v1211 = vshll.u32 %v834, 16
      %v1213 = vrot.slane %v1211, 5
      %v1214 = vsel %vm854, %v1209, %v1213
      %v1216 = vshrl.u32 %v802, 16
      %v1218 = vrot.slane %v1216, 4
      %v1219 = vshll.u32 %v802, 16
      %v1221 = vrot.slane %v1219, 5
      %v1222 = vor.u32 %v1218, %v1221
      %v1223 = vrot.slane %v1222, 4
      %v1225 = vshll.u32 %v803, 16
      %v1227 = vrot.slane %v1225, 5
      %v1228 = vsel %vm854, %v1223, %v1227
      %v1229 = vshrl.u32 %v803, 16
      %v1231 = vrot.slane %v1229, 4
      %v1232 = vor.u32 %v1231, %v1227
      %v1233 = vrot.slane %v1232, 4
      %v1235 = vshll.u32 %v835, 16
      %v1237 = vrot.slane %v1235, 5
      %v1238 = vsel %vm854, %v1233, %v1237
      %v1239 = vunpack.c.l.b16 %v868
      %v1240 = vunpack.c.l.b16 %v878
      %v1241 = vunpack.c.l.b16 %v892
      %v1242 = vunpack.c.l.b16 %v902
      %v1243 = vunpack.c.l.b16 %v916
      %v1244 = vunpack.c.l.b16 %v926
      %v1245 = vunpack.c.l.b16 %v940
      %v1246 = vunpack.c.l.b16 %v950
      %v1247 = vunpack.c.l.b16 %v964
      %v1248 = vunpack.c.l.b16 %v974
      %v1249 = vunpack.c.l.b16 %v988
      %v1250 = vunpack.c.l.b16 %v998
      %v1251 = vunpack.c.l.b16 %v1012
      %v1252 = vunpack.c.l.b16 %v1022
      %v1253 = vunpack.c.l.b16 %v1036
      %v1254 = vunpack.c.l.b16 %v1046
      %v1255 = vunpack.c.l.b16 %v1060
      %v1256 = vunpack.c.l.b16 %v1070
      %v1257 = vunpack.c.l.b16 %v1084
      %v1258 = vunpack.c.l.b16 %v1094
      %v1259 = vunpack.c.l.b16 %v1108
      %v1260 = vunpack.c.l.b16 %v1118
      %v1261 = vunpack.c.l.b16 %v1132
      %v1262 = vunpack.c.l.b16 %v1142
      %v1263 = vunpack.c.l.b16 %v1156
      %v1264 = vunpack.c.l.b16 %v1166
      %v1265 = vunpack.c.l.b16 %v1180
      %v1266 = vunpack.c.l.b16 %v1190
      %v1267 = vunpack.c.l.b16 %v1204
      %v1268 = vunpack.c.l.b16 %v1214
      %v1269 = vunpack.c.l.b16 %v1228
      %v1270 = vunpack.c.l.b16 %v1238
      %v1271 = vpack.c.b16 %v1240, %v1239
      %v1272 = vpack.c.b16 %v1242, %v1241
      %v1273 = vpack.c.b16 %v1244, %v1243
      %v1274 = vpack.c.b16 %v1246, %v1245
      %v1275 = vpack.c.b16 %v1248, %v1247
      %v1276 = vpack.c.b16 %v1250, %v1249
      %v1277 = vpack.c.b16 %v1252, %v1251
      %v1278 = vpack.c.b16 %v1254, %v1253
      %v1279 = vpack.c.b16 %v1256, %v1255
      %v1280 = vpack.c.b16 %v1258, %v1257
      %v1281 = vpack.c.b16 %v1260, %v1259
      %v1282 = vpack.c.b16 %v1262, %v1261
      %v1283 = vpack.c.b16 %v1264, %v1263
      %v1284 = vpack.c.b16 %v1266, %v1265
      %v1285 = vpack.c.b16 %v1268, %v1267
      %v1286 = vpack.c.b16 %v1270, %v1269
      %v1319 = vunpack.c.l.b16 %v836
      %v1320 = vunpack.c.l.b16 %v837
      %v1321 = vunpack.c.l.b16 %v838
      %v1322 = vunpack.c.l.b16 %v839
      %v1323 = vunpack.c.l.b16 %v840
      %v1324 = vunpack.c.l.b16 %v841
      %v1325 = vunpack.c.l.b16 %v842
      %v1326 = vunpack.c.l.b16 %v843
      %v1327 = vunpack.c.l.b16 %v844
      %v1328 = vunpack.c.l.b16 %v845
      %v1329 = vunpack.c.l.b16 %v846
      %v1330 = vunpack.c.l.b16 %v847
      %v1331 = vunpack.c.l.b16 %v848
      %v1332 = vunpack.c.l.b16 %v849
      %v1333 = vunpack.c.l.b16 %v850
      %v1334 = vunpack.c.l.b16 %v851
      %v1335 = vpack.c.b16 %v1320, %v1319
      %v1336 = vpack.c.b16 %v1322, %v1321
      %v1337 = vpack.c.b16 %v1324, %v1323
      %v1338 = vpack.c.b16 %v1326, %v1325
      %v1339 = vpack.c.b16 %v1328, %v1327
      %v1340 = vpack.c.b16 %v1330, %v1329
      %v1341 = vpack.c.b16 %v1332, %v1331
      %v1342 = vpack.c.b16 %v1334, %v1333
      %1351 = vmatprep.subr.bf16.mxu0 0
      %1352 = vmatpush1.bf16.msra.mxu0 %v1335
      %1353 = vmatprep.subr.bf16.mxu0 0
      %1354 = vmatpush1.bf16.msra.mxu0 %v1336
      %1355 = vmatprep.subr.bf16.mxu0 0
      %1356 = vmatpush1.bf16.msra.mxu0 %v1337
      %1357 = vmatprep.subr.bf16.mxu0 0
      %1358 = vmatpush1.bf16.msra.mxu0 %v1338
      %1359 = vmatprep.subr.bf16.mxu0 0
      %1360 = vmatpush1.bf16.msra.mxu0 %v1339
      %1361 = vmatprep.subr.bf16.mxu0 0
      %1362 = vmatpush1.bf16.msra.mxu0 %v1340
      %1363 = vmatprep.subr.bf16.mxu0 0
      %1364 = vmatpush1.bf16.msra.mxu0 %v1341
      %1365 = vmatprep.subr.bf16.mxu0 0
      %1366 = vmatpush1.bf16.msra.mxu0 %v1342
      %1367 = vmatprep.subr.bf16.mxu0 0
      %1368 = vmatpush1.bf16.msra.mxu0 0
      %1369 = vmatprep.subr.bf16.mxu0 0
      %1370 = vmatpush1.bf16.msra.mxu0 0
      %1371 = vmatprep.subr.bf16.mxu0 0
      %1372 = vmatpush1.bf16.msra.mxu0 0
      %1373 = vmatprep.subr.bf16.mxu0 0
      %1374 = vmatpush1.bf16.msra.mxu0 0
      %1375 = vmatprep.subr.bf16.mxu0 0
      %1376 = vmatpush1.bf16.msra.mxu0 0
      %1377 = vmatprep.subr.bf16.mxu0 0
      %1378 = vmatpush1.bf16.msra.mxu0 0
      %1379 = vmatprep.subr.bf16.mxu0 0
      %1380 = vmatpush1.bf16.msra.mxu0 0
      %1381 = vmatprep.subr.bf16.mxu0 0
      %1382 = vmatpush1.bf16.msra.mxu0 0
      %1383 = vmatprep.mubr.bf16.mxu0 0
      %1384 = vmatmul.mubr.bf16.gmra.mrb[0].mxu0 %v1271
      %v1385 = vpop.f32.mrb[0].mxu0
      %v1386 = vadd.f32 0.0, %v1385
      %v1387 = vpop.f32.mrb[0].mxu0
      %v1388 = vpop.f32.mrb[0].mxu0
      %v1389 = vadd.f32 0.0, %v1388
      %v1390 = vpop.f32.mrb[0].mxu0
      %1391 = vmatprep.mubr.bf16.mxu0 0
      %1392 = vmatmul.mubr.bf16.gmra.mrb[0].mxu0 %v1272
      %v1393 = vpop.f32.mrb[0].mxu0
      %v1394 = vadd.f32 0.0, %v1393
      %v1395 = vpop.f32.mrb[0].mxu0
      %v1396 = vpop.f32.mrb[0].mxu0
      %v1397 = vadd.f32 0.0, %v1396
      %v1398 = vpop.f32.mrb[0].mxu0
      %1399 = vmatprep.mubr.bf16.mxu0 0
      %1400 = vmatmul.mubr.bf16.gmra.mrb[0].mxu0 %v1273
      %v1401 = vpop.f32.mrb[0].mxu0
      %v1402 = vadd.f32 0.0, %v1401
      %v1403 = vpop.f32.mrb[0].mxu0
      %v1404 = vpop.f32.mrb[0].mxu0
      %v1405 = vadd.f32 0.0, %v1404
      %v1406 = vpop.f32.mrb[0].mxu0
      %1407 = vmatprep.mubr.bf16.mxu0 0
      %1408 = vmatmul.mubr.bf16.gmra.mrb[0].mxu0 %v1274
      %v1409 = vpop.f32.mrb[0].mxu0
      %v1410 = vadd.f32 0.0, %v1409
      %v1411 = vpop.f32.mrb[0].mxu0
      %v1412 = vpop.f32.mrb[0].mxu0
      %v1413 = vadd.f32 0.0, %v1412
      %v1414 = vpop.f32.mrb[0].mxu0
      %1415 = vmatprep.mubr.bf16.mxu0 0
      %1416 = vmatmul.mubr.bf16.gmra.mrb[0].mxu0 %v1275
      %v1417 = vpop.f32.mrb[0].mxu0
      %v1418 = vadd.f32 0.0, %v1417
      %v1419 = vpop.f32.mrb[0].mxu0
      %v1420 = vpop.f32.mrb[0].mxu0
      %v1421 = vadd.f32 0.0, %v1420
      %v1422 = vpop.f32.mrb[0].mxu0
      %1423 = vmatprep.mubr.bf16.mxu0 0
      %1424 = vmatmul.mubr.bf16.gmra.mrb[0].mxu0 %v1276
      %v1425 = vpop.f32.mrb[0].mxu0
      %v1426 = vadd.f32 0.0, %v1425
      %v1427 = vpop.f32.mrb[0].mxu0
      %v1428 = vpop.f32.mrb[0].mxu0
      %v1429 = vadd.f32 0.0, %v1428
      %v1430 = vpop.f32.mrb[0].mxu0
      %1431 = vmatprep.mubr.bf16.mxu0 0
      %1432 = vmatmul.mubr.bf16.gmra.mrb[0].mxu0 %v1277
      %v1433 = vpop.f32.mrb[0].mxu0
      %v1434 = vadd.f32 0.0, %v1433
      %v1435 = vpop.f32.mrb[0].mxu0
      %v1436 = vpop.f32.mrb[0].mxu0
      %v1437 = vadd.f32 0.0, %v1436
      %v1438 = vpop.f32.mrb[0].mxu0
      %1439 = vmatprep.mubr.bf16.mxu0 0
      %1440 = vmatmul.mubr.bf16.gmra.mrb[0].mxu0 %v1278
      %v1441 = vpop.f32.mrb[0].mxu0
      %v1442 = vadd.f32 0.0, %v1441
      %v1443 = vpop.f32.mrb[0].mxu0
      %v1444 = vpop.f32.mrb[0].mxu0
      %v1445 = vadd.f32 0.0, %v1444
      %v1446 = vpop.f32.mrb[0].mxu0
      %1447 = vmatprep.mubr.bf16.mxu0 0
      %1448 = vmatmul.mubr.bf16.gmra.mrb[0].mxu0 %v1279
      %v1449 = vpop.f32.mrb[0].mxu0
      %v1450 = vadd.f32 0.0, %v1449
      %v1451 = vpop.f32.mrb[0].mxu0
      %v1452 = vpop.f32.mrb[0].mxu0
      %v1453 = vadd.f32 0.0, %v1452
      %v1454 = vpop.f32.mrb[0].mxu0
      %1455 = vmatprep.mubr.bf16.mxu0 0
      %1456 = vmatmul.mubr.bf16.gmra.mrb[0].mxu0 %v1280
      %v1457 = vpop.f32.mrb[0].mxu0
      %v1458 = vadd.f32 0.0, %v1457
      %v1459 = vpop.f32.mrb[0].mxu0
      %v1460 = vpop.f32.mrb[0].mxu0
      %v1461 = vadd.f32 0.0, %v1460
      %v1462 = vpop.f32.mrb[0].mxu0
      %1463 = vmatprep.mubr.bf16.mxu0 0
      %1464 = vmatmul.mubr.bf16.gmra.mrb[0].mxu0 %v1281
      %v1465 = vpop.f32.mrb[0].mxu0
      %v1466 = vadd.f32 0.0, %v1465
      %v1467 = vpop.f32.mrb[0].mxu0
      %v1468 = vpop.f32.mrb[0].mxu0
      %v1469 = vadd.f32 0.0, %v1468
      %v1470 = vpop.f32.mrb[0].mxu0
      %1471 = vmatprep.mubr.bf16.mxu0 0
      %1472 = vmatmul.mubr.bf16.gmra.mrb[0].mxu0 %v1282
      %v1473 = vpop.f32.mrb[0].mxu0
      %v1474 = vadd.f32 0.0, %v1473
      %v1475 = vpop.f32.mrb[0].mxu0
      %v1476 = vpop.f32.mrb[0].mxu0
      %v1477 = vadd.f32 0.0, %v1476
      %v1478 = vpop.f32.mrb[0].mxu0
      %1479 = vmatprep.mubr.bf16.mxu0 0
      %1480 = vmatmul.mubr.bf16.gmra.mrb[0].mxu0 %v1283
      %v1481 = vpop.f32.mrb[0].mxu0
      %v1482 = vadd.f32 0.0, %v1481
      %v1483 = vpop.f32.mrb[0].mxu0
      %v1484 = vpop.f32.mrb[0].mxu0
      %v1485 = vadd.f32 0.0, %v1484
      %v1486 = vpop.f32.mrb[0].mxu0
      %1487 = vmatprep.mubr.bf16.mxu0 0
      %1488 = vmatmul.mubr.bf16.gmra.mrb[0].mxu0 %v1284
      %v1489 = vpop.f32.mrb[0].mxu0
      %v1490 = vadd.f32 0.0, %v1489
      %v1491 = vpop.f32.mrb[0].mxu0
      %v1492 = vpop.f32.mrb[0].mxu0
      %v1493 = vadd.f32 0.0, %v1492
      %v1494 = vpop.f32.mrb[0].mxu0
      %1495 = vmatprep.mubr.bf16.mxu0 0
      %1496 = vmatmul.mubr.bf16.gmra.mrb[0].mxu0 %v1285
      %v1497 = vpop.f32.mrb[0].mxu0
      %v1498 = vadd.f32 0.0, %v1497
      %v1499 = vpop.f32.mrb[0].mxu0
      %v1500 = vpop.f32.mrb[0].mxu0
      %v1501 = vadd.f32 0.0, %v1500
      %v1502 = vpop.f32.mrb[0].mxu0
      %1503 = vmatprep.mubr.bf16.mxu0 0
      %1504 = vmatmul.mubr.bf16.gmra.mrb[0].mxu0 %v1286
      %v1505 = vpop.f32.mrb[0].mxu0
      %v1506 = vadd.f32 0.0, %v1505
      %v1507 = vpop.f32.mrb[0].mxu0
      %v1508 = vpop.f32.mrb[0].mxu0
      %v1509 = vadd.f32 0.0, %v1508
      %v1510 = vpop.f32.mrb[0].mxu0
      %1511 = vdwg.mxu0
      %v1544 = vunpack.c.l.b16 %v772
      %v1545 = vunpack.c.l.b16 %v773
      %v1546 = vunpack.c.l.b16 %v774
      %v1547 = vunpack.c.l.b16 %v775
      %v1548 = vunpack.c.l.b16 %v776
      %v1549 = vunpack.c.l.b16 %v777
      %v1550 = vunpack.c.l.b16 %v778
      %v1551 = vunpack.c.l.b16 %v779
      %v1552 = vunpack.c.l.b16 %v780
      %v1553 = vunpack.c.l.b16 %v781
      %v1554 = vunpack.c.l.b16 %v782
      %v1555 = vunpack.c.l.b16 %v783
      %v1556 = vunpack.c.l.b16 %v784
      %v1557 = vunpack.c.l.b16 %v785
      %v1558 = vunpack.c.l.b16 %v786
      %v1559 = vunpack.c.l.b16 %v787
      %v1560 = vunpack.c.l.b16 %v788
      %v1561 = vunpack.c.l.b16 %v789
      %v1562 = vunpack.c.l.b16 %v790
      %v1563 = vunpack.c.l.b16 %v791
      %v1564 = vunpack.c.l.b16 %v792
      %v1565 = vunpack.c.l.b16 %v793
      %v1566 = vunpack.c.l.b16 %v794
      %v1567 = vunpack.c.l.b16 %v795
      %v1568 = vunpack.c.l.b16 %v796
      %v1569 = vunpack.c.l.b16 %v797
      %v1570 = vunpack.c.l.b16 %v798
      %v1571 = vunpack.c.l.b16 %v799
      %v1572 = vunpack.c.l.b16 %v800
      %v1573 = vunpack.c.l.b16 %v801
      %v1574 = vunpack.c.l.b16 %v802
      %v1575 = vunpack.c.l.b16 %v803
      %v1576 = vpack.c.b16 %v1545, %v1544
      %v1577 = vpack.c.b16 %v1547, %v1546
      %v1578 = vpack.c.b16 %v1549, %v1548
      %v1579 = vpack.c.b16 %v1551, %v1550
      %v1580 = vpack.c.b16 %v1553, %v1552
      %v1581 = vpack.c.b16 %v1555, %v1554
      %v1582 = vpack.c.b16 %v1557, %v1556
      %v1583 = vpack.c.b16 %v1559, %v1558
      %v1584 = vpack.c.b16 %v1561, %v1560
      %v1585 = vpack.c.b16 %v1563, %v1562
      %v1586 = vpack.c.b16 %v1565, %v1564
      %v1587 = vpack.c.b16 %v1567, %v1566
      %v1588 = vpack.c.b16 %v1569, %v1568
      %v1589 = vpack.c.b16 %v1571, %v1570
      %v1590 = vpack.c.b16 %v1573, %v1572
      %v1591 = vpack.c.b16 %v1575, %v1574
      %v1624 = vunpack.c.l.b16 %v804
      %v1625 = vunpack.c.l.b16 %v805
      %v1626 = vunpack.c.l.b16 %v806
      %v1627 = vunpack.c.l.b16 %v807
      %v1628 = vunpack.c.l.b16 %v808
      %v1629 = vunpack.c.l.b16 %v809
      %v1630 = vunpack.c.l.b16 %v810
      %v1631 = vunpack.c.l.b16 %v811
      %v1632 = vunpack.c.l.b16 %v812
      %v1633 = vunpack.c.l.b16 %v813
      %v1634 = vunpack.c.l.b16 %v814
      %v1635 = vunpack.c.l.b16 %v815
      %v1636 = vunpack.c.l.b16 %v816
      %v1637 = vunpack.c.l.b16 %v817
      %v1638 = vunpack.c.l.b16 %v818
      %v1639 = vunpack.c.l.b16 %v819
      %v1640 = vpack.c.b16 %v1625, %v1624
      %v1641 = vpack.c.b16 %v1627, %v1626
      %v1642 = vpack.c.b16 %v1629, %v1628
      %v1643 = vpack.c.b16 %v1631, %v1630
      %v1644 = vpack.c.b16 %v1633, %v1632
      %v1645 = vpack.c.b16 %v1635, %v1634
      %v1646 = vpack.c.b16 %v1637, %v1636
      %v1647 = vpack.c.b16 %v1639, %v1638
      %1656 = vmatprep.subr.bf16.mxu0 0
      %1657 = vmatpush1.bf16.msra.mxu0 %v1640
      %1658 = vmatprep.subr.bf16.mxu0 0
      %1659 = vmatpush1.bf16.msra.mxu0 %v1641
      %1660 = vmatprep.subr.bf16.mxu0 0
      %1661 = vmatpush1.bf16.msra.mxu0 %v1642
      %1662 = vmatprep.subr.bf16.mxu0 0
      %1663 = vmatpush1.bf16.msra.mxu0 %v1643
      %1664 = vmatprep.subr.bf16.mxu0 0
      %1665 = vmatpush1.bf16.msra.mxu0 %v1644
      %1666 = vmatprep.subr.bf16.mxu0 0
      %1667 = vmatpush1.bf16.msra.mxu0 %v1645
      %1668 = vmatprep.subr.bf16.mxu0 0
      %1669 = vmatpush1.bf16.msra.mxu0 %v1646
      %1670 = vmatprep.subr.bf16.mxu0 0
      %1671 = vmatpush1.bf16.msra.mxu0 %v1647
      %1672 = vmatprep.subr.bf16.mxu0 0
      %1673 = vmatpush1.bf16.msra.mxu0 0
      %1674 = vmatprep.subr.bf16.mxu0 0
      %1675 = vmatpush1.bf16.msra.mxu0 0
      %1676 = vmatprep.subr.bf16.mxu0 0
      %1677 = vmatpush1.bf16.msra.mxu0 0
      %1678 = vmatprep.subr.bf16.mxu0 0
      %1679 = vmatpush1.bf16.msra.mxu0 0
      %1680 = vmatprep.subr.bf16.mxu0 0
      %1681 = vmatpush1.bf16.msra.mxu0 0
      %1682 = vmatprep.subr.bf16.mxu0 0
      %1683 = vmatpush1.bf16.msra.mxu0 0
      %1684 = vmatprep.subr.bf16.mxu0 0
      %1685 = vmatpush1.bf16.msra.mxu0 0
      %1686 = vmatprep.subr.bf16.mxu0 0
      %1687 = vmatpush1.bf16.msra.mxu0 0
      %1688 = vmatprep.mubr.bf16.mxu0 0
      %1689 = vmatmul.mubr.bf16.gmra.mrb[0].mxu0 %v1576
      %v1690 = vpop.f32.mrb[0].mxu0
      %v1691 = vadd.f32 %v1386, %v1690
      %v1692 = vpop.f32.mrb[0].mxu0
      %v1693 = vpop.f32.mrb[0].mxu0
      %v1694 = vadd.f32 %v1389, %v1693
      %v1695 = vpop.f32.mrb[0].mxu0
      %1696 = vmatprep.mubr.bf16.mxu0 0
      %1697 = vmatmul.mubr.bf16.gmra.mrb[0].mxu0 %v1577
      %v1698 = vpop.f32.mrb[0].mxu0
      %v1699 = vadd.f32 %v1394, %v1698
      %v1700 = vpop.f32.mrb[0].mxu0
      %v1701 = vpop.f32.mrb[0].mxu0
      %v1702 = vadd.f32 %v1397, %v1701
      %v1703 = vpop.f32.mrb[0].mxu0
      %1704 = vmatprep.mubr.bf16.mxu0 0
      %1705 = vmatmul.mubr.bf16.gmra.mrb[0].mxu0 %v1578
      %v1706 = vpop.f32.mrb[0].mxu0
      %v1707 = vadd.f32 %v1402, %v1706
      %v1708 = vpop.f32.mrb[0].mxu0
      %v1709 = vpop.f32.mrb[0].mxu0
      %v1710 = vadd.f32 %v1405, %v1709
      %v1711 = vpop.f32.mrb[0].mxu0
      %1712 = vmatprep.mubr.bf16.mxu0 0
      %1713 = vmatmul.mubr.bf16.gmra.mrb[0].mxu0 %v1579
      %v1714 = vpop.f32.mrb[0].mxu0
      %v1715 = vadd.f32 %v1410, %v1714
      %v1716 = vpop.f32.mrb[0].mxu0
      %v1717 = vpop.f32.mrb[0].mxu0
      %v1718 = vadd.f32 %v1413, %v1717
      %v1719 = vpop.f32.mrb[0].mxu0
      %1720 = vmatprep.mubr.bf16.mxu0 0
      %1721 = vmatmul.mubr.bf16.gmra.mrb[0].mxu0 %v1580
      %v1722 = vpop.f32.mrb[0].mxu0
      %v1723 = vadd.f32 %v1418, %v1722
      %v1724 = vpop.f32.mrb[0].mxu0
      %v1725 = vpop.f32.mrb[0].mxu0
      %v1726 = vadd.f32 %v1421, %v1725
      %v1727 = vpop.f32.mrb[0].mxu0
      %1728 = vmatprep.mubr.bf16.mxu0 0
      %1729 = vmatmul.mubr.bf16.gmra.mrb[0].mxu0 %v1581
      %v1730 = vpop.f32.mrb[0].mxu0
      %v1731 = vadd.f32 %v1426, %v1730
      %v1732 = vpop.f32.mrb[0].mxu0
      %v1733 = vpop.f32.mrb[0].mxu0
      %v1734 = vadd.f32 %v1429, %v1733
      %v1735 = vpop.f32.mrb[0].mxu0
      %1736 = vmatprep.mubr.bf16.mxu0 0
      %1737 = vmatmul.mubr.bf16.gmra.mrb[0].mxu0 %v1582
      %v1738 = vpop.f32.mrb[0].mxu0
      %v1739 = vadd.f32 %v1434, %v1738
      %v1740 = vpop.f32.mrb[0].mxu0
      %v1741 = vpop.f32.mrb[0].mxu0
      %v1742 = vadd.f32 %v1437, %v1741
      %v1743 = vpop.f32.mrb[0].mxu0
      %1744 = vmatprep.mubr.bf16.mxu0 0
      %1745 = vmatmul.mubr.bf16.gmra.mrb[0].mxu0 %v1583
      %v1746 = vpop.f32.mrb[0].mxu0
      %v1747 = vadd.f32 %v1442, %v1746
      %v1748 = vpop.f32.mrb[0].mxu0
      %v1749 = vpop.f32.mrb[0].mxu0
      %v1750 = vadd.f32 %v1445, %v1749
      %v1751 = vpop.f32.mrb[0].mxu0
      %1752 = vmatprep.mubr.bf16.mxu0 0
      %1753 = vmatmul.mubr.bf16.gmra.mrb[0].mxu0 %v1584
      %v1754 = vpop.f32.mrb[0].mxu0
      %v1755 = vadd.f32 %v1450, %v1754
      %v1756 = vpop.f32.mrb[0].mxu0
      %v1757 = vpop.f32.mrb[0].mxu0
      %v1758 = vadd.f32 %v1453, %v1757
      %v1759 = vpop.f32.mrb[0].mxu0
      %1760 = vmatprep.mubr.bf16.mxu0 0
      %1761 = vmatmul.mubr.bf16.gmra.mrb[0].mxu0 %v1585
      %v1762 = vpop.f32.mrb[0].mxu0
      %v1763 = vadd.f32 %v1458, %v1762
      %v1764 = vpop.f32.mrb[0].mxu0
      %v1765 = vpop.f32.mrb[0].mxu0
      %v1766 = vadd.f32 %v1461, %v1765
      %v1767 = vpop.f32.mrb[0].mxu0
      %1768 = vmatprep.mubr.bf16.mxu0 0
      %1769 = vmatmul.mubr.bf16.gmra.mrb[0].mxu0 %v1586
      %v1770 = vpop.f32.mrb[0].mxu0
      %v1771 = vadd.f32 %v1466, %v1770
      %v1772 = vpop.f32.mrb[0].mxu0
      %v1773 = vpop.f32.mrb[0].mxu0
      %v1774 = vadd.f32 %v1469, %v1773
      %v1775 = vpop.f32.mrb[0].mxu0
      %1776 = vmatprep.mubr.bf16.mxu0 0
      %1777 = vmatmul.mubr.bf16.gmra.mrb[0].mxu0 %v1587
      %v1778 = vpop.f32.mrb[0].mxu0
      %v1779 = vadd.f32 %v1474, %v1778
      %v1780 = vpop.f32.mrb[0].mxu0
      %v1781 = vpop.f32.mrb[0].mxu0
      %v1782 = vadd.f32 %v1477, %v1781
      %v1783 = vpop.f32.mrb[0].mxu0
      %1784 = vmatprep.mubr.bf16.mxu0 0
      %1785 = vmatmul.mubr.bf16.gmra.mrb[0].mxu0 %v1588
      %v1786 = vpop.f32.mrb[0].mxu0
      %v1787 = vadd.f32 %v1482, %v1786
      %v1788 = vpop.f32.mrb[0].mxu0
      %v1789 = vpop.f32.mrb[0].mxu0
      %v1790 = vadd.f32 %v1485, %v1789
      %v1791 = vpop.f32.mrb[0].mxu0
      %1792 = vmatprep.mubr.bf16.mxu0 0
      %1793 = vmatmul.mubr.bf16.gmra.mrb[0].mxu0 %v1589
      %v1794 = vpop.f32.mrb[0].mxu0
      %v1795 = vadd.f32 %v1490, %v1794
      %v1796 = vpop.f32.mrb[0].mxu0
      %v1797 = vpop.f32.mrb[0].mxu0
      %v1798 = vadd.f32 %v1493, %v1797
      %v1799 = vpop.f32.mrb[0].mxu0
      %1800 = vmatprep.mubr.bf16.mxu0 0
      %1801 = vmatmul.mubr.bf16.gmra.mrb[0].mxu0 %v1590
      %v1802 = vpop.f32.mrb[0].mxu0
      %v1803 = vadd.f32 %v1498, %v1802
      %v1804 = vpop.f32.mrb[0].mxu0
      %v1805 = vpop.f32.mrb[0].mxu0
      %v1806 = vadd.f32 %v1501, %v1805
      %v1807 = vpop.f32.mrb[0].mxu0
      %1808 = vmatprep.mubr.bf16.mxu0 0
      %1809 = vmatmul.mubr.bf16.gmra.mrb[0].mxu0 %v1591
      %v1810 = vpop.f32.mrb[0].mxu0
      %v1811 = vadd.f32 %v1506, %v1810
      %v1812 = vpop.f32.mrb[0].mxu0
      %v1813 = vpop.f32.mrb[0].mxu0
      %v1814 = vadd.f32 %v1509, %v1813
      %v1815 = vpop.f32.mrb[0].mxu0
      %1816 = vdwg.mxu0
      %v1817 = vld [vmem:[#allocation2] sm:$0xe]
      %v1818 = vld [vmem:[#allocation2 + $0xc] sm:$0xe]
      %v1819 = vld [vmem:[#allocation2 + $0x18] sm:$0xe]
      %v1820 = vld [vmem:[#allocation2 + $0x24] sm:$0xe]
      %v1821 = vld [vmem:[#allocation2 + $0x30] sm:$0xe]
      %v1822 = vld [vmem:[#allocation2 + $0x3c] sm:$0xe]
      %v1823 = vld [vmem:[#allocation2 + $0x48] sm:$0xe]
      %v1824 = vld [vmem:[#allocation2 + $0x54] sm:$0xe]
      %v1825 = vld [vmem:[#allocation2 + $0x60] sm:$0xe]
      %v1826 = vld [vmem:[#allocation2 + $0x6c] sm:$0xe]
      %v1827 = vld [vmem:[#allocation2 + $0x78] sm:$0xe]
      %v1828 = vld [vmem:[#allocation2 + $0x84] sm:$0xe]
      %v1829 = vld [vmem:[#allocation2 + $0x90] sm:$0xe]
      %v1830 = vld [vmem:[#allocation2 + $0x9c] sm:$0xe]
      %v1831 = vld [vmem:[#allocation2 + $0xa8] sm:$0xe]
      %v1832 = vld [vmem:[#allocation2 + $0xb4] sm:$0xe]
      %v1833 = vld [vmem:[%s1 + $0x80] sm:$0xf]
      %v1834 = vld [vmem:[%s1 + $0x84] sm:$0xf]
      %v1835 = vld [vmem:[%s1 + $0x88] sm:$0xf]
      %v1836 = vld [vmem:[%s1 + $0x8c] sm:$0xf]
      %v1837 = vld [vmem:[%s1 + $0x90] sm:$0xf]
      %v1838 = vld [vmem:[%s1 + $0x94] sm:$0xf]
      %v1839 = vld [vmem:[%s1 + $0x98] sm:$0xf]
      %v1840 = vld [vmem:[%s1 + $0x9c] sm:$0xf]
      %v1841 = vld [vmem:[%s1 + $0xa0] sm:$0xf]
      %v1842 = vld [vmem:[%s1 + $0xa4] sm:$0xf]
      %v1843 = vld [vmem:[%s1 + $0xa8] sm:$0xf]
      %v1844 = vld [vmem:[%s1 + $0xac] sm:$0xf]
      %v1845 = vld [vmem:[%s1 + $0xb0] sm:$0xf]
      %v1846 = vld [vmem:[%s1 + $0xb4] sm:$0xf]
      %v1847 = vld [vmem:[%s1 + $0xb8] sm:$0xf]
      %v1848 = vld [vmem:[%s1 + $0xbc] sm:$0xf]
      %vm1881 = vcmask 1042432
      %vm1882 = vcmask 1046532
      %vm1883 = vmor %vm1881, %vm1882
      %v1884 = vrot.slane %v1817, 5
      %v1885 = vrot.slane %v1884, 4
      %v1886 = vrot.slane %v773, 5
      %v1887 = vsel %vm1883, %v1885, %v1886
      %v1888 = vrot.slane %v1886, 4
      %v1889 = vrot.slane %v820, 5
      %v1890 = vsel %vm1883, %v1888, %v1889
      %v1891 = vrot.slane %v1818, 5
      %v1892 = vrot.slane %v1891, 4
      %v1893 = vrot.slane %v775, 5
      %v1894 = vsel %vm1883, %v1892, %v1893
      %v1895 = vrot.slane %v1893, 4
      %v1896 = vrot.slane %v821, 5
      %v1897 = vsel %vm1883, %v1895, %v1896
      %v1898 = vrot.slane %v1819, 5
      %v1899 = vrot.slane %v1898, 4
      %v1900 = vrot.slane %v777, 5
      %v1901 = vsel %vm1883, %v1899, %v1900
      %v1902 = vrot.slane %v1900, 4
      %v1903 = vrot.slane %v822, 5
      %v1904 = vsel %vm1883, %v1902, %v1903
      %v1905 = vrot.slane %v1820, 5
      %v1906 = vrot.slane %v1905, 4
      %v1907 = vrot.slane %v779, 5
      %v1908 = vsel %vm1883, %v1906, %v1907
      %v1909 = vrot.slane %v1907, 4
      %v1910 = vrot.slane %v823, 5
      %v1911 = vsel %vm1883, %v1909, %v1910
      %v1912 = vrot.slane %v1821, 5
      %v1913 = vrot.slane %v1912, 4
      %v1914 = vrot.slane %v781, 5
      %v1915 = vsel %vm1883, %v1913, %v1914
      %v1916 = vrot.slane %v1914, 4
      %v1917 = vrot.slane %v824, 5
      %v1918 = vsel %vm1883, %v1916, %v1917
      %v1919 = vrot.slane %v1822, 5
      %v1920 = vrot.slane %v1919, 4
      %v1921 = vrot.slane %v783, 5
      %v1922 = vsel %vm1883, %v1920, %v1921
      %v1923 = vrot.slane %v1921, 4
      %v1924 = vrot.slane %v825, 5
      %v1925 = vsel %vm1883, %v1923, %v1924
      %v1926 = vrot.slane %v1823, 5
      %v1927 = vrot.slane %v1926, 4
      %v1928 = vrot.slane %v785, 5
      %v1929 = vsel %vm1883, %v1927, %v1928
      %v1930 = vrot.slane %v1928, 4
      %v1931 = vrot.slane %v826, 5
      %v1932 = vsel %vm1883, %v1930, %v1931
      %v1933 = vrot.slane %v1824, 5
      %v1934 = vrot.slane %v1933, 4
      %v1935 = vrot.slane %v787, 5
      %v1936 = vsel %vm1883, %v1934, %v1935
      %v1937 = vrot.slane %v1935, 4
      %v1938 = vrot.slane %v827, 5
      %v1939 = vsel %vm1883, %v1937, %v1938
      %v1940 = vrot.slane %v1825, 5
      %v1941 = vrot.slane %v1940, 4
      %v1942 = vrot.slane %v789, 5
      %v1943 = vsel %vm1883, %v1941, %v1942
      %v1944 = vrot.slane %v1942, 4
      %v1945 = vrot.slane %v828, 5
      %v1946 = vsel %vm1883, %v1944, %v1945
      %v1947 = vrot.slane %v1826, 5
      %v1948 = vrot.slane %v1947, 4
      %v1949 = vrot.slane %v791, 5
      %v1950 = vsel %vm1883, %v1948, %v1949
      %v1951 = vrot.slane %v1949, 4
      %v1952 = vrot.slane %v829, 5
      %v1953 = vsel %vm1883, %v1951, %v1952
      %v1954 = vrot.slane %v1827, 5
      %v1955 = vrot.slane %v1954, 4
      %v1956 = vrot.slane %v793, 5
      %v1957 = vsel %vm1883, %v1955, %v1956
      %v1958 = vrot.slane %v1956, 4
      %v1959 = vrot.slane %v830, 5
      %v1960 = vsel %vm1883, %v1958, %v1959
      %v1961 = vrot.slane %v1828, 5
      %v1962 = vrot.slane %v1961, 4
      %v1963 = vrot.slane %v795, 5
      %v1964 = vsel %vm1883, %v1962, %v1963
      %v1965 = vrot.slane %v1963, 4
      %v1966 = vrot.slane %v831, 5
      %v1967 = vsel %vm1883, %v1965, %v1966
      %v1968 = vrot.slane %v1829, 5
      %v1969 = vrot.slane %v1968, 4
      %v1970 = vrot.slane %v797, 5
      %v1971 = vsel %vm1883, %v1969, %v1970
      %v1972 = vrot.slane %v1970, 4
      %v1973 = vrot.slane %v832, 5
      %v1974 = vsel %vm1883, %v1972, %v1973
      %v1975 = vrot.slane %v1830, 5
      %v1976 = vrot.slane %v1975, 4
      %v1977 = vrot.slane %v799, 5
      %v1978 = vsel %vm1883, %v1976, %v1977
      %v1979 = vrot.slane %v1977, 4
      %v1980 = vrot.slane %v833, 5
      %v1981 = vsel %vm1883, %v1979, %v1980
      %v1982 = vrot.slane %v1831, 5
      %v1983 = vrot.slane %v1982, 4
      %v1984 = vrot.slane %v801, 5
      %v1985 = vsel %vm1883, %v1983, %v1984
      %v1986 = vrot.slane %v1984, 4
      %v1987 = vrot.slane %v834, 5
      %v1988 = vsel %vm1883, %v1986, %v1987
      %v1989 = vrot.slane %v1832, 5
      %v1990 = vrot.slane %v1989, 4
      %v1991 = vrot.slane %v803, 5
      %v1992 = vsel %vm1883, %v1990, %v1991
      %v1993 = vrot.slane %v1991, 4
      %v1994 = vrot.slane %v835, 5
      %v1995 = vsel %vm1883, %v1993, %v1994
      %v1996 = vunpack.c.l.b16 %v1887
      %v1997 = vunpack.c.l.b16 %v1890
      %v1998 = vunpack.c.l.b16 %v1894
      %v1999 = vunpack.c.l.b16 %v1897
      %v2000 = vunpack.c.l.b16 %v1901
      %v2001 = vunpack.c.l.b16 %v1904
      %v2002 = vunpack.c.l.b16 %v1908
      %v2003 = vunpack.c.l.b16 %v1911
      %v2004 = vunpack.c.l.b16 %v1915
      %v2005 = vunpack.c.l.b16 %v1918
      %v2006 = vunpack.c.l.b16 %v1922
      %v2007 = vunpack.c.l.b16 %v1925
      %v2008 = vunpack.c.l.b16 %v1929
      %v2009 = vunpack.c.l.b16 %v1932
      %v2010 = vunpack.c.l.b16 %v1936
      %v2011 = vunpack.c.l.b16 %v1939
      %v2012 = vunpack.c.l.b16 %v1943
      %v2013 = vunpack.c.l.b16 %v1946
      %v2014 = vunpack.c.l.b16 %v1950
      %v2015 = vunpack.c.l.b16 %v1953
      %v2016 = vunpack.c.l.b16 %v1957
      %v2017 = vunpack.c.l.b16 %v1960
      %v2018 = vunpack.c.l.b16 %v1964
      %v2019 = vunpack.c.l.b16 %v1967
      %v2020 = vunpack.c.l.b16 %v1971
      %v2021 = vunpack.c.l.b16 %v1974
      %v2022 = vunpack.c.l.b16 %v1978
      %v2023 = vunpack.c.l.b16 %v1981
      %v2024 = vunpack.c.l.b16 %v1985
      %v2025 = vunpack.c.l.b16 %v1988
      %v2026 = vunpack.c.l.b16 %v1992
      %v2027 = vunpack.c.l.b16 %v1995
      %v2028 = vpack.c.b16 %v1997, %v1996
      %v2029 = vpack.c.b16 %v1999, %v1998
      %v2030 = vpack.c.b16 %v2001, %v2000
      %v2031 = vpack.c.b16 %v2003, %v2002
      %v2032 = vpack.c.b16 %v2005, %v2004
      %v2033 = vpack.c.b16 %v2007, %v2006
      %v2034 = vpack.c.b16 %v2009, %v2008
      %v2035 = vpack.c.b16 %v2011, %v2010
      %v2036 = vpack.c.b16 %v2013, %v2012
      %v2037 = vpack.c.b16 %v2015, %v2014
      %v2038 = vpack.c.b16 %v2017, %v2016
      %v2039 = vpack.c.b16 %v2019, %v2018
      %v2040 = vpack.c.b16 %v2021, %v2020
      %v2041 = vpack.c.b16 %v2023, %v2022
      %v2042 = vpack.c.b16 %v2025, %v2024
      %v2043 = vpack.c.b16 %v2027, %v2026
      %v2076 = vunpack.c.l.b16 %v1833
      %v2077 = vunpack.c.l.b16 %v1834
      %v2078 = vunpack.c.l.b16 %v1835
      %v2079 = vunpack.c.l.b16 %v1836
      %v2080 = vunpack.c.l.b16 %v1837
      %v2081 = vunpack.c.l.b16 %v1838
      %v2082 = vunpack.c.l.b16 %v1839
      %v2083 = vunpack.c.l.b16 %v1840
      %v2084 = vunpack.c.l.b16 %v1841
      %v2085 = vunpack.c.l.b16 %v1842
      %v2086 = vunpack.c.l.b16 %v1843
      %v2087 = vunpack.c.l.b16 %v1844
      %v2088 = vunpack.c.l.b16 %v1845
      %v2089 = vunpack.c.l.b16 %v1846
      %v2090 = vunpack.c.l.b16 %v1847
      %v2091 = vunpack.c.l.b16 %v1848
      %v2092 = vpack.c.b16 %v2077, %v2076
      %v2093 = vpack.c.b16 %v2079, %v2078
      %v2094 = vpack.c.b16 %v2081, %v2080
      %v2095 = vpack.c.b16 %v2083, %v2082
      %v2096 = vpack.c.b16 %v2085, %v2084
      %v2097 = vpack.c.b16 %v2087, %v2086
      %v2098 = vpack.c.b16 %v2089, %v2088
      %v2099 = vpack.c.b16 %v2091, %v2090
      %2108 = vmatprep.subr.bf16.mxu0 0
      %2109 = vmatpush1.bf16.msra.mxu0 %v2092
      %2110 = vmatprep.subr.bf16.mxu0 0
      %2111 = vmatpush1.bf16.msra.mxu0 %v2093
      %2112 = vmatprep.subr.bf16.mxu0 0
      %2113 = vmatpush1.bf16.msra.mxu0 %v2094
      %2114 = vmatprep.subr.bf16.mxu0 0
      %2115 = vmatpush1.bf16.msra.mxu0 %v2095
      %2116 = vmatprep.subr.bf16.mxu0 0
      %2117 = vmatpush1.bf16.msra.mxu0 %v2096
      %2118 = vmatprep.subr.bf16.mxu0 0
      %2119 = vmatpush1.bf16.msra.mxu0 %v2097
      %2120 = vmatprep.subr.bf16.mxu0 0
      %2121 = vmatpush1.bf16.msra.mxu0 %v2098
      %2122 = vmatprep.subr.bf16.mxu0 0
      %2123 = vmatpush1.bf16.msra.mxu0 %v2099
      %2124 = vmatprep.subr.bf16.mxu0 0
      %2125 = vmatpush1.bf16.msra.mxu0 0
      %2126 = vmatprep.subr.bf16.mxu0 0
      %2127 = vmatpush1.bf16.msra.mxu0 0
      %2128 = vmatprep.subr.bf16.mxu0 0
      %2129 = vmatpush1.bf16.msra.mxu0 0
      %2130 = vmatprep.subr.bf16.mxu0 0
      %2131 = vmatpush1.bf16.msra.mxu0 0
      %2132 = vmatprep.subr.bf16.mxu0 0
      %2133 = vmatpush1.bf16.msra.mxu0 0
      %2134 = vmatprep.subr.bf16.mxu0 0
      %2135 = vmatpush1.bf16.msra.mxu0 0
      %2136 = vmatprep.subr.bf16.mxu0 0
      %2137 = vmatpush1.bf16.msra.mxu0 0
      %2138 = vmatprep.subr.bf16.mxu0 0
      %2139 = vmatpush1.bf16.msra.mxu0 0
      %2140 = vmatprep.mubr.bf16.mxu0 0
      %2141 = vmatmul.mubr.bf16.gmra.mrb[0].mxu0 %v2028
      %v2142 = vpop.f32.mrb[0].mxu0
      %v2143 = vadd.f32 0.0, %v2142
      %v2144 = vpop.f32.mrb[0].mxu0
      %v2145 = vpop.f32.mrb[0].mxu0
      %v2146 = vadd.f32 0.0, %v2145
      %v2147 = vpop.f32.mrb[0].mxu0
      %2148 = vmatprep.mubr.bf16.mxu0 0
      %2149 = vmatmul.mubr.bf16.gmra.mrb[0].mxu0 %v2029
      %v2150 = vpop.f32.mrb[0].mxu0
      %v2151 = vadd.f32 0.0, %v2150
      %v2152 = vpop.f32.mrb[0].mxu0
      %v2153 = vpop.f32.mrb[0].mxu0
      %v2154 = vadd.f32 0.0, %v2153
      %v2155 = vpop.f32.mrb[0].mxu0
      %2156 = vmatprep.mubr.bf16.mxu0 0
      %2157 = vmatmul.mubr.bf16.gmra.mrb[0].mxu0 %v2030
      %v2158 = vpop.f32.mrb[0].mxu0
      %v2159 = vadd.f32 0.0, %v2158
      %v2160 = vpop.f32.mrb[0].mxu0
      %v2161 = vpop.f32.mrb[0].mxu0
      %v2162 = vadd.f32 0.0, %v2161
      %v2163 = vpop.f32.mrb[0].mxu0
      %2164 = vmatprep.mubr.bf16.mxu0 0
      %2165 = vmatmul.mubr.bf16.gmra.mrb[0].mxu0 %v2031
      %v2166 = vpop.f32.mrb[0].mxu0
      %v2167 = vadd.f32 0.0, %v2166
      %v2168 = vpop.f32.mrb[0].mxu0
      %v2169 = vpop.f32.mrb[0].mxu0
      %v2170 = vadd.f32 0.0, %v2169
      %v2171 = vpop.f32.mrb[0].mxu0
      %2172 = vmatprep.mubr.bf16.mxu0 0
      %2173 = vmatmul.mubr.bf16.gmra.mrb[0].mxu0 %v2032
      %v2174 = vpop.f32.mrb[0].mxu0
      %v2175 = vadd.f32 0.0, %v2174
      %v2176 = vpop.f32.mrb[0].mxu0
      %v2177 = vpop.f32.mrb[0].mxu0
      %v2178 = vadd.f32 0.0, %v2177
      %v2179 = vpop.f32.mrb[0].mxu0
      %2180 = vmatprep.mubr.bf16.mxu0 0
      %2181 = vmatmul.mubr.bf16.gmra.mrb[0].mxu0 %v2033
      %v2182 = vpop.f32.mrb[0].mxu0
      %v2183 = vadd.f32 0.0, %v2182
      %v2184 = vpop.f32.mrb[0].mxu0
      %v2185 = vpop.f32.mrb[0].mxu0
      %v2186 = vadd.f32 0.0, %v2185
      %v2187 = vpop.f32.mrb[0].mxu0
      %2188 = vmatprep.mubr.bf16.mxu0 0
      %2189 = vmatmul.mubr.bf16.gmra.mrb[0].mxu0 %v2034
      %v2190 = vpop.f32.mrb[0].mxu0
      %v2191 = vadd.f32 0.0, %v2190
      %v2192 = vpop.f32.mrb[0].mxu0
      %v2193 = vpop.f32.mrb[0].mxu0
      %v2194 = vadd.f32 0.0, %v2193
      %v2195 = vpop.f32.mrb[0].mxu0
      %2196 = vmatprep.mubr.bf16.mxu0 0
      %2197 = vmatmul.mubr.bf16.gmra.mrb[0].mxu0 %v2035
      %v2198 = vpop.f32.mrb[0].mxu0
      %v2199 = vadd.f32 0.0, %v2198
      %v2200 = vpop.f32.mrb[0].mxu0
      %v2201 = vpop.f32.mrb[0].mxu0
      %v2202 = vadd.f32 0.0, %v2201
      %v2203 = vpop.f32.mrb[0].mxu0
      %2204 = vmatprep.mubr.bf16.mxu0 0
      %2205 = vmatmul.mubr.bf16.gmra.mrb[0].mxu0 %v2036
      %v2206 = vpop.f32.mrb[0].mxu0
      %v2207 = vadd.f32 0.0, %v2206
      %v2208 = vpop.f32.mrb[0].mxu0
      %v2209 = vpop.f32.mrb[0].mxu0
      %v2210 = vadd.f32 0.0, %v2209
      %v2211 = vpop.f32.mrb[0].mxu0
      %2212 = vmatprep.mubr.bf16.mxu0 0
      %2213 = vmatmul.mubr.bf16.gmra.mrb[0].mxu0 %v2037
      %v2214 = vpop.f32.mrb[0].mxu0
      %v2215 = vadd.f32 0.0, %v2214
      %v2216 = vpop.f32.mrb[0].mxu0
      %v2217 = vpop.f32.mrb[0].mxu0
      %v2218 = vadd.f32 0.0, %v2217
      %v2219 = vpop.f32.mrb[0].mxu0
      %2220 = vmatprep.mubr.bf16.mxu0 0
      %2221 = vmatmul.mubr.bf16.gmra.mrb[0].mxu0 %v2038
      %v2222 = vpop.f32.mrb[0].mxu0
      %v2223 = vadd.f32 0.0, %v2222
      %v2224 = vpop.f32.mrb[0].mxu0
      %v2225 = vpop.f32.mrb[0].mxu0
      %v2226 = vadd.f32 0.0, %v2225
      %v2227 = vpop.f32.mrb[0].mxu0
      %2228 = vmatprep.mubr.bf16.mxu0 0
      %2229 = vmatmul.mubr.bf16.gmra.mrb[0].mxu0 %v2039
      %v2230 = vpop.f32.mrb[0].mxu0
      %v2231 = vadd.f32 0.0, %v2230
      %v2232 = vpop.f32.mrb[0].mxu0
      %v2233 = vpop.f32.mrb[0].mxu0
      %v2234 = vadd.f32 0.0, %v2233
      %v2235 = vpop.f32.mrb[0].mxu0
      %2236 = vmatprep.mubr.bf16.mxu0 0
      %2237 = vmatmul.mubr.bf16.gmra.mrb[0].mxu0 %v2040
      %v2238 = vpop.f32.mrb[0].mxu0
      %v2239 = vadd.f32 0.0, %v2238
      %v2240 = vpop.f32.mrb[0].mxu0
      %v2241 = vpop.f32.mrb[0].mxu0
      %v2242 = vadd.f32 0.0, %v2241
      %v2243 = vpop.f32.mrb[0].mxu0
      %2244 = vmatprep.mubr.bf16.mxu0 0
      %2245 = vmatmul.mubr.bf16.gmra.mrb[0].mxu0 %v2041
      %v2246 = vpop.f32.mrb[0].mxu0
      %v2247 = vadd.f32 0.0, %v2246
      %v2248 = vpop.f32.mrb[0].mxu0
      %v2249 = vpop.f32.mrb[0].mxu0
      %v2250 = vadd.f32 0.0, %v2249
      %v2251 = vpop.f32.mrb[0].mxu0
      %2252 = vmatprep.mubr.bf16.mxu0 0
      %2253 = vmatmul.mubr.bf16.gmra.mrb[0].mxu0 %v2042
      %v2254 = vpop.f32.mrb[0].mxu0
      %v2255 = vadd.f32 0.0, %v2254
      %v2256 = vpop.f32.mrb[0].mxu0
      %v2257 = vpop.f32.mrb[0].mxu0
      %v2258 = vadd.f32 0.0, %v2257
      %v2259 = vpop.f32.mrb[0].mxu0
      %2260 = vmatprep.mubr.bf16.mxu0 0
      %2261 = vmatmul.mubr.bf16.gmra.mrb[0].mxu0 %v2043
      %v2262 = vpop.f32.mrb[0].mxu0
      %v2263 = vadd.f32 0.0, %v2262
      %v2264 = vpop.f32.mrb[0].mxu0
      %v2265 = vpop.f32.mrb[0].mxu0
      %v2266 = vadd.f32 0.0, %v2265
      %v2267 = vpop.f32.mrb[0].mxu0
      %2268 = vdwg.mxu0
      %v2269 = vadd.f32 %v1691, %v2143
      %v2270 = vadd.f32 %v1694, %v2146
      %v2271 = vadd.f32 %v1699, %v2151
      %v2272 = vadd.f32 %v1702, %v2154
      %v2273 = vadd.f32 %v1707, %v2159
      %v2274 = vadd.f32 %v1710, %v2162
      %v2275 = vadd.f32 %v1715, %v2167
      %v2276 = vadd.f32 %v1718, %v2170
      %v2277 = vadd.f32 %v1723, %v2175
      %v2278 = vadd.f32 %v1726, %v2178
      %v2279 = vadd.f32 %v1731, %v2183
      %v2280 = vadd.f32 %v1734, %v2186
      %v2281 = vadd.f32 %v1739, %v2191
      %v2282 = vadd.f32 %v1742, %v2194
      %v2283 = vadd.f32 %v1747, %v2199
      %v2284 = vadd.f32 %v1750, %v2202
      %v2285 = vadd.f32 %v1755, %v2207
      %v2286 = vadd.f32 %v1758, %v2210
      %v2287 = vadd.f32 %v1763, %v2215
      %v2288 = vadd.f32 %v1766, %v2218
      %v2289 = vadd.f32 %v1771, %v2223
      %v2290 = vadd.f32 %v1774, %v2226
      %v2291 = vadd.f32 %v1779, %v2231
      %v2292 = vadd.f32 %v1782, %v2234
      %v2293 = vadd.f32 %v1787, %v2239
      %v2294 = vadd.f32 %v1790, %v2242
      %v2295 = vadd.f32 %v1795, %v2247
      %v2296 = vadd.f32 %v1798, %v2250
      %v2297 = vadd.f32 %v1803, %v2255
      %v2298 = vadd.f32 %v1806, %v2258
      %v2299 = vadd.f32 %v1811, %v2263
      %v2300 = vadd.f32 %v1814, %v2266
      %v2301 = vld [vmem:[%s657] sm:$0xf]
      %v2302 = vld [vmem:[%s657 + $0x4] sm:$0xf]
      %v2303 = vld [vmem:[%s657 + $0xc] sm:$0xf]
      %v2304 = vld [vmem:[%s657 + $0x10] sm:$0xf]
      %v2305 = vld [vmem:[%s657 + $0x18] sm:$0xf]
      %v2306 = vld [vmem:[%s657 + $0x1c] sm:$0xf]
      %v2307 = vld [vmem:[%s657 + $0x24] sm:$0xf]
      %v2308 = vld [vmem:[%s657 + $0x28] sm:$0xf]
      %v2309 = vld [vmem:[%s657 + $0x30] sm:$0xf]
      %v2310 = vld [vmem:[%s657 + $0x34] sm:$0xf]
      %v2311 = vld [vmem:[%s657 + $0x3c] sm:$0xf]
      %v2312 = vld [vmem:[%s657 + $0x40] sm:$0xf]
      %v2313 = vld [vmem:[%s657 + $0x48] sm:$0xf]
      %v2314 = vld [vmem:[%s657 + $0x4c] sm:$0xf]
      %v2315 = vld [vmem:[%s657 + $0x54] sm:$0xf]
      %v2316 = vld [vmem:[%s657 + $0x58] sm:$0xf]
      %v2317 = vld [vmem:[%s657 + $0x60] sm:$0xf]
      %v2318 = vld [vmem:[%s657 + $0x64] sm:$0xf]
      %v2319 = vld [vmem:[%s657 + $0x6c] sm:$0xf]
      %v2320 = vld [vmem:[%s657 + $0x70] sm:$0xf]
      %v2321 = vld [vmem:[%s657 + $0x78] sm:$0xf]
      %v2322 = vld [vmem:[%s657 + $0x7c] sm:$0xf]
      %v2323 = vld [vmem:[%s657 + $0x84] sm:$0xf]
      %v2324 = vld [vmem:[%s657 + $0x88] sm:$0xf]
      %v2325 = vld [vmem:[%s657 + $0x90] sm:$0xf]
      %v2326 = vld [vmem:[%s657 + $0x94] sm:$0xf]
      %v2327 = vld [vmem:[%s657 + $0x9c] sm:$0xf]
      %v2328 = vld [vmem:[%s657 + $0xa0] sm:$0xf]
      %v2329 = vld [vmem:[%s657 + $0xa8] sm:$0xf]
      %v2330 = vld [vmem:[%s657 + $0xac] sm:$0xf]
      %v2331 = vld [vmem:[%s657 + $0xb4] sm:$0xf]
      %v2332 = vld [vmem:[%s657 + $0xb8] sm:$0xf]
      %v2333 = vld [vmem:[%s1 + $0xc0] sm:$0xf]
      %v2334 = vld [vmem:[%s1 + $0xc4] sm:$0xf]
      %v2335 = vld [vmem:[%s1 + $0xc8] sm:$0xf]
      %v2336 = vld [vmem:[%s1 + $0xcc] sm:$0xf]
      %v2337 = vld [vmem:[%s1 + $0xd0] sm:$0xf]
      %v2338 = vld [vmem:[%s1 + $0xd4] sm:$0xf]
      %v2339 = vld [vmem:[%s1 + $0xd8] sm:$0xf]
      %v2340 = vld [vmem:[%s1 + $0xdc] sm:$0xf]
      %v2341 = vld [vmem:[%s1 + $0xe0] sm:$0xf]
      %v2342 = vld [vmem:[%s1 + $0xe4] sm:$0xf]
      %v2343 = vld [vmem:[%s1 + $0xe8] sm:$0xf]
      %v2344 = vld [vmem:[%s1 + $0xec] sm:$0xf]
      %v2345 = vld [vmem:[%s1 + $0xf0] sm:$0xf]
      %v2346 = vld [vmem:[%s1 + $0xf4] sm:$0xf]
      %v2347 = vld [vmem:[%s1 + $0xf8] sm:$0xf]
      %v2348 = vld [vmem:[%s1 + $0xfc] sm:$0xf]
      %v2381 = vunpack.c.l.b16 %v2301
      %v2382 = vunpack.c.l.b16 %v2302
      %v2383 = vunpack.c.l.b16 %v2303
      %v2384 = vunpack.c.l.b16 %v2304
      %v2385 = vunpack.c.l.b16 %v2305
      %v2386 = vunpack.c.l.b16 %v2306
      %v2387 = vunpack.c.l.b16 %v2307
      %v2388 = vunpack.c.l.b16 %v2308
      %v2389 = vunpack.c.l.b16 %v2309
      %v2390 = vunpack.c.l.b16 %v2310
      %v2391 = vunpack.c.l.b16 %v2311
      %v2392 = vunpack.c.l.b16 %v2312
      %v2393 = vunpack.c.l.b16 %v2313
      %v2394 = vunpack.c.l.b16 %v2314
      %v2395 = vunpack.c.l.b16 %v2315
      %v2396 = vunpack.c.l.b16 %v2316
      %v2397 = vunpack.c.l.b16 %v2317
      %v2398 = vunpack.c.l.b16 %v2318
      %v2399 = vunpack.c.l.b16 %v2319
      %v2400 = vunpack.c.l.b16 %v2320
      %v2401 = vunpack.c.l.b16 %v2321
      %v2402 = vunpack.c.l.b16 %v2322
      %v2403 = vunpack.c.l.b16 %v2323
      %v2404 = vunpack.c.l.b16 %v2324
      %v2405 = vunpack.c.l.b16 %v2325
      %v2406 = vunpack.c.l.b16 %v2326
      %v2407 = vunpack.c.l.b16 %v2327
      %v2408 = vunpack.c.l.b16 %v2328
      %v2409 = vunpack.c.l.b16 %v2329
      %v2410 = vunpack.c.l.b16 %v2330
      %v2411 = vunpack.c.l.b16 %v2331
      %v2412 = vunpack.c.l.b16 %v2332
      %v2413 = vpack.c.b16 %v2382, %v2381
      %v2414 = vpack.c.b16 %v2384, %v2383
      %v2415 = vpack.c.b16 %v2386, %v2385
      %v2416 = vpack.c.b16 %v2388, %v2387
      %v2417 = vpack.c.b16 %v2390, %v2389
      %v2418 = vpack.c.b16 %v2392, %v2391
      %v2419 = vpack.c.b16 %v2394, %v2393
      %v2420 = vpack.c.b16 %v2396, %v2395
      %v2421 = vpack.c.b16 %v2398, %v2397
      %v2422 = vpack.c.b16 %v2400, %v2399
      %v2423 = vpack.c.b16 %v2402, %v2401
      %v2424 = vpack.c.b16 %v2404, %v2403
      %v2425 = vpack.c.b16 %v2406, %v2405
      %v2426 = vpack.c.b16 %v2408, %v2407
      %v2427 = vpack.c.b16 %v2410, %v2409
      %v2428 = vpack.c.b16 %v2412, %v2411
      %v2461 = vunpack.c.l.b16 %v2333
      %v2462 = vunpack.c.l.b16 %v2334
      %v2463 = vunpack.c.l.b16 %v2335
      %v2464 = vunpack.c.l.b16 %v2336
      %v2465 = vunpack.c.l.b16 %v2337
      %v2466 = vunpack.c.l.b16 %v2338
      %v2467 = vunpack.c.l.b16 %v2339
      %v2468 = vunpack.c.l.b16 %v2340
      %v2469 = vunpack.c.l.b16 %v2341
      %v2470 = vunpack.c.l.b16 %v2342
      %v2471 = vunpack.c.l.b16 %v2343
      %v2472 = vunpack.c.l.b16 %v2344
      %v2473 = vunpack.c.l.b16 %v2345
      %v2474 = vunpack.c.l.b16 %v2346
      %v2475 = vunpack.c.l.b16 %v2347
      %v2476 = vunpack.c.l.b16 %v2348
      %v2477 = vpack.c.b16 %v2462, %v2461
      %v2478 = vpack.c.b16 %v2464, %v2463
      %v2479 = vpack.c.b16 %v2466, %v2465
      %v2480 = vpack.c.b16 %v2468, %v2467
      %v2481 = vpack.c.b16 %v2470, %v2469
      %v2482 = vpack.c.b16 %v2472, %v2471
      %v2483 = vpack.c.b16 %v2474, %v2473
      %v2484 = vpack.c.b16 %v2476, %v2475
      %2493 = vmatprep.subr.bf16.mxu0 0
      %2494 = vmatpush1.bf16.msra.mxu0 %v2477
      %2495 = vmatprep.subr.bf16.mxu0 0
      %2496 = vmatpush1.bf16.msra.mxu0 %v2478
      %2497 = vmatprep.subr.bf16.mxu0 0
      %2498 = vmatpush1.bf16.msra.mxu0 %v2479
      %2499 = vmatprep.subr.bf16.mxu0 0
      %2500 = vmatpush1.bf16.msra.mxu0 %v2480
      %2501 = vmatprep.subr.bf16.mxu0 0
      %2502 = vmatpush1.bf16.msra.mxu0 %v2481
      %2503 = vmatprep.subr.bf16.mxu0 0
      %2504 = vmatpush1.bf16.msra.mxu0 %v2482
      %2505 = vmatprep.subr.bf16.mxu0 0
      %2506 = vmatpush1.bf16.msra.mxu0 %v2483
      %2507 = vmatprep.subr.bf16.mxu0 0
      %2508 = vmatpush1.bf16.msra.mxu0 %v2484
      %2509 = vmatprep.subr.bf16.mxu0 0
      %2510 = vmatpush1.bf16.msra.mxu0 0
      %2511 = vmatprep.subr.bf16.mxu0 0
      %2512 = vmatpush1.bf16.msra.mxu0 0
      %2513 = vmatprep.subr.bf16.mxu0 0
      %2514 = vmatpush1.bf16.msra.mxu0 0
      %2515 = vmatprep.subr.bf16.mxu0 0
      %2516 = vmatpush1.bf16.msra.mxu0 0
      %2517 = vmatprep.subr.bf16.mxu0 0
      %2518 = vmatpush1.bf16.msra.mxu0 0
      %2519 = vmatprep.subr.bf16.mxu0 0
      %2520 = vmatpush1.bf16.msra.mxu0 0
      %2521 = vmatprep.subr.bf16.mxu0 0
      %2522 = vmatpush1.bf16.msra.mxu0 0
      %2523 = vmatprep.subr.bf16.mxu0 0
      %2524 = vmatpush1.bf16.msra.mxu0 0
      %2525 = vmatprep.mubr.bf16.mxu0 0
      %2526 = vmatmul.mubr.bf16.gmra.mrb[0].mxu0 %v2413
      %v2527 = vpop.f32.mrb[0].mxu0
      %v2528 = vadd.f32 0.0, %v2527
      %v2529 = vpop.f32.mrb[0].mxu0
      %v2530 = vpop.f32.mrb[0].mxu0
      %v2531 = vadd.f32 0.0, %v2530
      %v2532 = vpop.f32.mrb[0].mxu0
      %2533 = vmatprep.mubr.bf16.mxu0 0
      %2534 = vmatmul.mubr.bf16.gmra.mrb[0].mxu0 %v2414
      %v2535 = vpop.f32.mrb[0].mxu0
      %v2536 = vadd.f32 0.0, %v2535
      %v2537 = vpop.f32.mrb[0].mxu0
      %v2538 = vpop.f32.mrb[0].mxu0
      %v2539 = vadd.f32 0.0, %v2538
      %v2540 = vpop.f32.mrb[0].mxu0
      %2541 = vmatprep.mubr.bf16.mxu0 0
      %2542 = vmatmul.mubr.bf16.gmra.mrb[0].mxu0 %v2415
      %v2543 = vpop.f32.mrb[0].mxu0
      %v2544 = vadd.f32 0.0, %v2543
      %v2545 = vpop.f32.mrb[0].mxu0
      %v2546 = vpop.f32.mrb[0].mxu0
      %v2547 = vadd.f32 0.0, %v2546
      %v2548 = vpop.f32.mrb[0].mxu0
      %2549 = vmatprep.mubr.bf16.mxu0 0
      %2550 = vmatmul.mubr.bf16.gmra.mrb[0].mxu0 %v2416
      %v2551 = vpop.f32.mrb[0].mxu0
      %v2552 = vadd.f32 0.0, %v2551
      %v2553 = vpop.f32.mrb[0].mxu0
      %v2554 = vpop.f32.mrb[0].mxu0
      %v2555 = vadd.f32 0.0, %v2554
      %v2556 = vpop.f32.mrb[0].mxu0
      %2557 = vmatprep.mubr.bf16.mxu0 0
      %2558 = vmatmul.mubr.bf16.gmra.mrb[0].mxu0 %v2417
      %v2559 = vpop.f32.mrb[0].mxu0
      %v2560 = vadd.f32 0.0, %v2559
      %v2561 = vpop.f32.mrb[0].mxu0
      %v2562 = vpop.f32.mrb[0].mxu0
      %v2563 = vadd.f32 0.0, %v2562
      %v2564 = vpop.f32.mrb[0].mxu0
      %2565 = vmatprep.mubr.bf16.mxu0 0
      %2566 = vmatmul.mubr.bf16.gmra.mrb[0].mxu0 %v2418
      %v2567 = vpop.f32.mrb[0].mxu0
      %v2568 = vadd.f32 0.0, %v2567
      %v2569 = vpop.f32.mrb[0].mxu0
      %v2570 = vpop.f32.mrb[0].mxu0
      %v2571 = vadd.f32 0.0, %v2570
      %v2572 = vpop.f32.mrb[0].mxu0
      %2573 = vmatprep.mubr.bf16.mxu0 0
      %2574 = vmatmul.mubr.bf16.gmra.mrb[0].mxu0 %v2419
      %v2575 = vpop.f32.mrb[0].mxu0
      %v2576 = vadd.f32 0.0, %v2575
      %v2577 = vpop.f32.mrb[0].mxu0
      %v2578 = vpop.f32.mrb[0].mxu0
      %v2579 = vadd.f32 0.0, %v2578
      %v2580 = vpop.f32.mrb[0].mxu0
      %2581 = vmatprep.mubr.bf16.mxu0 0
      %2582 = vmatmul.mubr.bf16.gmra.mrb[0].mxu0 %v2420
      %v2583 = vpop.f32.mrb[0].mxu0
      %v2584 = vadd.f32 0.0, %v2583
      %v2585 = vpop.f32.mrb[0].mxu0
      %v2586 = vpop.f32.mrb[0].mxu0
      %v2587 = vadd.f32 0.0, %v2586
      %v2588 = vpop.f32.mrb[0].mxu0
      %2589 = vmatprep.mubr.bf16.mxu0 0
      %2590 = vmatmul.mubr.bf16.gmra.mrb[0].mxu0 %v2421
      %v2591 = vpop.f32.mrb[0].mxu0
      %v2592 = vadd.f32 0.0, %v2591
      %v2593 = vpop.f32.mrb[0].mxu0
      %v2594 = vpop.f32.mrb[0].mxu0
      %v2595 = vadd.f32 0.0, %v2594
      %v2596 = vpop.f32.mrb[0].mxu0
      %2597 = vmatprep.mubr.bf16.mxu0 0
      %2598 = vmatmul.mubr.bf16.gmra.mrb[0].mxu0 %v2422
      %v2599 = vpop.f32.mrb[0].mxu0
      %v2600 = vadd.f32 0.0, %v2599
      %v2601 = vpop.f32.mrb[0].mxu0
      %v2602 = vpop.f32.mrb[0].mxu0
      %v2603 = vadd.f32 0.0, %v2602
      %v2604 = vpop.f32.mrb[0].mxu0
      %2605 = vmatprep.mubr.bf16.mxu0 0
      %2606 = vmatmul.mubr.bf16.gmra.mrb[0].mxu0 %v2423
      %v2607 = vpop.f32.mrb[0].mxu0
      %v2608 = vadd.f32 0.0, %v2607
      %v2609 = vpop.f32.mrb[0].mxu0
      %v2610 = vpop.f32.mrb[0].mxu0
      %v2611 = vadd.f32 0.0, %v2610
      %v2612 = vpop.f32.mrb[0].mxu0
      %2613 = vmatprep.mubr.bf16.mxu0 0
      %2614 = vmatmul.mubr.bf16.gmra.mrb[0].mxu0 %v2424
      %v2615 = vpop.f32.mrb[0].mxu0
      %v2616 = vadd.f32 0.0, %v2615
      %v2617 = vpop.f32.mrb[0].mxu0
      %v2618 = vpop.f32.mrb[0].mxu0
      %v2619 = vadd.f32 0.0, %v2618
      %v2620 = vpop.f32.mrb[0].mxu0
      %2621 = vmatprep.mubr.bf16.mxu0 0
      %2622 = vmatmul.mubr.bf16.gmra.mrb[0].mxu0 %v2425
      %v2623 = vpop.f32.mrb[0].mxu0
      %v2624 = vadd.f32 0.0, %v2623
      %v2625 = vpop.f32.mrb[0].mxu0
      %v2626 = vpop.f32.mrb[0].mxu0
      %v2627 = vadd.f32 0.0, %v2626
      %v2628 = vpop.f32.mrb[0].mxu0
      %2629 = vmatprep.mubr.bf16.mxu0 0
      %2630 = vmatmul.mubr.bf16.gmra.mrb[0].mxu0 %v2426
      %v2631 = vpop.f32.mrb[0].mxu0
      %v2632 = vadd.f32 0.0, %v2631
      %v2633 = vpop.f32.mrb[0].mxu0
      %v2634 = vpop.f32.mrb[0].mxu0
      %v2635 = vadd.f32 0.0, %v2634
      %v2636 = vpop.f32.mrb[0].mxu0
      %2637 = vmatprep.mubr.bf16.mxu0 0
      %2638 = vmatmul.mubr.bf16.gmra.mrb[0].mxu0 %v2427
      %v2639 = vpop.f32.mrb[0].mxu0
      %v2640 = vadd.f32 0.0, %v2639
      %v2641 = vpop.f32.mrb[0].mxu0
      %v2642 = vpop.f32.mrb[0].mxu0
      %v2643 = vadd.f32 0.0, %v2642
      %v2644 = vpop.f32.mrb[0].mxu0
      %2645 = vmatprep.mubr.bf16.mxu0 0
      %2646 = vmatmul.mubr.bf16.gmra.mrb[0].mxu0 %v2428
      %v2647 = vpop.f32.mrb[0].mxu0
      %v2648 = vadd.f32 0.0, %v2647
      %v2649 = vpop.f32.mrb[0].mxu0
      %v2650 = vpop.f32.mrb[0].mxu0
      %v2651 = vadd.f32 0.0, %v2650
      %v2652 = vpop.f32.mrb[0].mxu0
      %2653 = vdwg.mxu0
      %v2654 = vadd.f32 %v2269, %v2528
      %v2655 = vadd.f32 %v2270, %v2531
      %v2656 = vadd.f32 %v2271, %v2536
      %v2657 = vadd.f32 %v2272, %v2539
      %v2658 = vadd.f32 %v2273, %v2544
      %v2659 = vadd.f32 %v2274, %v2547
      %v2660 = vadd.f32 %v2275, %v2552
      %v2661 = vadd.f32 %v2276, %v2555
      %v2662 = vadd.f32 %v2277, %v2560
      %v2663 = vadd.f32 %v2278, %v2563
      %v2664 = vadd.f32 %v2279, %v2568
      %v2665 = vadd.f32 %v2280, %v2571
      %v2666 = vadd.f32 %v2281, %v2576
      %v2667 = vadd.f32 %v2282, %v2579
      %v2668 = vadd.f32 %v2283, %v2584
      %v2669 = vadd.f32 %v2284, %v2587
      %v2670 = vadd.f32 %v2285, %v2592
      %v2671 = vadd.f32 %v2286, %v2595
      %v2672 = vadd.f32 %v2287, %v2600
      %v2673 = vadd.f32 %v2288, %v2603
      %v2674 = vadd.f32 %v2289, %v2608
      %v2675 = vadd.f32 %v2290, %v2611
      %v2676 = vadd.f32 %v2291, %v2616
      %v2677 = vadd.f32 %v2292, %v2619
      %v2678 = vadd.f32 %v2293, %v2624
      %v2679 = vadd.f32 %v2294, %v2627
      %v2680 = vadd.f32 %v2295, %v2632
      %v2681 = vadd.f32 %v2296, %v2635
      %v2682 = vadd.f32 %v2297, %v2640
      %v2683 = vadd.f32 %v2298, %v2643
      %v2684 = vadd.f32 %v2299, %v2648
      %v2685 = vadd.f32 %v2300, %v2651
      %v2686 = vld [vmem:[%s657] sm:$0xf]
      %v2687 = vld [vmem:[%s657 + $0x4] sm:$0xf]
      %v2688 = vld [vmem:[%s657 + $0x8] sm:$0x1]
      %v2689 = vld [vmem:[%s657 + $0xc] sm:$0xf]
      %v2690 = vld [vmem:[%s657 + $0x10] sm:$0xf]
      %v2691 = vld [vmem:[%s657 + $0x14] sm:$0x1]
      %v2692 = vld [vmem:[%s657 + $0x18] sm:$0xf]
      %v2693 = vld [vmem:[%s657 + $0x1c] sm:$0xf]
      %v2694 = vld [vmem:[%s657 + $0x20] sm:$0x1]
      %v2695 = vld [vmem:[%s657 + $0x24] sm:$0xf]
      %v2696 = vld [vmem:[%s657 + $0x28] sm:$0xf]
      %v2697 = vld [vmem:[%s657 + $0x2c] sm:$0x1]
      %v2698 = vld [vmem:[%s657 + $0x30] sm:$0xf]
      %v2699 = vld [vmem:[%s657 + $0x34] sm:$0xf]
      %v2700 = vld [vmem:[%s657 + $0x38] sm:$0x1]
      %v2701 = vld [vmem:[%s657 + $0x3c] sm:$0xf]
      %v2702 = vld [vmem:[%s657 + $0x40] sm:$0xf]
      %v2703 = vld [vmem:[%s657 + $0x44] sm:$0x1]
      %v2704 = vld [vmem:[%s657 + $0x48] sm:$0xf]
      %v2705 = vld [vmem:[%s657 + $0x4c] sm:$0xf]
      %v2706 = vld [vmem:[%s657 + $0x50] sm:$0x1]
      %v2707 = vld [vmem:[%s657 + $0x54] sm:$0xf]
      %v2708 = vld [vmem:[%s657 + $0x58] sm:$0xf]
      %v2709 = vld [vmem:[%s657 + $0x5c] sm:$0x1]
      %v2710 = vld [vmem:[%s657 + $0x60] sm:$0xf]
      %v2711 = vld [vmem:[%s657 + $0x64] sm:$0xf]
      %v2712 = vld [vmem:[%s657 + $0x68] sm:$0x1]
      %v2713 = vld [vmem:[%s657 + $0x6c] sm:$0xf]
      %v2714 = vld [vmem:[%s657 + $0x70] sm:$0xf]
      %v2715 = vld [vmem:[%s657 + $0x74] sm:$0x1]
      %v2716 = vld [vmem:[%s657 + $0x78] sm:$0xf]
      %v2717 = vld [vmem:[%s657 + $0x7c] sm:$0xf]
      %v2718 = vld [vmem:[%s657 + $0x80] sm:$0x1]
      %v2719 = vld [vmem:[%s657 + $0x84] sm:$0xf]
      %v2720 = vld [vmem:[%s657 + $0x88] sm:$0xf]
      %v2721 = vld [vmem:[%s657 + $0x8c] sm:$0x1]
      %v2722 = vld [vmem:[%s657 + $0x90] sm:$0xf]
      %v2723 = vld [vmem:[%s657 + $0x94] sm:$0xf]
      %v2724 = vld [vmem:[%s657 + $0x98] sm:$0x1]
      %v2725 = vld [vmem:[%s657 + $0x9c] sm:$0xf]
      %v2726 = vld [vmem:[%s657 + $0xa0] sm:$0xf]
      %v2727 = vld [vmem:[%s657 + $0xa4] sm:$0x1]
      %v2728 = vld [vmem:[%s657 + $0xa8] sm:$0xf]
      %v2729 = vld [vmem:[%s657 + $0xac] sm:$0xf]
      %v2730 = vld [vmem:[%s657 + $0xb0] sm:$0x1]
      %v2731 = vld [vmem:[%s657 + $0xb4] sm:$0xf]
      %v2732 = vld [vmem:[%s657 + $0xb8] sm:$0xf]
      %v2733 = vld [vmem:[%s657 + $0xbc] sm:$0x1]
      %v2734 = vld [vmem:[%s1 + $0x100] sm:$0xf]
      %v2735 = vld [vmem:[%s1 + $0x104] sm:$0xf]
      %v2736 = vld [vmem:[%s1 + $0x108] sm:$0xf]
      %v2737 = vld [vmem:[%s1 + $0x10c] sm:$0xf]
      %v2738 = vld [vmem:[%s1 + $0x110] sm:$0xf]
      %v2739 = vld [vmem:[%s1 + $0x114] sm:$0xf]
      %v2740 = vld [vmem:[%s1 + $0x118] sm:$0xf]
      %v2741 = vld [vmem:[%s1 + $0x11c] sm:$0xf]
      %v2742 = vld [vmem:[%s1 + $0x120] sm:$0xf]
      %v2743 = vld [vmem:[%s1 + $0x124] sm:$0xf]
      %v2744 = vld [vmem:[%s1 + $0x128] sm:$0xf]
      %v2745 = vld [vmem:[%s1 + $0x12c] sm:$0xf]
      %v2746 = vld [vmem:[%s1 + $0x130] sm:$0xf]
      %v2747 = vld [vmem:[%s1 + $0x134] sm:$0xf]
      %v2748 = vld [vmem:[%s1 + $0x138] sm:$0xf]
      %v2749 = vld [vmem:[%s1 + $0x13c] sm:$0xf]
      %v2751 = vshrl.u32 %v2686, 16
      %v2753 = vrot.slane %v2751, 4
      %v2754 = vshll.u32 %v2686, 16
      %v2756 = vrot.slane %v2754, 5
      %v2757 = vor.u32 %v2753, %v2756
      %v2758 = vrot.slane %v2757, 4
      %v2760 = vshll.u32 %v2687, 16
      %v2762 = vrot.slane %v2760, 5
      %v2763 = vsel %vm854, %v2758, %v2762
      %v2764 = vshrl.u32 %v2687, 16
      %v2766 = vrot.slane %v2764, 4
      %v2767 = vor.u32 %v2766, %v2762
      %v2768 = vrot.slane %v2767, 4
      %v2770 = vshll.u32 %v2688, 16
      %v2772 = vrot.slane %v2770, 5
      %v2773 = vsel %vm854, %v2768, %v2772
      %v2775 = vshrl.u32 %v2689, 16
      %v2777 = vrot.slane %v2775, 4
      %v2778 = vshll.u32 %v2689, 16
      %v2780 = vrot.slane %v2778, 5
      %v2781 = vor.u32 %v2777, %v2780
      %v2782 = vrot.slane %v2781, 4
      %v2784 = vshll.u32 %v2690, 16
      %v2786 = vrot.slane %v2784, 5
      %v2787 = vsel %vm854, %v2782, %v2786
      %v2788 = vshrl.u32 %v2690, 16
      %v2790 = vrot.slane %v2788, 4
      %v2791 = vor.u32 %v2790, %v2786
      %v2792 = vrot.slane %v2791, 4
      %v2794 = vshll.u32 %v2691, 16
      %v2796 = vrot.slane %v2794, 5
      %v2797 = vsel %vm854, %v2792, %v2796
      %v2799 = vshrl.u32 %v2692, 16
      %v2801 = vrot.slane %v2799, 4
      %v2802 = vshll.u32 %v2692, 16
      %v2804 = vrot.slane %v2802, 5
      %v2805 = vor.u32 %v2801, %v2804
      %v2806 = vrot.slane %v2805, 4
      %v2808 = vshll.u32 %v2693, 16
      %v2810 = vrot.slane %v2808, 5
      %v2811 = vsel %vm854, %v2806, %v2810
      %v2812 = vshrl.u32 %v2693, 16
      %v2814 = vrot.slane %v2812, 4
      %v2815 = vor.u32 %v2814, %v2810
      %v2816 = vrot.slane %v2815, 4
      %v2818 = vshll.u32 %v2694, 16
      %v2820 = vrot.slane %v2818, 5
      %v2821 = vsel %vm854, %v2816, %v2820
      %v2823 = vshrl.u32 %v2695, 16
      %v2825 = vrot.slane %v2823, 4
      %v2826 = vshll.u32 %v2695, 16
      %v2828 = vrot.slane %v2826, 5
      %v2829 = vor.u32 %v2825, %v2828
      %v2830 = vrot.slane %v2829, 4
      %v2832 = vshll.u32 %v2696, 16
      %v2834 = vrot.slane %v2832, 5
      %v2835 = vsel %vm854, %v2830, %v2834
      %v2836 = vshrl.u32 %v2696, 16
      %v2838 = vrot.slane %v2836, 4
      %v2839 = vor.u32 %v2838, %v2834
      %v2840 = vrot.slane %v2839, 4
      %v2842 = vshll.u32 %v2697, 16
      %v2844 = vrot.slane %v2842, 5
      %v2845 = vsel %vm854, %v2840, %v2844
      %v2847 = vshrl.u32 %v2698, 16
      %v2849 = vrot.slane %v2847, 4
      %v2850 = vshll.u32 %v2698, 16
      %v2852 = vrot.slane %v2850, 5
      %v2853 = vor.u32 %v2849, %v2852
      %v2854 = vrot.slane %v2853, 4
      %v2856 = vshll.u32 %v2699, 16
      %v2858 = vrot.slane %v2856, 5
      %v2859 = vsel %vm854, %v2854, %v2858
      %v2860 = vshrl.u32 %v2699, 16
      %v2862 = vrot.slane %v2860, 4
      %v2863 = vor.u32 %v2862, %v2858
      %v2864 = vrot.slane %v2863, 4
      %v2866 = vshll.u32 %v2700, 16
      %v2868 = vrot.slane %v2866, 5
      %v2869 = vsel %vm854, %v2864, %v2868
      %v2871 = vshrl.u32 %v2701, 16
      %v2873 = vrot.slane %v2871, 4
      %v2874 = vshll.u32 %v2701, 16
      %v2876 = vrot.slane %v2874, 5
      %v2877 = vor.u32 %v2873, %v2876
      %v2878 = vrot.slane %v2877, 4
      %v2880 = vshll.u32 %v2702, 16
      %v2882 = vrot.slane %v2880, 5
      %v2883 = vsel %vm854, %v2878, %v2882
      %v2884 = vshrl.u32 %v2702, 16
      %v2886 = vrot.slane %v2884, 4
      %v2887 = vor.u32 %v2886, %v2882
      %v2888 = vrot.slane %v2887, 4
      %v2890 = vshll.u32 %v2703, 16
      %v2892 = vrot.slane %v2890, 5
      %v2893 = vsel %vm854, %v2888, %v2892
      %v2895 = vshrl.u32 %v2704, 16
      %v2897 = vrot.slane %v2895, 4
      %v2898 = vshll.u32 %v2704, 16
      %v2900 = vrot.slane %v2898, 5
      %v2901 = vor.u32 %v2897, %v2900
      %v2902 = vrot.slane %v2901, 4
      %v2904 = vshll.u32 %v2705, 16
      %v2906 = vrot.slane %v2904, 5
      %v2907 = vsel %vm854, %v2902, %v2906
      %v2908 = vshrl.u32 %v2705, 16
      %v2910 = vrot.slane %v2908, 4
      %v2911 = vor.u32 %v2910, %v2906
      %v2912 = vrot.slane %v2911, 4
      %v2914 = vshll.u32 %v2706, 16
      %v2916 = vrot.slane %v2914, 5
      %v2917 = vsel %vm854, %v2912, %v2916
      %v2919 = vshrl.u32 %v2707, 16
      %v2921 = vrot.slane %v2919, 4
      %v2922 = vshll.u32 %v2707, 16
      %v2924 = vrot.slane %v2922, 5
      %v2925 = vor.u32 %v2921, %v2924
      %v2926 = vrot.slane %v2925, 4
      %v2928 = vshll.u32 %v2708, 16
      %v2930 = vrot.slane %v2928, 5
      %v2931 = vsel %vm854, %v2926, %v2930
      %v2932 = vshrl.u32 %v2708, 16
      %v2934 = vrot.slane %v2932, 4
      %v2935 = vor.u32 %v2934, %v2930
      %v2936 = vrot.slane %v2935, 4
      %v2938 = vshll.u32 %v2709, 16
      %v2940 = vrot.slane %v2938, 5
      %v2941 = vsel %vm854, %v2936, %v2940
      %v2943 = vshrl.u32 %v2710, 16
      %v2945 = vrot.slane %v2943, 4
      %v2946 = vshll.u32 %v2710, 16
      %v2948 = vrot.slane %v2946, 5
      %v2949 = vor.u32 %v2945, %v2948
      %v2950 = vrot.slane %v2949, 4
      %v2952 = vshll.u32 %v2711, 16
      %v2954 = vrot.slane %v2952, 5
      %v2955 = vsel %vm854, %v2950, %v2954
      %v2956 = vshrl.u32 %v2711, 16
      %v2958 = vrot.slane %v2956, 4
      %v2959 = vor.u32 %v2958, %v2954
      %v2960 = vrot.slane %v2959, 4
      %v2962 = vshll.u32 %v2712, 16
      %v2964 = vrot.slane %v2962, 5
      %v2965 = vsel %vm854, %v2960, %v2964
      %v2967 = vshrl.u32 %v2713, 16
      %v2969 = vrot.slane %v2967, 4
      %v2970 = vshll.u32 %v2713, 16
      %v2972 = vrot.slane %v2970, 5
      %v2973 = vor.u32 %v2969, %v2972
      %v2974 = vrot.slane %v2973, 4
      %v2976 = vshll.u32 %v2714, 16
      %v2978 = vrot.slane %v2976, 5
      %v2979 = vsel %vm854, %v2974, %v2978
      %v2980 = vshrl.u32 %v2714, 16
      %v2982 = vrot.slane %v2980, 4
      %v2983 = vor.u32 %v2982, %v2978
      %v2984 = vrot.slane %v2983, 4
      %v2986 = vshll.u32 %v2715, 16
      %v2988 = vrot.slane %v2986, 5
      %v2989 = vsel %vm854, %v2984, %v2988
      %v2991 = vshrl.u32 %v2716, 16
      %v2993 = vrot.slane %v2991, 4
      %v2994 = vshll.u32 %v2716, 16
      %v2996 = vrot.slane %v2994, 5
      %v2997 = vor.u32 %v2993, %v2996
      %v2998 = vrot.slane %v2997, 4
      %v3000 = vshll.u32 %v2717, 16
      %v3002 = vrot.slane %v3000, 5
      %v3003 = vsel %vm854, %v2998, %v3002
      %v3004 = vshrl.u32 %v2717, 16
      %v3006 = vrot.slane %v3004, 4
      %v3007 = vor.u32 %v3006, %v3002
      %v3008 = vrot.slane %v3007, 4
      %v3010 = vshll.u32 %v2718, 16
      %v3012 = vrot.slane %v3010, 5
      %v3013 = vsel %vm854, %v3008, %v3012
      %v3015 = vshrl.u32 %v2719, 16
      %v3017 = vrot.slane %v3015, 4
      %v3018 = vshll.u32 %v2719, 16
      %v3020 = vrot.slane %v3018, 5
      %v3021 = vor.u32 %v3017, %v3020
      %v3022 = vrot.slane %v3021, 4
      %v3024 = vshll.u32 %v2720, 16
      %v3026 = vrot.slane %v3024, 5
      %v3027 = vsel %vm854, %v3022, %v3026
      %v3028 = vshrl.u32 %v2720, 16
      %v3030 = vrot.slane %v3028, 4
      %v3031 = vor.u32 %v3030, %v3026
      %v3032 = vrot.slane %v3031, 4
      %v3034 = vshll.u32 %v2721, 16
      %v3036 = vrot.slane %v3034, 5
      %v3037 = vsel %vm854, %v3032, %v3036
      %v3039 = vshrl.u32 %v2722, 16
      %v3041 = vrot.slane %v3039, 4
      %v3042 = vshll.u32 %v2722, 16
      %v3044 = vrot.slane %v3042, 5
      %v3045 = vor.u32 %v3041, %v3044
      %v3046 = vrot.slane %v3045, 4
      %v3048 = vshll.u32 %v2723, 16
      %v3050 = vrot.slane %v3048, 5
      %v3051 = vsel %vm854, %v3046, %v3050
      %v3052 = vshrl.u32 %v2723, 16
      %v3054 = vrot.slane %v3052, 4
      %v3055 = vor.u32 %v3054, %v3050
      %v3056 = vrot.slane %v3055, 4
      %v3058 = vshll.u32 %v2724, 16
      %v3060 = vrot.slane %v3058, 5
      %v3061 = vsel %vm854, %v3056, %v3060
      %v3063 = vshrl.u32 %v2725, 16
      %v3065 = vrot.slane %v3063, 4
      %v3066 = vshll.u32 %v2725, 16
      %v3068 = vrot.slane %v3066, 5
      %v3069 = vor.u32 %v3065, %v3068
      %v3070 = vrot.slane %v3069, 4
      %v3072 = vshll.u32 %v2726, 16
      %v3074 = vrot.slane %v3072, 5
      %v3075 = vsel %vm854, %v3070, %v3074
      %v3076 = vshrl.u32 %v2726, 16
      %v3078 = vrot.slane %v3076, 4
      %v3079 = vor.u32 %v3078, %v3074
      %v3080 = vrot.slane %v3079, 4
      %v3082 = vshll.u32 %v2727, 16
      %v3084 = vrot.slane %v3082, 5
      %v3085 = vsel %vm854, %v3080, %v3084
      %v3087 = vshrl.u32 %v2728, 16
      %v3089 = vrot.slane %v3087, 4
      %v3090 = vshll.u32 %v2728, 16
      %v3092 = vrot.slane %v3090, 5
      %v3093 = vor.u32 %v3089, %v3092
      %v3094 = vrot.slane %v3093, 4
      %v3096 = vshll.u32 %v2729, 16
      %v3098 = vrot.slane %v3096, 5
      %v3099 = vsel %vm854, %v3094, %v3098
      %v3100 = vshrl.u32 %v2729, 16
      %v3102 = vrot.slane %v3100, 4
      %v3103 = vor.u32 %v3102, %v3098
      %v3104 = vrot.slane %v3103, 4
      %v3106 = vshll.u32 %v2730, 16
      %v3108 = vrot.slane %v3106, 5
      %v3109 = vsel %vm854, %v3104, %v3108
      %v3111 = vshrl.u32 %v2731, 16
      %v3113 = vrot.slane %v3111, 4
      %v3114 = vshll.u32 %v2731, 16
      %v3116 = vrot.slane %v3114, 5
      %v3117 = vor.u32 %v3113, %v3116
      %v3118 = vrot.slane %v3117, 4
      %v3120 = vshll.u32 %v2732, 16
      %v3122 = vrot.slane %v3120, 5
      %v3123 = vsel %vm854, %v3118, %v3122
      %v3124 = vshrl.u32 %v2732, 16
      %v3126 = vrot.slane %v3124, 4
      %v3127 = vor.u32 %v3126, %v3122
      %v3128 = vrot.slane %v3127, 4
      %v3130 = vshll.u32 %v2733, 16
      %v3132 = vrot.slane %v3130, 5
      %v3133 = vsel %vm854, %v3128, %v3132
      %v3134 = vunpack.c.l.b16 %v2763
      %v3135 = vunpack.c.l.b16 %v2773
      %v3136 = vunpack.c.l.b16 %v2787
      %v3137 = vunpack.c.l.b16 %v2797
      %v3138 = vunpack.c.l.b16 %v2811
      %v3139 = vunpack.c.l.b16 %v2821
      %v3140 = vunpack.c.l.b16 %v2835
      %v3141 = vunpack.c.l.b16 %v2845
      %v3142 = vunpack.c.l.b16 %v2859
      %v3143 = vunpack.c.l.b16 %v2869
      %v3144 = vunpack.c.l.b16 %v2883
      %v3145 = vunpack.c.l.b16 %v2893
      %v3146 = vunpack.c.l.b16 %v2907
      %v3147 = vunpack.c.l.b16 %v2917
      %v3148 = vunpack.c.l.b16 %v2931
      %v3149 = vunpack.c.l.b16 %v2941
      %v3150 = vunpack.c.l.b16 %v2955
      %v3151 = vunpack.c.l.b16 %v2965
      %v3152 = vunpack.c.l.b16 %v2979
      %v3153 = vunpack.c.l.b16 %v2989
      %v3154 = vunpack.c.l.b16 %v3003
      %v3155 = vunpack.c.l.b16 %v3013
      %v3156 = vunpack.c.l.b16 %v3027
      %v3157 = vunpack.c.l.b16 %v3037
      %v3158 = vunpack.c.l.b16 %v3051
      %v3159 = vunpack.c.l.b16 %v3061
      %v3160 = vunpack.c.l.b16 %v3075
      %v3161 = vunpack.c.l.b16 %v3085
      %v3162 = vunpack.c.l.b16 %v3099
      %v3163 = vunpack.c.l.b16 %v3109
      %v3164 = vunpack.c.l.b16 %v3123
      %v3165 = vunpack.c.l.b16 %v3133
      %v3166 = vpack.c.b16 %v3135, %v3134
      %v3167 = vpack.c.b16 %v3137, %v3136
      %v3168 = vpack.c.b16 %v3139, %v3138
      %v3169 = vpack.c.b16 %v3141, %v3140
      %v3170 = vpack.c.b16 %v3143, %v3142
      %v3171 = vpack.c.b16 %v3145, %v3144
      %v3172 = vpack.c.b16 %v3147, %v3146
      %v3173 = vpack.c.b16 %v3149, %v3148
      %v3174 = vpack.c.b16 %v3151, %v3150
      %v3175 = vpack.c.b16 %v3153, %v3152
      %v3176 = vpack.c.b16 %v3155, %v3154
      %v3177 = vpack.c.b16 %v3157, %v3156
      %v3178 = vpack.c.b16 %v3159, %v3158
      %v3179 = vpack.c.b16 %v3161, %v3160
      %v3180 = vpack.c.b16 %v3163, %v3162
      %v3181 = vpack.c.b16 %v3165, %v3164
      %v3214 = vunpack.c.l.b16 %v2734
      %v3215 = vunpack.c.l.b16 %v2735
      %v3216 = vunpack.c.l.b16 %v2736
      %v3217 = vunpack.c.l.b16 %v2737
      %v3218 = vunpack.c.l.b16 %v2738
      %v3219 = vunpack.c.l.b16 %v2739
      %v3220 = vunpack.c.l.b16 %v2740
      %v3221 = vunpack.c.l.b16 %v2741
      %v3222 = vunpack.c.l.b16 %v2742
      %v3223 = vunpack.c.l.b16 %v2743
      %v3224 = vunpack.c.l.b16 %v2744
      %v3225 = vunpack.c.l.b16 %v2745
      %v3226 = vunpack.c.l.b16 %v2746
      %v3227 = vunpack.c.l.b16 %v2747
      %v3228 = vunpack.c.l.b16 %v2748
      %v3229 = vunpack.c.l.b16 %v2749
      %v3230 = vpack.c.b16 %v3215, %v3214
      %v3231 = vpack.c.b16 %v3217, %v3216
      %v3232 = vpack.c.b16 %v3219, %v3218
      %v3233 = vpack.c.b16 %v3221, %v3220
      %v3234 = vpack.c.b16 %v3223, %v3222
      %v3235 = vpack.c.b16 %v3225, %v3224
      %v3236 = vpack.c.b16 %v3227, %v3226
      %v3237 = vpack.c.b16 %v3229, %v3228
      %3246 = vmatprep.subr.bf16.mxu0 0
      %3247 = vmatpush1.bf16.msra.mxu0 %v3230
      %3248 = vmatprep.subr.bf16.mxu0 0
      %3249 = vmatpush1.bf16.msra.mxu0 %v3231
      %3250 = vmatprep.subr.bf16.mxu0 0
      %3251 = vmatpush1.bf16.msra.mxu0 %v3232
      %3252 = vmatprep.subr.bf16.mxu0 0
      %3253 = vmatpush1.bf16.msra.mxu0 %v3233
      %3254 = vmatprep.subr.bf16.mxu0 0
      %3255 = vmatpush1.bf16.msra.mxu0 %v3234
      %3256 = vmatprep.subr.bf16.mxu0 0
      %3257 = vmatpush1.bf16.msra.mxu0 %v3235
      %3258 = vmatprep.subr.bf16.mxu0 0
      %3259 = vmatpush1.bf16.msra.mxu0 %v3236
      %3260 = vmatprep.subr.bf16.mxu0 0
      %3261 = vmatpush1.bf16.msra.mxu0 %v3237
      %3262 = vmatprep.subr.bf16.mxu0 0
      %3263 = vmatpush1.bf16.msra.mxu0 0
      %3264 = vmatprep.subr.bf16.mxu0 0
      %3265 = vmatpush1.bf16.msra.mxu0 0
      %3266 = vmatprep.subr.bf16.mxu0 0
      %3267 = vmatpush1.bf16.msra.mxu0 0
      %3268 = vmatprep.subr.bf16.mxu0 0
      %3269 = vmatpush1.bf16.msra.mxu0 0
      %3270 = vmatprep.subr.bf16.mxu0 0
      %3271 = vmatpush1.bf16.msra.mxu0 0
      %3272 = vmatprep.subr.bf16.mxu0 0
      %3273 = vmatpush1.bf16.msra.mxu0 0
      %3274 = vmatprep.subr.bf16.mxu0 0
      %3275 = vmatpush1.bf16.msra.mxu0 0
      %3276 = vmatprep.subr.bf16.mxu0 0
      %3277 = vmatpush1.bf16.msra.mxu0 0
      %3278 = vmatprep.mubr.bf16.mxu0 0
      %3279 = vmatmul.mubr.bf16.gmra.mrb[0].mxu0 %v3166
      %v3280 = vpop.f32.mrb[0].mxu0
      %v3281 = vadd.f32 0.0, %v3280
      %v3282 = vpop.f32.mrb[0].mxu0
      %v3283 = vpop.f32.mrb[0].mxu0
      %v3284 = vadd.f32 0.0, %v3283
      %v3285 = vpop.f32.mrb[0].mxu0
      %3286 = vmatprep.mubr.bf16.mxu0 0
      %3287 = vmatmul.mubr.bf16.gmra.mrb[0].mxu0 %v3167
      %v3288 = vpop.f32.mrb[0].mxu0
      %v3289 = vadd.f32 0.0, %v3288
      %v3290 = vpop.f32.mrb[0].mxu0
      %v3291 = vpop.f32.mrb[0].mxu0
      %v3292 = vadd.f32 0.0, %v3291
      %v3293 = vpop.f32.mrb[0].mxu0
      %3294 = vmatprep.mubr.bf16.mxu0 0
      %3295 = vmatmul.mubr.bf16.gmra.mrb[0].mxu0 %v3168
      %v3296 = vpop.f32.mrb[0].mxu0
      %v3297 = vadd.f32 0.0, %v3296
      %v3298 = vpop.f32.mrb[0].mxu0
      %v3299 = vpop.f32.mrb[0].mxu0
      %v3300 = vadd.f32 0.0, %v3299
      %v3301 = vpop.f32.mrb[0].mxu0
      %3302 = vmatprep.mubr.bf16.mxu0 0
      %3303 = vmatmul.mubr.bf16.gmra.mrb[0].mxu0 %v3169
      %v3304 = vpop.f32.mrb[0].mxu0
      %v3305 = vadd.f32 0.0, %v3304
      %v3306 = vpop.f32.mrb[0].mxu0
      %v3307 = vpop.f32.mrb[0].mxu0
      %v3308 = vadd.f32 0.0, %v3307
      %v3309 = vpop.f32.mrb[0].mxu0
      %3310 = vmatprep.mubr.bf16.mxu0 0
      %3311 = vmatmul.mubr.bf16.gmra.mrb[0].mxu0 %v3170
      %v3312 = vpop.f32.mrb[0].mxu0
      %v3313 = vadd.f32 0.0, %v3312
      %v3314 = vpop.f32.mrb[0].mxu0
      %v3315 = vpop.f32.mrb[0].mxu0
      %v3316 = vadd.f32 0.0, %v3315
      %v3317 = vpop.f32.mrb[0].mxu0
      %3318 = vmatprep.mubr.bf16.mxu0 0
      %3319 = vmatmul.mubr.bf16.gmra.mrb[0].mxu0 %v3171
      %v3320 = vpop.f32.mrb[0].mxu0
      %v3321 = vadd.f32 0.0, %v3320
      %v3322 = vpop.f32.mrb[0].mxu0
      %v3323 = vpop.f32.mrb[0].mxu0
      %v3324 = vadd.f32 0.0, %v3323
      %v3325 = vpop.f32.mrb[0].mxu0
      %3326 = vmatprep.mubr.bf16.mxu0 0
      %3327 = vmatmul.mubr.bf16.gmra.mrb[0].mxu0 %v3172
      %v3328 = vpop.f32.mrb[0].mxu0
      %v3329 = vadd.f32 0.0, %v3328
      %v3330 = vpop.f32.mrb[0].mxu0
      %v3331 = vpop.f32.mrb[0].mxu0
      %v3332 = vadd.f32 0.0, %v3331
      %v3333 = vpop.f32.mrb[0].mxu0
      %3334 = vmatprep.mubr.bf16.mxu0 0
      %3335 = vmatmul.mubr.bf16.gmra.mrb[0].mxu0 %v3173
      %v3336 = vpop.f32.mrb[0].mxu0
      %v3337 = vadd.f32 0.0, %v3336
      %v3338 = vpop.f32.mrb[0].mxu0
      %v3339 = vpop.f32.mrb[0].mxu0
      %v3340 = vadd.f32 0.0, %v3339
      %v3341 = vpop.f32.mrb[0].mxu0
      %3342 = vmatprep.mubr.bf16.mxu0 0
      %3343 = vmatmul.mubr.bf16.gmra.mrb[0].mxu0 %v3174
      %v3344 = vpop.f32.mrb[0].mxu0
      %v3345 = vadd.f32 0.0, %v3344
      %v3346 = vpop.f32.mrb[0].mxu0
      %v3347 = vpop.f32.mrb[0].mxu0
      %v3348 = vadd.f32 0.0, %v3347
      %v3349 = vpop.f32.mrb[0].mxu0
      %3350 = vmatprep.mubr.bf16.mxu0 0
      %3351 = vmatmul.mubr.bf16.gmra.mrb[0].mxu0 %v3175
      %v3352 = vpop.f32.mrb[0].mxu0
      %v3353 = vadd.f32 0.0, %v3352
      %v3354 = vpop.f32.mrb[0].mxu0
      %v3355 = vpop.f32.mrb[0].mxu0
      %v3356 = vadd.f32 0.0, %v3355
      %v3357 = vpop.f32.mrb[0].mxu0
      %3358 = vmatprep.mubr.bf16.mxu0 0
      %3359 = vmatmul.mubr.bf16.gmra.mrb[0].mxu0 %v3176
      %v3360 = vpop.f32.mrb[0].mxu0
      %v3361 = vadd.f32 0.0, %v3360
      %v3362 = vpop.f32.mrb[0].mxu0
      %v3363 = vpop.f32.mrb[0].mxu0
      %v3364 = vadd.f32 0.0, %v3363
      %v3365 = vpop.f32.mrb[0].mxu0
      %3366 = vmatprep.mubr.bf16.mxu0 0
      %3367 = vmatmul.mubr.bf16.gmra.mrb[0].mxu0 %v3177
      %v3368 = vpop.f32.mrb[0].mxu0
      %v3369 = vadd.f32 0.0, %v3368
      %v3370 = vpop.f32.mrb[0].mxu0
      %v3371 = vpop.f32.mrb[0].mxu0
      %v3372 = vadd.f32 0.0, %v3371
      %v3373 = vpop.f32.mrb[0].mxu0
      %3374 = vmatprep.mubr.bf16.mxu0 0
      %3375 = vmatmul.mubr.bf16.gmra.mrb[0].mxu0 %v3178
      %v3376 = vpop.f32.mrb[0].mxu0
      %v3377 = vadd.f32 0.0, %v3376
      %v3378 = vpop.f32.mrb[0].mxu0
      %v3379 = vpop.f32.mrb[0].mxu0
      %v3380 = vadd.f32 0.0, %v3379
      %v3381 = vpop.f32.mrb[0].mxu0
      %3382 = vmatprep.mubr.bf16.mxu0 0
      %3383 = vmatmul.mubr.bf16.gmra.mrb[0].mxu0 %v3179
      %v3384 = vpop.f32.mrb[0].mxu0
      %v3385 = vadd.f32 0.0, %v3384
      %v3386 = vpop.f32.mrb[0].mxu0
      %v3387 = vpop.f32.mrb[0].mxu0
      %v3388 = vadd.f32 0.0, %v3387
      %v3389 = vpop.f32.mrb[0].mxu0
      %3390 = vmatprep.mubr.bf16.mxu0 0
      %3391 = vmatmul.mubr.bf16.gmra.mrb[0].mxu0 %v3180
      %v3392 = vpop.f32.mrb[0].mxu0
      %v3393 = vadd.f32 0.0, %v3392
      %v3394 = vpop.f32.mrb[0].mxu0
      %v3395 = vpop.f32.mrb[0].mxu0
      %v3396 = vadd.f32 0.0, %v3395
      %v3397 = vpop.f32.mrb[0].mxu0
      %3398 = vmatprep.mubr.bf16.mxu0 0
      %3399 = vmatmul.mubr.bf16.gmra.mrb[0].mxu0 %v3181
      %v3400 = vpop.f32.mrb[0].mxu0
      %v3401 = vadd.f32 0.0, %v3400
      %v3402 = vpop.f32.mrb[0].mxu0
      %v3403 = vpop.f32.mrb[0].mxu0
      %v3404 = vadd.f32 0.0, %v3403
      %v3405 = vpop.f32.mrb[0].mxu0
      %3406 = vdwg.mxu0
      %v3407 = vadd.f32 %v2654, %v3281
      %v3408 = vadd.f32 %v2655, %v3284
      %v3409 = vadd.f32 %v2656, %v3289
      %v3410 = vadd.f32 %v2657, %v3292
      %v3411 = vadd.f32 %v2658, %v3297
      %v3412 = vadd.f32 %v2659, %v3300
      %v3413 = vadd.f32 %v2660, %v3305
      %v3414 = vadd.f32 %v2661, %v3308
      %v3415 = vadd.f32 %v2662, %v3313
      %v3416 = vadd.f32 %v2663, %v3316
      %v3417 = vadd.f32 %v2664, %v3321
      %v3418 = vadd.f32 %v2665, %v3324
      %v3419 = vadd.f32 %v2666, %v3329
      %v3420 = vadd.f32 %v2667, %v3332
      %v3421 = vadd.f32 %v2668, %v3337
      %v3422 = vadd.f32 %v2669, %v3340
      %v3423 = vadd.f32 %v2670, %v3345
      %v3424 = vadd.f32 %v2671, %v3348
      %v3425 = vadd.f32 %v2672, %v3353
      %v3426 = vadd.f32 %v2673, %v3356
      %v3427 = vadd.f32 %v2674, %v3361
      %v3428 = vadd.f32 %v2675, %v3364
      %v3429 = vadd.f32 %v2676, %v3369
      %v3430 = vadd.f32 %v2677, %v3372
      %v3431 = vadd.f32 %v2678, %v3377
      %v3432 = vadd.f32 %v2679, %v3380
      %v3433 = vadd.f32 %v2680, %v3385
      %v3434 = vadd.f32 %v2681, %v3388
      %v3435 = vadd.f32 %v2682, %v3393
      %v3436 = vadd.f32 %v2683, %v3396
      %v3437 = vadd.f32 %v2684, %v3401
      %v3438 = vadd.f32 %v2685, %v3404
      %v3439 = vld [vmem:[%s657] sm:$0xe]
      %v3440 = vld [vmem:[%s657 + $0xc] sm:$0xe]
      %v3441 = vld [vmem:[%s657 + $0x18] sm:$0xe]
      %v3442 = vld [vmem:[%s657 + $0x24] sm:$0xe]
      %v3443 = vld [vmem:[%s657 + $0x30] sm:$0xe]
      %v3444 = vld [vmem:[%s657 + $0x3c] sm:$0xe]
      %v3445 = vld [vmem:[%s657 + $0x48] sm:$0xe]
      %v3446 = vld [vmem:[%s657 + $0x54] sm:$0xe]
      %v3447 = vld [vmem:[%s657 + $0x60] sm:$0xe]
      %v3448 = vld [vmem:[%s657 + $0x6c] sm:$0xe]
      %v3449 = vld [vmem:[%s657 + $0x78] sm:$0xe]
      %v3450 = vld [vmem:[%s657 + $0x84] sm:$0xe]
      %v3451 = vld [vmem:[%s657 + $0x90] sm:$0xe]
      %v3452 = vld [vmem:[%s657 + $0x9c] sm:$0xe]
      %v3453 = vld [vmem:[%s657 + $0xa8] sm:$0xe]
      %v3454 = vld [vmem:[%s657 + $0xb4] sm:$0xe]
      %v3455 = vld [vmem:[%s1 + $0x140] sm:$0xf]
      %v3456 = vld [vmem:[%s1 + $0x144] sm:$0xf]
      %v3457 = vld [vmem:[%s1 + $0x148] sm:$0xf]
      %v3458 = vld [vmem:[%s1 + $0x14c] sm:$0xf]
      %v3459 = vld [vmem:[%s1 + $0x150] sm:$0xf]
      %v3460 = vld [vmem:[%s1 + $0x154] sm:$0xf]
      %v3461 = vld [vmem:[%s1 + $0x158] sm:$0xf]
      %v3462 = vld [vmem:[%s1 + $0x15c] sm:$0xf]
      %v3463 = vld [vmem:[%s1 + $0x160] sm:$0xf]
      %v3464 = vld [vmem:[%s1 + $0x164] sm:$0xf]
      %v3465 = vld [vmem:[%s1 + $0x168] sm:$0xf]
      %v3466 = vld [vmem:[%s1 + $0x16c] sm:$0xf]
      %v3467 = vld [vmem:[%s1 + $0x170] sm:$0xf]
      %v3468 = vld [vmem:[%s1 + $0x174] sm:$0xf]
      %v3469 = vld [vmem:[%s1 + $0x178] sm:$0xf]
      %v3470 = vld [vmem:[%s1 + $0x17c] sm:$0xf]
      %v3519 = vrot.slane %v3439, 5
      %v3520 = vrot.slane %v3519, 4
      %v3521 = vrot.slane %v2687, 5
      %v3522 = vsel %vm1883, %v3520, %v3521
      %v3523 = vrot.slane %v3521, 4
      %v3524 = vrot.slane %v2688, 5
      %v3525 = vsel %vm1883, %v3523, %v3524
      %v3526 = vrot.slane %v3440, 5
      %v3527 = vrot.slane %v3526, 4
      %v3528 = vrot.slane %v2690, 5
      %v3529 = vsel %vm1883, %v3527, %v3528
      %v3530 = vrot.slane %v3528, 4
      %v3531 = vrot.slane %v2691, 5
      %v3532 = vsel %vm1883, %v3530, %v3531
      %v3533 = vrot.slane %v3441, 5
      %v3534 = vrot.slane %v3533, 4
      %v3535 = vrot.slane %v2693, 5
      %v3536 = vsel %vm1883, %v3534, %v3535
      %v3537 = vrot.slane %v3535, 4
      %v3538 = vrot.slane %v2694, 5
      %v3539 = vsel %vm1883, %v3537, %v3538
      %v3540 = vrot.slane %v3442, 5
      %v3541 = vrot.slane %v3540, 4
      %v3542 = vrot.slane %v2696, 5
      %v3543 = vsel %vm1883, %v3541, %v3542
      %v3544 = vrot.slane %v3542, 4
      %v3545 = vrot.slane %v2697, 5
      %v3546 = vsel %vm1883, %v3544, %v3545
      %v3547 = vrot.slane %v3443, 5
      %v3548 = vrot.slane %v3547, 4
      %v3549 = vrot.slane %v2699, 5
      %v3550 = vsel %vm1883, %v3548, %v3549
      %v3551 = vrot.slane %v3549, 4
      %v3552 = vrot.slane %v2700, 5
      %v3553 = vsel %vm1883, %v3551, %v3552
      %v3554 = vrot.slane %v3444, 5
      %v3555 = vrot.slane %v3554, 4
      %v3556 = vrot.slane %v2702, 5
      %v3557 = vsel %vm1883, %v3555, %v3556
      %v3558 = vrot.slane %v3556, 4
      %v3559 = vrot.slane %v2703, 5
      %v3560 = vsel %vm1883, %v3558, %v3559
      %v3561 = vrot.slane %v3445, 5
      %v3562 = vrot.slane %v3561, 4
      %v3563 = vrot.slane %v2705, 5
      %v3564 = vsel %vm1883, %v3562, %v3563
      %v3565 = vrot.slane %v3563, 4
      %v3566 = vrot.slane %v2706, 5
      %v3567 = vsel %vm1883, %v3565, %v3566
      %v3568 = vrot.slane %v3446, 5
      %v3569 = vrot.slane %v3568, 4
      %v3570 = vrot.slane %v2708, 5
      %v3571 = vsel %vm1883, %v3569, %v3570
      %v3572 = vrot.slane %v3570, 4
      %v3573 = vrot.slane %v2709, 5
      %v3574 = vsel %vm1883, %v3572, %v3573
      %v3575 = vrot.slane %v3447, 5
      %v3576 = vrot.slane %v3575, 4
      %v3577 = vrot.slane %v2711, 5
      %v3578 = vsel %vm1883, %v3576, %v3577
      %v3579 = vrot.slane %v3577, 4
      %v3580 = vrot.slane %v2712, 5
      %v3581 = vsel %vm1883, %v3579, %v3580
      %v3582 = vrot.slane %v3448, 5
      %v3583 = vrot.slane %v3582, 4
      %v3584 = vrot.slane %v2714, 5
      %v3585 = vsel %vm1883, %v3583, %v3584
      %v3586 = vrot.slane %v3584, 4
      %v3587 = vrot.slane %v2715, 5
      %v3588 = vsel %vm1883, %v3586, %v3587
      %v3589 = vrot.slane %v3449, 5
      %v3590 = vrot.slane %v3589, 4
      %v3591 = vrot.slane %v2717, 5
      %v3592 = vsel %vm1883, %v3590, %v3591
      %v3593 = vrot.slane %v3591, 4
      %v3594 = vrot.slane %v2718, 5
      %v3595 = vsel %vm1883, %v3593, %v3594
      %v3596 = vrot.slane %v3450, 5
      %v3597 = vrot.slane %v3596, 4
      %v3598 = vrot.slane %v2720, 5
      %v3599 = vsel %vm1883, %v3597, %v3598
      %v3600 = vrot.slane %v3598, 4
      %v3601 = vrot.slane %v2721, 5
      %v3602 = vsel %vm1883, %v3600, %v3601
      %v3603 = vrot.slane %v3451, 5
      %v3604 = vrot.slane %v3603, 4
      %v3605 = vrot.slane %v2723, 5
      %v3606 = vsel %vm1883, %v3604, %v3605
      %v3607 = vrot.slane %v3605, 4
      %v3608 = vrot.slane %v2724, 5
      %v3609 = vsel %vm1883, %v3607, %v3608
      %v3610 = vrot.slane %v3452, 5
      %v3611 = vrot.slane %v3610, 4
      %v3612 = vrot.slane %v2726, 5
      %v3613 = vsel %vm1883, %v3611, %v3612
      %v3614 = vrot.slane %v3612, 4
      %v3615 = vrot.slane %v2727, 5
      %v3616 = vsel %vm1883, %v3614, %v3615
      %v3617 = vrot.slane %v3453, 5
      %v3618 = vrot.slane %v3617, 4
      %v3619 = vrot.slane %v2729, 5
      %v3620 = vsel %vm1883, %v3618, %v3619
      %v3621 = vrot.slane %v3619, 4
      %v3622 = vrot.slane %v2730, 5
      %v3623 = vsel %vm1883, %v3621, %v3622
      %v3624 = vrot.slane %v3454, 5
      %v3625 = vrot.slane %v3624, 4
      %v3626 = vrot.slane %v2732, 5
      %v3627 = vsel %vm1883, %v3625, %v3626
      %v3628 = vrot.slane %v3626, 4
      %v3629 = vrot.slane %v2733, 5
      %v3630 = vsel %vm1883, %v3628, %v3629
      %v3631 = vunpack.c.l.b16 %v3522
      %v3632 = vunpack.c.l.b16 %v3525
      %v3633 = vunpack.c.l.b16 %v3529
      %v3634 = vunpack.c.l.b16 %v3532
      %v3635 = vunpack.c.l.b16 %v3536
      %v3636 = vunpack.c.l.b16 %v3539
      %v3637 = vunpack.c.l.b16 %v3543
      %v3638 = vunpack.c.l.b16 %v3546
      %v3639 = vunpack.c.l.b16 %v3550
      %v3640 = vunpack.c.l.b16 %v3553
      %v3641 = vunpack.c.l.b16 %v3557
      %v3642 = vunpack.c.l.b16 %v3560
      %v3643 = vunpack.c.l.b16 %v3564
      %v3644 = vunpack.c.l.b16 %v3567
      %v3645 = vunpack.c.l.b16 %v3571
      %v3646 = vunpack.c.l.b16 %v3574
      %v3647 = vunpack.c.l.b16 %v3578
      %v3648 = vunpack.c.l.b16 %v3581
      %v3649 = vunpack.c.l.b16 %v3585
      %v3650 = vunpack.c.l.b16 %v3588
      %v3651 = vunpack.c.l.b16 %v3592
      %v3652 = vunpack.c.l.b16 %v3595
      %v3653 = vunpack.c.l.b16 %v3599
      %v3654 = vunpack.c.l.b16 %v3602
      %v3655 = vunpack.c.l.b16 %v3606
      %v3656 = vunpack.c.l.b16 %v3609
      %v3657 = vunpack.c.l.b16 %v3613
      %v3658 = vunpack.c.l.b16 %v3616
      %v3659 = vunpack.c.l.b16 %v3620
      %v3660 = vunpack.c.l.b16 %v3623
      %v3661 = vunpack.c.l.b16 %v3627
      %v3662 = vunpack.c.l.b16 %v3630
      %v3663 = vpack.c.b16 %v3632, %v3631
      %v3664 = vpack.c.b16 %v3634, %v3633
      %v3665 = vpack.c.b16 %v3636, %v3635
      %v3666 = vpack.c.b16 %v3638, %v3637
      %v3667 = vpack.c.b16 %v3640, %v3639
      %v3668 = vpack.c.b16 %v3642, %v3641
      %v3669 = vpack.c.b16 %v3644, %v3643
      %v3670 = vpack.c.b16 %v3646, %v3645
      %v3671 = vpack.c.b16 %v3648, %v3647
      %v3672 = vpack.c.b16 %v3650, %v3649
      %v3673 = vpack.c.b16 %v3652, %v3651
      %v3674 = vpack.c.b16 %v3654, %v3653
      %v3675 = vpack.c.b16 %v3656, %v3655
      %v3676 = vpack.c.b16 %v3658, %v3657
      %v3677 = vpack.c.b16 %v3660, %v3659
      %v3678 = vpack.c.b16 %v3662, %v3661
      %v3711 = vunpack.c.l.b16 %v3455
      %v3712 = vunpack.c.l.b16 %v3456
      %v3713 = vunpack.c.l.b16 %v3457
      %v3714 = vunpack.c.l.b16 %v3458
      %v3715 = vunpack.c.l.b16 %v3459
      %v3716 = vunpack.c.l.b16 %v3460
      %v3717 = vunpack.c.l.b16 %v3461
      %v3718 = vunpack.c.l.b16 %v3462
      %v3719 = vunpack.c.l.b16 %v3463
      %v3720 = vunpack.c.l.b16 %v3464
      %v3721 = vunpack.c.l.b16 %v3465
      %v3722 = vunpack.c.l.b16 %v3466
      %v3723 = vunpack.c.l.b16 %v3467
      %v3724 = vunpack.c.l.b16 %v3468
      %v3725 = vunpack.c.l.b16 %v3469
      %v3726 = vunpack.c.l.b16 %v3470
      %v3727 = vpack.c.b16 %v3712, %v3711
      %v3728 = vpack.c.b16 %v3714, %v3713
      %v3729 = vpack.c.b16 %v3716, %v3715
      %v3730 = vpack.c.b16 %v3718, %v3717
      %v3731 = vpack.c.b16 %v3720, %v3719
      %v3732 = vpack.c.b16 %v3722, %v3721
      %v3733 = vpack.c.b16 %v3724, %v3723
      %v3734 = vpack.c.b16 %v3726, %v3725
      %3743 = vmatprep.subr.bf16.mxu0 0
      %3744 = vmatpush1.bf16.msra.mxu0 %v3727
      %3745 = vmatprep.subr.bf16.mxu0 0
      %3746 = vmatpush1.bf16.msra.mxu0 %v3728
      %3747 = vmatprep.subr.bf16.mxu0 0
      %3748 = vmatpush1.bf16.msra.mxu0 %v3729
      %3749 = vmatprep.subr.bf16.mxu0 0
      %3750 = vmatpush1.bf16.msra.mxu0 %v3730
      %3751 = vmatprep.subr.bf16.mxu0 0
      %3752 = vmatpush1.bf16.msra.mxu0 %v3731
      %3753 = vmatprep.subr.bf16.mxu0 0
      %3754 = vmatpush1.bf16.msra.mxu0 %v3732
      %3755 = vmatprep.subr.bf16.mxu0 0
      %3756 = vmatpush1.bf16.msra.mxu0 %v3733
      %3757 = vmatprep.subr.bf16.mxu0 0
      %3758 = vmatpush1.bf16.msra.mxu0 %v3734
      %3759 = vmatprep.subr.bf16.mxu0 0
      %3760 = vmatpush1.bf16.msra.mxu0 0
      %3761 = vmatprep.subr.bf16.mxu0 0
      %3762 = vmatpush1.bf16.msra.mxu0 0
      %3763 = vmatprep.subr.bf16.mxu0 0
      %3764 = vmatpush1.bf16.msra.mxu0 0
      %3765 = vmatprep.subr.bf16.mxu0 0
      %3766 = vmatpush1.bf16.msra.mxu0 0
      %3767 = vmatprep.subr.bf16.mxu0 0
      %3768 = vmatpush1.bf16.msra.mxu0 0
      %3769 = vmatprep.subr.bf16.mxu0 0
      %3770 = vmatpush1.bf16.msra.mxu0 0
      %3771 = vmatprep.subr.bf16.mxu0 0
      %3772 = vmatpush1.bf16.msra.mxu0 0
      %3773 = vmatprep.subr.bf16.mxu0 0
      %3774 = vmatpush1.bf16.msra.mxu0 0
      %3775 = vmatprep.mubr.bf16.mxu0 0
      %3776 = vmatmul.mubr.bf16.gmra.mrb[0].mxu0 %v3663
      %v3777 = vpop.f32.mrb[0].mxu0
      %v3778 = vadd.f32 0.0, %v3777
      %v3779 = vpop.f32.mrb[0].mxu0
      %v3780 = vpop.f32.mrb[0].mxu0
      %v3781 = vadd.f32 0.0, %v3780
      %v3782 = vpop.f32.mrb[0].mxu0
      %3783 = vmatprep.mubr.bf16.mxu0 0
      %3784 = vmatmul.mubr.bf16.gmra.mrb[0].mxu0 %v3664
      %v3785 = vpop.f32.mrb[0].mxu0
      %v3786 = vadd.f32 0.0, %v3785
      %v3787 = vpop.f32.mrb[0].mxu0
      %v3788 = vpop.f32.mrb[0].mxu0
      %v3789 = vadd.f32 0.0, %v3788
      %v3790 = vpop.f32.mrb[0].mxu0
      %3791 = vmatprep.mubr.bf16.mxu0 0
      %3792 = vmatmul.mubr.bf16.gmra.mrb[0].mxu0 %v3665
      %v3793 = vpop.f32.mrb[0].mxu0
      %v3794 = vadd.f32 0.0, %v3793
      %v3795 = vpop.f32.mrb[0].mxu0
      %v3796 = vpop.f32.mrb[0].mxu0
      %v3797 = vadd.f32 0.0, %v3796
      %v3798 = vpop.f32.mrb[0].mxu0
      %3799 = vmatprep.mubr.bf16.mxu0 0
      %3800 = vmatmul.mubr.bf16.gmra.mrb[0].mxu0 %v3666
      %v3801 = vpop.f32.mrb[0].mxu0
      %v3802 = vadd.f32 0.0, %v3801
      %v3803 = vpop.f32.mrb[0].mxu0
      %v3804 = vpop.f32.mrb[0].mxu0
      %v3805 = vadd.f32 0.0, %v3804
      %v3806 = vpop.f32.mrb[0].mxu0
      %3807 = vmatprep.mubr.bf16.mxu0 0
      %3808 = vmatmul.mubr.bf16.gmra.mrb[0].mxu0 %v3667
      %v3809 = vpop.f32.mrb[0].mxu0
      %v3810 = vadd.f32 0.0, %v3809
      %v3811 = vpop.f32.mrb[0].mxu0
      %v3812 = vpop.f32.mrb[0].mxu0
      %v3813 = vadd.f32 0.0, %v3812
      %v3814 = vpop.f32.mrb[0].mxu0
      %3815 = vmatprep.mubr.bf16.mxu0 0
      %3816 = vmatmul.mubr.bf16.gmra.mrb[0].mxu0 %v3668
      %v3817 = vpop.f32.mrb[0].mxu0
      %v3818 = vadd.f32 0.0, %v3817
      %v3819 = vpop.f32.mrb[0].mxu0
      %v3820 = vpop.f32.mrb[0].mxu0
      %v3821 = vadd.f32 0.0, %v3820
      %v3822 = vpop.f32.mrb[0].mxu0
      %3823 = vmatprep.mubr.bf16.mxu0 0
      %3824 = vmatmul.mubr.bf16.gmra.mrb[0].mxu0 %v3669
      %v3825 = vpop.f32.mrb[0].mxu0
      %v3826 = vadd.f32 0.0, %v3825
      %v3827 = vpop.f32.mrb[0].mxu0
      %v3828 = vpop.f32.mrb[0].mxu0
      %v3829 = vadd.f32 0.0, %v3828
      %v3830 = vpop.f32.mrb[0].mxu0
      %3831 = vmatprep.mubr.bf16.mxu0 0
      %3832 = vmatmul.mubr.bf16.gmra.mrb[0].mxu0 %v3670
      %v3833 = vpop.f32.mrb[0].mxu0
      %v3834 = vadd.f32 0.0, %v3833
      %v3835 = vpop.f32.mrb[0].mxu0
      %v3836 = vpop.f32.mrb[0].mxu0
      %v3837 = vadd.f32 0.0, %v3836
      %v3838 = vpop.f32.mrb[0].mxu0
      %3839 = vmatprep.mubr.bf16.mxu0 0
      %3840 = vmatmul.mubr.bf16.gmra.mrb[0].mxu0 %v3671
      %v3841 = vpop.f32.mrb[0].mxu0
      %v3842 = vadd.f32 0.0, %v3841
      %v3843 = vpop.f32.mrb[0].mxu0
      %v3844 = vpop.f32.mrb[0].mxu0
      %v3845 = vadd.f32 0.0, %v3844
      %v3846 = vpop.f32.mrb[0].mxu0
      %3847 = vmatprep.mubr.bf16.mxu0 0
      %3848 = vmatmul.mubr.bf16.gmra.mrb[0].mxu0 %v3672
      %v3849 = vpop.f32.mrb[0].mxu0
      %v3850 = vadd.f32 0.0, %v3849
      %v3851 = vpop.f32.mrb[0].mxu0
      %v3852 = vpop.f32.mrb[0].mxu0
      %v3853 = vadd.f32 0.0, %v3852
      %v3854 = vpop.f32.mrb[0].mxu0
      %3855 = vmatprep.mubr.bf16.mxu0 0
      %3856 = vmatmul.mubr.bf16.gmra.mrb[0].mxu0 %v3673
      %v3857 = vpop.f32.mrb[0].mxu0
      %v3858 = vadd.f32 0.0, %v3857
      %v3859 = vpop.f32.mrb[0].mxu0
      %v3860 = vpop.f32.mrb[0].mxu0
      %v3861 = vadd.f32 0.0, %v3860
      %v3862 = vpop.f32.mrb[0].mxu0
      %3863 = vmatprep.mubr.bf16.mxu0 0
      %3864 = vmatmul.mubr.bf16.gmra.mrb[0].mxu0 %v3674
      %v3865 = vpop.f32.mrb[0].mxu0
      %v3866 = vadd.f32 0.0, %v3865
      %v3867 = vpop.f32.mrb[0].mxu0
      %v3868 = vpop.f32.mrb[0].mxu0
      %v3869 = vadd.f32 0.0, %v3868
      %v3870 = vpop.f32.mrb[0].mxu0
      %3871 = vmatprep.mubr.bf16.mxu0 0
      %3872 = vmatmul.mubr.bf16.gmra.mrb[0].mxu0 %v3675
      %v3873 = vpop.f32.mrb[0].mxu0
      %v3874 = vadd.f32 0.0, %v3873
      %v3875 = vpop.f32.mrb[0].mxu0
      %v3876 = vpop.f32.mrb[0].mxu0
      %v3877 = vadd.f32 0.0, %v3876
      %v3878 = vpop.f32.mrb[0].mxu0
      %3879 = vmatprep.mubr.bf16.mxu0 0
      %3880 = vmatmul.mubr.bf16.gmra.mrb[0].mxu0 %v3676
      %v3881 = vpop.f32.mrb[0].mxu0
      %v3882 = vadd.f32 0.0, %v3881
      %v3883 = vpop.f32.mrb[0].mxu0
      %v3884 = vpop.f32.mrb[0].mxu0
      %v3885 = vadd.f32 0.0, %v3884
      %v3886 = vpop.f32.mrb[0].mxu0
      %3887 = vmatprep.mubr.bf16.mxu0 0
      %3888 = vmatmul.mubr.bf16.gmra.mrb[0].mxu0 %v3677
      %v3889 = vpop.f32.mrb[0].mxu0
      %v3890 = vadd.f32 0.0, %v3889
      %v3891 = vpop.f32.mrb[0].mxu0
      %v3892 = vpop.f32.mrb[0].mxu0
      %v3893 = vadd.f32 0.0, %v3892
      %v3894 = vpop.f32.mrb[0].mxu0
      %3895 = vmatprep.mubr.bf16.mxu0 0
      %3896 = vmatmul.mubr.bf16.gmra.mrb[0].mxu0 %v3678
      %v3897 = vpop.f32.mrb[0].mxu0
      %v3898 = vadd.f32 0.0, %v3897
      %v3899 = vpop.f32.mrb[0].mxu0
      %v3900 = vpop.f32.mrb[0].mxu0
      %v3901 = vadd.f32 0.0, %v3900
      %v3902 = vpop.f32.mrb[0].mxu0
      %3903 = vdwg.mxu0
      %v3904 = vadd.f32 %v3407, %v3778
      %v3905 = vadd.f32 %v3408, %v3781
      %v3906 = vadd.f32 %v3409, %v3786
      %v3907 = vadd.f32 %v3410, %v3789
      %v3908 = vadd.f32 %v3411, %v3794
      %v3909 = vadd.f32 %v3412, %v3797
      %v3910 = vadd.f32 %v3413, %v3802
      %v3911 = vadd.f32 %v3414, %v3805
      %v3912 = vadd.f32 %v3415, %v3810
      %v3913 = vadd.f32 %v3416, %v3813
      %v3914 = vadd.f32 %v3417, %v3818
      %v3915 = vadd.f32 %v3418, %v3821
      %v3916 = vadd.f32 %v3419, %v3826
      %v3917 = vadd.f32 %v3420, %v3829
      %v3918 = vadd.f32 %v3421, %v3834
      %v3919 = vadd.f32 %v3422, %v3837
      %v3920 = vadd.f32 %v3423, %v3842
      %v3921 = vadd.f32 %v3424, %v3845
      %v3922 = vadd.f32 %v3425, %v3850
      %v3923 = vadd.f32 %v3426, %v3853
      %v3924 = vadd.f32 %v3427, %v3858
      %v3925 = vadd.f32 %v3428, %v3861
      %v3926 = vadd.f32 %v3429, %v3866
      %v3927 = vadd.f32 %v3430, %v3869
      %v3928 = vadd.f32 %v3431, %v3874
      %v3929 = vadd.f32 %v3432, %v3877
      %v3930 = vadd.f32 %v3433, %v3882
      %v3931 = vadd.f32 %v3434, %v3885
      %v3932 = vadd.f32 %v3435, %v3890
      %v3933 = vadd.f32 %v3436, %v3893
      %v3934 = vadd.f32 %v3437, %v3898
      %v3935 = vadd.f32 %v3438, %v3901
      %s3936 = scalar_lea.vmem [#allocation2], 24
      %v3937 = vld [vmem:[%s3936] sm:$0xf]
      %v3938 = vld [vmem:[%s3936 + $0x4] sm:$0xf]
      %v3939 = vld [vmem:[%s3936 + $0xc] sm:$0xf]
      %v3940 = vld [vmem:[%s3936 + $0x10] sm:$0xf]
      %v3941 = vld [vmem:[%s3936 + $0x18] sm:$0xf]
      %v3942 = vld [vmem:[%s3936 + $0x1c] sm:$0xf]
      %v3943 = vld [vmem:[%s3936 + $0x24] sm:$0xf]
      %v3944 = vld [vmem:[%s3936 + $0x28] sm:$0xf]
      %v3945 = vld [vmem:[%s3936 + $0x30] sm:$0xf]
      %v3946 = vld [vmem:[%s3936 + $0x34] sm:$0xf]
      %v3947 = vld [vmem:[%s3936 + $0x3c] sm:$0xf]
      %v3948 = vld [vmem:[%s3936 + $0x40] sm:$0xf]
      %v3949 = vld [vmem:[%s3936 + $0x48] sm:$0xf]
      %v3950 = vld [vmem:[%s3936 + $0x4c] sm:$0xf]
      %v3951 = vld [vmem:[%s3936 + $0x54] sm:$0xf]
      %v3952 = vld [vmem:[%s3936 + $0x58] sm:$0xf]
      %v3953 = vld [vmem:[%s3936 + $0x60] sm:$0xf]
      %v3954 = vld [vmem:[%s3936 + $0x64] sm:$0xf]
      %v3955 = vld [vmem:[%s3936 + $0x6c] sm:$0xf]
      %v3956 = vld [vmem:[%s3936 + $0x70] sm:$0xf]
      %v3957 = vld [vmem:[%s3936 + $0x78] sm:$0xf]
      %v3958 = vld [vmem:[%s3936 + $0x7c] sm:$0xf]
      %v3959 = vld [vmem:[%s3936 + $0x84] sm:$0xf]
      %v3960 = vld [vmem:[%s3936 + $0x88] sm:$0xf]
      %v3961 = vld [vmem:[%s3936 + $0x90] sm:$0xf]
      %v3962 = vld [vmem:[%s3936 + $0x94] sm:$0xf]
      %v3963 = vld [vmem:[%s3936 + $0x9c] sm:$0xf]
      %v3964 = vld [vmem:[%s3936 + $0xa0] sm:$0xf]
      %v3965 = vld [vmem:[%s3936 + $0xa8] sm:$0xf]
      %v3966 = vld [vmem:[%s3936 + $0xac] sm:$0xf]
      %v3967 = vld [vmem:[%s3936 + $0xb4] sm:$0xf]
      %v3968 = vld [vmem:[%s3936 + $0xb8] sm:$0xf]
      %v3969 = vld [vmem:[%s1 + $0x180] sm:$0xf]
      %v3970 = vld [vmem:[%s1 + $0x184] sm:$0xf]
      %v3971 = vld [vmem:[%s1 + $0x188] sm:$0xf]
      %v3972 = vld [vmem:[%s1 + $0x18c] sm:$0xf]
      %v3973 = vld [vmem:[%s1 + $0x190] sm:$0xf]
      %v3974 = vld [vmem:[%s1 + $0x194] sm:$0xf]
      %v3975 = vld [vmem:[%s1 + $0x198] sm:$0xf]
      %v3976 = vld [vmem:[%s1 + $0x19c] sm:$0xf]
      %v3977 = vld [vmem:[%s1 + $0x1a0] sm:$0xf]
      %v3978 = vld [vmem:[%s1 + $0x1a4] sm:$0xf]
      %v3979 = vld [vmem:[%s1 + $0x1a8] sm:$0xf]
      %v3980 = vld [vmem:[%s1 + $0x1ac] sm:$0xf]
      %v3981 = vld [vmem:[%s1 + $0x1b0] sm:$0xf]
      %v3982 = vld [vmem:[%s1 + $0x1b4] sm:$0xf]
      %v3983 = vld [vmem:[%s1 + $0x1b8] sm:$0xf]
      %v3984 = vld [vmem:[%s1 + $0x1bc] sm:$0xf]
      %v4017 = vunpack.c.l.b16 %v3937
      %v4018 = vunpack.c.l.b16 %v3938
      %v4019 = vunpack.c.l.b16 %v3939
      %v4020 = vunpack.c.l.b16 %v3940
      %v4021 = vunpack.c.l.b16 %v3941
      %v4022 = vunpack.c.l.b16 %v3942
      %v4023 = vunpack.c.l.b16 %v3943
      %v4024 = vunpack.c.l.b16 %v3944
      %v4025 = vunpack.c.l.b16 %v3945
      %v4026 = vunpack.c.l.b16 %v3946
      %v4027 = vunpack.c.l.b16 %v3947
      %v4028 = vunpack.c.l.b16 %v3948
      %v4029 = vunpack.c.l.b16 %v3949
      %v4030 = vunpack.c.l.b16 %v3950
      %v4031 = vunpack.c.l.b16 %v3951
      %v4032 = vunpack.c.l.b16 %v3952
      %v4033 = vunpack.c.l.b16 %v3953
      %v4034 = vunpack.c.l.b16 %v3954
      %v4035 = vunpack.c.l.b16 %v3955
      %v4036 = vunpack.c.l.b16 %v3956
      %v4037 = vunpack.c.l.b16 %v3957
      %v4038 = vunpack.c.l.b16 %v3958
      %v4039 = vunpack.c.l.b16 %v3959
      %v4040 = vunpack.c.l.b16 %v3960
      %v4041 = vunpack.c.l.b16 %v3961
      %v4042 = vunpack.c.l.b16 %v3962
      %v4043 = vunpack.c.l.b16 %v3963
      %v4044 = vunpack.c.l.b16 %v3964
      %v4045 = vunpack.c.l.b16 %v3965
      %v4046 = vunpack.c.l.b16 %v3966
      %v4047 = vunpack.c.l.b16 %v3967
      %v4048 = vunpack.c.l.b16 %v3968
      %v4049 = vpack.c.b16 %v4018, %v4017
      %v4050 = vpack.c.b16 %v4020, %v4019
      %v4051 = vpack.c.b16 %v4022, %v4021
      %v4052 = vpack.c.b16 %v4024, %v4023
      %v4053 = vpack.c.b16 %v4026, %v4025
      %v4054 = vpack.c.b16 %v4028, %v4027
      %v4055 = vpack.c.b16 %v4030, %v4029
      %v4056 = vpack.c.b16 %v4032, %v4031
      %v4057 = vpack.c.b16 %v4034, %v4033
      %v4058 = vpack.c.b16 %v4036, %v4035
      %v4059 = vpack.c.b16 %v4038, %v4037
      %v4060 = vpack.c.b16 %v4040, %v4039
      %v4061 = vpack.c.b16 %v4042, %v4041
      %v4062 = vpack.c.b16 %v4044, %v4043
      %v4063 = vpack.c.b16 %v4046, %v4045
      %v4064 = vpack.c.b16 %v4048, %v4047
      %v4097 = vunpack.c.l.b16 %v3969
      %v4098 = vunpack.c.l.b16 %v3970
      %v4099 = vunpack.c.l.b16 %v3971
      %v4100 = vunpack.c.l.b16 %v3972
      %v4101 = vunpack.c.l.b16 %v3973
      %v4102 = vunpack.c.l.b16 %v3974
      %v4103 = vunpack.c.l.b16 %v3975
      %v4104 = vunpack.c.l.b16 %v3976
      %v4105 = vunpack.c.l.b16 %v3977
      %v4106 = vunpack.c.l.b16 %v3978
      %v4107 = vunpack.c.l.b16 %v3979
      %v4108 = vunpack.c.l.b16 %v3980
      %v4109 = vunpack.c.l.b16 %v3981
      %v4110 = vunpack.c.l.b16 %v3982
      %v4111 = vunpack.c.l.b16 %v3983
      %v4112 = vunpack.c.l.b16 %v3984
      %v4113 = vpack.c.b16 %v4098, %v4097
      %v4114 = vpack.c.b16 %v4100, %v4099
      %v4115 = vpack.c.b16 %v4102, %v4101
      %v4116 = vpack.c.b16 %v4104, %v4103
      %v4117 = vpack.c.b16 %v4106, %v4105
      %v4118 = vpack.c.b16 %v4108, %v4107
      %v4119 = vpack.c.b16 %v4110, %v4109
      %v4120 = vpack.c.b16 %v4112, %v4111
      %4129 = vmatprep.subr.bf16.mxu0 0
      %4130 = vmatpush1.bf16.msra.mxu0 %v4113
      %4131 = vmatprep.subr.bf16.mxu0 0
      %4132 = vmatpush1.bf16.msra.mxu0 %v4114
      %4133 = vmatprep.subr.bf16.mxu0 0
      %4134 = vmatpush1.bf16.msra.mxu0 %v4115
      %4135 = vmatprep.subr.bf16.mxu0 0
      %4136 = vmatpush1.bf16.msra.mxu0 %v4116
      %4137 = vmatprep.subr.bf16.mxu0 0
      %4138 = vmatpush1.bf16.msra.mxu0 %v4117
      %4139 = vmatprep.subr.bf16.mxu0 0
      %4140 = vmatpush1.bf16.msra.mxu0 %v4118
      %4141 = vmatprep.subr.bf16.mxu0 0
      %4142 = vmatpush1.bf16.msra.mxu0 %v4119
      %4143 = vmatprep.subr.bf16.mxu0 0
      %4144 = vmatpush1.bf16.msra.mxu0 %v4120
      %4145 = vmatprep.subr.bf16.mxu0 0
      %4146 = vmatpush1.bf16.msra.mxu0 0
      %4147 = vmatprep.subr.bf16.mxu0 0
      %4148 = vmatpush1.bf16.msra.mxu0 0
      %4149 = vmatprep.subr.bf16.mxu0 0
      %4150 = vmatpush1.bf16.msra.mxu0 0
      %4151 = vmatprep.subr.bf16.mxu0 0
      %4152 = vmatpush1.bf16.msra.mxu0 0
      %4153 = vmatprep.subr.bf16.mxu0 0
      %4154 = vmatpush1.bf16.msra.mxu0 0
      %4155 = vmatprep.subr.bf16.mxu0 0
      %4156 = vmatpush1.bf16.msra.mxu0 0
      %4157 = vmatprep.subr.bf16.mxu0 0
      %4158 = vmatpush1.bf16.msra.mxu0 0
      %4159 = vmatprep.subr.bf16.mxu0 0
      %4160 = vmatpush1.bf16.msra.mxu0 0
      %4161 = vmatprep.mubr.bf16.mxu0 0
      %4162 = vmatmul.mubr.bf16.gmra.mrb[0].mxu0 %v4049
      %v4163 = vpop.f32.mrb[0].mxu0
      %v4164 = vadd.f32 0.0, %v4163
      %v4165 = vpop.f32.mrb[0].mxu0
      %v4166 = vpop.f32.mrb[0].mxu0
      %v4167 = vadd.f32 0.0, %v4166
      %v4168 = vpop.f32.mrb[0].mxu0
      %4169 = vmatprep.mubr.bf16.mxu0 0
      %4170 = vmatmul.mubr.bf16.gmra.mrb[0].mxu0 %v4050
      %v4171 = vpop.f32.mrb[0].mxu0
      %v4172 = vadd.f32 0.0, %v4171
      %v4173 = vpop.f32.mrb[0].mxu0
      %v4174 = vpop.f32.mrb[0].mxu0
      %v4175 = vadd.f32 0.0, %v4174
      %v4176 = vpop.f32.mrb[0].mxu0
      %4177 = vmatprep.mubr.bf16.mxu0 0
      %4178 = vmatmul.mubr.bf16.gmra.mrb[0].mxu0 %v4051
      %v4179 = vpop.f32.mrb[0].mxu0
      %v4180 = vadd.f32 0.0, %v4179
      %v4181 = vpop.f32.mrb[0].mxu0
      %v4182 = vpop.f32.mrb[0].mxu0
      %v4183 = vadd.f32 0.0, %v4182
      %v4184 = vpop.f32.mrb[0].mxu0
      %4185 = vmatprep.mubr.bf16.mxu0 0
      %4186 = vmatmul.mubr.bf16.gmra.mrb[0].mxu0 %v4052
      %v4187 = vpop.f32.mrb[0].mxu0
      %v4188 = vadd.f32 0.0, %v4187
      %v4189 = vpop.f32.mrb[0].mxu0
      %v4190 = vpop.f32.mrb[0].mxu0
      %v4191 = vadd.f32 0.0, %v4190
      %v4192 = vpop.f32.mrb[0].mxu0
      %4193 = vmatprep.mubr.bf16.mxu0 0
      %4194 = vmatmul.mubr.bf16.gmra.mrb[0].mxu0 %v4053
      %v4195 = vpop.f32.mrb[0].mxu0
      %v4196 = vadd.f32 0.0, %v4195
      %v4197 = vpop.f32.mrb[0].mxu0
      %v4198 = vpop.f32.mrb[0].mxu0
      %v4199 = vadd.f32 0.0, %v4198
      %v4200 = vpop.f32.mrb[0].mxu0
      %4201 = vmatprep.mubr.bf16.mxu0 0
      %4202 = vmatmul.mubr.bf16.gmra.mrb[0].mxu0 %v4054
      %v4203 = vpop.f32.mrb[0].mxu0
      %v4204 = vadd.f32 0.0, %v4203
      %v4205 = vpop.f32.mrb[0].mxu0
      %v4206 = vpop.f32.mrb[0].mxu0
      %v4207 = vadd.f32 0.0, %v4206
      %v4208 = vpop.f32.mrb[0].mxu0
      %4209 = vmatprep.mubr.bf16.mxu0 0
      %4210 = vmatmul.mubr.bf16.gmra.mrb[0].mxu0 %v4055
      %v4211 = vpop.f32.mrb[0].mxu0
      %v4212 = vadd.f32 0.0, %v4211
      %v4213 = vpop.f32.mrb[0].mxu0
      %v4214 = vpop.f32.mrb[0].mxu0
      %v4215 = vadd.f32 0.0, %v4214
      %v4216 = vpop.f32.mrb[0].mxu0
      %4217 = vmatprep.mubr.bf16.mxu0 0
      %4218 = vmatmul.mubr.bf16.gmra.mrb[0].mxu0 %v4056
      %v4219 = vpop.f32.mrb[0].mxu0
      %v4220 = vadd.f32 0.0, %v4219
      %v4221 = vpop.f32.mrb[0].mxu0
      %v4222 = vpop.f32.mrb[0].mxu0
      %v4223 = vadd.f32 0.0, %v4222
      %v4224 = vpop.f32.mrb[0].mxu0
      %4225 = vmatprep.mubr.bf16.mxu0 0
      %4226 = vmatmul.mubr.bf16.gmra.mrb[0].mxu0 %v4057
      %v4227 = vpop.f32.mrb[0].mxu0
      %v4228 = vadd.f32 0.0, %v4227
      %v4229 = vpop.f32.mrb[0].mxu0
      %v4230 = vpop.f32.mrb[0].mxu0
      %v4231 = vadd.f32 0.0, %v4230
      %v4232 = vpop.f32.mrb[0].mxu0
      %4233 = vmatprep.mubr.bf16.mxu0 0
      %4234 = vmatmul.mubr.bf16.gmra.mrb[0].mxu0 %v4058
      %v4235 = vpop.f32.mrb[0].mxu0
      %v4236 = vadd.f32 0.0, %v4235
      %v4237 = vpop.f32.mrb[0].mxu0
      %v4238 = vpop.f32.mrb[0].mxu0
      %v4239 = vadd.f32 0.0, %v4238
      %v4240 = vpop.f32.mrb[0].mxu0
      %4241 = vmatprep.mubr.bf16.mxu0 0
      %4242 = vmatmul.mubr.bf16.gmra.mrb[0].mxu0 %v4059
      %v4243 = vpop.f32.mrb[0].mxu0
      %v4244 = vadd.f32 0.0, %v4243
      %v4245 = vpop.f32.mrb[0].mxu0
      %v4246 = vpop.f32.mrb[0].mxu0
      %v4247 = vadd.f32 0.0, %v4246
      %v4248 = vpop.f32.mrb[0].mxu0
      %4249 = vmatprep.mubr.bf16.mxu0 0
      %4250 = vmatmul.mubr.bf16.gmra.mrb[0].mxu0 %v4060
      %v4251 = vpop.f32.mrb[0].mxu0
      %v4252 = vadd.f32 0.0, %v4251
      %v4253 = vpop.f32.mrb[0].mxu0
      %v4254 = vpop.f32.mrb[0].mxu0
      %v4255 = vadd.f32 0.0, %v4254
      %v4256 = vpop.f32.mrb[0].mxu0
      %4257 = vmatprep.mubr.bf16.mxu0 0
      %4258 = vmatmul.mubr.bf16.gmra.mrb[0].mxu0 %v4061
      %v4259 = vpop.f32.mrb[0].mxu0
      %v4260 = vadd.f32 0.0, %v4259
      %v4261 = vpop.f32.mrb[0].mxu0
      %v4262 = vpop.f32.mrb[0].mxu0
      %v4263 = vadd.f32 0.0, %v4262
      %v4264 = vpop.f32.mrb[0].mxu0
      %4265 = vmatprep.mubr.bf16.mxu0 0
      %4266 = vmatmul.mubr.bf16.gmra.mrb[0].mxu0 %v4062
      %v4267 = vpop.f32.mrb[0].mxu0
      %v4268 = vadd.f32 0.0, %v4267
      %v4269 = vpop.f32.mrb[0].mxu0
      %v4270 = vpop.f32.mrb[0].mxu0
      %v4271 = vadd.f32 0.0, %v4270
      %v4272 = vpop.f32.mrb[0].mxu0
      %4273 = vmatprep.mubr.bf16.mxu0 0
      %4274 = vmatmul.mubr.bf16.gmra.mrb[0].mxu0 %v4063
      %v4275 = vpop.f32.mrb[0].mxu0
      %v4276 = vadd.f32 0.0, %v4275
      %v4277 = vpop.f32.mrb[0].mxu0
      %v4278 = vpop.f32.mrb[0].mxu0
      %v4279 = vadd.f32 0.0, %v4278
      %v4280 = vpop.f32.mrb[0].mxu0
      %4281 = vmatprep.mubr.bf16.mxu0 0
      %4282 = vmatmul.mubr.bf16.gmra.mrb[0].mxu0 %v4064
      %v4283 = vpop.f32.mrb[0].mxu0
      %v4284 = vadd.f32 0.0, %v4283
      %v4285 = vpop.f32.mrb[0].mxu0
      %v4286 = vpop.f32.mrb[0].mxu0
      %v4287 = vadd.f32 0.0, %v4286
      %v4288 = vpop.f32.mrb[0].mxu0
      %4289 = vdwg.mxu0
      %v4290 = vadd.f32 %v3904, %v4164
      %v4291 = vadd.f32 %v3905, %v4167
      %v4292 = vadd.f32 %v3906, %v4172
      %v4293 = vadd.f32 %v3907, %v4175
      %v4294 = vadd.f32 %v3908, %v4180
      %v4295 = vadd.f32 %v3909, %v4183
      %v4296 = vadd.f32 %v3910, %v4188
      %v4297 = vadd.f32 %v3911, %v4191
      %v4298 = vadd.f32 %v3912, %v4196
      %v4299 = vadd.f32 %v3913, %v4199
      %v4300 = vadd.f32 %v3914, %v4204
      %v4301 = vadd.f32 %v3915, %v4207
      %v4302 = vadd.f32 %v3916, %v4212
      %v4303 = vadd.f32 %v3917, %v4215
      %v4304 = vadd.f32 %v3918, %v4220
      %v4305 = vadd.f32 %v3919, %v4223
      %v4306 = vadd.f32 %v3920, %v4228
      %v4307 = vadd.f32 %v3921, %v4231
      %v4308 = vadd.f32 %v3922, %v4236
      %v4309 = vadd.f32 %v3923, %v4239
      %v4310 = vadd.f32 %v3924, %v4244
      %v4311 = vadd.f32 %v3925, %v4247
      %v4312 = vadd.f32 %v3926, %v4252
      %v4313 = vadd.f32 %v3927, %v4255
      %v4314 = vadd.f32 %v3928, %v4260
      %v4315 = vadd.f32 %v3929, %v4263
      %v4316 = vadd.f32 %v3930, %v4268
      %v4317 = vadd.f32 %v3931, %v4271
      %v4318 = vadd.f32 %v3932, %v4276
      %v4319 = vadd.f32 %v3933, %v4279
      %v4320 = vadd.f32 %v3934, %v4284
      %v4321 = vadd.f32 %v3935, %v4287
      %v4322 = vld [vmem:[%s3936] sm:$0xf]
      %v4323 = vld [vmem:[%s3936 + $0x4] sm:$0xf]
      %v4324 = vld [vmem:[%s3936 + $0x8] sm:$0x1]
      %v4325 = vld [vmem:[%s3936 + $0xc] sm:$0xf]
      %v4326 = vld [vmem:[%s3936 + $0x10] sm:$0xf]
      %v4327 = vld [vmem:[%s3936 + $0x14] sm:$0x1]
      %v4328 = vld [vmem:[%s3936 + $0x18] sm:$0xf]
      %v4329 = vld [vmem:[%s3936 + $0x1c] sm:$0xf]
      %v4330 = vld [vmem:[%s3936 + $0x20] sm:$0x1]
      %v4331 = vld [vmem:[%s3936 + $0x24] sm:$0xf]
      %v4332 = vld [vmem:[%s3936 + $0x28] sm:$0xf]
      %v4333 = vld [vmem:[%s3936 + $0x2c] sm:$0x1]
      %v4334 = vld [vmem:[%s3936 + $0x30] sm:$0xf]
      %v4335 = vld [vmem:[%s3936 + $0x34] sm:$0xf]
      %v4336 = vld [vmem:[%s3936 + $0x38] sm:$0x1]
      %v4337 = vld [vmem:[%s3936 + $0x3c] sm:$0xf]
      %v4338 = vld [vmem:[%s3936 + $0x40] sm:$0xf]
      %v4339 = vld [vmem:[%s3936 + $0x44] sm:$0x1]
      %v4340 = vld [vmem:[%s3936 + $0x48] sm:$0xf]
      %v4341 = vld [vmem:[%s3936 + $0x4c] sm:$0xf]
      %v4342 = vld [vmem:[%s3936 + $0x50] sm:$0x1]
      %v4343 = vld [vmem:[%s3936 + $0x54] sm:$0xf]
      %v4344 = vld [vmem:[%s3936 + $0x58] sm:$0xf]
      %v4345 = vld [vmem:[%s3936 + $0x5c] sm:$0x1]
      %v4346 = vld [vmem:[%s3936 + $0x60] sm:$0xf]
      %v4347 = vld [vmem:[%s3936 + $0x64] sm:$0xf]
      %v4348 = vld [vmem:[%s3936 + $0x68] sm:$0x1]
      %v4349 = vld [vmem:[%s3936 + $0x6c] sm:$0xf]
      %v4350 = vld [vmem:[%s3936 + $0x70] sm:$0xf]
      %v4351 = vld [vmem:[%s3936 + $0x74] sm:$0x1]
      %v4352 = vld [vmem:[%s3936 + $0x78] sm:$0xf]
      %v4353 = vld [vmem:[%s3936 + $0x7c] sm:$0xf]
      %v4354 = vld [vmem:[%s3936 + $0x80] sm:$0x1]
      %v4355 = vld [vmem:[%s3936 + $0x84] sm:$0xf]
      %v4356 = vld [vmem:[%s3936 + $0x88] sm:$0xf]
      %v4357 = vld [vmem:[%s3936 + $0x8c] sm:$0x1]
      %v4358 = vld [vmem:[%s3936 + $0x90] sm:$0xf]
      %v4359 = vld [vmem:[%s3936 + $0x94] sm:$0xf]
      %v4360 = vld [vmem:[%s3936 + $0x98] sm:$0x1]
      %v4361 = vld [vmem:[%s3936 + $0x9c] sm:$0xf]
      %v4362 = vld [vmem:[%s3936 + $0xa0] sm:$0xf]
      %v4363 = vld [vmem:[%s3936 + $0xa4] sm:$0x1]
      %v4364 = vld [vmem:[%s3936 + $0xa8] sm:$0xf]
      %v4365 = vld [vmem:[%s3936 + $0xac] sm:$0xf]
      %v4366 = vld [vmem:[%s3936 + $0xb0] sm:$0x1]
      %v4367 = vld [vmem:[%s3936 + $0xb4] sm:$0xf]
      %v4368 = vld [vmem:[%s3936 + $0xb8] sm:$0xf]
      %v4369 = vld [vmem:[%s3936 + $0xbc] sm:$0x1]
      %v4370 = vld [vmem:[%s1 + $0x1c0] sm:$0xf]
      %v4371 = vld [vmem:[%s1 + $0x1c4] sm:$0xf]
      %v4372 = vld [vmem:[%s1 + $0x1c8] sm:$0xf]
      %v4373 = vld [vmem:[%s1 + $0x1cc] sm:$0xf]
      %v4374 = vld [vmem:[%s1 + $0x1d0] sm:$0xf]
      %v4375 = vld [vmem:[%s1 + $0x1d4] sm:$0xf]
      %v4376 = vld [vmem:[%s1 + $0x1d8] sm:$0xf]
      %v4377 = vld [vmem:[%s1 + $0x1dc] sm:$0xf]
      %v4378 = vld [vmem:[%s1 + $0x1e0] sm:$0xf]
      %v4379 = vld [vmem:[%s1 + $0x1e4] sm:$0xf]
      %v4380 = vld [vmem:[%s1 + $0x1e8] sm:$0xf]
      %v4381 = vld [vmem:[%s1 + $0x1ec] sm:$0xf]
      %v4382 = vld [vmem:[%s1 + $0x1f0] sm:$0xf]
      %v4383 = vld [vmem:[%s1 + $0x1f4] sm:$0xf]
      %v4384 = vld [vmem:[%s1 + $0x1f8] sm:$0xf]
      %v4385 = vld [vmem:[%s1 + $0x1fc] sm:$0xf]
      %v4387 = vshrl.u32 %v4322, 16
      %v4389 = vrot.slane %v4387, 4
      %v4390 = vshll.u32 %v4322, 16
      %v4392 = vrot.slane %v4390, 5
      %v4393 = vor.u32 %v4389, %v4392
      %v4394 = vrot.slane %v4393, 4
      %v4396 = vshll.u32 %v4323, 16
      %v4398 = vrot.slane %v4396, 5
      %v4399 = vsel %vm854, %v4394, %v4398
      %v4400 = vshrl.u32 %v4323, 16
      %v4402 = vrot.slane %v4400, 4
      %v4403 = vor.u32 %v4402, %v4398
      %v4404 = vrot.slane %v4403, 4
      %v4406 = vshll.u32 %v4324, 16
      %v4408 = vrot.slane %v4406, 5
      %v4409 = vsel %vm854, %v4404, %v4408
      %v4411 = vshrl.u32 %v4325, 16
      %v4413 = vrot.slane %v4411, 4
      %v4414 = vshll.u32 %v4325, 16
      %v4416 = vrot.slane %v4414, 5
      %v4417 = vor.u32 %v4413, %v4416
      %v4418 = vrot.slane %v4417, 4
      %v4420 = vshll.u32 %v4326, 16
      %v4422 = vrot.slane %v4420, 5
      %v4423 = vsel %vm854, %v4418, %v4422
      %v4424 = vshrl.u32 %v4326, 16
      %v4426 = vrot.slane %v4424, 4
      %v4427 = vor.u32 %v4426, %v4422
      %v4428 = vrot.slane %v4427, 4
      %v4430 = vshll.u32 %v4327, 16
      %v4432 = vrot.slane %v4430, 5
      %v4433 = vsel %vm854, %v4428, %v4432
      %v4435 = vshrl.u32 %v4328, 16
      %v4437 = vrot.slane %v4435, 4
      %v4438 = vshll.u32 %v4328, 16
      %v4440 = vrot.slane %v4438, 5
      %v4441 = vor.u32 %v4437, %v4440
      %v4442 = vrot.slane %v4441, 4
      %v4444 = vshll.u32 %v4329, 16
      %v4446 = vrot.slane %v4444, 5
      %v4447 = vsel %vm854, %v4442, %v4446
      %v4448 = vshrl.u32 %v4329, 16
      %v4450 = vrot.slane %v4448, 4
      %v4451 = vor.u32 %v4450, %v4446
      %v4452 = vrot.slane %v4451, 4
      %v4454 = vshll.u32 %v4330, 16
      %v4456 = vrot.slane %v4454, 5
      %v4457 = vsel %vm854, %v4452, %v4456
      %v4459 = vshrl.u32 %v4331, 16
      %v4461 = vrot.slane %v4459, 4
      %v4462 = vshll.u32 %v4331, 16
      %v4464 = vrot.slane %v4462, 5
      %v4465 = vor.u32 %v4461, %v4464
      %v4466 = vrot.slane %v4465, 4
      %v4468 = vshll.u32 %v4332, 16
      %v4470 = vrot.slane %v4468, 5
      %v4471 = vsel %vm854, %v4466, %v4470
      %v4472 = vshrl.u32 %v4332, 16
      %v4474 = vrot.slane %v4472, 4
      %v4475 = vor.u32 %v4474, %v4470
      %v4476 = vrot.slane %v4475, 4
      %v4478 = vshll.u32 %v4333, 16
      %v4480 = vrot.slane %v4478, 5
      %v4481 = vsel %vm854, %v4476, %v4480
      %v4483 = vshrl.u32 %v4334, 16
      %v4485 = vrot.slane %v4483, 4
      %v4486 = vshll.u32 %v4334, 16
      %v4488 = vrot.slane %v4486, 5
      %v4489 = vor.u32 %v4485, %v4488
      %v4490 = vrot.slane %v4489, 4
      %v4492 = vshll.u32 %v4335, 16
      %v4494 = vrot.slane %v4492, 5
      %v4495 = vsel %vm854, %v4490, %v4494
      %v4496 = vshrl.u32 %v4335, 16
      %v4498 = vrot.slane %v4496, 4
      %v4499 = vor.u32 %v4498, %v4494
      %v4500 = vrot.slane %v4499, 4
      %v4502 = vshll.u32 %v4336, 16
      %v4504 = vrot.slane %v4502, 5
      %v4505 = vsel %vm854, %v4500, %v4504
      %v4507 = vshrl.u32 %v4337, 16
      %v4509 = vrot.slane %v4507, 4
      %v4510 = vshll.u32 %v4337, 16
      %v4512 = vrot.slane %v4510, 5
      %v4513 = vor.u32 %v4509, %v4512
      %v4514 = vrot.slane %v4513, 4
      %v4516 = vshll.u32 %v4338, 16
      %v4518 = vrot.slane %v4516, 5
      %v4519 = vsel %vm854, %v4514, %v4518
      %v4520 = vshrl.u32 %v4338, 16
      %v4522 = vrot.slane %v4520, 4
      %v4523 = vor.u32 %v4522, %v4518
      %v4524 = vrot.slane %v4523, 4
      %v4526 = vshll.u32 %v4339, 16
      %v4528 = vrot.slane %v4526, 5
      %v4529 = vsel %vm854, %v4524, %v4528
      %v4531 = vshrl.u32 %v4340, 16
      %v4533 = vrot.slane %v4531, 4
      %v4534 = vshll.u32 %v4340, 16
      %v4536 = vrot.slane %v4534, 5
      %v4537 = vor.u32 %v4533, %v4536
      %v4538 = vrot.slane %v4537, 4
      %v4540 = vshll.u32 %v4341, 16
      %v4542 = vrot.slane %v4540, 5
      %v4543 = vsel %vm854, %v4538, %v4542
      %v4544 = vshrl.u32 %v4341, 16
      %v4546 = vrot.slane %v4544, 4
      %v4547 = vor.u32 %v4546, %v4542
      %v4548 = vrot.slane %v4547, 4
      %v4550 = vshll.u32 %v4342, 16
      %v4552 = vrot.slane %v4550, 5
      %v4553 = vsel %vm854, %v4548, %v4552
      %v4555 = vshrl.u32 %v4343, 16
      %v4557 = vrot.slane %v4555, 4
      %v4558 = vshll.u32 %v4343, 16
      %v4560 = vrot.slane %v4558, 5
      %v4561 = vor.u32 %v4557, %v4560
      %v4562 = vrot.slane %v4561, 4
      %v4564 = vshll.u32 %v4344, 16
      %v4566 = vrot.slane %v4564, 5
      %v4567 = vsel %vm854, %v4562, %v4566
      %v4568 = vshrl.u32 %v4344, 16
      %v4570 = vrot.slane %v4568, 4
      %v4571 = vor.u32 %v4570, %v4566
      %v4572 = vrot.slane %v4571, 4
      %v4574 = vshll.u32 %v4345, 16
      %v4576 = vrot.slane %v4574, 5
      %v4577 = vsel %vm854, %v4572, %v4576
      %v4579 = vshrl.u32 %v4346, 16
      %v4581 = vrot.slane %v4579, 4
      %v4582 = vshll.u32 %v4346, 16
      %v4584 = vrot.slane %v4582, 5
      %v4585 = vor.u32 %v4581, %v4584
      %v4586 = vrot.slane %v4585, 4
      %v4588 = vshll.u32 %v4347, 16
      %v4590 = vrot.slane %v4588, 5
      %v4591 = vsel %vm854, %v4586, %v4590
      %v4592 = vshrl.u32 %v4347, 16
      %v4594 = vrot.slane %v4592, 4
      %v4595 = vor.u32 %v4594, %v4590
      %v4596 = vrot.slane %v4595, 4
      %v4598 = vshll.u32 %v4348, 16
      %v4600 = vrot.slane %v4598, 5
      %v4601 = vsel %vm854, %v4596, %v4600
      %v4603 = vshrl.u32 %v4349, 16
      %v4605 = vrot.slane %v4603, 4
      %v4606 = vshll.u32 %v4349, 16
      %v4608 = vrot.slane %v4606, 5
      %v4609 = vor.u32 %v4605, %v4608
      %v4610 = vrot.slane %v4609, 4
      %v4612 = vshll.u32 %v4350, 16
      %v4614 = vrot.slane %v4612, 5
      %v4615 = vsel %vm854, %v4610, %v4614
      %v4616 = vshrl.u32 %v4350, 16
      %v4618 = vrot.slane %v4616, 4
      %v4619 = vor.u32 %v4618, %v4614
      %v4620 = vrot.slane %v4619, 4
      %v4622 = vshll.u32 %v4351, 16
      %v4624 = vrot.slane %v4622, 5
      %v4625 = vsel %vm854, %v4620, %v4624
      %v4627 = vshrl.u32 %v4352, 16
      %v4629 = vrot.slane %v4627, 4
      %v4630 = vshll.u32 %v4352, 16
      %v4632 = vrot.slane %v4630, 5
      %v4633 = vor.u32 %v4629, %v4632
      %v4634 = vrot.slane %v4633, 4
      %v4636 = vshll.u32 %v4353, 16
      %v4638 = vrot.slane %v4636, 5
      %v4639 = vsel %vm854, %v4634, %v4638
      %v4640 = vshrl.u32 %v4353, 16
      %v4642 = vrot.slane %v4640, 4
      %v4643 = vor.u32 %v4642, %v4638
      %v4644 = vrot.slane %v4643, 4
      %v4646 = vshll.u32 %v4354, 16
      %v4648 = vrot.slane %v4646, 5
      %v4649 = vsel %vm854, %v4644, %v4648
      %v4651 = vshrl.u32 %v4355, 16
      %v4653 = vrot.slane %v4651, 4
      %v4654 = vshll.u32 %v4355, 16
      %v4656 = vrot.slane %v4654, 5
      %v4657 = vor.u32 %v4653, %v4656
      %v4658 = vrot.slane %v4657, 4
      %v4660 = vshll.u32 %v4356, 16
      %v4662 = vrot.slane %v4660, 5
      %v4663 = vsel %vm854, %v4658, %v4662
      %v4664 = vshrl.u32 %v4356, 16
      %v4666 = vrot.slane %v4664, 4
      %v4667 = vor.u32 %v4666, %v4662
      %v4668 = vrot.slane %v4667, 4
      %v4670 = vshll.u32 %v4357, 16
      %v4672 = vrot.slane %v4670, 5
      %v4673 = vsel %vm854, %v4668, %v4672
      %v4675 = vshrl.u32 %v4358, 16
      %v4677 = vrot.slane %v4675, 4
      %v4678 = vshll.u32 %v4358, 16
      %v4680 = vrot.slane %v4678, 5
      %v4681 = vor.u32 %v4677, %v4680
      %v4682 = vrot.slane %v4681, 4
      %v4684 = vshll.u32 %v4359, 16
      %v4686 = vrot.slane %v4684, 5
      %v4687 = vsel %vm854, %v4682, %v4686
      %v4688 = vshrl.u32 %v4359, 16
      %v4690 = vrot.slane %v4688, 4
      %v4691 = vor.u32 %v4690, %v4686
      %v4692 = vrot.slane %v4691, 4
      %v4694 = vshll.u32 %v4360, 16
      %v4696 = vrot.slane %v4694, 5
      %v4697 = vsel %vm854, %v4692, %v4696
      %v4699 = vshrl.u32 %v4361, 16
      %v4701 = vrot.slane %v4699, 4
      %v4702 = vshll.u32 %v4361, 16
      %v4704 = vrot.slane %v4702, 5
      %v4705 = vor.u32 %v4701, %v4704
      %v4706 = vrot.slane %v4705, 4
      %v4708 = vshll.u32 %v4362, 16
      %v4710 = vrot.slane %v4708, 5
      %v4711 = vsel %vm854, %v4706, %v4710
      %v4712 = vshrl.u32 %v4362, 16
      %v4714 = vrot.slane %v4712, 4
      %v4715 = vor.u32 %v4714, %v4710
      %v4716 = vrot.slane %v4715, 4
      %v4718 = vshll.u32 %v4363, 16
      %v4720 = vrot.slane %v4718, 5
      %v4721 = vsel %vm854, %v4716, %v4720
      %v4723 = vshrl.u32 %v4364, 16
      %v4725 = vrot.slane %v4723, 4
      %v4726 = vshll.u32 %v4364, 16
      %v4728 = vrot.slane %v4726, 5
      %v4729 = vor.u32 %v4725, %v4728
      %v4730 = vrot.slane %v4729, 4
      %v4732 = vshll.u32 %v4365, 16
      %v4734 = vrot.slane %v4732, 5
      %v4735 = vsel %vm854, %v4730, %v4734
      %v4736 = vshrl.u32 %v4365, 16
      %v4738 = vrot.slane %v4736, 4
      %v4739 = vor.u32 %v4738, %v4734
      %v4740 = vrot.slane %v4739, 4
      %v4742 = vshll.u32 %v4366, 16
      %v4744 = vrot.slane %v4742, 5
      %v4745 = vsel %vm854, %v4740, %v4744
      %v4747 = vshrl.u32 %v4367, 16
      %v4749 = vrot.slane %v4747, 4
      %v4750 = vshll.u32 %v4367, 16
      %v4752 = vrot.slane %v4750, 5
      %v4753 = vor.u32 %v4749, %v4752
      %v4754 = vrot.slane %v4753, 4
      %v4756 = vshll.u32 %v4368, 16
      %v4758 = vrot.slane %v4756, 5
      %v4759 = vsel %vm854, %v4754, %v4758
      %v4760 = vshrl.u32 %v4368, 16
      %v4762 = vrot.slane %v4760, 4
      %v4763 = vor.u32 %v4762, %v4758
      %v4764 = vrot.slane %v4763, 4
      %v4766 = vshll.u32 %v4369, 16
      %v4768 = vrot.slane %v4766, 5
      %v4769 = vsel %vm854, %v4764, %v4768
      %v4770 = vunpack.c.l.b16 %v4399
      %v4771 = vunpack.c.l.b16 %v4409
      %v4772 = vunpack.c.l.b16 %v4423
      %v4773 = vunpack.c.l.b16 %v4433
      %v4774 = vunpack.c.l.b16 %v4447
      %v4775 = vunpack.c.l.b16 %v4457
      %v4776 = vunpack.c.l.b16 %v4471
      %v4777 = vunpack.c.l.b16 %v4481
      %v4778 = vunpack.c.l.b16 %v4495
      %v4779 = vunpack.c.l.b16 %v4505
      %v4780 = vunpack.c.l.b16 %v4519
      %v4781 = vunpack.c.l.b16 %v4529
      %v4782 = vunpack.c.l.b16 %v4543
      %v4783 = vunpack.c.l.b16 %v4553
      %v4784 = vunpack.c.l.b16 %v4567
      %v4785 = vunpack.c.l.b16 %v4577
      %v4786 = vunpack.c.l.b16 %v4591
      %v4787 = vunpack.c.l.b16 %v4601
      %v4788 = vunpack.c.l.b16 %v4615
      %v4789 = vunpack.c.l.b16 %v4625
      %v4790 = vunpack.c.l.b16 %v4639
      %v4791 = vunpack.c.l.b16 %v4649
      %v4792 = vunpack.c.l.b16 %v4663
      %v4793 = vunpack.c.l.b16 %v4673
      %v4794 = vunpack.c.l.b16 %v4687
      %v4795 = vunpack.c.l.b16 %v4697
      %v4796 = vunpack.c.l.b16 %v4711
      %v4797 = vunpack.c.l.b16 %v4721
      %v4798 = vunpack.c.l.b16 %v4735
      %v4799 = vunpack.c.l.b16 %v4745
      %v4800 = vunpack.c.l.b16 %v4759
      %v4801 = vunpack.c.l.b16 %v4769
      %v4802 = vpack.c.b16 %v4771, %v4770
      %v4803 = vpack.c.b16 %v4773, %v4772
      %v4804 = vpack.c.b16 %v4775, %v4774
      %v4805 = vpack.c.b16 %v4777, %v4776
      %v4806 = vpack.c.b16 %v4779, %v4778
      %v4807 = vpack.c.b16 %v4781, %v4780
      %v4808 = vpack.c.b16 %v4783, %v4782
      %v4809 = vpack.c.b16 %v4785, %v4784
      %v4810 = vpack.c.b16 %v4787, %v4786
      %v4811 = vpack.c.b16 %v4789, %v4788
      %v4812 = vpack.c.b16 %v4791, %v4790
      %v4813 = vpack.c.b16 %v4793, %v4792
      %v4814 = vpack.c.b16 %v4795, %v4794
      %v4815 = vpack.c.b16 %v4797, %v4796
      %v4816 = vpack.c.b16 %v4799, %v4798
      %v4817 = vpack.c.b16 %v4801, %v4800
      %v4850 = vunpack.c.l.b16 %v4370
      %v4851 = vunpack.c.l.b16 %v4371
      %v4852 = vunpack.c.l.b16 %v4372
      %v4853 = vunpack.c.l.b16 %v4373
      %v4854 = vunpack.c.l.b16 %v4374
      %v4855 = vunpack.c.l.b16 %v4375
      %v4856 = vunpack.c.l.b16 %v4376
      %v4857 = vunpack.c.l.b16 %v4377
      %v4858 = vunpack.c.l.b16 %v4378
      %v4859 = vunpack.c.l.b16 %v4379
      %v4860 = vunpack.c.l.b16 %v4380
      %v4861 = vunpack.c.l.b16 %v4381
      %v4862 = vunpack.c.l.b16 %v4382
      %v4863 = vunpack.c.l.b16 %v4383
      %v4864 = vunpack.c.l.b16 %v4384
      %v4865 = vunpack.c.l.b16 %v4385
      %v4866 = vpack.c.b16 %v4851, %v4850
      %v4867 = vpack.c.b16 %v4853, %v4852
      %v4868 = vpack.c.b16 %v4855, %v4854
      %v4869 = vpack.c.b16 %v4857, %v4856
      %v4870 = vpack.c.b16 %v4859, %v4858
      %v4871 = vpack.c.b16 %v4861, %v4860
      %v4872 = vpack.c.b16 %v4863, %v4862
      %v4873 = vpack.c.b16 %v4865, %v4864
      %4882 = vmatprep.subr.bf16.mxu0 0
      %4883 = vmatpush1.bf16.msra.mxu0 %v4866
      %4884 = vmatprep.subr.bf16.mxu0 0
      %4885 = vmatpush1.bf16.msra.mxu0 %v4867
      %4886 = vmatprep.subr.bf16.mxu0 0
      %4887 = vmatpush1.bf16.msra.mxu0 %v4868
      %4888 = vmatprep.subr.bf16.mxu0 0
      %4889 = vmatpush1.bf16.msra.mxu0 %v4869
      %4890 = vmatprep.subr.bf16.mxu0 0
      %4891 = vmatpush1.bf16.msra.mxu0 %v4870
      %4892 = vmatprep.subr.bf16.mxu0 0
      %4893 = vmatpush1.bf16.msra.mxu0 %v4871
      %4894 = vmatprep.subr.bf16.mxu0 0
      %4895 = vmatpush1.bf16.msra.mxu0 %v4872
      %4896 = vmatprep.subr.bf16.mxu0 0
      %4897 = vmatpush1.bf16.msra.mxu0 %v4873
      %4898 = vmatprep.subr.bf16.mxu0 0
      %4899 = vmatpush1.bf16.msra.mxu0 0
      %4900 = vmatprep.subr.bf16.mxu0 0
      %4901 = vmatpush1.bf16.msra.mxu0 0
      %4902 = vmatprep.subr.bf16.mxu0 0
      %4903 = vmatpush1.bf16.msra.mxu0 0
      %4904 = vmatprep.subr.bf16.mxu0 0
      %4905 = vmatpush1.bf16.msra.mxu0 0
      %4906 = vmatprep.subr.bf16.mxu0 0
      %4907 = vmatpush1.bf16.msra.mxu0 0
      %4908 = vmatprep.subr.bf16.mxu0 0
      %4909 = vmatpush1.bf16.msra.mxu0 0
      %4910 = vmatprep.subr.bf16.mxu0 0
      %4911 = vmatpush1.bf16.msra.mxu0 0
      %4912 = vmatprep.subr.bf16.mxu0 0
      %4913 = vmatpush1.bf16.msra.mxu0 0
      %4914 = vmatprep.mubr.bf16.mxu0 0
      %4915 = vmatmul.mubr.bf16.gmra.mrb[0].mxu0 %v4802
      %v4916 = vpop.f32.mrb[0].mxu0
      %v4917 = vadd.f32 0.0, %v4916
      %v4918 = vpop.f32.mrb[0].mxu0
      %v4919 = vpop.f32.mrb[0].mxu0
      %v4920 = vadd.f32 0.0, %v4919
      %v4921 = vpop.f32.mrb[0].mxu0
      %4922 = vmatprep.mubr.bf16.mxu0 0
      %4923 = vmatmul.mubr.bf16.gmra.mrb[0].mxu0 %v4803
      %v4924 = vpop.f32.mrb[0].mxu0
      %v4925 = vadd.f32 0.0, %v4924
      %v4926 = vpop.f32.mrb[0].mxu0
      %v4927 = vpop.f32.mrb[0].mxu0
      %v4928 = vadd.f32 0.0, %v4927
      %v4929 = vpop.f32.mrb[0].mxu0
      %4930 = vmatprep.mubr.bf16.mxu0 0
      %4931 = vmatmul.mubr.bf16.gmra.mrb[0].mxu0 %v4804
      %v4932 = vpop.f32.mrb[0].mxu0
      %v4933 = vadd.f32 0.0, %v4932
      %v4934 = vpop.f32.mrb[0].mxu0
      %v4935 = vpop.f32.mrb[0].mxu0
      %v4936 = vadd.f32 0.0, %v4935
      %v4937 = vpop.f32.mrb[0].mxu0
      %4938 = vmatprep.mubr.bf16.mxu0 0
      %4939 = vmatmul.mubr.bf16.gmra.mrb[0].mxu0 %v4805
      %v4940 = vpop.f32.mrb[0].mxu0
      %v4941 = vadd.f32 0.0, %v4940
      %v4942 = vpop.f32.mrb[0].mxu0
      %v4943 = vpop.f32.mrb[0].mxu0
      %v4944 = vadd.f32 0.0, %v4943
      %v4945 = vpop.f32.mrb[0].mxu0
      %4946 = vmatprep.mubr.bf16.mxu0 0
      %4947 = vmatmul.mubr.bf16.gmra.mrb[0].mxu0 %v4806
      %v4948 = vpop.f32.mrb[0].mxu0
      %v4949 = vadd.f32 0.0, %v4948
      %v4950 = vpop.f32.mrb[0].mxu0
      %v4951 = vpop.f32.mrb[0].mxu0
      %v4952 = vadd.f32 0.0, %v4951
      %v4953 = vpop.f32.mrb[0].mxu0
      %4954 = vmatprep.mubr.bf16.mxu0 0
      %4955 = vmatmul.mubr.bf16.gmra.mrb[0].mxu0 %v4807
      %v4956 = vpop.f32.mrb[0].mxu0
      %v4957 = vadd.f32 0.0, %v4956
      %v4958 = vpop.f32.mrb[0].mxu0
      %v4959 = vpop.f32.mrb[0].mxu0
      %v4960 = vadd.f32 0.0, %v4959
      %v4961 = vpop.f32.mrb[0].mxu0
      %4962 = vmatprep.mubr.bf16.mxu0 0
      %4963 = vmatmul.mubr.bf16.gmra.mrb[0].mxu0 %v4808
      %v4964 = vpop.f32.mrb[0].mxu0
      %v4965 = vadd.f32 0.0, %v4964
      %v4966 = vpop.f32.mrb[0].mxu0
      %v4967 = vpop.f32.mrb[0].mxu0
      %v4968 = vadd.f32 0.0, %v4967
      %v4969 = vpop.f32.mrb[0].mxu0
      %4970 = vmatprep.mubr.bf16.mxu0 0
      %4971 = vmatmul.mubr.bf16.gmra.mrb[0].mxu0 %v4809
      %v4972 = vpop.f32.mrb[0].mxu0
      %v4973 = vadd.f32 0.0, %v4972
      %v4974 = vpop.f32.mrb[0].mxu0
      %v4975 = vpop.f32.mrb[0].mxu0
      %v4976 = vadd.f32 0.0, %v4975
      %v4977 = vpop.f32.mrb[0].mxu0
      %4978 = vmatprep.mubr.bf16.mxu0 0
      %4979 = vmatmul.mubr.bf16.gmra.mrb[0].mxu0 %v4810
      %v4980 = vpop.f32.mrb[0].mxu0
      %v4981 = vadd.f32 0.0, %v4980
      %v4982 = vpop.f32.mrb[0].mxu0
      %v4983 = vpop.f32.mrb[0].mxu0
      %v4984 = vadd.f32 0.0, %v4983
      %v4985 = vpop.f32.mrb[0].mxu0
      %4986 = vmatprep.mubr.bf16.mxu0 0
      %4987 = vmatmul.mubr.bf16.gmra.mrb[0].mxu0 %v4811
      %v4988 = vpop.f32.mrb[0].mxu0
      %v4989 = vadd.f32 0.0, %v4988
      %v4990 = vpop.f32.mrb[0].mxu0
      %v4991 = vpop.f32.mrb[0].mxu0
      %v4992 = vadd.f32 0.0, %v4991
      %v4993 = vpop.f32.mrb[0].mxu0
      %4994 = vmatprep.mubr.bf16.mxu0 0
      %4995 = vmatmul.mubr.bf16.gmra.mrb[0].mxu0 %v4812
      %v4996 = vpop.f32.mrb[0].mxu0
      %v4997 = vadd.f32 0.0, %v4996
      %v4998 = vpop.f32.mrb[0].mxu0
      %v4999 = vpop.f32.mrb[0].mxu0
      %v5000 = vadd.f32 0.0, %v4999
      %v5001 = vpop.f32.mrb[0].mxu0
      %5002 = vmatprep.mubr.bf16.mxu0 0
      %5003 = vmatmul.mubr.bf16.gmra.mrb[0].mxu0 %v4813
      %v5004 = vpop.f32.mrb[0].mxu0
      %v5005 = vadd.f32 0.0, %v5004
      %v5006 = vpop.f32.mrb[0].mxu0
      %v5007 = vpop.f32.mrb[0].mxu0
      %v5008 = vadd.f32 0.0, %v5007
      %v5009 = vpop.f32.mrb[0].mxu0
      %5010 = vmatprep.mubr.bf16.mxu0 0
      %5011 = vmatmul.mubr.bf16.gmra.mrb[0].mxu0 %v4814
      %v5012 = vpop.f32.mrb[0].mxu0
      %v5013 = vadd.f32 0.0, %v5012
      %v5014 = vpop.f32.mrb[0].mxu0
      %v5015 = vpop.f32.mrb[0].mxu0
      %v5016 = vadd.f32 0.0, %v5015
      %v5017 = vpop.f32.mrb[0].mxu0
      %5018 = vmatprep.mubr.bf16.mxu0 0
      %5019 = vmatmul.mubr.bf16.gmra.mrb[0].mxu0 %v4815
      %v5020 = vpop.f32.mrb[0].mxu0
      %v5021 = vadd.f32 0.0, %v5020
      %v5022 = vpop.f32.mrb[0].mxu0
      %v5023 = vpop.f32.mrb[0].mxu0
      %v5024 = vadd.f32 0.0, %v5023
      %v5025 = vpop.f32.mrb[0].mxu0
      %5026 = vmatprep.mubr.bf16.mxu0 0
      %5027 = vmatmul.mubr.bf16.gmra.mrb[0].mxu0 %v4816
      %v5028 = vpop.f32.mrb[0].mxu0
      %v5029 = vadd.f32 0.0, %v5028
      %v5030 = vpop.f32.mrb[0].mxu0
      %v5031 = vpop.f32.mrb[0].mxu0
      %v5032 = vadd.f32 0.0, %v5031
      %v5033 = vpop.f32.mrb[0].mxu0
      %5034 = vmatprep.mubr.bf16.mxu0 0
      %5035 = vmatmul.mubr.bf16.gmra.mrb[0].mxu0 %v4817
      %v5036 = vpop.f32.mrb[0].mxu0
      %v5037 = vadd.f32 0.0, %v5036
      %v5038 = vpop.f32.mrb[0].mxu0
      %v5039 = vpop.f32.mrb[0].mxu0
      %v5040 = vadd.f32 0.0, %v5039
      %v5041 = vpop.f32.mrb[0].mxu0
      %5042 = vdwg.mxu0
      %v5043 = vadd.f32 %v4290, %v4917
      %v5044 = vadd.f32 %v4291, %v4920
      %v5045 = vadd.f32 %v4292, %v4925
      %v5046 = vadd.f32 %v4293, %v4928
      %v5047 = vadd.f32 %v4294, %v4933
      %v5048 = vadd.f32 %v4295, %v4936
      %v5049 = vadd.f32 %v4296, %v4941
      %v5050 = vadd.f32 %v4297, %v4944
      %v5051 = vadd.f32 %v4298, %v4949
      %v5052 = vadd.f32 %v4299, %v4952
      %v5053 = vadd.f32 %v4300, %v4957
      %v5054 = vadd.f32 %v4301, %v4960
      %v5055 = vadd.f32 %v4302, %v4965
      %v5056 = vadd.f32 %v4303, %v4968
      %v5057 = vadd.f32 %v4304, %v4973
      %v5058 = vadd.f32 %v4305, %v4976
      %v5059 = vadd.f32 %v4306, %v4981
      %v5060 = vadd.f32 %v4307, %v4984
      %v5061 = vadd.f32 %v4308, %v4989
      %v5062 = vadd.f32 %v4309, %v4992
      %v5063 = vadd.f32 %v4310, %v4997
      %v5064 = vadd.f32 %v4311, %v5000
      %v5065 = vadd.f32 %v4312, %v5005
      %v5066 = vadd.f32 %v4313, %v5008
      %v5067 = vadd.f32 %v4314, %v5013
      %v5068 = vadd.f32 %v4315, %v5016
      %v5069 = vadd.f32 %v4316, %v5021
      %v5070 = vadd.f32 %v4317, %v5024
      %v5071 = vadd.f32 %v4318, %v5029
      %v5072 = vadd.f32 %v4319, %v5032
      %v5073 = vadd.f32 %v4320, %v5037
      %v5074 = vadd.f32 %v4321, %v5040
      %v5075 = vld [vmem:[%s3936] sm:$0xe]
      %v5076 = vld [vmem:[%s3936 + $0xc] sm:$0xe]
      %v5077 = vld [vmem:[%s3936 + $0x18] sm:$0xe]
      %v5078 = vld [vmem:[%s3936 + $0x24] sm:$0xe]
      %v5079 = vld [vmem:[%s3936 + $0x30] sm:$0xe]
      %v5080 = vld [vmem:[%s3936 + $0x3c] sm:$0xe]
      %v5081 = vld [vmem:[%s3936 + $0x48] sm:$0xe]
      %v5082 = vld [vmem:[%s3936 + $0x54] sm:$0xe]
      %v5083 = vld [vmem:[%s3936 + $0x60] sm:$0xe]
      %v5084 = vld [vmem:[%s3936 + $0x6c] sm:$0xe]
      %v5085 = vld [vmem:[%s3936 + $0x78] sm:$0xe]
      %v5086 = vld [vmem:[%s3936 + $0x84] sm:$0xe]
      %v5087 = vld [vmem:[%s3936 + $0x90] sm:$0xe]
      %v5088 = vld [vmem:[%s3936 + $0x9c] sm:$0xe]
      %v5089 = vld [vmem:[%s3936 + $0xa8] sm:$0xe]
      %v5090 = vld [vmem:[%s3936 + $0xb4] sm:$0xe]
      %v5091 = vld [vmem:[%s1 + $0x200] sm:$0xf]
      %v5092 = vld [vmem:[%s1 + $0x204] sm:$0xf]
      %v5093 = vld [vmem:[%s1 + $0x208] sm:$0xf]
      %v5094 = vld [vmem:[%s1 + $0x20c] sm:$0xf]
      %v5095 = vld [vmem:[%s1 + $0x210] sm:$0xf]
      %v5096 = vld [vmem:[%s1 + $0x214] sm:$0xf]
      %v5097 = vld [vmem:[%s1 + $0x218] sm:$0xf]
      %v5098 = vld [vmem:[%s1 + $0x21c] sm:$0xf]
      %v5099 = vld [vmem:[%s1 + $0x220] sm:$0xf]
      %v5100 = vld [vmem:[%s1 + $0x224] sm:$0xf]
      %v5101 = vld [vmem:[%s1 + $0x228] sm:$0xf]
      %v5102 = vld [vmem:[%s1 + $0x22c] sm:$0xf]
      %v5103 = vld [vmem:[%s1 + $0x230] sm:$0xf]
      %v5104 = vld [vmem:[%s1 + $0x234] sm:$0xf]
      %v5105 = vld [vmem:[%s1 + $0x238] sm:$0xf]
      %v5106 = vld [vmem:[%s1 + $0x23c] sm:$0xf]
      %v5155 = vrot.slane %v5075, 5
      %v5156 = vrot.slane %v5155, 4
      %v5157 = vrot.slane %v4323, 5
      %v5158 = vsel %vm1883, %v5156, %v5157
      %v5159 = vrot.slane %v5157, 4
      %v5160 = vrot.slane %v4324, 5
      %v5161 = vsel %vm1883, %v5159, %v5160
      %v5162 = vrot.slane %v5076, 5
      %v5163 = vrot.slane %v5162, 4
      %v5164 = vrot.slane %v4326, 5
      %v5165 = vsel %vm1883, %v5163, %v5164
      %v5166 = vrot.slane %v5164, 4
      %v5167 = vrot.slane %v4327, 5
      %v5168 = vsel %vm1883, %v5166, %v5167
      %v5169 = vrot.slane %v5077, 5
      %v5170 = vrot.slane %v5169, 4
      %v5171 = vrot.slane %v4329, 5
      %v5172 = vsel %vm1883, %v5170, %v5171
      %v5173 = vrot.slane %v5171, 4
      %v5174 = vrot.slane %v4330, 5
      %v5175 = vsel %vm1883, %v5173, %v5174
      %v5176 = vrot.slane %v5078, 5
      %v5177 = vrot.slane %v5176, 4
      %v5178 = vrot.slane %v4332, 5
      %v5179 = vsel %vm1883, %v5177, %v5178
      %v5180 = vrot.slane %v5178, 4
      %v5181 = vrot.slane %v4333, 5
      %v5182 = vsel %vm1883, %v5180, %v5181
      %v5183 = vrot.slane %v5079, 5
      %v5184 = vrot.slane %v5183, 4
      %v5185 = vrot.slane %v4335, 5
      %v5186 = vsel %vm1883, %v5184, %v5185
      %v5187 = vrot.slane %v5185, 4
      %v5188 = vrot.slane %v4336, 5
      %v5189 = vsel %vm1883, %v5187, %v5188
      %v5190 = vrot.slane %v5080, 5
      %v5191 = vrot.slane %v5190, 4
      %v5192 = vrot.slane %v4338, 5
      %v5193 = vsel %vm1883, %v5191, %v5192
      %v5194 = vrot.slane %v5192, 4
      %v5195 = vrot.slane %v4339, 5
      %v5196 = vsel %vm1883, %v5194, %v5195
      %v5197 = vrot.slane %v5081, 5
      %v5198 = vrot.slane %v5197, 4
      %v5199 = vrot.slane %v4341, 5
      %v5200 = vsel %vm1883, %v5198, %v5199
      %v5201 = vrot.slane %v5199, 4
      %v5202 = vrot.slane %v4342, 5
      %v5203 = vsel %vm1883, %v5201, %v5202
      %v5204 = vrot.slane %v5082, 5
      %v5205 = vrot.slane %v5204, 4
      %v5206 = vrot.slane %v4344, 5
      %v5207 = vsel %vm1883, %v5205, %v5206
      %v5208 = vrot.slane %v5206, 4
      %v5209 = vrot.slane %v4345, 5
      %v5210 = vsel %vm1883, %v5208, %v5209
      %v5211 = vrot.slane %v5083, 5
      %v5212 = vrot.slane %v5211, 4
      %v5213 = vrot.slane %v4347, 5
      %v5214 = vsel %vm1883, %v5212, %v5213
      %v5215 = vrot.slane %v5213, 4
      %v5216 = vrot.slane %v4348, 5
      %v5217 = vsel %vm1883, %v5215, %v5216
      %v5218 = vrot.slane %v5084, 5
      %v5219 = vrot.slane %v5218, 4
      %v5220 = vrot.slane %v4350, 5
      %v5221 = vsel %vm1883, %v5219, %v5220
      %v5222 = vrot.slane %v5220, 4
      %v5223 = vrot.slane %v4351, 5
      %v5224 = vsel %vm1883, %v5222, %v5223
      %v5225 = vrot.slane %v5085, 5
      %v5226 = vrot.slane %v5225, 4
      %v5227 = vrot.slane %v4353, 5
      %v5228 = vsel %vm1883, %v5226, %v5227
      %v5229 = vrot.slane %v5227, 4
      %v5230 = vrot.slane %v4354, 5
      %v5231 = vsel %vm1883, %v5229, %v5230
      %v5232 = vrot.slane %v5086, 5
      %v5233 = vrot.slane %v5232, 4
      %v5234 = vrot.slane %v4356, 5
      %v5235 = vsel %vm1883, %v5233, %v5234
      %v5236 = vrot.slane %v5234, 4
      %v5237 = vrot.slane %v4357, 5
      %v5238 = vsel %vm1883, %v5236, %v5237
      %v5239 = vrot.slane %v5087, 5
      %v5240 = vrot.slane %v5239, 4
      %v5241 = vrot.slane %v4359, 5
      %v5242 = vsel %vm1883, %v5240, %v5241
      %v5243 = vrot.slane %v5241, 4
      %v5244 = vrot.slane %v4360, 5
      %v5245 = vsel %vm1883, %v5243, %v5244
      %v5246 = vrot.slane %v5088, 5
      %v5247 = vrot.slane %v5246, 4
      %v5248 = vrot.slane %v4362, 5
      %v5249 = vsel %vm1883, %v5247, %v5248
      %v5250 = vrot.slane %v5248, 4
      %v5251 = vrot.slane %v4363, 5
      %v5252 = vsel %vm1883, %v5250, %v5251
      %v5253 = vrot.slane %v5089, 5
      %v5254 = vrot.slane %v5253, 4
      %v5255 = vrot.slane %v4365, 5
      %v5256 = vsel %vm1883, %v5254, %v5255
      %v5257 = vrot.slane %v5255, 4
      %v5258 = vrot.slane %v4366, 5
      %v5259 = vsel %vm1883, %v5257, %v5258
      %v5260 = vrot.slane %v5090, 5
      %v5261 = vrot.slane %v5260, 4
      %v5262 = vrot.slane %v4368, 5
      %v5263 = vsel %vm1883, %v5261, %v5262
      %v5264 = vrot.slane %v5262, 4
      %v5265 = vrot.slane %v4369, 5
      %v5266 = vsel %vm1883, %v5264, %v5265
      %v5267 = vunpack.c.l.b16 %v5158
      %v5268 = vunpack.c.l.b16 %v5161
      %v5269 = vunpack.c.l.b16 %v5165
      %v5270 = vunpack.c.l.b16 %v5168
      %v5271 = vunpack.c.l.b16 %v5172
      %v5272 = vunpack.c.l.b16 %v5175
      %v5273 = vunpack.c.l.b16 %v5179
      %v5274 = vunpack.c.l.b16 %v5182
      %v5275 = vunpack.c.l.b16 %v5186
      %v5276 = vunpack.c.l.b16 %v5189
      %v5277 = vunpack.c.l.b16 %v5193
      %v5278 = vunpack.c.l.b16 %v5196
      %v5279 = vunpack.c.l.b16 %v5200
      %v5280 = vunpack.c.l.b16 %v5203
      %v5281 = vunpack.c.l.b16 %v5207
      %v5282 = vunpack.c.l.b16 %v5210
      %v5283 = vunpack.c.l.b16 %v5214
      %v5284 = vunpack.c.l.b16 %v5217
      %v5285 = vunpack.c.l.b16 %v5221
      %v5286 = vunpack.c.l.b16 %v5224
      %v5287 = vunpack.c.l.b16 %v5228
      %v5288 = vunpack.c.l.b16 %v5231
      %v5289 = vunpack.c.l.b16 %v5235
      %v5290 = vunpack.c.l.b16 %v5238
      %v5291 = vunpack.c.l.b16 %v5242
      %v5292 = vunpack.c.l.b16 %v5245
      %v5293 = vunpack.c.l.b16 %v5249
      %v5294 = vunpack.c.l.b16 %v5252
      %v5295 = vunpack.c.l.b16 %v5256
      %v5296 = vunpack.c.l.b16 %v5259
      %v5297 = vunpack.c.l.b16 %v5263
      %v5298 = vunpack.c.l.b16 %v5266
      %v5299 = vpack.c.b16 %v5268, %v5267
      %v5300 = vpack.c.b16 %v5270, %v5269
      %v5301 = vpack.c.b16 %v5272, %v5271
      %v5302 = vpack.c.b16 %v5274, %v5273
      %v5303 = vpack.c.b16 %v5276, %v5275
      %v5304 = vpack.c.b16 %v5278, %v5277
      %v5305 = vpack.c.b16 %v5280, %v5279
      %v5306 = vpack.c.b16 %v5282, %v5281
      %v5307 = vpack.c.b16 %v5284, %v5283
      %v5308 = vpack.c.b16 %v5286, %v5285
      %v5309 = vpack.c.b16 %v5288, %v5287
      %v5310 = vpack.c.b16 %v5290, %v5289
      %v5311 = vpack.c.b16 %v5292, %v5291
      %v5312 = vpack.c.b16 %v5294, %v5293
      %v5313 = vpack.c.b16 %v5296, %v5295
      %v5314 = vpack.c.b16 %v5298, %v5297
      %v5347 = vunpack.c.l.b16 %v5091
      %v5348 = vunpack.c.l.b16 %v5092
      %v5349 = vunpack.c.l.b16 %v5093
      %v5350 = vunpack.c.l.b16 %v5094
      %v5351 = vunpack.c.l.b16 %v5095
      %v5352 = vunpack.c.l.b16 %v5096
      %v5353 = vunpack.c.l.b16 %v5097
      %v5354 = vunpack.c.l.b16 %v5098
      %v5355 = vunpack.c.l.b16 %v5099
      %v5356 = vunpack.c.l.b16 %v5100
      %v5357 = vunpack.c.l.b16 %v5101
      %v5358 = vunpack.c.l.b16 %v5102
      %v5359 = vunpack.c.l.b16 %v5103
      %v5360 = vunpack.c.l.b16 %v5104
      %v5361 = vunpack.c.l.b16 %v5105
      %v5362 = vunpack.c.l.b16 %v5106
      %v5363 = vpack.c.b16 %v5348, %v5347
      %v5364 = vpack.c.b16 %v5350, %v5349
      %v5365 = vpack.c.b16 %v5352, %v5351
      %v5366 = vpack.c.b16 %v5354, %v5353
      %v5367 = vpack.c.b16 %v5356, %v5355
      %v5368 = vpack.c.b16 %v5358, %v5357
      %v5369 = vpack.c.b16 %v5360, %v5359
      %v5370 = vpack.c.b16 %v5362, %v5361
      %5379 = vmatprep.subr.bf16.mxu0 0
      %5380 = vmatpush1.bf16.msra.mxu0 %v5363
      %5381 = vmatprep.subr.bf16.mxu0 0
      %5382 = vmatpush1.bf16.msra.mxu0 %v5364
      %5383 = vmatprep.subr.bf16.mxu0 0
      %5384 = vmatpush1.bf16.msra.mxu0 %v5365
      %5385 = vmatprep.subr.bf16.mxu0 0
      %5386 = vmatpush1.bf16.msra.mxu0 %v5366
      %5387 = vmatprep.subr.bf16.mxu0 0
      %5388 = vmatpush1.bf16.msra.mxu0 %v5367
      %5389 = vmatprep.subr.bf16.mxu0 0
      %5390 = vmatpush1.bf16.msra.mxu0 %v5368
      %5391 = vmatprep.subr.bf16.mxu0 0
      %5392 = vmatpush1.bf16.msra.mxu0 %v5369
      %5393 = vmatprep.subr.bf16.mxu0 0
      %5394 = vmatpush1.bf16.msra.mxu0 %v5370
      %5395 = vmatprep.subr.bf16.mxu0 0
      %5396 = vmatpush1.bf16.msra.mxu0 0
      %5397 = vmatprep.subr.bf16.mxu0 0
      %5398 = vmatpush1.bf16.msra.mxu0 0
      %5399 = vmatprep.subr.bf16.mxu0 0
      %5400 = vmatpush1.bf16.msra.mxu0 0
      %5401 = vmatprep.subr.bf16.mxu0 0
      %5402 = vmatpush1.bf16.msra.mxu0 0
      %5403 = vmatprep.subr.bf16.mxu0 0
      %5404 = vmatpush1.bf16.msra.mxu0 0
      %5405 = vmatprep.subr.bf16.mxu0 0
      %5406 = vmatpush1.bf16.msra.mxu0 0
      %5407 = vmatprep.subr.bf16.mxu0 0
      %5408 = vmatpush1.bf16.msra.mxu0 0
      %5409 = vmatprep.subr.bf16.mxu0 0
      %5410 = vmatpush1.bf16.msra.mxu0 0
      %5411 = vmatprep.mubr.bf16.mxu0 0
      %5412 = vmatmul.mubr.bf16.gmra.mrb[0].mxu0 %v5299
      %v5413 = vpop.f32.mrb[0].mxu0
      %v5414 = vadd.f32 0.0, %v5413
      %v5415 = vpop.f32.mrb[0].mxu0
      %v5416 = vpop.f32.mrb[0].mxu0
      %v5417 = vadd.f32 0.0, %v5416
      %v5418 = vpop.f32.mrb[0].mxu0
      %5419 = vmatprep.mubr.bf16.mxu0 0
      %5420 = vmatmul.mubr.bf16.gmra.mrb[0].mxu0 %v5300
      %v5421 = vpop.f32.mrb[0].mxu0
      %v5422 = vadd.f32 0.0, %v5421
      %v5423 = vpop.f32.mrb[0].mxu0
      %v5424 = vpop.f32.mrb[0].mxu0
      %v5425 = vadd.f32 0.0, %v5424
      %v5426 = vpop.f32.mrb[0].mxu0
      %5427 = vmatprep.mubr.bf16.mxu0 0
      %5428 = vmatmul.mubr.bf16.gmra.mrb[0].mxu0 %v5301
      %v5429 = vpop.f32.mrb[0].mxu0
      %v5430 = vadd.f32 0.0, %v5429
      %v5431 = vpop.f32.mrb[0].mxu0
      %v5432 = vpop.f32.mrb[0].mxu0
      %v5433 = vadd.f32 0.0, %v5432
      %v5434 = vpop.f32.mrb[0].mxu0
      %5435 = vmatprep.mubr.bf16.mxu0 0
      %5436 = vmatmul.mubr.bf16.gmra.mrb[0].mxu0 %v5302
      %v5437 = vpop.f32.mrb[0].mxu0
      %v5438 = vadd.f32 0.0, %v5437
      %v5439 = vpop.f32.mrb[0].mxu0
      %v5440 = vpop.f32.mrb[0].mxu0
      %v5441 = vadd.f32 0.0, %v5440
      %v5442 = vpop.f32.mrb[0].mxu0
      %5443 = vmatprep.mubr.bf16.mxu0 0
      %5444 = vmatmul.mubr.bf16.gmra.mrb[0].mxu0 %v5303
      %v5445 = vpop.f32.mrb[0].mxu0
      %v5446 = vadd.f32 0.0, %v5445
      %v5447 = vpop.f32.mrb[0].mxu0
      %v5448 = vpop.f32.mrb[0].mxu0
      %v5449 = vadd.f32 0.0, %v5448
      %v5450 = vpop.f32.mrb[0].mxu0
      %5451 = vmatprep.mubr.bf16.mxu0 0
      %5452 = vmatmul.mubr.bf16.gmra.mrb[0].mxu0 %v5304
      %v5453 = vpop.f32.mrb[0].mxu0
      %v5454 = vadd.f32 0.0, %v5453
      %v5455 = vpop.f32.mrb[0].mxu0
      %v5456 = vpop.f32.mrb[0].mxu0
      %v5457 = vadd.f32 0.0, %v5456
      %v5458 = vpop.f32.mrb[0].mxu0
      %5459 = vmatprep.mubr.bf16.mxu0 0
      %5460 = vmatmul.mubr.bf16.gmra.mrb[0].mxu0 %v5305
      %v5461 = vpop.f32.mrb[0].mxu0
      %v5462 = vadd.f32 0.0, %v5461
      %v5463 = vpop.f32.mrb[0].mxu0
      %v5464 = vpop.f32.mrb[0].mxu0
      %v5465 = vadd.f32 0.0, %v5464
      %v5466 = vpop.f32.mrb[0].mxu0
      %5467 = vmatprep.mubr.bf16.mxu0 0
      %5468 = vmatmul.mubr.bf16.gmra.mrb[0].mxu0 %v5306
      %v5469 = vpop.f32.mrb[0].mxu0
      %v5470 = vadd.f32 0.0, %v5469
      %v5471 = vpop.f32.mrb[0].mxu0
      %v5472 = vpop.f32.mrb[0].mxu0
      %v5473 = vadd.f32 0.0, %v5472
      %v5474 = vpop.f32.mrb[0].mxu0
      %5475 = vmatprep.mubr.bf16.mxu0 0
      %5476 = vmatmul.mubr.bf16.gmra.mrb[0].mxu0 %v5307
      %v5477 = vpop.f32.mrb[0].mxu0
      %v5478 = vadd.f32 0.0, %v5477
      %v5479 = vpop.f32.mrb[0].mxu0
      %v5480 = vpop.f32.mrb[0].mxu0
      %v5481 = vadd.f32 0.0, %v5480
      %v5482 = vpop.f32.mrb[0].mxu0
      %5483 = vmatprep.mubr.bf16.mxu0 0
      %5484 = vmatmul.mubr.bf16.gmra.mrb[0].mxu0 %v5308
      %v5485 = vpop.f32.mrb[0].mxu0
      %v5486 = vadd.f32 0.0, %v5485
      %v5487 = vpop.f32.mrb[0].mxu0
      %v5488 = vpop.f32.mrb[0].mxu0
      %v5489 = vadd.f32 0.0, %v5488
      %v5490 = vpop.f32.mrb[0].mxu0
      %5491 = vmatprep.mubr.bf16.mxu0 0
      %5492 = vmatmul.mubr.bf16.gmra.mrb[0].mxu0 %v5309
      %v5493 = vpop.f32.mrb[0].mxu0
      %v5494 = vadd.f32 0.0, %v5493
      %v5495 = vpop.f32.mrb[0].mxu0
      %v5496 = vpop.f32.mrb[0].mxu0
      %v5497 = vadd.f32 0.0, %v5496
      %v5498 = vpop.f32.mrb[0].mxu0
      %5499 = vmatprep.mubr.bf16.mxu0 0
      %5500 = vmatmul.mubr.bf16.gmra.mrb[0].mxu0 %v5310
      %v5501 = vpop.f32.mrb[0].mxu0
      %v5502 = vadd.f32 0.0, %v5501
      %v5503 = vpop.f32.mrb[0].mxu0
      %v5504 = vpop.f32.mrb[0].mxu0
      %v5505 = vadd.f32 0.0, %v5504
      %v5506 = vpop.f32.mrb[0].mxu0
      %5507 = vmatprep.mubr.bf16.mxu0 0
      %5508 = vmatmul.mubr.bf16.gmra.mrb[0].mxu0 %v5311
      %v5509 = vpop.f32.mrb[0].mxu0
      %v5510 = vadd.f32 0.0, %v5509
      %v5511 = vpop.f32.mrb[0].mxu0
      %v5512 = vpop.f32.mrb[0].mxu0
      %v5513 = vadd.f32 0.0, %v5512
      %v5514 = vpop.f32.mrb[0].mxu0
      %5515 = vmatprep.mubr.bf16.mxu0 0
      %5516 = vmatmul.mubr.bf16.gmra.mrb[0].mxu0 %v5312
      %v5517 = vpop.f32.mrb[0].mxu0
      %v5518 = vadd.f32 0.0, %v5517
      %v5519 = vpop.f32.mrb[0].mxu0
      %v5520 = vpop.f32.mrb[0].mxu0
      %v5521 = vadd.f32 0.0, %v5520
      %v5522 = vpop.f32.mrb[0].mxu0
      %5523 = vmatprep.mubr.bf16.mxu0 0
      %5524 = vmatmul.mubr.bf16.gmra.mrb[0].mxu0 %v5313
      %v5525 = vpop.f32.mrb[0].mxu0
      %v5526 = vadd.f32 0.0, %v5525
      %v5527 = vpop.f32.mrb[0].mxu0
      %v5528 = vpop.f32.mrb[0].mxu0
      %v5529 = vadd.f32 0.0, %v5528
      %v5530 = vpop.f32.mrb[0].mxu0
      %5531 = vmatprep.mubr.bf16.mxu0 0
      %5532 = vmatmul.mubr.bf16.gmra.mrb[0].mxu0 %v5314
      %v5533 = vpop.f32.mrb[0].mxu0
      %v5534 = vadd.f32 0.0, %v5533
      %v5535 = vpop.f32.mrb[0].mxu0
      %v5536 = vpop.f32.mrb[0].mxu0
      %v5537 = vadd.f32 0.0, %v5536
      %v5538 = vpop.f32.mrb[0].mxu0
      %5539 = vdwg.mxu0
      %v5540 = vadd.f32 %v5043, %v5414
      %v5541 = vadd.f32 %v5044, %v5417
      %v5542 = vadd.f32 %v5045, %v5422
      %v5543 = vadd.f32 %v5046, %v5425
      %v5544 = vadd.f32 %v5047, %v5430
      %v5545 = vadd.f32 %v5048, %v5433
      %v5546 = vadd.f32 %v5049, %v5438
      %v5547 = vadd.f32 %v5050, %v5441
      %v5548 = vadd.f32 %v5051, %v5446
      %v5549 = vadd.f32 %v5052, %v5449
      %v5550 = vadd.f32 %v5053, %v5454
      %v5551 = vadd.f32 %v5054, %v5457
      %v5552 = vadd.f32 %v5055, %v5462
      %v5553 = vadd.f32 %v5056, %v5465
      %v5554 = vadd.f32 %v5057, %v5470
      %v5555 = vadd.f32 %v5058, %v5473
      %v5556 = vadd.f32 %v5059, %v5478
      %v5557 = vadd.f32 %v5060, %v5481
      %v5558 = vadd.f32 %v5061, %v5486
      %v5559 = vadd.f32 %v5062, %v5489
      %v5560 = vadd.f32 %v5063, %v5494
      %v5561 = vadd.f32 %v5064, %v5497
      %v5562 = vadd.f32 %v5065, %v5502
      %v5563 = vadd.f32 %v5066, %v5505
      %v5564 = vadd.f32 %v5067, %v5510
      %v5565 = vadd.f32 %v5068, %v5513
      %v5566 = vadd.f32 %v5069, %v5518
      %v5567 = vadd.f32 %v5070, %v5521
      %v5568 = vadd.f32 %v5071, %v5526
      %v5569 = vadd.f32 %v5072, %v5529
      %v5570 = vadd.f32 %v5073, %v5534
      %v5571 = vadd.f32 %v5074, %v5537
      %v5572 = vpack.c.bf16 %v5541, %v5540
      %v5573 = vpack.c.bf16 %v5543, %v5542
      %v5574 = vpack.c.bf16 %v5545, %v5544
      %v5575 = vpack.c.bf16 %v5547, %v5546
      %v5576 = vpack.c.bf16 %v5549, %v5548
      %v5577 = vpack.c.bf16 %v5551, %v5550
      %v5578 = vpack.c.bf16 %v5553, %v5552
      %v5579 = vpack.c.bf16 %v5555, %v5554
      %v5580 = vpack.c.bf16 %v5557, %v5556
      %v5581 = vpack.c.bf16 %v5559, %v5558
      %v5582 = vpack.c.bf16 %v5561, %v5560
      %v5583 = vpack.c.bf16 %v5563, %v5562
      %v5584 = vpack.c.bf16 %v5565, %v5564
      %v5585 = vpack.c.bf16 %v5567, %v5566
      %v5586 = vpack.c.bf16 %v5569, %v5568
      %v5587 = vpack.c.bf16 %v5571, %v5570
      %v5604 = vunpack.c.l.b16 %v5572
      %v5605 = vunpack.c.h.b16 %v5572
      %v5606 = vunpack.c.l.b16 %v5573
      %v5607 = vunpack.c.h.b16 %v5573
      %v5608 = vunpack.c.l.b16 %v5574
      %v5609 = vunpack.c.h.b16 %v5574
      %v5610 = vunpack.c.l.b16 %v5575
      %v5611 = vunpack.c.h.b16 %v5575
      %v5612 = vunpack.c.l.b16 %v5576
      %v5613 = vunpack.c.h.b16 %v5576
      %v5614 = vunpack.c.l.b16 %v5577
      %v5615 = vunpack.c.h.b16 %v5577
      %v5616 = vunpack.c.l.b16 %v5578
      %v5617 = vunpack.c.h.b16 %v5578
      %v5618 = vunpack.c.l.b16 %v5579
      %v5619 = vunpack.c.h.b16 %v5579
      %v5620 = vunpack.c.l.b16 %v5580
      %v5621 = vunpack.c.h.b16 %v5580
      %v5622 = vunpack.c.l.b16 %v5581
      %v5623 = vunpack.c.h.b16 %v5581
      %v5624 = vunpack.c.l.b16 %v5582
      %v5625 = vunpack.c.h.b16 %v5582
      %v5626 = vunpack.c.l.b16 %v5583
      %v5627 = vunpack.c.h.b16 %v5583
      %v5628 = vunpack.c.l.b16 %v5584
      %v5629 = vunpack.c.h.b16 %v5584
      %v5630 = vunpack.c.l.b16 %v5585
      %v5631 = vunpack.c.h.b16 %v5585
      %v5632 = vunpack.c.l.b16 %v5586
      %v5633 = vunpack.c.h.b16 %v5586
      %v5634 = vunpack.c.l.b16 %v5587
      %v5635 = vunpack.c.h.b16 %v5587
      %v5636 = vpack.c.b16 %v5604, %v5604
      %v5637 = vpack.c.b16 %v5605, %v5605
      %v5638 = vpack.c.b16 %v5606, %v5606
      %v5639 = vpack.c.b16 %v5607, %v5607
      %v5640 = vpack.c.b16 %v5608, %v5608
      %v5641 = vpack.c.b16 %v5609, %v5609
      %v5642 = vpack.c.b16 %v5610, %v5610
      %v5643 = vpack.c.b16 %v5611, %v5611
      %v5644 = vpack.c.b16 %v5612, %v5612
      %v5645 = vpack.c.b16 %v5613, %v5613
      %v5646 = vpack.c.b16 %v5614, %v5614
      %v5647 = vpack.c.b16 %v5615, %v5615
      %v5648 = vpack.c.b16 %v5616, %v5616
      %v5649 = vpack.c.b16 %v5617, %v5617
      %v5650 = vpack.c.b16 %v5618, %v5618
      %v5651 = vpack.c.b16 %v5619, %v5619
      %v5652 = vpack.c.b16 %v5620, %v5620
      %v5653 = vpack.c.b16 %v5621, %v5621
      %v5654 = vpack.c.b16 %v5622, %v5622
      %v5655 = vpack.c.b16 %v5623, %v5623
      %v5656 = vpack.c.b16 %v5624, %v5624
      %v5657 = vpack.c.b16 %v5625, %v5625
      %v5658 = vpack.c.b16 %v5626, %v5626
      %v5659 = vpack.c.b16 %v5627, %v5627
      %v5660 = vpack.c.b16 %v5628, %v5628
      %v5661 = vpack.c.b16 %v5629, %v5629
      %v5662 = vpack.c.b16 %v5630, %v5630
      %v5663 = vpack.c.b16 %v5631, %v5631
      %v5664 = vpack.c.b16 %v5632, %v5632
      %v5665 = vpack.c.b16 %v5633, %v5633
      %v5666 = vpack.c.b16 %v5634, %v5634
      %v5667 = vpack.c.b16 %v5635, %v5635
      %5700 = vst [vmem:[%s177] sm:$0xf] %v5636
      %5701 = vst [vmem:[%s177 + $0x4] sm:$0xf] %v5637
      %5702 = vst [vmem:[%s177 + $0x8] sm:$0xf] %v5638
      %5703 = vst [vmem:[%s177 + $0xc] sm:$0xf] %v5639
      %5704 = vst [vmem:[%s177 + $0x10] sm:$0xf] %v5640
      %5705 = vst [vmem:[%s177 + $0x14] sm:$0xf] %v5641
      %5706 = vst [vmem:[%s177 + $0x18] sm:$0xf] %v5642
      %5707 = vst [vmem:[%s177 + $0x1c] sm:$0xf] %v5643
      %5708 = vst [vmem:[%s177 + $0x20] sm:$0xf] %v5644
      %5709 = vst [vmem:[%s177 + $0x24] sm:$0xf] %v5645
      %5710 = vst [vmem:[%s177 + $0x28] sm:$0xf] %v5646
      %5711 = vst [vmem:[%s177 + $0x2c] sm:$0xf] %v5647
      %5712 = vst [vmem:[%s177 + $0x30] sm:$0xf] %v5648
      %5713 = vst [vmem:[%s177 + $0x34] sm:$0xf] %v5649
      %5714 = vst [vmem:[%s177 + $0x38] sm:$0xf] %v5650
      %5715 = vst [vmem:[%s177 + $0x3c] sm:$0xf] %v5651
      %5716 = vst [vmem:[%s177 + $0x40] sm:$0xf] %v5652
      %5717 = vst [vmem:[%s177 + $0x44] sm:$0xf] %v5653
      %5718 = vst [vmem:[%s177 + $0x48] sm:$0xf] %v5654
      %5719 = vst [vmem:[%s177 + $0x4c] sm:$0xf] %v5655
      %5720 = vst [vmem:[%s177 + $0x50] sm:$0xf] %v5656
      %5721 = vst [vmem:[%s177 + $0x54] sm:$0xf] %v5657
      %5722 = vst [vmem:[%s177 + $0x58] sm:$0xf] %v5658
      %5723 = vst [vmem:[%s177 + $0x5c] sm:$0xf] %v5659
      %5724 = vst [vmem:[%s177 + $0x60] sm:$0xf] %v5660
      %5725 = vst [vmem:[%s177 + $0x64] sm:$0xf] %v5661
      %5726 = vst [vmem:[%s177 + $0x68] sm:$0xf] %v5662
      %5727 = vst [vmem:[%s177 + $0x6c] sm:$0xf] %v5663
      %5728 = vst [vmem:[%s177 + $0x70] sm:$0xf] %v5664
      %5729 = vst [vmem:[%s177 + $0x74] sm:$0xf] %v5665
      %5730 = vst [vmem:[%s177 + $0x78] sm:$0xf] %v5666
      %5731 = vst [vmem:[%s177 + $0x7c] sm:$0xf] %v5667
      %v5732 = vadd.f32 %v5540, %v5541
      %v5733 = vadd.f32 %v5732, %v5542
      %v5734 = vadd.f32 %v5733, %v5543
      %v5735 = vadd.f32 %v5734, %v5544
      %v5736 = vadd.f32 %v5735, %v5545
      %v5737 = vadd.f32 %v5736, %v5546
      %v5738 = vadd.f32 %v5737, %v5547
      %v5739 = vadd.f32 %v5738, %v5548
      %v5740 = vadd.f32 %v5739, %v5549
      %v5741 = vadd.f32 %v5740, %v5550
      %v5742 = vadd.f32 %v5741, %v5551
      %v5743 = vadd.f32 %v5742, %v5552
      %v5744 = vadd.f32 %v5743, %v5553
      %v5745 = vadd.f32 %v5744, %v5554
      %v5746 = vadd.f32 %v5745, %v5555
      %v5747 = vadd.f32 %v5746, %v5556
      %v5748 = vadd.f32 %v5747, %v5557
      %v5749 = vadd.f32 %v5748, %v5558
      %v5750 = vadd.f32 %v5749, %v5559
      %v5751 = vadd.f32 %v5750, %v5560
      %v5752 = vadd.f32 %v5751, %v5561
      %v5753 = vadd.f32 %v5752, %v5562
      %v5754 = vadd.f32 %v5753, %v5563
      %v5755 = vadd.f32 %v5754, %v5564
      %v5756 = vadd.f32 %v5755, %v5565
      %v5757 = vadd.f32 %v5756, %v5566
      %v5758 = vadd.f32 %v5757, %v5567
      %v5759 = vadd.f32 %v5758, %v5568
      %v5760 = vadd.f32 %v5759, %v5569
      %v5761 = vadd.f32 %v5760, %v5570
      %v5762 = vadd.f32 %v5761, %v5571
      %v5763 = vrot.slane %v5762, 4
      %v5764 = vadd.f32 %v5762, %v5763
      %v5765 = vrot.slane %v5764, 2
      %v5766 = vadd.f32 %v5764, %v5765
      %v5767 = vrot.slane %v5766, 1
      %v5768 = vadd.f32 %v5766, %v5767
      %v5769 = vadd.f32 %v5768, 0.0
      %v5770 = vmul.f32 %v5540, %v5540
      %v5771 = vmul.f32 %v5541, %v5541
      %v5772 = vmul.f32 %v5542, %v5542
      %v5773 = vmul.f32 %v5543, %v5543
      %v5774 = vmul.f32 %v5544, %v5544
      %v5775 = vmul.f32 %v5545, %v5545
      %v5776 = vmul.f32 %v5546, %v5546
      %v5777 = vmul.f32 %v5547, %v5547
      %v5778 = vmul.f32 %v5548, %v5548
      %v5779 = vmul.f32 %v5549, %v5549
      %v5780 = vmul.f32 %v5550, %v5550
      %v5781 = vmul.f32 %v5551, %v5551
      %v5782 = vmul.f32 %v5552, %v5552
      %v5783 = vmul.f32 %v5553, %v5553
      %v5784 = vmul.f32 %v5554, %v5554
      %v5785 = vmul.f32 %v5555, %v5555
      %v5786 = vmul.f32 %v5556, %v5556
      %v5787 = vmul.f32 %v5557, %v5557
      %v5788 = vmul.f32 %v5558, %v5558
      %v5789 = vmul.f32 %v5559, %v5559
      %v5790 = vmul.f32 %v5560, %v5560
      %v5791 = vmul.f32 %v5561, %v5561
      %v5792 = vmul.f32 %v5562, %v5562
      %v5793 = vmul.f32 %v5563, %v5563
      %v5794 = vmul.f32 %v5564, %v5564
      %v5795 = vmul.f32 %v5565, %v5565
      %v5796 = vmul.f32 %v5566, %v5566
      %v5797 = vmul.f32 %v5567, %v5567
      %v5798 = vmul.f32 %v5568, %v5568
      %v5799 = vmul.f32 %v5569, %v5569
      %v5800 = vmul.f32 %v5570, %v5570
      %v5801 = vmul.f32 %v5571, %v5571
      %v5802 = vadd.f32 %v5770, %v5771
      %v5803 = vadd.f32 %v5802, %v5772
      %v5804 = vadd.f32 %v5803, %v5773
      %v5805 = vadd.f32 %v5804, %v5774
      %v5806 = vadd.f32 %v5805, %v5775
      %v5807 = vadd.f32 %v5806, %v5776
      %v5808 = vadd.f32 %v5807, %v5777
      %v5809 = vadd.f32 %v5808, %v5778
      %v5810 = vadd.f32 %v5809, %v5779
      %v5811 = vadd.f32 %v5810, %v5780
      %v5812 = vadd.f32 %v5811, %v5781
      %v5813 = vadd.f32 %v5812, %v5782
      %v5814 = vadd.f32 %v5813, %v5783
      %v5815 = vadd.f32 %v5814, %v5784
      %v5816 = vadd.f32 %v5815, %v5785
      %v5817 = vadd.f32 %v5816, %v5786
      %v5818 = vadd.f32 %v5817, %v5787
      %v5819 = vadd.f32 %v5818, %v5788
      %v5820 = vadd.f32 %v5819, %v5789
      %v5821 = vadd.f32 %v5820, %v5790
      %v5822 = vadd.f32 %v5821, %v5791
      %v5823 = vadd.f32 %v5822, %v5792
      %v5824 = vadd.f32 %v5823, %v5793
      %v5825 = vadd.f32 %v5824, %v5794
      %v5826 = vadd.f32 %v5825, %v5795
      %v5827 = vadd.f32 %v5826, %v5796
      %v5828 = vadd.f32 %v5827, %v5797
      %v5829 = vadd.f32 %v5828, %v5798
      %v5830 = vadd.f32 %v5829, %v5799
      %v5831 = vadd.f32 %v5830, %v5800
      %v5832 = vadd.f32 %v5831, %v5801
      %v5833 = vrot.slane %v5832, 4
      %v5834 = vadd.f32 %v5832, %v5833
      %v5835 = vrot.slane %v5834, 2
      %v5836 = vadd.f32 %v5834, %v5835
      %v5837 = vrot.slane %v5836, 1
      %v5838 = vadd.f32 %v5836, %v5837
      %v5839 = vadd.f32 %v5838, 0.0
      %vm5840 = vcmask 1040384
      %v5841 = vsel %vm5840, %v5769, %v5839
      %5842 = vst [vmem:[%s181] sm:$0x3] %v5841
      %p5843 = scmp.lt.s32.totalorder %s15, 1
      %s5844 = scalar_select %p5843, %s15, 1
      %s5845 = smul.addr %s5844, 32
      %s5846 = smul.addr %s5845, 4
      %s5847 = scalar_lea.vmem %s2, %s5846
      %p5848 = scmp.lt.s32.totalorder %s15, 1
      %s5849 = scalar_select %p5848, %s15, 1
      %s5850 = smul.addr %s5849, 2
      %s5851 = scalar_lea.vmem %s3, %s5850
      // Predicated region
      $region29: #{pt_block_forward.3} parent=27 // pred_check
        %p5852 = pneg %p80
      $region30: #{pt_block_forward.3} parent=27 // pred_check_branch
        %5854 = sbr.rel (%p5852) target = $region32
      $region31: #{pt_block_forward.3} parent=27 // pred_region
        _
      $region32: #{pt_block_forward.3} parent=27 // pred_fallthru
        _
      // Predicated region
      $region33: #{pt_block_forward.3} parent=27 // pred_check
        %p5855 = pneg %p106
      $region34: #{pt_block_forward.3} parent=27 // pred_check_branch
        %5857 = sbr.rel (%p5855) target = $region36
      $region35: #{pt_block_forward.3} parent=27 // pred_region
        _
      $region36: #{pt_block_forward.3} parent=27 // pred_fallthru
        _
    $region28: #{pt_block_forward.3} parent=5 // pred_fallthru
      _
    %p5858 = scmp.le.s32.totalorder 2, %s10
    // Predicated region
    $region37: #{pt_block_forward.3} parent=5 // pred_check
      %p5859 = pneg %p5858
    $region38: #{pt_block_forward.3} parent=5 // pred_check_branch
      %5861 = sbr.rel (%p5859) target = $region40
    $region39: #{pt_block_forward.3} parent=5 // pred_region
      %s5862 = ssub.s32 %s10, 2
      // Predicated region
      $region41: #{pt_block_forward.3} parent=39 // pred_check
        %p5863 = pneg %p86
      $region42: #{pt_block_forward.3} parent=39 // pred_check_branch
        %5865 = sbr.rel (%p5863) target = $region44
      $region43: #{pt_block_forward.3} parent=39 // pred_region
        %p5866 = scmp.lt.s32.totalorder %s16, 1
        %s5867 = scalar_select %p5866, %s16, 1
        %s5868 = smul.addr %s5867, 32
        %s5869 = smul.addr %s5868, 4
        %s5870 = scalar_lea.vmem %s2, %s5869
      $region44: #{pt_block_forward.3} parent=39 // pred_fallthru
        _
      // Predicated region
      $region45: #{pt_block_forward.3} parent=39 // pred_check
        %p5871 = pneg %p112
      $region46: #{pt_block_forward.3} parent=39 // pred_check_branch
        %5873 = sbr.rel (%p5871) target = $region48
      $region47: #{pt_block_forward.3} parent=39 // pred_region
        %p5874 = scmp.lt.s32.totalorder %s16, 1
        %s5875 = scalar_select %p5874, %s16, 1
        %s5876 = smul.addr %s5875, 2
        %s5877 = scalar_lea.vmem %s3, %s5876
      $region48: #{pt_block_forward.3} parent=39 // pred_fallthru
        _
    $region40: #{pt_block_forward.3} parent=5 // pred_fallthru
      _
  $region6: #{pt_block_forward.3} parent=0 // loop_footer
    %s14 = sadd.s32 1, %s10
  $region7: #{pt_block_forward.3} parent=0 // loop_footer_branch
    %9 = sbr.rel target = $region3
  $region8: #{pt_block_forward.3} parent=0 // loop_exit
    _

// kernel: pt_block_forward.4
$region0: #{pt_block_forward.4}
  #allocation0 [shape = 'u32[]', space=smem, size = 0x4, offset = 0x4, fixed_abs, tag = 'smem constant byte address 0x4 - core index']
  #allocation1 [shape = 'u32[144,128]{1,0:T(1,128)}', space=vmem, size = 0x12000, scoped, tag = 'internal scratch']
  #allocation2 [shape = 'bf16[18,18,128]{2,1,0:T(8,128)(2,1)}', space=vmem, size = 0x1b000, scoped, tag = 'scratch operand']
  %s0 = inlined_call_operand.vmem [shape: bf16[2,16,16,128], index: 0, kind: input, shape index: {}]
  %s1 = inlined_call_operand.vmem [shape: bf16[1152,128], index: 1, kind: input, shape index: {}]
  %s2 = inlined_call_operand.vmem [shape: f32[1,128], index: 2, kind: input, shape index: {}]
  %s3 = inlined_call_operand.vmem [shape: f32[1,128], index: 3, kind: input, shape index: {}]
  %s4 = inlined_call_operand.vmem [shape: bf16[2,16,16,128], index: 4, kind: output, shape index: {0}]
  %s5 = inlined_call_operand.vmem [shape: f32[2,2,128], index: 5, kind: output, shape index: {1}]
  %6 = xla_tuple %s4, %s5
  %s7 = sld [smem:[#allocation0]]
  $region57: #{pt_block_forward.4} parent=0
    _
  %s9 = ssub.s32 1, %s7
  %s10 = scalar_select 0, %s9, %s7
  loop: start=0, step=1, limit=4
  $region2: #{pt_block_forward.4} parent=0 // loop_pre_header
    _
  $region3: #{pt_block_forward.4} parent=0 // loop_header
    %s12 = sphi 0, %s16
    %p13 = scmp.ge.s32.totalorder %s12, 4
    %s22 = sphi 0, %s24
    %s25 = sphi 0, %s22
    %s26 = sphi 0, %s25
    %s42 = sphi 0, %s26
    %s46 = sphi 0, %s46
    %s48 = sphi 0, %s46
    %s49 = sphi 0, %s48
    %s63 = sphi 0, %s49
    %s67 = sphi 0, %s67
    %s69 = sphi 0, %s67
    %s70 = sphi 0, %s69
    %s84 = sphi 0, %s70
    %s88 = sphi 0, %s88
    %s90 = sphi 0, %s88
    %s91 = sphi 0, %s90
    %s105 = sphi 0, %s91
    %s111 = sphi 0, %s113
    %s114 = sphi 0, %s111
    %s115 = sphi 0, %s114
    %s131 = sphi 0, %s115
    %s137 = sphi 0, %s139
    %s140 = sphi 0, %s137
    %s141 = sphi 0, %s140
    %s157 = sphi 0, %s141
  $region4: #{pt_block_forward.4} parent=0 // loop_header_branch
    %15 = sbr.rel (%p13) target = $region8
  $region5: #{pt_block_forward.4} parent=0 // loop_body
    %s17 = ssub.s32 %s12, 1
    %s18 = ssub.s32 %s12, 2
    %s19 = sadd.s32 %s12, 1
    %s20 = ssub.s32 %s12, %s19
    %p21 = scmp.eq.s32.totalorder %s20, 0
    %s23 = sadd.s32 %s22, 1
    %s24 = scalar_select %p21, %s22, %s23
    %p27 = pneg %p21
    %p28 = scmp.eq.s32.totalorder %s12, 1
    %p29 = por %p27, %p28
    %p30 = scmp.ne.s32.totalorder %s22, %s25
    %p31 = scmp.eq.s32.totalorder %s12, 0
    %p32 = por %p30, %p31
    %p33 = scmp.ne.s32.totalorder %s22, %s25
    %p34 = scmp.eq.s32.totalorder %s17, 1
    %p35 = por %p33, %p34
    %p36 = scmp.ne.s32.totalorder %s25, %s26
    %p37 = scmp.eq.s32.totalorder %s17, 0
    %p38 = por %p36, %p37
    %p39 = scmp.ne.s32.totalorder %s25, %s26
    %p40 = scmp.eq.s32.totalorder %s18, 1
    %p41 = por %p39, %p40
    %p43 = scmp.ne.s32.totalorder %s26, %s42
    %p44 = scmp.eq.s32.totalorder %s18, 0
    %p45 = por %p43, %p44
    %s47 = sadd.s32 %s46, 1
    %p50 = scmp.eq.s32.totalorder %s12, 1
    %p51 = scmp.ne.s32.totalorder %s46, %s48
    %p52 = scmp.eq.s32.totalorder %s12, 0
    %p53 = por %p51, %p52
    %p54 = scmp.ne.s32.totalorder %s46, %s48
    %p55 = scmp.eq.s32.totalorder %s17, 1
    %p56 = por %p54, %p55
    %p57 = scmp.ne.s32.totalorder %s48, %s49
    %p58 = scmp.eq.s32.totalorder %s17, 0
    %p59 = por %p57, %p58
    %p60 = scmp.ne.s32.totalorder %s48, %s49
    %p61 = scmp.eq.s32.totalorder %s18, 1
    %p62 = por %p60, %p61
    %p64 = scmp.ne.s32.totalorder %s49, %s63
    %p65 = scmp.eq.s32.totalorder %s18, 0
    %p66 = por %p64, %p65
    %s68 = sadd.s32 %s67, 1
    %p71 = scmp.eq.s32.totalorder %s12, 1
    %p72 = scmp.ne.s32.totalorder %s67, %s69
    %p73 = scmp.eq.s32.totalorder %s12, 0
    %p74 = por %p72, %p73
    %p75 = scmp.ne.s32.totalorder %s67, %s69
    %p76 = scmp.eq.s32.totalorder %s17, 1
    %p77 = por %p75, %p76
    %p78 = scmp.ne.s32.totalorder %s69, %s70
    %p79 = scmp.eq.s32.totalorder %s17, 0
    %p80 = por %p78, %p79
    %p81 = scmp.ne.s32.totalorder %s69, %s70
    %p82 = scmp.eq.s32.totalorder %s18, 1
    %p83 = por %p81, %p82
    %p85 = scmp.ne.s32.totalorder %s70, %s84
    %p86 = scmp.eq.s32.totalorder %s18, 0
    %p87 = por %p85, %p86
    %s89 = sadd.s32 %s88, 1
    %p92 = scmp.eq.s32.totalorder %s12, 1
    %p93 = scmp.ne.s32.totalorder %s88, %s90
    %p94 = scmp.eq.s32.totalorder %s12, 0
    %p95 = por %p93, %p94
    %p96 = scmp.ne.s32.totalorder %s88, %s90
    %p97 = scmp.eq.s32.totalorder %s17, 1
    %p98 = por %p96, %p97
    %p99 = scmp.ne.s32.totalorder %s90, %s91
    %p100 = scmp.eq.s32.totalorder %s17, 0
    %p101 = por %p99, %p100
    %p102 = scmp.ne.s32.totalorder %s90, %s91
    %p103 = scmp.eq.s32.totalorder %s18, 1
    %p104 = por %p102, %p103
    %p106 = scmp.ne.s32.totalorder %s91, %s105
    %p107 = scmp.eq.s32.totalorder %s18, 0
    %p108 = por %p106, %p107
    %s109 = ssub.s32 %s12, %s19
    %p110 = scmp.eq.s32.totalorder %s109, 0
    %s112 = sadd.s32 %s111, 1
    %s113 = scalar_select %p110, %s111, %s112
    %p116 = pneg %p110
    %p117 = scmp.eq.s32.totalorder %s12, 1
    %p118 = por %p116, %p117
    %p119 = scmp.ne.s32.totalorder %s111, %s114
    %p120 = scmp.eq.s32.totalorder %s12, 0
    %p121 = por %p119, %p120
    %p122 = scmp.ne.s32.totalorder %s111, %s114
    %p123 = scmp.eq.s32.totalorder %s17, 1
    %p124 = por %p122, %p123
    %p125 = scmp.ne.s32.totalorder %s114, %s115
    %p126 = scmp.eq.s32.totalorder %s17, 0
    %p127 = por %p125, %p126
    %p128 = scmp.ne.s32.totalorder %s114, %s115
    %p129 = scmp.eq.s32.totalorder %s18, 1
    %p130 = por %p128, %p129
    %p132 = scmp.ne.s32.totalorder %s115, %s131
    %p133 = scmp.eq.s32.totalorder %s18, 0
    %p134 = por %p132, %p133
    %s135 = ssub.s32 %s12, %s19
    %p136 = scmp.eq.s32.totalorder %s135, 0
    %s138 = sadd.s32 %s137, 1
    %s139 = scalar_select %p136, %s137, %s138
    %p142 = pneg %p136
    %p143 = scmp.eq.s32.totalorder %s12, 1
    %p144 = por %p142, %p143
    %p145 = scmp.ne.s32.totalorder %s137, %s140
    %p146 = scmp.eq.s32.totalorder %s12, 0
    %p147 = por %p145, %p146
    %p148 = scmp.ne.s32.totalorder %s137, %s140
    %p149 = scmp.eq.s32.totalorder %s17, 1
    %p150 = por %p148, %p149
    %p151 = scmp.ne.s32.totalorder %s140, %s141
    %p152 = scmp.eq.s32.totalorder %s17, 0
    %p153 = por %p151, %p152
    %p154 = scmp.ne.s32.totalorder %s140, %s141
    %p155 = scmp.eq.s32.totalorder %s18, 1
    %p156 = por %p154, %p155
    %p158 = scmp.ne.s32.totalorder %s141, %s157
    %p159 = scmp.eq.s32.totalorder %s18, 0
    %p160 = por %p158, %p159
    %p161 = scmp.le.s32.totalorder 1, %s12
    %p162 = scmp.lt.s32.totalorder %s12, 3
    %p163 = pnand %p161, %p162
    %p164 = pneg %p163
    // Predicated region
    $region9: #{pt_block_forward.4} parent=5 // pred_check
      _
    $region10: #{pt_block_forward.4} parent=5 // pred_check_branch
      %166 = sbr.rel (%p163) target = $region12
    $region11: #{pt_block_forward.4} parent=5 // pred_region
      %s167 = ssub.s32 %s12, 1
      // Predicated region
      $region13: #{pt_block_forward.4} parent=11 // pred_check
        %p168 = pneg %p59
      $region14: #{pt_block_forward.4} parent=11 // pred_check_branch
        %170 = sbr.rel (%p168) target = $region16
      $region15: #{pt_block_forward.4} parent=11 // pred_region
        _
      $region16: #{pt_block_forward.4} parent=11 // pred_fallthru
        _
      // Predicated region
      $region17: #{pt_block_forward.4} parent=11 // pred_check
        %p171 = pneg %p80
      $region18: #{pt_block_forward.4} parent=11 // pred_check_branch
        %173 = sbr.rel (%p171) target = $region20
      $region19: #{pt_block_forward.4} parent=11 // pred_region
        _
      $region20: #{pt_block_forward.4} parent=11 // pred_fallthru
        _
      // Predicated region
      $region21: #{pt_block_forward.4} parent=11 // pred_check
        %p174 = pneg %p101
      $region22: #{pt_block_forward.4} parent=11 // pred_check_branch
        %176 = sbr.rel (%p174) target = $region24
      $region23: #{pt_block_forward.4} parent=11 // pred_region
        _
      $region24: #{pt_block_forward.4} parent=11 // pred_fallthru
        _
    $region12: #{pt_block_forward.4} parent=5 // pred_fallthru
      _
    %p177 = scmp.lt.s32.totalorder %s12, 2
    // Predicated region
    $region25: #{pt_block_forward.4} parent=5 // pred_check
      %p178 = pneg %p177
    $region26: #{pt_block_forward.4} parent=5 // pred_check_branch
      %180 = sbr.rel (%p178) target = $region28
    $region27: #{pt_block_forward.4} parent=5 // pred_region
      // Predicated region
      $region29: #{pt_block_forward.4} parent=27 // pred_check
        %p181 = pneg %p32
      $region30: #{pt_block_forward.4} parent=27 // pred_check_branch
        %183 = sbr.rel (%p181) target = $region32
      $region31: #{pt_block_forward.4} parent=27 // pred_region
        %p184 = scmp.lt.s32.totalorder %s12, 1
        %s185 = scalar_select %p184, %s12, 1
        %s186 = smul.addr %s185, 32
        %s187 = smul.addr %s186, 4
        %s188 = scalar_lea.vmem %s0, %s187
      $region32: #{pt_block_forward.4} parent=27 // pred_fallthru
        _
    $region28: #{pt_block_forward.4} parent=5 // pred_fallthru
      _
    %p189 = scmp.le.s32.totalorder 1, %s12
    %p190 = scmp.lt.s32.totalorder %s12, 3
    %p191 = pnand %p189, %p190
    %p192 = pneg %p191
    // Predicated region
    $region33: #{pt_block_forward.4} parent=5 // pred_check
      _
    $region34: #{pt_block_forward.4} parent=5 // pred_check_branch
      %194 = sbr.rel (%p191) target = $region36
    $region35: #{pt_block_forward.4} parent=5 // pred_region
      %s195 = ssub.s32 %s12, 1
      %p196 = scmp.lt.s32.totalorder %s17, 1
      %s197 = scalar_select %p196, %s17, 1
      %s198 = smul.addr %s197, 32
      %s199 = smul.addr %s198, 4
      %s200 = scalar_lea.vmem %s0, %s199
      %p201 = pneg %p38
      %p202 = pneg %p35
      %p203 = pneg %p59
      %p204 = pneg %p56
      %p205 = pneg %p80
      %p206 = pneg %p77
      %p207 = pneg %p101
      %p208 = pneg %p98
      %p209 = pneg %p127
      %p210 = pneg %p124
      %p211 = scmp.lt.s32.totalorder %s17, 1
      %s212 = scalar_select %p211, %s17, 1
      %s213 = smul.addr %s212, 32
      %s214 = smul.addr %s213, 4
      %s215 = scalar_lea.vmem %s4, %s214
      %p216 = pneg %p153
      %p217 = pneg %p150
      %p218 = scmp.lt.s32.totalorder %s17, 1
      %s219 = scalar_select %p218, %s17, 1
      %s220 = smul.addr %s219, 2
      %s221 = scalar_lea.vmem %s5, %s220
      %p222 = scmp.lt.s32.totalorder %s17, 1
      %s223 = scalar_select %p222, %s17, 1
      %s224 = smul.addr %s223, 32
      %s225 = smul.addr %s224, 4
      %s226 = scalar_lea.vmem %s0, %s225
      %p227 = scmp.lt.s32.totalorder %s17, 1
      %s228 = scalar_select %p227, %s17, 1
      %s229 = smul.addr %s228, 32
      %s230 = smul.addr %s229, 4
      %s231 = scalar_lea.vmem %s4, %s230
      %p232 = scmp.lt.s32.totalorder %s17, 1
      %s233 = scalar_select %p232, %s17, 1
      %s234 = smul.addr %s233, 2
      %s235 = scalar_lea.vmem %s5, %s234
      %237 = vst [vmem:[#allocation2] sm:$0xf] 0
      %238 = vst [vmem:[#allocation2 + $0x4] sm:$0xf] 0
      %239 = vst [vmem:[#allocation2 + $0x8] sm:$0x1] 0
      %s240 = scalar_lea.vmem [#allocation2], 204
      %241 = vst [vmem:[%s240] sm:$0xf] 0
      %242 = vst [vmem:[%s240 + $0x4] sm:$0xf] 0
      %243 = vst [vmem:[%s240 + $0x8] sm:$0x1] 0
      %vm244 = vcmask 1040384
      %vm245 = vsmask.f32 256
      %vm246 = vmand %vm244, %vm245
      %v247 = vld [vmem:[#allocation2] sm:$0x1]
      %v248 = vsel %vm246, 0, %v247
      %249 = vst [vmem:[#allocation2] sm:$0x1] %v248
      %v250 = vld [vmem:[#allocation2 + $0xc] sm:$0x1]
      %v251 = vsel %vm246, 0, %v250
      %252 = vst [vmem:[#allocation2 + $0xc] sm:$0x1] %v251
      %v253 = vld [vmem:[#allocation2 + $0x18] sm:$0x1]
      %v254 = vsel %vm246, 0, %v253
      %255 = vst [vmem:[#allocation2 + $0x18] sm:$0x1] %v254
      %v256 = vld [vmem:[#allocation2 + $0x24] sm:$0x1]
      %v257 = vsel %vm246, 0, %v256
      %258 = vst [vmem:[#allocation2 + $0x24] sm:$0x1] %v257
      %v259 = vld [vmem:[#allocation2 + $0x30] sm:$0x1]
      %v260 = vsel %vm246, 0, %v259
      %261 = vst [vmem:[#allocation2 + $0x30] sm:$0x1] %v260
      %v262 = vld [vmem:[#allocation2 + $0x3c] sm:$0x1]
      %v263 = vsel %vm246, 0, %v262
      %264 = vst [vmem:[#allocation2 + $0x3c] sm:$0x1] %v263
      %v265 = vld [vmem:[#allocation2 + $0x48] sm:$0x1]
      %v266 = vsel %vm246, 0, %v265
      %267 = vst [vmem:[#allocation2 + $0x48] sm:$0x1] %v266
      %v268 = vld [vmem:[#allocation2 + $0x54] sm:$0x1]
      %v269 = vsel %vm246, 0, %v268
      %270 = vst [vmem:[#allocation2 + $0x54] sm:$0x1] %v269
      %v271 = vld [vmem:[#allocation2 + $0x60] sm:$0x1]
      %v272 = vsel %vm246, 0, %v271
      %273 = vst [vmem:[#allocation2 + $0x60] sm:$0x1] %v272
      %v274 = vld [vmem:[#allocation2 + $0x6c] sm:$0x1]
      %v275 = vsel %vm246, 0, %v274
      %276 = vst [vmem:[#allocation2 + $0x6c] sm:$0x1] %v275
      %v277 = vld [vmem:[#allocation2 + $0x78] sm:$0x1]
      %v278 = vsel %vm246, 0, %v277
      %279 = vst [vmem:[#allocation2 + $0x78] sm:$0x1] %v278
      %v280 = vld [vmem:[#allocation2 + $0x84] sm:$0x1]
      %v281 = vsel %vm246, 0, %v280
      %282 = vst [vmem:[#allocation2 + $0x84] sm:$0x1] %v281
      %v283 = vld [vmem:[#allocation2 + $0x90] sm:$0x1]
      %v284 = vsel %vm246, 0, %v283
      %285 = vst [vmem:[#allocation2 + $0x90] sm:$0x1] %v284
      %v286 = vld [vmem:[#allocation2 + $0x9c] sm:$0x1]
      %v287 = vsel %vm246, 0, %v286
      %288 = vst [vmem:[#allocation2 + $0x9c] sm:$0x1] %v287
      %v289 = vld [vmem:[#allocation2 + $0xa8] sm:$0x1]
      %v290 = vsel %vm246, 0, %v289
      %291 = vst [vmem:[#allocation2 + $0xa8] sm:$0x1] %v290
      %v292 = vld [vmem:[#allocation2 + $0xb4] sm:$0x1]
      %v293 = vsel %vm246, 0, %v292
      %294 = vst [vmem:[#allocation2 + $0xb4] sm:$0x1] %v293
      %v295 = vld [vmem:[#allocation2 + $0xc0] sm:$0x1]
      %v296 = vsel %vm246, 0, %v295
      %297 = vst [vmem:[#allocation2 + $0xc0] sm:$0x1] %v296
      %v298 = vld [vmem:[#allocation2 + $0xcc] sm:$0x1]
      %v299 = vsel %vm246, 0, %v298
      %300 = vst [vmem:[#allocation2 + $0xcc] sm:$0x1] %v299
      %vm301 = vsmask.f32 7938
      %vm302 = vmand %vm244, %vm301
      %v303 = vld [vmem:[#allocation2 + $0x8] sm:$0x1]
      %v304 = vsel %vm302, 0, %v303
      %305 = vst [vmem:[#allocation2 + $0x8] sm:$0x1] %v304
      %v306 = vld [vmem:[#allocation2 + $0x14] sm:$0x1]
      %v307 = vsel %vm302, 0, %v306
      %308 = vst [vmem:[#allocation2 + $0x14] sm:$0x1] %v307
      %v309 = vld [vmem:[#allocation2 + $0x20] sm:$0x1]
      %v310 = vsel %vm302, 0, %v309
      %311 = vst [vmem:[#allocation2 + $0x20] sm:$0x1] %v310
      %v312 = vld [vmem:[#allocation2 + $0x2c] sm:$0x1]
      %v313 = vsel %vm302, 0, %v312
      %314 = vst [vmem:[#allocation2 + $0x2c] sm:$0x1] %v313
      %v315 = vld [vmem:[#allocation2 + $0x38] sm:$0x1]
      %v316 = vsel %vm302, 0, %v315
      %317 = vst [vmem:[#allocation2 + $0x38] sm:$0x1] %v316
      %v318 = vld [vmem:[#allocation2 + $0x44] sm:$0x1]
      %v319 = vsel %vm302, 0, %v318
      %320 = vst [vmem:[#allocation2 + $0x44] sm:$0x1] %v319
      %v321 = vld [vmem:[#allocation2 + $0x50] sm:$0x1]
      %v322 = vsel %vm302, 0, %v321
      %323 = vst [vmem:[#allocation2 + $0x50] sm:$0x1] %v322
      %v324 = vld [vmem:[#allocation2 + $0x5c] sm:$0x1]
      %v325 = vsel %vm302, 0, %v324
      %326 = vst [vmem:[#allocation2 + $0x5c] sm:$0x1] %v325
      %v327 = vld [vmem:[#allocation2 + $0x68] sm:$0x1]
      %v328 = vsel %vm302, 0, %v327
      %329 = vst [vmem:[#allocation2 + $0x68] sm:$0x1] %v328
      %v330 = vld [vmem:[#allocation2 + $0x74] sm:$0x1]
      %v331 = vsel %vm302, 0, %v330
      %332 = vst [vmem:[#allocation2 + $0x74] sm:$0x1] %v331
      %v333 = vld [vmem:[#allocation2 + $0x80] sm:$0x1]
      %v334 = vsel %vm302, 0, %v333
      %335 = vst [vmem:[#allocation2 + $0x80] sm:$0x1] %v334
      %v336 = vld [vmem:[#allocation2 + $0x8c] sm:$0x1]
      %v337 = vsel %vm302, 0, %v336
      %338 = vst [vmem:[#allocation2 + $0x8c] sm:$0x1] %v337
      %v339 = vld [vmem:[#allocation2 + $0x98] sm:$0x1]
      %v340 = vsel %vm302, 0, %v339
      %341 = vst [vmem:[#allocation2 + $0x98] sm:$0x1] %v340
      %v342 = vld [vmem:[#allocation2 + $0xa4] sm:$0x1]
      %v343 = vsel %vm302, 0, %v342
      %344 = vst [vmem:[#allocation2 + $0xa4] sm:$0x1] %v343
      %v345 = vld [vmem:[#allocation2 + $0xb0] sm:$0x1]
      %v346 = vsel %vm302, 0, %v345
      %347 = vst [vmem:[#allocation2 + $0xb0] sm:$0x1] %v346
      %v348 = vld [vmem:[#allocation2 + $0xbc] sm:$0x1]
      %v349 = vsel %vm302, 0, %v348
      %350 = vst [vmem:[#allocation2 + $0xbc] sm:$0x1] %v349
      %v351 = vld [vmem:[#allocation2 + $0xc8] sm:$0x1]
      %v352 = vsel %vm302, 0, %v351
      %353 = vst [vmem:[#allocation2 + $0xc8] sm:$0x1] %v352
      %v354 = vld [vmem:[#allocation2 + $0xd4] sm:$0x1]
      %v355 = vsel %vm302, 0, %v354
      %356 = vst [vmem:[#allocation2 + $0xd4] sm:$0x1] %v355
      %v357 = vld [vmem:[%s226] sm:$0xf]
      %v358 = vld [vmem:[%s226 + $0x4] sm:$0xf]
      %v359 = vld [vmem:[%s226 + $0x8] sm:$0xf]
      %v360 = vld [vmem:[%s226 + $0xc] sm:$0xf]
      %v361 = vld [vmem:[%s226 + $0x10] sm:$0xf]
      %v362 = vld [vmem:[%s226 + $0x14] sm:$0xf]
      %v363 = vld [vmem:[%s226 + $0x18] sm:$0xf]
      %v364 = vld [vmem:[%s226 + $0x1c] sm:$0xf]
      %v365 = vld [vmem:[%s226 + $0x20] sm:$0xf]
      %v366 = vld [vmem:[%s226 + $0x24] sm:$0xf]
      %v367 = vld [vmem:[%s226 + $0x28] sm:$0xf]
      %v368 = vld [vmem:[%s226 + $0x2c] sm:$0xf]
      %v369 = vld [vmem:[%s226 + $0x30] sm:$0xf]
      %v370 = vld [vmem:[%s226 + $0x34] sm:$0xf]
      %v371 = vld [vmem:[%s226 + $0x38] sm:$0xf]
      %v372 = vld [vmem:[%s226 + $0x3c] sm:$0xf]
      %v373 = vld [vmem:[%s226 + $0x40] sm:$0xf]
      %v374 = vld [vmem:[%s226 + $0x44] sm:$0xf]
      %v375 = vld [vmem:[%s226 + $0x48] sm:$0xf]
      %v376 = vld [vmem:[%s226 + $0x4c] sm:$0xf]
      %v377 = vld [vmem:[%s226 + $0x50] sm:$0xf]
      %v378 = vld [vmem:[%s226 + $0x54] sm:$0xf]
      %v379 = vld [vmem:[%s226 + $0x58] sm:$0xf]
      %v380 = vld [vmem:[%s226 + $0x5c] sm:$0xf]
      %v381 = vld [vmem:[%s226 + $0x60] sm:$0xf]
      %v382 = vld [vmem:[%s226 + $0x64] sm:$0xf]
      %v383 = vld [vmem:[%s226 + $0x68] sm:$0xf]
      %v384 = vld [vmem:[%s226 + $0x6c] sm:$0xf]
      %v385 = vld [vmem:[%s226 + $0x70] sm:$0xf]
      %v386 = vld [vmem:[%s226 + $0x74] sm:$0xf]
      %v387 = vld [vmem:[%s226 + $0x78] sm:$0xf]
      %v388 = vld [vmem:[%s226 + $0x7c] sm:$0xf]
      %v389 = vunpack.c.l.bf16 %v357
      %v390 = vunpack.c.l.bf16 %v358
      %v391 = vunpack.c.l.bf16 %v359
      %v392 = vunpack.c.l.bf16 %v360
      %v393 = vunpack.c.l.bf16 %v361
      %v394 = vunpack.c.l.bf16 %v362
      %v395 = vunpack.c.l.bf16 %v363
      %v396 = vunpack.c.l.bf16 %v364
      %v397 = vunpack.c.l.bf16 %v365
      %v398 = vunpack.c.l.bf16 %v366
      %v399 = vunpack.c.l.bf16 %v367
      %v400 = vunpack.c.l.bf16 %v368
      %v401 = vunpack.c.l.bf16 %v369
      %v402 = vunpack.c.l.bf16 %v370
      %v403 = vunpack.c.l.bf16 %v371
      %v404 = vunpack.c.l.bf16 %v372
      %v405 = vunpack.c.l.bf16 %v373
      %v406 = vunpack.c.l.bf16 %v374
      %v407 = vunpack.c.l.bf16 %v375
      %v408 = vunpack.c.l.bf16 %v376
      %v409 = vunpack.c.l.bf16 %v377
      %v410 = vunpack.c.l.bf16 %v378
      %v411 = vunpack.c.l.bf16 %v379
      %v412 = vunpack.c.l.bf16 %v380
      %v413 = vunpack.c.l.bf16 %v381
      %v414 = vunpack.c.l.bf16 %v382
      %v415 = vunpack.c.l.bf16 %v383
      %v416 = vunpack.c.l.bf16 %v384
      %v417 = vunpack.c.l.bf16 %v385
      %v418 = vunpack.c.l.bf16 %v386
      %v419 = vunpack.c.l.bf16 %v387
      %v420 = vunpack.c.l.bf16 %v388
      %v421 = vld [vmem:[%s2] sm:$0x1]
      %v423 = vlaneseq
      %v424 = vshrl.u32 %v423, 7
      %v425 = vsub.s32 0, %v424
      %v426 = vrot.slane %v421, %v425
      %v428 = vmul.f32 %v389, %v426
      %v429 = vmul.f32 %v390, %v426
      %v430 = vmul.f32 %v391, %v426
      %v431 = vmul.f32 %v392, %v426
      %v432 = vmul.f32 %v393, %v426
      %v433 = vmul.f32 %v394, %v426
      %v434 = vmul.f32 %v395, %v426
      %v435 = vmul.f32 %v396, %v426
      %v436 = vmul.f32 %v397, %v426
      %v437 = vmul.f32 %v398, %v426
      %v438 = vmul.f32 %v399, %v426
      %v439 = vmul.f32 %v400, %v426
      %v440 = vmul.f32 %v401, %v426
      %v441 = vmul.f32 %v402, %v426
      %v442 = vmul.f32 %v403, %v426
      %v443 = vmul.f32 %v404, %v426
      %v444 = vmul.f32 %v405, %v426
      %v445 = vmul.f32 %v406, %v426
      %v446 = vmul.f32 %v407, %v426
      %v447 = vmul.f32 %v408, %v426
      %v448 = vmul.f32 %v409, %v426
      %v449 = vmul.f32 %v410, %v426
      %v450 = vmul.f32 %v411, %v426
      %v451 = vmul.f32 %v412, %v426
      %v452 = vmul.f32 %v413, %v426
      %v453 = vmul.f32 %v414, %v426
      %v454 = vmul.f32 %v415, %v426
      %v455 = vmul.f32 %v416, %v426
      %v456 = vmul.f32 %v417, %v426
      %v457 = vmul.f32 %v418, %v426
      %v458 = vmul.f32 %v419, %v426
      %v459 = vmul.f32 %v420, %v426
      %v460 = vld [vmem:[%s3] sm:$0x1]
      %v462 = vlaneseq
      %v463 = vshrl.u32 %v462, 7
      %v464 = vsub.s32 0, %v463
      %v465 = vrot.slane %v460, %v464
      %v467 = vadd.f32 %v428, %v465
      %v468 = vadd.f32 %v429, %v465
      %v469 = vadd.f32 %v430, %v465
      %v470 = vadd.f32 %v431, %v465
      %v471 = vadd.f32 %v432, %v465
      %v472 = vadd.f32 %v433, %v465
      %v473 = vadd.f32 %v434, %v465
      %v474 = vadd.f32 %v435, %v465
      %v475 = vadd.f32 %v436, %v465
      %v476 = vadd.f32 %v437, %v465
      %v477 = vadd.f32 %v438, %v465
      %v478 = vadd.f32 %v439, %v465
      %v479 = vadd.f32 %v440, %v465
      %v480 = vadd.f32 %v441, %v465
      %v481 = vadd.f32 %v442, %v465
      %v482 = vadd.f32 %v443, %v465
      %v483 = vadd.f32 %v444, %v465
      %v484 = vadd.f32 %v445, %v465
      %v485 = vadd.f32 %v446, %v465
      %v486 = vadd.f32 %v447, %v465
      %v487 = vadd.f32 %v448, %v465
      %v488 = vadd.f32 %v449, %v465
      %v489 = vadd.f32 %v450, %v465
      %v490 = vadd.f32 %v451, %v465
      %v491 = vadd.f32 %v452, %v465
      %v492 = vadd.f32 %v453, %v465
      %v493 = vadd.f32 %v454, %v465
      %v494 = vadd.f32 %v455, %v465
      %v495 = vadd.f32 %v456, %v465
      %v496 = vadd.f32 %v457, %v465
      %v497 = vadd.f32 %v458, %v465
      %v498 = vadd.f32 %v459, %v465
      %v499 = vmax.f32 %v467, 0.0
      %v500 = vmax.f32 %v468, 0.0
      %v501 = vmax.f32 %v469, 0.0
      %v502 = vmax.f32 %v470, 0.0
      %v503 = vmax.f32 %v471, 0.0
      %v504 = vmax.f32 %v472, 0.0
      %v505 = vmax.f32 %v473, 0.0
      %v506 = vmax.f32 %v474, 0.0
      %v507 = vmax.f32 %v475, 0.0
      %v508 = vmax.f32 %v476, 0.0
      %v509 = vmax.f32 %v477, 0.0
      %v510 = vmax.f32 %v478, 0.0
      %v511 = vmax.f32 %v479, 0.0
      %v512 = vmax.f32 %v480, 0.0
      %v513 = vmax.f32 %v481, 0.0
      %v514 = vmax.f32 %v482, 0.0
      %v515 = vmax.f32 %v483, 0.0
      %v516 = vmax.f32 %v484, 0.0
      %v517 = vmax.f32 %v485, 0.0
      %v518 = vmax.f32 %v486, 0.0
      %v519 = vmax.f32 %v487, 0.0
      %v520 = vmax.f32 %v488, 0.0
      %v521 = vmax.f32 %v489, 0.0
      %v522 = vmax.f32 %v490, 0.0
      %v523 = vmax.f32 %v491, 0.0
      %v524 = vmax.f32 %v492, 0.0
      %v525 = vmax.f32 %v493, 0.0
      %v526 = vmax.f32 %v494, 0.0
      %v527 = vmax.f32 %v495, 0.0
      %v528 = vmax.f32 %v496, 0.0
      %v529 = vmax.f32 %v497, 0.0
      %v530 = vmax.f32 %v498, 0.0
      %v531 = vpack.c.bf16 %v500, %v499
      %v532 = vpack.c.bf16 %v502, %v501
      %v533 = vpack.c.bf16 %v504, %v503
      %v534 = vpack.c.bf16 %v506, %v505
      %v535 = vpack.c.bf16 %v508, %v507
      %v536 = vpack.c.bf16 %v510, %v509
      %v537 = vpack.c.bf16 %v512, %v511
      %v538 = vpack.c.bf16 %v514, %v513
      %v539 = vpack.c.bf16 %v516, %v515
      %v540 = vpack.c.bf16 %v518, %v517
      %v541 = vpack.c.bf16 %v520, %v519
      %v542 = vpack.c.bf16 %v522, %v521
      %v543 = vpack.c.bf16 %v524, %v523
      %v544 = vpack.c.bf16 %v526, %v525
      %v545 = vpack.c.bf16 %v528, %v527
      %v546 = vpack.c.bf16 %v530, %v529
      %v563 = vunpack.c.l.b16 %v531
      %v564 = vunpack.c.h.b16 %v531
      %v565 = vunpack.c.l.b16 %v532
      %v566 = vunpack.c.h.b16 %v532
      %v567 = vunpack.c.l.b16 %v533
      %v568 = vunpack.c.h.b16 %v533
      %v569 = vunpack.c.l.b16 %v534
      %v570 = vunpack.c.h.b16 %v534
      %v571 = vunpack.c.l.b16 %v535
      %v572 = vunpack.c.h.b16 %v535
      %v573 = vunpack.c.l.b16 %v536
      %v574 = vunpack.c.h.b16 %v536
      %v575 = vunpack.c.l.b16 %v537
      %v576 = vunpack.c.h.b16 %v537
      %v577 = vunpack.c.l.b16 %v538
      %v578 = vunpack.c.h.b16 %v538
      %v579 = vunpack.c.l.b16 %v539
      %v580 = vunpack.c.h.b16 %v539
      %v581 = vunpack.c.l.b16 %v540
      %v582 = vunpack.c.h.b16 %v540
      %v583 = vunpack.c.l.b16 %v541
      %v584 = vunpack.c.h.b16 %v541
      %v585 = vunpack.c.l.b16 %v542
      %v586 = vunpack.c.h.b16 %v542
      %v587 = vunpack.c.l.b16 %v543
      %v588 = vunpack.c.h.b16 %v543
      %v589 = vunpack.c.l.b16 %v544
      %v590 = vunpack.c.h.b16 %v544
      %v591 = vunpack.c.l.b16 %v545
      %v592 = vunpack.c.h.b16 %v545
      %v593 = vunpack.c.l.b16 %v546
      %v594 = vunpack.c.h.b16 %v546
      %v595 = vpack.c.b16 %v563, %v563
      %v596 = vpack.c.b16 %v564, %v564
      %v597 = vpack.c.b16 %v565, %v565
      %v598 = vpack.c.b16 %v566, %v566
      %v599 = vpack.c.b16 %v567, %v567
      %v600 = vpack.c.b16 %v568, %v568
      %v601 = vpack.c.b16 %v569, %v569
      %v602 = vpack.c.b16 %v570, %v570
      %v603 = vpack.c.b16 %v571, %v571
      %v604 = vpack.c.b16 %v572, %v572
      %v605 = vpack.c.b16 %v573, %v573
      %v606 = vpack.c.b16 %v574, %v574
      %v607 = vpack.c.b16 %v575, %v575
      %v608 = vpack.c.b16 %v576, %v576
      %v609 = vpack.c.b16 %v577, %v577
      %v610 = vpack.c.b16 %v578, %v578
      %v611 = vpack.c.b16 %v579, %v579
      %v612 = vpack.c.b16 %v580, %v580
      %v613 = vpack.c.b16 %v581, %v581
      %v614 = vpack.c.b16 %v582, %v582
      %v615 = vpack.c.b16 %v583, %v583
      %v616 = vpack.c.b16 %v584, %v584
      %v617 = vpack.c.b16 %v585, %v585
      %v618 = vpack.c.b16 %v586, %v586
      %v619 = vpack.c.b16 %v587, %v587
      %v620 = vpack.c.b16 %v588, %v588
      %v621 = vpack.c.b16 %v589, %v589
      %v622 = vpack.c.b16 %v590, %v590
      %v623 = vpack.c.b16 %v591, %v591
      %v624 = vpack.c.b16 %v592, %v592
      %v625 = vpack.c.b16 %v593, %v593
      %v626 = vpack.c.b16 %v594, %v594
      %vm627 = vsmask.f32 4368
      %vm628 = vmor %vm245, %vm627
      %v630 = vshrl.u32 %v595, 16
      %v632 = vrot.slane %v630, 7
      %v633 = vshll.u32 %v595, 16
      %v635 = vor.u32 %v632, %v633
      %v636 = vrot.slane %v632, 4
      %v638 = vshrl.u32 %v596, 16
      %v640 = vrot.slane %v638, 7
      %v641 = vshll.u32 %v596, 16
      %v643 = vor.u32 %v640, %v641
      %v644 = vsel %vm628, %v636, %v643
      %v645 = vrot.slane %v640, 4
      %v647 = vshrl.u32 %v597, 16
      %v649 = vrot.slane %v647, 7
      %v650 = vshll.u32 %v597, 16
      %v652 = vor.u32 %v649, %v650
      %v653 = vrot.slane %v649, 4
      %v655 = vshrl.u32 %v598, 16
      %v657 = vrot.slane %v655, 7
      %v658 = vshll.u32 %v598, 16
      %v660 = vor.u32 %v657, %v658
      %v661 = vsel %vm628, %v653, %v660
      %v662 = vrot.slane %v657, 4
      %v664 = vshrl.u32 %v599, 16
      %v666 = vrot.slane %v664, 7
      %v667 = vshll.u32 %v599, 16
      %v669 = vor.u32 %v666, %v667
      %v670 = vrot.slane %v666, 4
      %v672 = vshrl.u32 %v600, 16
      %v674 = vrot.slane %v672, 7
      %v675 = vshll.u32 %v600, 16
      %v677 = vor.u32 %v674, %v675
      %v678 = vsel %vm628, %v670, %v677
      %v679 = vrot.slane %v674, 4
      %v681 = vshrl.u32 %v601, 16
      %v683 = vrot.slane %v681, 7
      %v684 = vshll.u32 %v601, 16
      %v686 = vor.u32 %v683, %v684
      %v687 = vrot.slane %v683, 4
      %v689 = vshrl.u32 %v602, 16
      %v691 = vrot.slane %v689, 7
      %v692 = vshll.u32 %v602, 16
      %v694 = vor.u32 %v691, %v692
      %v695 = vsel %vm628, %v687, %v694
      %v696 = vrot.slane %v691, 4
      %v698 = vshrl.u32 %v603, 16
      %v700 = vrot.slane %v698, 7
      %v701 = vshll.u32 %v603, 16
      %v703 = vor.u32 %v700, %v701
      %v704 = vrot.slane %v700, 4
      %v706 = vshrl.u32 %v604, 16
      %v708 = vrot.slane %v706, 7
      %v709 = vshll.u32 %v604, 16
      %v711 = vor.u32 %v708, %v709
      %v712 = vsel %vm628, %v704, %v711
      %v713 = vrot.slane %v708, 4
      %v715 = vshrl.u32 %v605, 16
      %v717 = vrot.slane %v715, 7
      %v718 = vshll.u32 %v605, 16
      %v720 = vor.u32 %v717, %v718
      %v721 = vrot.slane %v717, 4
      %v723 = vshrl.u32 %v606, 16
      %v725 = vrot.slane %v723, 7
      %v726 = vshll.u32 %v606, 16
      %v728 = vor.u32 %v725, %v726
      %v729 = vsel %vm628, %v721, %v728
      %v730 = vrot.slane %v725, 4
      %v732 = vshrl.u32 %v607, 16
      %v734 = vrot.slane %v732, 7
      %v735 = vshll.u32 %v607, 16
      %v737 = vor.u32 %v734, %v735
      %v738 = vrot.slane %v734, 4
      %v740 = vshrl.u32 %v608, 16
      %v742 = vrot.slane %v740, 7
      %v743 = vshll.u32 %v608, 16
      %v745 = vor.u32 %v742, %v743
      %v746 = vsel %vm628, %v738, %v745
      %v747 = vrot.slane %v742, 4
      %v749 = vshrl.u32 %v609, 16
      %v751 = vrot.slane %v749, 7
      %v752 = vshll.u32 %v609, 16
      %v754 = vor.u32 %v751, %v752
      %v755 = vrot.slane %v751, 4
      %v757 = vshrl.u32 %v610, 16
      %v759 = vrot.slane %v757, 7
      %v760 = vshll.u32 %v610, 16
      %v762 = vor.u32 %v759, %v760
      %v763 = vsel %vm628, %v755, %v762
      %v764 = vrot.slane %v759, 4
      %v766 = vshrl.u32 %v611, 16
      %v768 = vrot.slane %v766, 7
      %v769 = vshll.u32 %v611, 16
      %v771 = vor.u32 %v768, %v769
      %v772 = vrot.slane %v768, 4
      %v774 = vshrl.u32 %v612, 16
      %v776 = vrot.slane %v774, 7
      %v777 = vshll.u32 %v612, 16
      %v779 = vor.u32 %v776, %v777
      %v780 = vsel %vm628, %v772, %v779
      %v781 = vrot.slane %v776, 4
      %v783 = vshrl.u32 %v613, 16
      %v785 = vrot.slane %v783, 7
      %v786 = vshll.u32 %v613, 16
      %v788 = vor.u32 %v785, %v786
      %v789 = vrot.slane %v785, 4
      %v791 = vshrl.u32 %v614, 16
      %v793 = vrot.slane %v791, 7
      %v794 = vshll.u32 %v614, 16
      %v796 = vor.u32 %v793, %v794
      %v797 = vsel %vm628, %v789, %v796
      %v798 = vrot.slane %v793, 4
      %v800 = vshrl.u32 %v615, 16
      %v802 = vrot.slane %v800, 7
      %v803 = vshll.u32 %v615, 16
      %v805 = vor.u32 %v802, %v803
      %v806 = vrot.slane %v802, 4
      %v808 = vshrl.u32 %v616, 16
      %v810 = vrot.slane %v808, 7
      %v811 = vshll.u32 %v616, 16
      %v813 = vor.u32 %v810, %v811
      %v814 = vsel %vm628, %v806, %v813
      %v815 = vrot.slane %v810, 4
      %v817 = vshrl.u32 %v617, 16
      %v819 = vrot.slane %v817, 7
      %v820 = vshll.u32 %v617, 16
      %v822 = vor.u32 %v819, %v820
      %v823 = vrot.slane %v819, 4
      %v825 = vshrl.u32 %v618, 16
      %v827 = vrot.slane %v825, 7
      %v828 = vshll.u32 %v618, 16
      %v830 = vor.u32 %v827, %v828
      %v831 = vsel %vm628, %v823, %v830
      %v832 = vrot.slane %v827, 4
      %v834 = vshrl.u32 %v619, 16
      %v836 = vrot.slane %v834, 7
      %v837 = vshll.u32 %v619, 16
      %v839 = vor.u32 %v836, %v837
      %v840 = vrot.slane %v836, 4
      %v842 = vshrl.u32 %v620, 16
      %v844 = vrot.slane %v842, 7
      %v845 = vshll.u32 %v620, 16
      %v847 = vor.u32 %v844, %v845
      %v848 = vsel %vm628, %v840, %v847
      %v849 = vrot.slane %v844, 4
      %v851 = vshrl.u32 %v621, 16
      %v853 = vrot.slane %v851, 7
      %v854 = vshll.u32 %v621, 16
      %v856 = vor.u32 %v853, %v854
      %v857 = vrot.slane %v853, 4
      %v859 = vshrl.u32 %v622, 16
      %v861 = vrot.slane %v859, 7
      %v862 = vshll.u32 %v622, 16
      %v864 = vor.u32 %v861, %v862
      %v865 = vsel %vm628, %v857, %v864
      %v866 = vrot.slane %v861, 4
      %v868 = vshrl.u32 %v623, 16
      %v870 = vrot.slane %v868, 7
      %v871 = vshll.u32 %v623, 16
      %v873 = vor.u32 %v870, %v871
      %v874 = vrot.slane %v870, 4
      %v876 = vshrl.u32 %v624, 16
      %v878 = vrot.slane %v876, 7
      %v879 = vshll.u32 %v624, 16
      %v881 = vor.u32 %v878, %v879
      %v882 = vsel %vm628, %v874, %v881
      %v883 = vrot.slane %v878, 4
      %v885 = vshrl.u32 %v625, 16
      %v887 = vrot.slane %v885, 7
      %v888 = vshll.u32 %v625, 16
      %v890 = vor.u32 %v887, %v888
      %v891 = vrot.slane %v887, 4
      %v893 = vshrl.u32 %v626, 16
      %v895 = vrot.slane %v893, 7
      %v896 = vshll.u32 %v626, 16
      %v898 = vor.u32 %v895, %v896
      %v899 = vsel %vm628, %v891, %v898
      %v900 = vrot.slane %v895, 4
      %s949 = scalar_lea.vmem [#allocation2], 12
      %vm950 = vcmask 1043456
      %vm951 = vmand %vm950, %vm301
      %v952 = vld [vmem:[%s949] sm:$0xf]
      %v953 = vsel %vm951, %v635, %v952
      %954 = vst [vmem:[%s949] sm:$0xf] %v953
      %955 = vst [vmem:[%s949 + $0x4] sm:$0xf] %v644
      %v956 = vld [vmem:[%s949 + $0x8] sm:$0x1]
      %v957 = vsel %vm246, %v645, %v956
      %958 = vst [vmem:[%s949 + $0x8] sm:$0x1] %v957
      %v959 = vld [vmem:[%s949 + $0xc] sm:$0xf]
      %v960 = vsel %vm951, %v652, %v959
      %961 = vst [vmem:[%s949 + $0xc] sm:$0xf] %v960
      %962 = vst [vmem:[%s949 + $0x10] sm:$0xf] %v661
      %v963 = vld [vmem:[%s949 + $0x14] sm:$0x1]
      %v964 = vsel %vm246, %v662, %v963
      %965 = vst [vmem:[%s949 + $0x14] sm:$0x1] %v964
      %v966 = vld [vmem:[%s949 + $0x18] sm:$0xf]
      %v967 = vsel %vm951, %v669, %v966
      %968 = vst [vmem:[%s949 + $0x18] sm:$0xf] %v967
      %969 = vst [vmem:[%s949 + $0x1c] sm:$0xf] %v678
      %v970 = vld [vmem:[%s949 + $0x20] sm:$0x1]
      %v971 = vsel %vm246, %v679, %v970
      %972 = vst [vmem:[%s949 + $0x20] sm:$0x1] %v971
      %v973 = vld [vmem:[%s949 + $0x24] sm:$0xf]
      %v974 = vsel %vm951, %v686, %v973
      %975 = vst [vmem:[%s949 + $0x24] sm:$0xf] %v974
      %976 = vst [vmem:[%s949 + $0x28] sm:$0xf] %v695
      %v977 = vld [vmem:[%s949 + $0x2c] sm:$0x1]
      %v978 = vsel %vm246, %v696, %v977
      %979 = vst [vmem:[%s949 + $0x2c] sm:$0x1] %v978
      %v980 = vld [vmem:[%s949 + $0x30] sm:$0xf]
      %v981 = vsel %vm951, %v703, %v980
      %982 = vst [vmem:[%s949 + $0x30] sm:$0xf] %v981
      %983 = vst [vmem:[%s949 + $0x34] sm:$0xf] %v712
      %v984 = vld [vmem:[%s949 + $0x38] sm:$0x1]
      %v985 = vsel %vm246, %v713, %v984
      %986 = vst [vmem:[%s949 + $0x38] sm:$0x1] %v985
      %v987 = vld [vmem:[%s949 + $0x3c] sm:$0xf]
      %v988 = vsel %vm951, %v720, %v987
      %989 = vst [vmem:[%s949 + $0x3c] sm:$0xf] %v988
      %990 = vst [vmem:[%s949 + $0x40] sm:$0xf] %v729
      %v991 = vld [vmem:[%s949 + $0x44] sm:$0x1]
      %v992 = vsel %vm246, %v730, %v991
      %993 = vst [vmem:[%s949 + $0x44] sm:$0x1] %v992
      %v994 = vld [vmem:[%s949 + $0x48] sm:$0xf]
      %v995 = vsel %vm951, %v737, %v994
      %996 = vst [vmem:[%s949 + $0x48] sm:$0xf] %v995
      %997 = vst [vmem:[%s949 + $0x4c] sm:$0xf] %v746
      %v998 = vld [vmem:[%s949 + $0x50] sm:$0x1]
      %v999 = vsel %vm246, %v747, %v998
      %1000 = vst [vmem:[%s949 + $0x50] sm:$0x1] %v999
      %v1001 = vld [vmem:[%s949 + $0x54] sm:$0xf]
      %v1002 = vsel %vm951, %v754, %v1001
      %1003 = vst [vmem:[%s949 + $0x54] sm:$0xf] %v1002
      %1004 = vst [vmem:[%s949 + $0x58] sm:$0xf] %v763
      %v1005 = vld [vmem:[%s949 + $0x5c] sm:$0x1]
      %v1006 = vsel %vm246, %v764, %v1005
      %1007 = vst [vmem:[%s949 + $0x5c] sm:$0x1] %v1006
      %v1008 = vld [vmem:[%s949 + $0x60] sm:$0xf]
      %v1009 = vsel %vm951, %v771, %v1008
      %1010 = vst [vmem:[%s949 + $0x60] sm:$0xf] %v1009
      %1011 = vst [vmem:[%s949 + $0x64] sm:$0xf] %v780
      %v1012 = vld [vmem:[%s949 + $0x68] sm:$0x1]
      %v1013 = vsel %vm246, %v781, %v1012
      %1014 = vst [vmem:[%s949 + $0x68] sm:$0x1] %v1013
      %v1015 = vld [vmem:[%s949 + $0x6c] sm:$0xf]
      %v1016 = vsel %vm951, %v788, %v1015
      %1017 = vst [vmem:[%s949 + $0x6c] sm:$0xf] %v1016
      %1018 = vst [vmem:[%s949 + $0x70] sm:$0xf] %v797
      %v1019 = vld [vmem:[%s949 + $0x74] sm:$0x1]
      %v1020 = vsel %vm246, %v798, %v1019
      %1021 = vst [vmem:[%s949 + $0x74] sm:$0x1] %v1020
      %v1022 = vld [vmem:[%s949 + $0x78] sm:$0xf]
      %v1023 = vsel %vm951, %v805, %v1022
      %1024 = vst [vmem:[%s949 + $0x78] sm:$0xf] %v1023
      %1025 = vst [vmem:[%s949 + $0x7c] sm:$0xf] %v814
      %v1026 = vld [vmem:[%s949 + $0x80] sm:$0x1]
      %v1027 = vsel %vm246, %v815, %v1026
      %1028 = vst [vmem:[%s949 + $0x80] sm:$0x1] %v1027
      %v1029 = vld [vmem:[%s949 + $0x84] sm:$0xf]
      %v1030 = vsel %vm951, %v822, %v1029
      %1031 = vst [vmem:[%s949 + $0x84] sm:$0xf] %v1030
      %1032 = vst [vmem:[%s949 + $0x88] sm:$0xf] %v831
      %v1033 = vld [vmem:[%s949 + $0x8c] sm:$0x1]
      %v1034 = vsel %vm246, %v832, %v1033
      %1035 = vst [vmem:[%s949 + $0x8c] sm:$0x1] %v1034
      %v1036 = vld [vmem:[%s949 + $0x90] sm:$0xf]
      %v1037 = vsel %vm951, %v839, %v1036
      %1038 = vst [vmem:[%s949 + $0x90] sm:$0xf] %v1037
      %1039 = vst [vmem:[%s949 + $0x94] sm:$0xf] %v848
      %v1040 = vld [vmem:[%s949 + $0x98] sm:$0x1]
      %v1041 = vsel %vm246, %v849, %v1040
      %1042 = vst [vmem:[%s949 + $0x98] sm:$0x1] %v1041
      %v1043 = vld [vmem:[%s949 + $0x9c] sm:$0xf]
      %v1044 = vsel %vm951, %v856, %v1043
      %1045 = vst [vmem:[%s949 + $0x9c] sm:$0xf] %v1044
      %1046 = vst [vmem:[%s949 + $0xa0] sm:$0xf] %v865
      %v1047 = vld [vmem:[%s949 + $0xa4] sm:$0x1]
      %v1048 = vsel %vm246, %v866, %v1047
      %1049 = vst [vmem:[%s949 + $0xa4] sm:$0x1] %v1048
      %v1050 = vld [vmem:[%s949 + $0xa8] sm:$0xf]
      %v1051 = vsel %vm951, %v873, %v1050
      %1052 = vst [vmem:[%s949 + $0xa8] sm:$0xf] %v1051
      %1053 = vst [vmem:[%s949 + $0xac] sm:$0xf] %v882
      %v1054 = vld [vmem:[%s949 + $0xb0] sm:$0x1]
      %v1055 = vsel %vm246, %v883, %v1054
      %1056 = vst [vmem:[%s949 + $0xb0] sm:$0x1] %v1055
      %v1057 = vld [vmem:[%s949 + $0xb4] sm:$0xf]
      %v1058 = vsel %vm951, %v890, %v1057
      %1059 = vst [vmem:[%s949 + $0xb4] sm:$0xf] %v1058
      %1060 = vst [vmem:[%s949 + $0xb8] sm:$0xf] %v899
      %v1061 = vld [vmem:[%s949 + $0xbc] sm:$0x1]
      %v1062 = vsel %vm246, %v900, %v1061
      %1063 = vst [vmem:[%s949 + $0xbc] sm:$0x1] %v1062
      %v1064 = vld [vmem:[#allocation2] sm:$0xf]
      %v1065 = vld [vmem:[#allocation2 + $0x4] sm:$0xf]
      %v1066 = vld [vmem:[#allocation2 + $0xc] sm:$0xf]
      %v1067 = vld [vmem:[#allocation2 + $0x10] sm:$0xf]
      %v1068 = vld [vmem:[#allocation2 + $0x18] sm:$0xf]
      %v1069 = vld [vmem:[#allocation2 + $0x1c] sm:$0xf]
      %v1070 = vld [vmem:[#allocation2 + $0x24] sm:$0xf]
      %v1071 = vld [vmem:[#allocation2 + $0x28] sm:$0xf]
      %v1072 = vld [vmem:[#allocation2 + $0x30] sm:$0xf]
      %v1073 = vld [vmem:[#allocation2 + $0x34] sm:$0xf]
      %v1074 = vld [vmem:[#allocation2 + $0x3c] sm:$0xf]
      %v1075 = vld [vmem:[#allocation2 + $0x40] sm:$0xf]
      %v1076 = vld [vmem:[#allocation2 + $0x48] sm:$0xf]
      %v1077 = vld [vmem:[#allocation2 + $0x4c] sm:$0xf]
      %v1078 = vld [vmem:[#allocation2 + $0x54] sm:$0xf]
      %v1079 = vld [vmem:[#allocation2 + $0x58] sm:$0xf]
      %v1080 = vld [vmem:[#allocation2 + $0x60] sm:$0xf]
      %v1081 = vld [vmem:[#allocation2 + $0x64] sm:$0xf]
      %v1082 = vld [vmem:[#allocation2 + $0x6c] sm:$0xf]
      %v1083 = vld [vmem:[#allocation2 + $0x70] sm:$0xf]
      %v1084 = vld [vmem:[#allocation2 + $0x78] sm:$0xf]
      %v1085 = vld [vmem:[#allocation2 + $0x7c] sm:$0xf]
      %v1086 = vld [vmem:[#allocation2 + $0x84] sm:$0xf]
      %v1087 = vld [vmem:[#allocation2 + $0x88] sm:$0xf]
      %v1088 = vld [vmem:[#allocation2 + $0x90] sm:$0xf]
      %v1089 = vld [vmem:[#allocation2 + $0x94] sm:$0xf]
      %v1090 = vld [vmem:[#allocation2 + $0x9c] sm:$0xf]
      %v1091 = vld [vmem:[#allocation2 + $0xa0] sm:$0xf]
      %v1092 = vld [vmem:[#allocation2 + $0xa8] sm:$0xf]
      %v1093 = vld [vmem:[#allocation2 + $0xac] sm:$0xf]
      %v1094 = vld [vmem:[#allocation2 + $0xb4] sm:$0xf]
      %v1095 = vld [vmem:[#allocation2 + $0xb8] sm:$0xf]
      %v1096 = vld [vmem:[%s1] sm:$0xf]
      %v1097 = vld [vmem:[%s1 + $0x4] sm:$0xf]
      %v1098 = vld [vmem:[%s1 + $0x8] sm:$0xf]
      %v1099 = vld [vmem:[%s1 + $0xc] sm:$0xf]
      %v1100 = vld [vmem:[%s1 + $0x10] sm:$0xf]
      %v1101 = vld [vmem:[%s1 + $0x14] sm:$0xf]
      %v1102 = vld [vmem:[%s1 + $0x18] sm:$0xf]
      %v1103 = vld [vmem:[%s1 + $0x1c] sm:$0xf]
      %v1104 = vld [vmem:[%s1 + $0x20] sm:$0xf]
      %v1105 = vld [vmem:[%s1 + $0x24] sm:$0xf]
      %v1106 = vld [vmem:[%s1 + $0x28] sm:$0xf]
      %v1107 = vld [vmem:[%s1 + $0x2c] sm:$0xf]
      %v1108 = vld [vmem:[%s1 + $0x30] sm:$0xf]
      %v1109 = vld [vmem:[%s1 + $0x34] sm:$0xf]
      %v1110 = vld [vmem:[%s1 + $0x38] sm:$0xf]
      %v1111 = vld [vmem:[%s1 + $0x3c] sm:$0xf]
      %v1112 = vld [vmem:[#allocation2 + $0x8] sm:$0x1]
      %v1113 = vld [vmem:[#allocation2 + $0x14] sm:$0x1]
      %v1114 = vld [vmem:[#allocation2 + $0x20] sm:$0x1]
      %v1115 = vld [vmem:[#allocation2 + $0x2c] sm:$0x1]
      %v1116 = vld [vmem:[#allocation2 + $0x38] sm:$0x1]
      %v1117 = vld [vmem:[#allocation2 + $0x44] sm:$0x1]
      %v1118 = vld [vmem:[#allocation2 + $0x50] sm:$0x1]
      %v1119 = vld [vmem:[#allocation2 + $0x5c] sm:$0x1]
      %v1120 = vld [vmem:[#allocation2 + $0x68] sm:$0x1]
      %v1121 = vld [vmem:[#allocation2 + $0x74] sm:$0x1]
      %v1122 = vld [vmem:[#allocation2 + $0x80] sm:$0x1]
      %v1123 = vld [vmem:[#allocation2 + $0x8c] sm:$0x1]
      %v1124 = vld [vmem:[#allocation2 + $0x98] sm:$0x1]
      %v1125 = vld [vmem:[#allocation2 + $0xa4] sm:$0x1]
      %v1126 = vld [vmem:[#allocation2 + $0xb0] sm:$0x1]
      %v1127 = vld [vmem:[#allocation2 + $0xbc] sm:$0x1]
      %v1128 = vld [vmem:[%s1 + $0x40] sm:$0xf]
      %v1129 = vld [vmem:[%s1 + $0x44] sm:$0xf]
      %v1130 = vld [vmem:[%s1 + $0x48] sm:$0xf]
      %v1131 = vld [vmem:[%s1 + $0x4c] sm:$0xf]
      %v1132 = vld [vmem:[%s1 + $0x50] sm:$0xf]
      %v1133 = vld [vmem:[%s1 + $0x54] sm:$0xf]
      %v1134 = vld [vmem:[%s1 + $0x58] sm:$0xf]
      %v1135 = vld [vmem:[%s1 + $0x5c] sm:$0xf]
      %v1136 = vld [vmem:[%s1 + $0x60] sm:$0xf]
      %v1137 = vld [vmem:[%s1 + $0x64] sm:$0xf]
      %v1138 = vld [vmem:[%s1 + $0x68] sm:$0xf]
      %v1139 = vld [vmem:[%s1 + $0x6c] sm:$0xf]
      %v1140 = vld [vmem:[%s1 + $0x70] sm:$0xf]
      %v1141 = vld [vmem:[%s1 + $0x74] sm:$0xf]
      %v1142 = vld [vmem:[%s1 + $0x78] sm:$0xf]
      %v1143 = vld [vmem:[%s1 + $0x7c] sm:$0xf]
      %vm1144 = vsmask.f32 3328
      %vm1145 = vsmask.f32 7440
      %vm1146 = vmor %vm1144, %vm1145
      %v1148 = vshrl.u32 %v1064, 16
      %v1150 = vrot.slane %v1148, 4
      %v1151 = vshll.u32 %v1064, 16
      %v1153 = vrot.slane %v1151, 5
      %v1154 = vor.u32 %v1150, %v1153
      %v1155 = vrot.slane %v1154, 4
      %v1157 = vshll.u32 %v1065, 16
      %v1159 = vrot.slane %v1157, 5
      %v1160 = vsel %vm1146, %v1155, %v1159
      %v1161 = vshrl.u32 %v1065, 16
      %v1163 = vrot.slane %v1161, 4
      %v1164 = vor.u32 %v1163, %v1159
      %v1165 = vrot.slane %v1164, 4
      %v1167 = vshll.u32 %v1112, 16
      %v1169 = vrot.slane %v1167, 5
      %v1170 = vsel %vm1146, %v1165, %v1169
      %v1172 = vshrl.u32 %v1066, 16
      %v1174 = vrot.slane %v1172, 4
      %v1175 = vshll.u32 %v1066, 16
      %v1177 = vrot.slane %v1175, 5
      %v1178 = vor.u32 %v1174, %v1177
      %v1179 = vrot.slane %v1178, 4
      %v1181 = vshll.u32 %v1067, 16
      %v1183 = vrot.slane %v1181, 5
      %v1184 = vsel %vm1146, %v1179, %v1183
      %v1185 = vshrl.u32 %v1067, 16
      %v1187 = vrot.slane %v1185, 4
      %v1188 = vor.u32 %v1187, %v1183
      %v1189 = vrot.slane %v1188, 4
      %v1191 = vshll.u32 %v1113, 16
      %v1193 = vrot.slane %v1191, 5
      %v1194 = vsel %vm1146, %v1189, %v1193
      %v1196 = vshrl.u32 %v1068, 16
      %v1198 = vrot.slane %v1196, 4
      %v1199 = vshll.u32 %v1068, 16
      %v1201 = vrot.slane %v1199, 5
      %v1202 = vor.u32 %v1198, %v1201
      %v1203 = vrot.slane %v1202, 4
      %v1205 = vshll.u32 %v1069, 16
      %v1207 = vrot.slane %v1205, 5
      %v1208 = vsel %vm1146, %v1203, %v1207
      %v1209 = vshrl.u32 %v1069, 16
      %v1211 = vrot.slane %v1209, 4
      %v1212 = vor.u32 %v1211, %v1207
      %v1213 = vrot.slane %v1212, 4
      %v1215 = vshll.u32 %v1114, 16
      %v1217 = vrot.slane %v1215, 5
      %v1218 = vsel %vm1146, %v1213, %v1217
      %v1220 = vshrl.u32 %v1070, 16
      %v1222 = vrot.slane %v1220, 4
      %v1223 = vshll.u32 %v1070, 16
      %v1225 = vrot.slane %v1223, 5
      %v1226 = vor.u32 %v1222, %v1225
      %v1227 = vrot.slane %v1226, 4
      %v1229 = vshll.u32 %v1071, 16
      %v1231 = vrot.slane %v1229, 5
      %v1232 = vsel %vm1146, %v1227, %v1231
      %v1233 = vshrl.u32 %v1071, 16
      %v1235 = vrot.slane %v1233, 4
      %v1236 = vor.u32 %v1235, %v1231
      %v1237 = vrot.slane %v1236, 4
      %v1239 = vshll.u32 %v1115, 16
      %v1241 = vrot.slane %v1239, 5
      %v1242 = vsel %vm1146, %v1237, %v1241
      %v1244 = vshrl.u32 %v1072, 16
      %v1246 = vrot.slane %v1244, 4
      %v1247 = vshll.u32 %v1072, 16
      %v1249 = vrot.slane %v1247, 5
      %v1250 = vor.u32 %v1246, %v1249
      %v1251 = vrot.slane %v1250, 4
      %v1253 = vshll.u32 %v1073, 16
      %v1255 = vrot.slane %v1253, 5
      %v1256 = vsel %vm1146, %v1251, %v1255
      %v1257 = vshrl.u32 %v1073, 16
      %v1259 = vrot.slane %v1257, 4
      %v1260 = vor.u32 %v1259, %v1255
      %v1261 = vrot.slane %v1260, 4
      %v1263 = vshll.u32 %v1116, 16
      %v1265 = vrot.slane %v1263, 5
      %v1266 = vsel %vm1146, %v1261, %v1265
      %v1268 = vshrl.u32 %v1074, 16
      %v1270 = vrot.slane %v1268, 4
      %v1271 = vshll.u32 %v1074, 16
      %v1273 = vrot.slane %v1271, 5
      %v1274 = vor.u32 %v1270, %v1273
      %v1275 = vrot.slane %v1274, 4
      %v1277 = vshll.u32 %v1075, 16
      %v1279 = vrot.slane %v1277, 5
      %v1280 = vsel %vm1146, %v1275, %v1279
      %v1281 = vshrl.u32 %v1075, 16
      %v1283 = vrot.slane %v1281, 4
      %v1284 = vor.u32 %v1283, %v1279
      %v1285 = vrot.slane %v1284, 4
      %v1287 = vshll.u32 %v1117, 16
      %v1289 = vrot.slane %v1287, 5
      %v1290 = vsel %vm1146, %v1285, %v1289
      %v1292 = vshrl.u32 %v1076, 16
      %v1294 = vrot.slane %v1292, 4
      %v1295 = vshll.u32 %v1076, 16
      %v1297 = vrot.slane %v1295, 5
      %v1298 = vor.u32 %v1294, %v1297
      %v1299 = vrot.slane %v1298, 4
      %v1301 = vshll.u32 %v1077, 16
      %v1303 = vrot.slane %v1301, 5
      %v1304 = vsel %vm1146, %v1299, %v1303
      %v1305 = vshrl.u32 %v1077, 16
      %v1307 = vrot.slane %v1305, 4
      %v1308 = vor.u32 %v1307, %v1303
      %v1309 = vrot.slane %v1308, 4
      %v1311 = vshll.u32 %v1118, 16
      %v1313 = vrot.slane %v1311, 5
      %v1314 = vsel %vm1146, %v1309, %v1313
      %v1316 = vshrl.u32 %v1078, 16
      %v1318 = vrot.slane %v1316, 4
      %v1319 = vshll.u32 %v1078, 16
      %v1321 = vrot.slane %v1319, 5
      %v1322 = vor.u32 %v1318, %v1321
      %v1323 = vrot.slane %v1322, 4
      %v1325 = vshll.u32 %v1079, 16
      %v1327 = vrot.slane %v1325, 5
      %v1328 = vsel %vm1146, %v1323, %v1327
      %v1329 = vshrl.u32 %v1079, 16
      %v1331 = vrot.slane %v1329, 4
      %v1332 = vor.u32 %v1331, %v1327
      %v1333 = vrot.slane %v1332, 4
      %v1335 = vshll.u32 %v1119, 16
      %v1337 = vrot.slane %v1335, 5
      %v1338 = vsel %vm1146, %v1333, %v1337
      %v1340 = vshrl.u32 %v1080, 16
      %v1342 = vrot.slane %v1340, 4
      %v1343 = vshll.u32 %v1080, 16
      %v1345 = vrot.slane %v1343, 5
      %v1346 = vor.u32 %v1342, %v1345
      %v1347 = vrot.slane %v1346, 4
      %v1349 = vshll.u32 %v1081, 16
      %v1351 = vrot.slane %v1349, 5
      %v1352 = vsel %vm1146, %v1347, %v1351
      %v1353 = vshrl.u32 %v1081, 16
      %v1355 = vrot.slane %v1353, 4
      %v1356 = vor.u32 %v1355, %v1351
      %v1357 = vrot.slane %v1356, 4
      %v1359 = vshll.u32 %v1120, 16
      %v1361 = vrot.slane %v1359, 5
      %v1362 = vsel %vm1146, %v1357, %v1361
      %v1364 = vshrl.u32 %v1082, 16
      %v1366 = vrot.slane %v1364, 4
      %v1367 = vshll.u32 %v1082, 16
      %v1369 = vrot.slane %v1367, 5
      %v1370 = vor.u32 %v1366, %v1369
      %v1371 = vrot.slane %v1370, 4
      %v1373 = vshll.u32 %v1083, 16
      %v1375 = vrot.slane %v1373, 5
      %v1376 = vsel %vm1146, %v1371, %v1375
      %v1377 = vshrl.u32 %v1083, 16
      %v1379 = vrot.slane %v1377, 4
      %v1380 = vor.u32 %v1379, %v1375
      %v1381 = vrot.slane %v1380, 4
      %v1383 = vshll.u32 %v1121, 16
      %v1385 = vrot.slane %v1383, 5
      %v1386 = vsel %vm1146, %v1381, %v1385
      %v1388 = vshrl.u32 %v1084, 16
      %v1390 = vrot.slane %v1388, 4
      %v1391 = vshll.u32 %v1084, 16
      %v1393 = vrot.slane %v1391, 5
      %v1394 = vor.u32 %v1390, %v1393
      %v1395 = vrot.slane %v1394, 4
      %v1397 = vshll.u32 %v1085, 16
      %v1399 = vrot.slane %v1397, 5
      %v1400 = vsel %vm1146, %v1395, %v1399
      %v1401 = vshrl.u32 %v1085, 16
      %v1403 = vrot.slane %v1401, 4
      %v1404 = vor.u32 %v1403, %v1399
      %v1405 = vrot.slane %v1404, 4
      %v1407 = vshll.u32 %v1122, 16
      %v1409 = vrot.slane %v1407, 5
      %v1410 = vsel %vm1146, %v1405, %v1409
      %v1412 = vshrl.u32 %v1086, 16
      %v1414 = vrot.slane %v1412, 4
      %v1415 = vshll.u32 %v1086, 16
      %v1417 = vrot.slane %v1415, 5
      %v1418 = vor.u32 %v1414, %v1417
      %v1419 = vrot.slane %v1418, 4
      %v1421 = vshll.u32 %v1087, 16
      %v1423 = vrot.slane %v1421, 5
      %v1424 = vsel %vm1146, %v1419, %v1423
      %v1425 = vshrl.u32 %v1087, 16
      %v1427 = vrot.slane %v1425, 4
      %v1428 = vor.u32 %v1427, %v1423
      %v1429 = vrot.slane %v1428, 4
      %v1431 = vshll.u32 %v1123, 16
      %v1433 = vrot.slane %v1431, 5
      %v1434 = vsel %vm1146, %v1429, %v1433
      %v1436 = vshrl.u32 %v1088, 16
      %v1438 = vrot.slane %v1436, 4
      %v1439 = vshll.u32 %v1088, 16
      %v1441 = vrot.slane %v1439, 5
      %v1442 = vor.u32 %v1438, %v1441
      %v1443 = vrot.slane %v1442, 4
      %v1445 = vshll.u32 %v1089, 16
      %v1447 = vrot.slane %v1445, 5
      %v1448 = vsel %vm1146, %v1443, %v1447
      %v1449 = vshrl.u32 %v1089, 16
      %v1451 = vrot.slane %v1449, 4
      %v1452 = vor.u32 %v1451, %v1447
      %v1453 = vrot.slane %v1452, 4
      %v1455 = vshll.u32 %v1124, 16
      %v1457 = vrot.slane %v1455, 5
      %v1458 = vsel %vm1146, %v1453, %v1457
      %v1460 = vshrl.u32 %v1090, 16
      %v1462 = vrot.slane %v1460, 4
      %v1463 = vshll.u32 %v1090, 16
      %v1465 = vrot.slane %v1463, 5
      %v1466 = vor.u32 %v1462, %v1465
      %v1467 = vrot.slane %v1466, 4
      %v1469 = vshll.u32 %v1091, 16
      %v1471 = vrot.slane %v1469, 5
      %v1472 = vsel %vm1146, %v1467, %v1471
      %v1473 = vshrl.u32 %v1091, 16
      %v1475 = vrot.slane %v1473, 4
      %v1476 = vor.u32 %v1475, %v1471
      %v1477 = vrot.slane %v1476, 4
      %v1479 = vshll.u32 %v1125, 16
      %v1481 = vrot.slane %v1479, 5
      %v1482 = vsel %vm1146, %v1477, %v1481
      %v1484 = vshrl.u32 %v1092, 16
      %v1486 = vrot.slane %v1484, 4
      %v1487 = vshll.u32 %v1092, 16
      %v1489 = vrot.slane %v1487, 5
      %v1490 = vor.u32 %v1486, %v1489
      %v1491 = vrot.slane %v1490, 4
      %v1493 = vshll.u32 %v1093, 16
      %v1495 = vrot.slane %v1493, 5
      %v1496 = vsel %vm1146, %v1491, %v1495
      %v1497 = vshrl.u32 %v1093, 16
      %v1499 = vrot.slane %v1497, 4
      %v1500 = vor.u32 %v1499, %v1495
      %v1501 = vrot.slane %v1500, 4
      %v1503 = vshll.u32 %v1126, 16
      %v1505 = vrot.slane %v1503, 5
      %v1506 = vsel %vm1146, %v1501, %v1505
      %v1508 = vshrl.u32 %v1094, 16
      %v1510 = vrot.slane %v1508, 4
      %v1511 = vshll.u32 %v1094, 16
      %v1513 = vrot.slane %v1511, 5
      %v1514 = vor.u32 %v1510, %v1513
      %v1515 = vrot.slane %v1514, 4
      %v1517 = vshll.u32 %v1095, 16
      %v1519 = vrot.slane %v1517, 5
      %v1520 = vsel %vm1146, %v1515, %v1519
      %v1521 = vshrl.u32 %v1095, 16
      %v1523 = vrot.slane %v1521, 4
      %v1524 = vor.u32 %v1523, %v1519
      %v1525 = vrot.slane %v1524, 4
      %v1527 = vshll.u32 %v1127, 16
      %v1529 = vrot.slane %v1527, 5
      %v1530 = vsel %vm1146, %v1525, %v1529
      %v1531 = vunpack.c.l.b16 %v1160
      %v1532 = vunpack.c.l.b16 %v1170
      %v1533 = vunpack.c.l.b16 %v1184
      %v1534 = vunpack.c.l.b16 %v1194
      %v1535 = vunpack.c.l.b16 %v1208
      %v1536 = vunpack.c.l.b16 %v1218
      %v1537 = vunpack.c.l.b16 %v1232
      %v1538 = vunpack.c.l.b16 %v1242
      %v1539 = vunpack.c.l.b16 %v1256
      %v1540 = vunpack.c.l.b16 %v1266
      %v1541 = vunpack.c.l.b16 %v1280
      %v1542 = vunpack.c.l.b16 %v1290
      %v1543 = vunpack.c.l.b16 %v1304
      %v1544 = vunpack.c.l.b16 %v1314
      %v1545 = vunpack.c.l.b16 %v1328
      %v1546 = vunpack.c.l.b16 %v1338
      %v1547 = vunpack.c.l.b16 %v1352
      %v1548 = vunpack.c.l.b16 %v1362
      %v1549 = vunpack.c.l.b16 %v1376
      %v1550 = vunpack.c.l.b16 %v1386
      %v1551 = vunpack.c.l.b16 %v1400
      %v1552 = vunpack.c.l.b16 %v1410
      %v1553 = vunpack.c.l.b16 %v1424
      %v1554 = vunpack.c.l.b16 %v1434
      %v1555 = vunpack.c.l.b16 %v1448
      %v1556 = vunpack.c.l.b16 %v1458
      %v1557 = vunpack.c.l.b16 %v1472
      %v1558 = vunpack.c.l.b16 %v1482
      %v1559 = vunpack.c.l.b16 %v1496
      %v1560 = vunpack.c.l.b16 %v1506
      %v1561 = vunpack.c.l.b16 %v1520
      %v1562 = vunpack.c.l.b16 %v1530
      %v1563 = vpack.c.b16 %v1532, %v1531
      %v1564 = vpack.c.b16 %v1534, %v1533
      %v1565 = vpack.c.b16 %v1536, %v1535
      %v1566 = vpack.c.b16 %v1538, %v1537
      %v1567 = vpack.c.b16 %v1540, %v1539
      %v1568 = vpack.c.b16 %v1542, %v1541
      %v1569 = vpack.c.b16 %v1544, %v1543
      %v1570 = vpack.c.b16 %v1546, %v1545
      %v1571 = vpack.c.b16 %v1548, %v1547
      %v1572 = vpack.c.b16 %v1550, %v1549
      %v1573 = vpack.c.b16 %v1552, %v1551
      %v1574 = vpack.c.b16 %v1554, %v1553
      %v1575 = vpack.c.b16 %v1556, %v1555
      %v1576 = vpack.c.b16 %v1558, %v1557
      %v1577 = vpack.c.b16 %v1560, %v1559
      %v1578 = vpack.c.b16 %v1562, %v1561
      %v1611 = vunpack.c.l.b16 %v1128
      %v1612 = vunpack.c.l.b16 %v1129
      %v1613 = vunpack.c.l.b16 %v1130
      %v1614 = vunpack.c.l.b16 %v1131
      %v1615 = vunpack.c.l.b16 %v1132
      %v1616 = vunpack.c.l.b16 %v1133
      %v1617 = vunpack.c.l.b16 %v1134
      %v1618 = vunpack.c.l.b16 %v1135
      %v1619 = vunpack.c.l.b16 %v1136
      %v1620 = vunpack.c.l.b16 %v1137
      %v1621 = vunpack.c.l.b16 %v1138
      %v1622 = vunpack.c.l.b16 %v1139
      %v1623 = vunpack.c.l.b16 %v1140
      %v1624 = vunpack.c.l.b16 %v1141
      %v1625 = vunpack.c.l.b16 %v1142
      %v1626 = vunpack.c.l.b16 %v1143
      %v1627 = vpack.c.b16 %v1612, %v1611
      %v1628 = vpack.c.b16 %v1614, %v1613
      %v1629 = vpack.c.b16 %v1616, %v1615
      %v1630 = vpack.c.b16 %v1618, %v1617
      %v1631 = vpack.c.b16 %v1620, %v1619
      %v1632 = vpack.c.b16 %v1622, %v1621
      %v1633 = vpack.c.b16 %v1624, %v1623
      %v1634 = vpack.c.b16 %v1626, %v1625
      %1643 = vmatprep.subr.bf16.mxu0 0
      %1644 = vmatpush1.bf16.msra.mxu0 %v1627
      %1645 = vmatprep.subr.bf16.mxu0 0
      %1646 = vmatpush1.bf16.msra.mxu0 %v1628
      %1647 = vmatprep.subr.bf16.mxu0 0
      %1648 = vmatpush1.bf16.msra.mxu0 %v1629
      %1649 = vmatprep.subr.bf16.mxu0 0
      %1650 = vmatpush1.bf16.msra.mxu0 %v1630
      %1651 = vmatprep.subr.bf16.mxu0 0
      %1652 = vmatpush1.bf16.msra.mxu0 %v1631
      %1653 = vmatprep.subr.bf16.mxu0 0
      %1654 = vmatpush1.bf16.msra.mxu0 %v1632
      %1655 = vmatprep.subr.bf16.mxu0 0
      %1656 = vmatpush1.bf16.msra.mxu0 %v1633
      %1657 = vmatprep.subr.bf16.mxu0 0
      %1658 = vmatpush1.bf16.msra.mxu0 %v1634
      %1659 = vmatprep.subr.bf16.mxu0 0
      %1660 = vmatpush1.bf16.msra.mxu0 0
      %1661 = vmatprep.subr.bf16.mxu0 0
      %1662 = vmatpush1.bf16.msra.mxu0 0
      %1663 = vmatprep.subr.bf16.mxu0 0
      %1664 = vmatpush1.bf16.msra.mxu0 0
      %1665 = vmatprep.subr.bf16.mxu0 0
      %1666 = vmatpush1.bf16.msra.mxu0 0
      %1667 = vmatprep.subr.bf16.mxu0 0
      %1668 = vmatpush1.bf16.msra.mxu0 0
      %1669 = vmatprep.subr.bf16.mxu0 0
      %1670 = vmatpush1.bf16.msra.mxu0 0
      %1671 = vmatprep.subr.bf16.mxu0 0
      %1672 = vmatpush1.bf16.msra.mxu0 0
      %1673 = vmatprep.subr.bf16.mxu0 0
      %1674 = vmatpush1.bf16.msra.mxu0 0
      %1675 = vmatprep.mubr.bf16.mxu0 0
      %1676 = vmatmul.mubr.bf16.gmra.mrb[0].mxu0 %v1563
      %v1677 = vpop.f32.mrb[0].mxu0
      %v1678 = vadd.f32 0.0, %v1677
      %v1679 = vpop.f32.mrb[0].mxu0
      %v1680 = vpop.f32.mrb[0].mxu0
      %v1681 = vadd.f32 0.0, %v1680
      %v1682 = vpop.f32.mrb[0].mxu0
      %1683 = vmatprep.mubr.bf16.mxu0 0
      %1684 = vmatmul.mubr.bf16.gmra.mrb[0].mxu0 %v1564
      %v1685 = vpop.f32.mrb[0].mxu0
      %v1686 = vadd.f32 0.0, %v1685
      %v1687 = vpop.f32.mrb[0].mxu0
      %v1688 = vpop.f32.mrb[0].mxu0
      %v1689 = vadd.f32 0.0, %v1688
      %v1690 = vpop.f32.mrb[0].mxu0
      %1691 = vmatprep.mubr.bf16.mxu0 0
      %1692 = vmatmul.mubr.bf16.gmra.mrb[0].mxu0 %v1565
      %v1693 = vpop.f32.mrb[0].mxu0
      %v1694 = vadd.f32 0.0, %v1693
      %v1695 = vpop.f32.mrb[0].mxu0
      %v1696 = vpop.f32.mrb[0].mxu0
      %v1697 = vadd.f32 0.0, %v1696
      %v1698 = vpop.f32.mrb[0].mxu0
      %1699 = vmatprep.mubr.bf16.mxu0 0
      %1700 = vmatmul.mubr.bf16.gmra.mrb[0].mxu0 %v1566
      %v1701 = vpop.f32.mrb[0].mxu0
      %v1702 = vadd.f32 0.0, %v1701
      %v1703 = vpop.f32.mrb[0].mxu0
      %v1704 = vpop.f32.mrb[0].mxu0
      %v1705 = vadd.f32 0.0, %v1704
      %v1706 = vpop.f32.mrb[0].mxu0
      %1707 = vmatprep.mubr.bf16.mxu0 0
      %1708 = vmatmul.mubr.bf16.gmra.mrb[0].mxu0 %v1567
      %v1709 = vpop.f32.mrb[0].mxu0
      %v1710 = vadd.f32 0.0, %v1709
      %v1711 = vpop.f32.mrb[0].mxu0
      %v1712 = vpop.f32.mrb[0].mxu0
      %v1713 = vadd.f32 0.0, %v1712
      %v1714 = vpop.f32.mrb[0].mxu0
      %1715 = vmatprep.mubr.bf16.mxu0 0
      %1716 = vmatmul.mubr.bf16.gmra.mrb[0].mxu0 %v1568
      %v1717 = vpop.f32.mrb[0].mxu0
      %v1718 = vadd.f32 0.0, %v1717
      %v1719 = vpop.f32.mrb[0].mxu0
      %v1720 = vpop.f32.mrb[0].mxu0
      %v1721 = vadd.f32 0.0, %v1720
      %v1722 = vpop.f32.mrb[0].mxu0
      %1723 = vmatprep.mubr.bf16.mxu0 0
      %1724 = vmatmul.mubr.bf16.gmra.mrb[0].mxu0 %v1569
      %v1725 = vpop.f32.mrb[0].mxu0
      %v1726 = vadd.f32 0.0, %v1725
      %v1727 = vpop.f32.mrb[0].mxu0
      %v1728 = vpop.f32.mrb[0].mxu0
      %v1729 = vadd.f32 0.0, %v1728
      %v1730 = vpop.f32.mrb[0].mxu0
      %1731 = vmatprep.mubr.bf16.mxu0 0
      %1732 = vmatmul.mubr.bf16.gmra.mrb[0].mxu0 %v1570
      %v1733 = vpop.f32.mrb[0].mxu0
      %v1734 = vadd.f32 0.0, %v1733
      %v1735 = vpop.f32.mrb[0].mxu0
      %v1736 = vpop.f32.mrb[0].mxu0
      %v1737 = vadd.f32 0.0, %v1736
      %v1738 = vpop.f32.mrb[0].mxu0
      %1739 = vmatprep.mubr.bf16.mxu0 0
      %1740 = vmatmul.mubr.bf16.gmra.mrb[0].mxu0 %v1571
      %v1741 = vpop.f32.mrb[0].mxu0
      %v1742 = vadd.f32 0.0, %v1741
      %v1743 = vpop.f32.mrb[0].mxu0
      %v1744 = vpop.f32.mrb[0].mxu0
      %v1745 = vadd.f32 0.0, %v1744
      %v1746 = vpop.f32.mrb[0].mxu0
      %1747 = vmatprep.mubr.bf16.mxu0 0
      %1748 = vmatmul.mubr.bf16.gmra.mrb[0].mxu0 %v1572
      %v1749 = vpop.f32.mrb[0].mxu0
      %v1750 = vadd.f32 0.0, %v1749
      %v1751 = vpop.f32.mrb[0].mxu0
      %v1752 = vpop.f32.mrb[0].mxu0
      %v1753 = vadd.f32 0.0, %v1752
      %v1754 = vpop.f32.mrb[0].mxu0
      %1755 = vmatprep.mubr.bf16.mxu0 0
      %1756 = vmatmul.mubr.bf16.gmra.mrb[0].mxu0 %v1573
      %v1757 = vpop.f32.mrb[0].mxu0
      %v1758 = vadd.f32 0.0, %v1757
      %v1759 = vpop.f32.mrb[0].mxu0
      %v1760 = vpop.f32.mrb[0].mxu0
      %v1761 = vadd.f32 0.0, %v1760
      %v1762 = vpop.f32.mrb[0].mxu0
      %1763 = vmatprep.mubr.bf16.mxu0 0
      %1764 = vmatmul.mubr.bf16.gmra.mrb[0].mxu0 %v1574
      %v1765 = vpop.f32.mrb[0].mxu0
      %v1766 = vadd.f32 0.0, %v1765
      %v1767 = vpop.f32.mrb[0].mxu0
      %v1768 = vpop.f32.mrb[0].mxu0
      %v1769 = vadd.f32 0.0, %v1768
      %v1770 = vpop.f32.mrb[0].mxu0
      %1771 = vmatprep.mubr.bf16.mxu0 0
      %1772 = vmatmul.mubr.bf16.gmra.mrb[0].mxu0 %v1575
      %v1773 = vpop.f32.mrb[0].mxu0
      %v1774 = vadd.f32 0.0, %v1773
      %v1775 = vpop.f32.mrb[0].mxu0
      %v1776 = vpop.f32.mrb[0].mxu0
      %v1777 = vadd.f32 0.0, %v1776
      %v1778 = vpop.f32.mrb[0].mxu0
      %1779 = vmatprep.mubr.bf16.mxu0 0
      %1780 = vmatmul.mubr.bf16.gmra.mrb[0].mxu0 %v1576
      %v1781 = vpop.f32.mrb[0].mxu0
      %v1782 = vadd.f32 0.0, %v1781
      %v1783 = vpop.f32.mrb[0].mxu0
      %v1784 = vpop.f32.mrb[0].mxu0
      %v1785 = vadd.f32 0.0, %v1784
      %v1786 = vpop.f32.mrb[0].mxu0
      %1787 = vmatprep.mubr.bf16.mxu0 0
      %1788 = vmatmul.mubr.bf16.gmra.mrb[0].mxu0 %v1577
      %v1789 = vpop.f32.mrb[0].mxu0
      %v1790 = vadd.f32 0.0, %v1789
      %v1791 = vpop.f32.mrb[0].mxu0
      %v1792 = vpop.f32.mrb[0].mxu0
      %v1793 = vadd.f32 0.0, %v1792
      %v1794 = vpop.f32.mrb[0].mxu0
      %1795 = vmatprep.mubr.bf16.mxu0 0
      %1796 = vmatmul.mubr.bf16.gmra.mrb[0].mxu0 %v1578
      %v1797 = vpop.f32.mrb[0].mxu0
      %v1798 = vadd.f32 0.0, %v1797
      %v1799 = vpop.f32.mrb[0].mxu0
      %v1800 = vpop.f32.mrb[0].mxu0
      %v1801 = vadd.f32 0.0, %v1800
      %v1802 = vpop.f32.mrb[0].mxu0
      %1803 = vdwg.mxu0
      %v1836 = vunpack.c.l.b16 %v1064
      %v1837 = vunpack.c.l.b16 %v1065
      %v1838 = vunpack.c.l.b16 %v1066
      %v1839 = vunpack.c.l.b16 %v1067
      %v1840 = vunpack.c.l.b16 %v1068
      %v1841 = vunpack.c.l.b16 %v1069
      %v1842 = vunpack.c.l.b16 %v1070
      %v1843 = vunpack.c.l.b16 %v1071
      %v1844 = vunpack.c.l.b16 %v1072
      %v1845 = vunpack.c.l.b16 %v1073
      %v1846 = vunpack.c.l.b16 %v1074
      %v1847 = vunpack.c.l.b16 %v1075
      %v1848 = vunpack.c.l.b16 %v1076
      %v1849 = vunpack.c.l.b16 %v1077
      %v1850 = vunpack.c.l.b16 %v1078
      %v1851 = vunpack.c.l.b16 %v1079
      %v1852 = vunpack.c.l.b16 %v1080
      %v1853 = vunpack.c.l.b16 %v1081
      %v1854 = vunpack.c.l.b16 %v1082
      %v1855 = vunpack.c.l.b16 %v1083
      %v1856 = vunpack.c.l.b16 %v1084
      %v1857 = vunpack.c.l.b16 %v1085
      %v1858 = vunpack.c.l.b16 %v1086
      %v1859 = vunpack.c.l.b16 %v1087
      %v1860 = vunpack.c.l.b16 %v1088
      %v1861 = vunpack.c.l.b16 %v1089
      %v1862 = vunpack.c.l.b16 %v1090
      %v1863 = vunpack.c.l.b16 %v1091
      %v1864 = vunpack.c.l.b16 %v1092
      %v1865 = vunpack.c.l.b16 %v1093
      %v1866 = vunpack.c.l.b16 %v1094
      %v1867 = vunpack.c.l.b16 %v1095
      %v1868 = vpack.c.b16 %v1837, %v1836
      %v1869 = vpack.c.b16 %v1839, %v1838
      %v1870 = vpack.c.b16 %v1841, %v1840
      %v1871 = vpack.c.b16 %v1843, %v1842
      %v1872 = vpack.c.b16 %v1845, %v1844
      %v1873 = vpack.c.b16 %v1847, %v1846
      %v1874 = vpack.c.b16 %v1849, %v1848
      %v1875 = vpack.c.b16 %v1851, %v1850
      %v1876 = vpack.c.b16 %v1853, %v1852
      %v1877 = vpack.c.b16 %v1855, %v1854
      %v1878 = vpack.c.b16 %v1857, %v1856
      %v1879 = vpack.c.b16 %v1859, %v1858
      %v1880 = vpack.c.b16 %v1861, %v1860
      %v1881 = vpack.c.b16 %v1863, %v1862
      %v1882 = vpack.c.b16 %v1865, %v1864
      %v1883 = vpack.c.b16 %v1867, %v1866
      %v1916 = vunpack.c.l.b16 %v1096
      %v1917 = vunpack.c.l.b16 %v1097
      %v1918 = vunpack.c.l.b16 %v1098
      %v1919 = vunpack.c.l.b16 %v1099
      %v1920 = vunpack.c.l.b16 %v1100
      %v1921 = vunpack.c.l.b16 %v1101
      %v1922 = vunpack.c.l.b16 %v1102
      %v1923 = vunpack.c.l.b16 %v1103
      %v1924 = vunpack.c.l.b16 %v1104
      %v1925 = vunpack.c.l.b16 %v1105
      %v1926 = vunpack.c.l.b16 %v1106
      %v1927 = vunpack.c.l.b16 %v1107
      %v1928 = vunpack.c.l.b16 %v1108
      %v1929 = vunpack.c.l.b16 %v1109
      %v1930 = vunpack.c.l.b16 %v1110
      %v1931 = vunpack.c.l.b16 %v1111
      %v1932 = vpack.c.b16 %v1917, %v1916
      %v1933 = vpack.c.b16 %v1919, %v1918
      %v1934 = vpack.c.b16 %v1921, %v1920
      %v1935 = vpack.c.b16 %v1923, %v1922
      %v1936 = vpack.c.b16 %v1925, %v1924
      %v1937 = vpack.c.b16 %v1927, %v1926
      %v1938 = vpack.c.b16 %v1929, %v1928
      %v1939 = vpack.c.b16 %v1931, %v1930
      %1948 = vmatprep.subr.bf16.mxu0 0
      %1949 = vmatpush1.bf16.msra.mxu0 %v1932
      %1950 = vmatprep.subr.bf16.mxu0 0
      %1951 = vmatpush1.bf16.msra.mxu0 %v1933
      %1952 = vmatprep.subr.bf16.mxu0 0
      %1953 = vmatpush1.bf16.msra.mxu0 %v1934
      %1954 = vmatprep.subr.bf16.mxu0 0
      %1955 = vmatpush1.bf16.msra.mxu0 %v1935
      %1956 = vmatprep.subr.bf16.mxu0 0
      %1957 = vmatpush1.bf16.msra.mxu0 %v1936
      %1958 = vmatprep.subr.bf16.mxu0 0
      %1959 = vmatpush1.bf16.msra.mxu0 %v1937
      %1960 = vmatprep.subr.bf16.mxu0 0
      %1961 = vmatpush1.bf16.msra.mxu0 %v1938
      %1962 = vmatprep.subr.bf16.mxu0 0
      %1963 = vmatpush1.bf16.msra.mxu0 %v1939
      %1964 = vmatprep.subr.bf16.mxu0 0
      %1965 = vmatpush1.bf16.msra.mxu0 0
      %1966 = vmatprep.subr.bf16.mxu0 0
      %1967 = vmatpush1.bf16.msra.mxu0 0
      %1968 = vmatprep.subr.bf16.mxu0 0
      %1969 = vmatpush1.bf16.msra.mxu0 0
      %1970 = vmatprep.subr.bf16.mxu0 0
      %1971 = vmatpush1.bf16.msra.mxu0 0
      %1972 = vmatprep.subr.bf16.mxu0 0
      %1973 = vmatpush1.bf16.msra.mxu0 0
      %1974 = vmatprep.subr.bf16.mxu0 0
      %1975 = vmatpush1.bf16.msra.mxu0 0
      %1976 = vmatprep.subr.bf16.mxu0 0
      %1977 = vmatpush1.bf16.msra.mxu0 0
      %1978 = vmatprep.subr.bf16.mxu0 0
      %1979 = vmatpush1.bf16.msra.mxu0 0
      %1980 = vmatprep.mubr.bf16.mxu0 0
      %1981 = vmatmul.mubr.bf16.gmra.mrb[0].mxu0 %v1868
      %v1982 = vpop.f32.mrb[0].mxu0
      %v1983 = vadd.f32 %v1678, %v1982
      %v1984 = vpop.f32.mrb[0].mxu0
      %v1985 = vpop.f32.mrb[0].mxu0
      %v1986 = vadd.f32 %v1681, %v1985
      %v1987 = vpop.f32.mrb[0].mxu0
      %1988 = vmatprep.mubr.bf16.mxu0 0
      %1989 = vmatmul.mubr.bf16.gmra.mrb[0].mxu0 %v1869
      %v1990 = vpop.f32.mrb[0].mxu0
      %v1991 = vadd.f32 %v1686, %v1990
      %v1992 = vpop.f32.mrb[0].mxu0
      %v1993 = vpop.f32.mrb[0].mxu0
      %v1994 = vadd.f32 %v1689, %v1993
      %v1995 = vpop.f32.mrb[0].mxu0
      %1996 = vmatprep.mubr.bf16.mxu0 0
      %1997 = vmatmul.mubr.bf16.gmra.mrb[0].mxu0 %v1870
      %v1998 = vpop.f32.mrb[0].mxu0
      %v1999 = vadd.f32 %v1694, %v1998
      %v2000 = vpop.f32.mrb[0].mxu0
      %v2001 = vpop.f32.mrb[0].mxu0
      %v2002 = vadd.f32 %v1697, %v2001
      %v2003 = vpop.f32.mrb[0].mxu0
      %2004 = vmatprep.mubr.bf16.mxu0 0
      %2005 = vmatmul.mubr.bf16.gmra.mrb[0].mxu0 %v1871
      %v2006 = vpop.f32.mrb[0].mxu0
      %v2007 = vadd.f32 %v1702, %v2006
      %v2008 = vpop.f32.mrb[0].mxu0
      %v2009 = vpop.f32.mrb[0].mxu0
      %v2010 = vadd.f32 %v1705, %v2009
      %v2011 = vpop.f32.mrb[0].mxu0
      %2012 = vmatprep.mubr.bf16.mxu0 0
      %2013 = vmatmul.mubr.bf16.gmra.mrb[0].mxu0 %v1872
      %v2014 = vpop.f32.mrb[0].mxu0
      %v2015 = vadd.f32 %v1710, %v2014
      %v2016 = vpop.f32.mrb[0].mxu0
      %v2017 = vpop.f32.mrb[0].mxu0
      %v2018 = vadd.f32 %v1713, %v2017
      %v2019 = vpop.f32.mrb[0].mxu0
      %2020 = vmatprep.mubr.bf16.mxu0 0
      %2021 = vmatmul.mubr.bf16.gmra.mrb[0].mxu0 %v1873
      %v2022 = vpop.f32.mrb[0].mxu0
      %v2023 = vadd.f32 %v1718, %v2022
      %v2024 = vpop.f32.mrb[0].mxu0
      %v2025 = vpop.f32.mrb[0].mxu0
      %v2026 = vadd.f32 %v1721, %v2025
      %v2027 = vpop.f32.mrb[0].mxu0
      %2028 = vmatprep.mubr.bf16.mxu0 0
      %2029 = vmatmul.mubr.bf16.gmra.mrb[0].mxu0 %v1874
      %v2030 = vpop.f32.mrb[0].mxu0
      %v2031 = vadd.f32 %v1726, %v2030
      %v2032 = vpop.f32.mrb[0].mxu0
      %v2033 = vpop.f32.mrb[0].mxu0
      %v2034 = vadd.f32 %v1729, %v2033
      %v2035 = vpop.f32.mrb[0].mxu0
      %2036 = vmatprep.mubr.bf16.mxu0 0
      %2037 = vmatmul.mubr.bf16.gmra.mrb[0].mxu0 %v1875
      %v2038 = vpop.f32.mrb[0].mxu0
      %v2039 = vadd.f32 %v1734, %v2038
      %v2040 = vpop.f32.mrb[0].mxu0
      %v2041 = vpop.f32.mrb[0].mxu0
      %v2042 = vadd.f32 %v1737, %v2041
      %v2043 = vpop.f32.mrb[0].mxu0
      %2044 = vmatprep.mubr.bf16.mxu0 0
      %2045 = vmatmul.mubr.bf16.gmra.mrb[0].mxu0 %v1876
      %v2046 = vpop.f32.mrb[0].mxu0
      %v2047 = vadd.f32 %v1742, %v2046
      %v2048 = vpop.f32.mrb[0].mxu0
      %v2049 = vpop.f32.mrb[0].mxu0
      %v2050 = vadd.f32 %v1745, %v2049
      %v2051 = vpop.f32.mrb[0].mxu0
      %2052 = vmatprep.mubr.bf16.mxu0 0
      %2053 = vmatmul.mubr.bf16.gmra.mrb[0].mxu0 %v1877
      %v2054 = vpop.f32.mrb[0].mxu0
      %v2055 = vadd.f32 %v1750, %v2054
      %v2056 = vpop.f32.mrb[0].mxu0
      %v2057 = vpop.f32.mrb[0].mxu0
      %v2058 = vadd.f32 %v1753, %v2057
      %v2059 = vpop.f32.mrb[0].mxu0
      %2060 = vmatprep.mubr.bf16.mxu0 0
      %2061 = vmatmul.mubr.bf16.gmra.mrb[0].mxu0 %v1878
      %v2062 = vpop.f32.mrb[0].mxu0
      %v2063 = vadd.f32 %v1758, %v2062
      %v2064 = vpop.f32.mrb[0].mxu0
      %v2065 = vpop.f32.mrb[0].mxu0
      %v2066 = vadd.f32 %v1761, %v2065
      %v2067 = vpop.f32.mrb[0].mxu0
      %2068 = vmatprep.mubr.bf16.mxu0 0
      %2069 = vmatmul.mubr.bf16.gmra.mrb[0].mxu0 %v1879
      %v2070 = vpop.f32.mrb[0].mxu0
      %v2071 = vadd.f32 %v1766, %v2070
      %v2072 = vpop.f32.mrb[0].mxu0
      %v2073 = vpop.f32.mrb[0].mxu0
      %v2074 = vadd.f32 %v1769, %v2073
      %v2075 = vpop.f32.mrb[0].mxu0
      %2076 = vmatprep.mubr.bf16.mxu0 0
      %2077 = vmatmul.mubr.bf16.gmra.mrb[0].mxu0 %v1880
      %v2078 = vpop.f32.mrb[0].mxu0
      %v2079 = vadd.f32 %v1774, %v2078
      %v2080 = vpop.f32.mrb[0].mxu0
      %v2081 = vpop.f32.mrb[0].mxu0
      %v2082 = vadd.f32 %v1777, %v2081
      %v2083 = vpop.f32.mrb[0].mxu0
      %2084 = vmatprep.mubr.bf16.mxu0 0
      %2085 = vmatmul.mubr.bf16.gmra.mrb[0].mxu0 %v1881
      %v2086 = vpop.f32.mrb[0].mxu0
      %v2087 = vadd.f32 %v1782, %v2086
      %v2088 = vpop.f32.mrb[0].mxu0
      %v2089 = vpop.f32.mrb[0].mxu0
      %v2090 = vadd.f32 %v1785, %v2089
      %v2091 = vpop.f32.mrb[0].mxu0
      %2092 = vmatprep.mubr.bf16.mxu0 0
      %2093 = vmatmul.mubr.bf16.gmra.mrb[0].mxu0 %v1882
      %v2094 = vpop.f32.mrb[0].mxu0
      %v2095 = vadd.f32 %v1790, %v2094
      %v2096 = vpop.f32.mrb[0].mxu0
      %v2097 = vpop.f32.mrb[0].mxu0
      %v2098 = vadd.f32 %v1793, %v2097
      %v2099 = vpop.f32.mrb[0].mxu0
      %2100 = vmatprep.mubr.bf16.mxu0 0
      %2101 = vmatmul.mubr.bf16.gmra.mrb[0].mxu0 %v1883
      %v2102 = vpop.f32.mrb[0].mxu0
      %v2103 = vadd.f32 %v1798, %v2102
      %v2104 = vpop.f32.mrb[0].mxu0
      %v2105 = vpop.f32.mrb[0].mxu0
      %v2106 = vadd.f32 %v1801, %v2105
      %v2107 = vpop.f32.mrb[0].mxu0
      %2108 = vdwg.mxu0
      %v2109 = vld [vmem:[#allocation2] sm:$0xe]
      %v2110 = vld [vmem:[#allocation2 + $0xc] sm:$0xe]
      %v2111 = vld [vmem:[#allocation2 + $0x18] sm:$0xe]
      %v2112 = vld [vmem:[#allocation2 + $0x24] sm:$0xe]
      %v2113 = vld [vmem:[#allocation2 + $0x30] sm:$0xe]
      %v2114 = vld [vmem:[#allocation2 + $0x3c] sm:$0xe]
      %v2115 = vld [vmem:[#allocation2 + $0x48] sm:$0xe]
      %v2116 = vld [vmem:[#allocation2 + $0x54] sm:$0xe]
      %v2117 = vld [vmem:[#allocation2 + $0x60] sm:$0xe]
      %v2118 = vld [vmem:[#allocation2 + $0x6c] sm:$0xe]
      %v2119 = vld [vmem:[#allocation2 + $0x78] sm:$0xe]
      %v2120 = vld [vmem:[#allocation2 + $0x84] sm:$0xe]
      %v2121 = vld [vmem:[#allocation2 + $0x90] sm:$0xe]
      %v2122 = vld [vmem:[#allocation2 + $0x9c] sm:$0xe]
      %v2123 = vld [vmem:[#allocation2 + $0xa8] sm:$0xe]
      %v2124 = vld [vmem:[#allocation2 + $0xb4] sm:$0xe]
      %v2125 = vld [vmem:[%s1 + $0x80] sm:$0xf]
      %v2126 = vld [vmem:[%s1 + $0x84] sm:$0xf]
      %v2127 = vld [vmem:[%s1 + $0x88] sm:$0xf]
      %v2128 = vld [vmem:[%s1 + $0x8c] sm:$0xf]
      %v2129 = vld [vmem:[%s1 + $0x90] sm:$0xf]
      %v2130 = vld [vmem:[%s1 + $0x94] sm:$0xf]
      %v2131 = vld [vmem:[%s1 + $0x98] sm:$0xf]
      %v2132 = vld [vmem:[%s1 + $0x9c] sm:$0xf]
      %v2133 = vld [vmem:[%s1 + $0xa0] sm:$0xf]
      %v2134 = vld [vmem:[%s1 + $0xa4] sm:$0xf]
      %v2135 = vld [vmem:[%s1 + $0xa8] sm:$0xf]
      %v2136 = vld [vmem:[%s1 + $0xac] sm:$0xf]
      %v2137 = vld [vmem:[%s1 + $0xb0] sm:$0xf]
      %v2138 = vld [vmem:[%s1 + $0xb4] sm:$0xf]
      %v2139 = vld [vmem:[%s1 + $0xb8] sm:$0xf]
      %v2140 = vld [vmem:[%s1 + $0xbc] sm:$0xf]
      %vm2173 = vcmask 1042432
      %vm2174 = vcmask 1046532
      %vm2175 = vmor %vm2173, %vm2174
      %v2176 = vrot.slane %v2109, 5
      %v2177 = vrot.slane %v2176, 4
      %v2178 = vrot.slane %v1065, 5
      %v2179 = vsel %vm2175, %v2177, %v2178
      %v2180 = vrot.slane %v2178, 4
      %v2181 = vrot.slane %v1112, 5
      %v2182 = vsel %vm2175, %v2180, %v2181
      %v2183 = vrot.slane %v2110, 5
      %v2184 = vrot.slane %v2183, 4
      %v2185 = vrot.slane %v1067, 5
      %v2186 = vsel %vm2175, %v2184, %v2185
      %v2187 = vrot.slane %v2185, 4
      %v2188 = vrot.slane %v1113, 5
      %v2189 = vsel %vm2175, %v2187, %v2188
      %v2190 = vrot.slane %v2111, 5
      %v2191 = vrot.slane %v2190, 4
      %v2192 = vrot.slane %v1069, 5
      %v2193 = vsel %vm2175, %v2191, %v2192
      %v2194 = vrot.slane %v2192, 4
      %v2195 = vrot.slane %v1114, 5
      %v2196 = vsel %vm2175, %v2194, %v2195
      %v2197 = vrot.slane %v2112, 5
      %v2198 = vrot.slane %v2197, 4
      %v2199 = vrot.slane %v1071, 5
      %v2200 = vsel %vm2175, %v2198, %v2199
      %v2201 = vrot.slane %v2199, 4
      %v2202 = vrot.slane %v1115, 5
      %v2203 = vsel %vm2175, %v2201, %v2202
      %v2204 = vrot.slane %v2113, 5
      %v2205 = vrot.slane %v2204, 4
      %v2206 = vrot.slane %v1073, 5
      %v2207 = vsel %vm2175, %v2205, %v2206
      %v2208 = vrot.slane %v2206, 4
      %v2209 = vrot.slane %v1116, 5
      %v2210 = vsel %vm2175, %v2208, %v2209
      %v2211 = vrot.slane %v2114, 5
      %v2212 = vrot.slane %v2211, 4
      %v2213 = vrot.slane %v1075, 5
      %v2214 = vsel %vm2175, %v2212, %v2213
      %v2215 = vrot.slane %v2213, 4
      %v2216 = vrot.slane %v1117, 5
      %v2217 = vsel %vm2175, %v2215, %v2216
      %v2218 = vrot.slane %v2115, 5
      %v2219 = vrot.slane %v2218, 4
      %v2220 = vrot.slane %v1077, 5
      %v2221 = vsel %vm2175, %v2219, %v2220
      %v2222 = vrot.slane %v2220, 4
      %v2223 = vrot.slane %v1118, 5
      %v2224 = vsel %vm2175, %v2222, %v2223
      %v2225 = vrot.slane %v2116, 5
      %v2226 = vrot.slane %v2225, 4
      %v2227 = vrot.slane %v1079, 5
      %v2228 = vsel %vm2175, %v2226, %v2227
      %v2229 = vrot.slane %v2227, 4
      %v2230 = vrot.slane %v1119, 5
      %v2231 = vsel %vm2175, %v2229, %v2230
      %v2232 = vrot.slane %v2117, 5
      %v2233 = vrot.slane %v2232, 4
      %v2234 = vrot.slane %v1081, 5
      %v2235 = vsel %vm2175, %v2233, %v2234
      %v2236 = vrot.slane %v2234, 4
      %v2237 = vrot.slane %v1120, 5
      %v2238 = vsel %vm2175, %v2236, %v2237
      %v2239 = vrot.slane %v2118, 5
      %v2240 = vrot.slane %v2239, 4
      %v2241 = vrot.slane %v1083, 5
      %v2242 = vsel %vm2175, %v2240, %v2241
      %v2243 = vrot.slane %v2241, 4
      %v2244 = vrot.slane %v1121, 5
      %v2245 = vsel %vm2175, %v2243, %v2244
      %v2246 = vrot.slane %v2119, 5
      %v2247 = vrot.slane %v2246, 4
      %v2248 = vrot.slane %v1085, 5
      %v2249 = vsel %vm2175, %v2247, %v2248
      %v2250 = vrot.slane %v2248, 4
      %v2251 = vrot.slane %v1122, 5
      %v2252 = vsel %vm2175, %v2250, %v2251
      %v2253 = vrot.slane %v2120, 5
      %v2254 = vrot.slane %v2253, 4
      %v2255 = vrot.slane %v1087, 5
      %v2256 = vsel %vm2175, %v2254, %v2255
      %v2257 = vrot.slane %v2255, 4
      %v2258 = vrot.slane %v1123, 5
      %v2259 = vsel %vm2175, %v2257, %v2258
      %v2260 = vrot.slane %v2121, 5
      %v2261 = vrot.slane %v2260, 4
      %v2262 = vrot.slane %v1089, 5
      %v2263 = vsel %vm2175, %v2261, %v2262
      %v2264 = vrot.slane %v2262, 4
      %v2265 = vrot.slane %v1124, 5
      %v2266 = vsel %vm2175, %v2264, %v2265
      %v2267 = vrot.slane %v2122, 5
      %v2268 = vrot.slane %v2267, 4
      %v2269 = vrot.slane %v1091, 5
      %v2270 = vsel %vm2175, %v2268, %v2269
      %v2271 = vrot.slane %v2269, 4
      %v2272 = vrot.slane %v1125, 5
      %v2273 = vsel %vm2175, %v2271, %v2272
      %v2274 = vrot.slane %v2123, 5
      %v2275 = vrot.slane %v2274, 4
      %v2276 = vrot.slane %v1093, 5
      %v2277 = vsel %vm2175, %v2275, %v2276
      %v2278 = vrot.slane %v2276, 4
      %v2279 = vrot.slane %v1126, 5
      %v2280 = vsel %vm2175, %v2278, %v2279
      %v2281 = vrot.slane %v2124, 5
      %v2282 = vrot.slane %v2281, 4
      %v2283 = vrot.slane %v1095, 5
      %v2284 = vsel %vm2175, %v2282, %v2283
      %v2285 = vrot.slane %v2283, 4
      %v2286 = vrot.slane %v1127, 5
      %v2287 = vsel %vm2175, %v2285, %v2286
      %v2288 = vunpack.c.l.b16 %v2179
      %v2289 = vunpack.c.l.b16 %v2182
      %v2290 = vunpack.c.l.b16 %v2186
      %v2291 = vunpack.c.l.b16 %v2189
      %v2292 = vunpack.c.l.b16 %v2193
      %v2293 = vunpack.c.l.b16 %v2196
      %v2294 = vunpack.c.l.b16 %v2200
      %v2295 = vunpack.c.l.b16 %v2203
      %v2296 = vunpack.c.l.b16 %v2207
      %v2297 = vunpack.c.l.b16 %v2210
      %v2298 = vunpack.c.l.b16 %v2214
      %v2299 = vunpack.c.l.b16 %v2217
      %v2300 = vunpack.c.l.b16 %v2221
      %v2301 = vunpack.c.l.b16 %v2224
      %v2302 = vunpack.c.l.b16 %v2228
      %v2303 = vunpack.c.l.b16 %v2231
      %v2304 = vunpack.c.l.b16 %v2235
      %v2305 = vunpack.c.l.b16 %v2238
      %v2306 = vunpack.c.l.b16 %v2242
      %v2307 = vunpack.c.l.b16 %v2245
      %v2308 = vunpack.c.l.b16 %v2249
      %v2309 = vunpack.c.l.b16 %v2252
      %v2310 = vunpack.c.l.b16 %v2256
      %v2311 = vunpack.c.l.b16 %v2259
      %v2312 = vunpack.c.l.b16 %v2263
      %v2313 = vunpack.c.l.b16 %v2266
      %v2314 = vunpack.c.l.b16 %v2270
      %v2315 = vunpack.c.l.b16 %v2273
      %v2316 = vunpack.c.l.b16 %v2277
      %v2317 = vunpack.c.l.b16 %v2280
      %v2318 = vunpack.c.l.b16 %v2284
      %v2319 = vunpack.c.l.b16 %v2287
      %v2320 = vpack.c.b16 %v2289, %v2288
      %v2321 = vpack.c.b16 %v2291, %v2290
      %v2322 = vpack.c.b16 %v2293, %v2292
      %v2323 = vpack.c.b16 %v2295, %v2294
      %v2324 = vpack.c.b16 %v2297, %v2296
      %v2325 = vpack.c.b16 %v2299, %v2298
      %v2326 = vpack.c.b16 %v2301, %v2300
      %v2327 = vpack.c.b16 %v2303, %v2302
      %v2328 = vpack.c.b16 %v2305, %v2304
      %v2329 = vpack.c.b16 %v2307, %v2306
      %v2330 = vpack.c.b16 %v2309, %v2308
      %v2331 = vpack.c.b16 %v2311, %v2310
      %v2332 = vpack.c.b16 %v2313, %v2312
      %v2333 = vpack.c.b16 %v2315, %v2314
      %v2334 = vpack.c.b16 %v2317, %v2316
      %v2335 = vpack.c.b16 %v2319, %v2318
      %v2368 = vunpack.c.l.b16 %v2125
      %v2369 = vunpack.c.l.b16 %v2126
      %v2370 = vunpack.c.l.b16 %v2127
      %v2371 = vunpack.c.l.b16 %v2128
      %v2372 = vunpack.c.l.b16 %v2129
      %v2373 = vunpack.c.l.b16 %v2130
      %v2374 = vunpack.c.l.b16 %v2131
      %v2375 = vunpack.c.l.b16 %v2132
      %v2376 = vunpack.c.l.b16 %v2133
      %v2377 = vunpack.c.l.b16 %v2134
      %v2378 = vunpack.c.l.b16 %v2135
      %v2379 = vunpack.c.l.b16 %v2136
      %v2380 = vunpack.c.l.b16 %v2137
      %v2381 = vunpack.c.l.b16 %v2138
      %v2382 = vunpack.c.l.b16 %v2139
      %v2383 = vunpack.c.l.b16 %v2140
      %v2384 = vpack.c.b16 %v2369, %v2368
      %v2385 = vpack.c.b16 %v2371, %v2370
      %v2386 = vpack.c.b16 %v2373, %v2372
      %v2387 = vpack.c.b16 %v2375, %v2374
      %v2388 = vpack.c.b16 %v2377, %v2376
      %v2389 = vpack.c.b16 %v2379, %v2378
      %v2390 = vpack.c.b16 %v2381, %v2380
      %v2391 = vpack.c.b16 %v2383, %v2382
      %2400 = vmatprep.subr.bf16.mxu0 0
      %2401 = vmatpush1.bf16.msra.mxu0 %v2384
      %2402 = vmatprep.subr.bf16.mxu0 0
      %2403 = vmatpush1.bf16.msra.mxu0 %v2385
      %2404 = vmatprep.subr.bf16.mxu0 0
      %2405 = vmatpush1.bf16.msra.mxu0 %v2386
      %2406 = vmatprep.subr.bf16.mxu0 0
      %2407 = vmatpush1.bf16.msra.mxu0 %v2387
      %2408 = vmatprep.subr.bf16.mxu0 0
      %2409 = vmatpush1.bf16.msra.mxu0 %v2388
      %2410 = vmatprep.subr.bf16.mxu0 0
      %2411 = vmatpush1.bf16.msra.mxu0 %v2389
      %2412 = vmatprep.subr.bf16.mxu0 0
      %2413 = vmatpush1.bf16.msra.mxu0 %v2390
      %2414 = vmatprep.subr.bf16.mxu0 0
      %2415 = vmatpush1.bf16.msra.mxu0 %v2391
      %2416 = vmatprep.subr.bf16.mxu0 0
      %2417 = vmatpush1.bf16.msra.mxu0 0
      %2418 = vmatprep.subr.bf16.mxu0 0
      %2419 = vmatpush1.bf16.msra.mxu0 0
      %2420 = vmatprep.subr.bf16.mxu0 0
      %2421 = vmatpush1.bf16.msra.mxu0 0
      %2422 = vmatprep.subr.bf16.mxu0 0
      %2423 = vmatpush1.bf16.msra.mxu0 0
      %2424 = vmatprep.subr.bf16.mxu0 0
      %2425 = vmatpush1.bf16.msra.mxu0 0
      %2426 = vmatprep.subr.bf16.mxu0 0
      %2427 = vmatpush1.bf16.msra.mxu0 0
      %2428 = vmatprep.subr.bf16.mxu0 0
      %2429 = vmatpush1.bf16.msra.mxu0 0
      %2430 = vmatprep.subr.bf16.mxu0 0
      %2431 = vmatpush1.bf16.msra.mxu0 0
      %2432 = vmatprep.mubr.bf16.mxu0 0
      %2433 = vmatmul.mubr.bf16.gmra.mrb[0].mxu0 %v2320
      %v2434 = vpop.f32.mrb[0].mxu0
      %v2435 = vadd.f32 0.0, %v2434
      %v2436 = vpop.f32.mrb[0].mxu0
      %v2437 = vpop.f32.mrb[0].mxu0
      %v2438 = vadd.f32 0.0, %v2437
      %v2439 = vpop.f32.mrb[0].mxu0
      %2440 = vmatprep.mubr.bf16.mxu0 0
      %2441 = vmatmul.mubr.bf16.gmra.mrb[0].mxu0 %v2321
      %v2442 = vpop.f32.mrb[0].mxu0
      %v2443 = vadd.f32 0.0, %v2442
      %v2444 = vpop.f32.mrb[0].mxu0
      %v2445 = vpop.f32.mrb[0].mxu0
      %v2446 = vadd.f32 0.0, %v2445
      %v2447 = vpop.f32.mrb[0].mxu0
      %2448 = vmatprep.mubr.bf16.mxu0 0
      %2449 = vmatmul.mubr.bf16.gmra.mrb[0].mxu0 %v2322
      %v2450 = vpop.f32.mrb[0].mxu0
      %v2451 = vadd.f32 0.0, %v2450
      %v2452 = vpop.f32.mrb[0].mxu0
      %v2453 = vpop.f32.mrb[0].mxu0
      %v2454 = vadd.f32 0.0, %v2453
      %v2455 = vpop.f32.mrb[0].mxu0
      %2456 = vmatprep.mubr.bf16.mxu0 0
      %2457 = vmatmul.mubr.bf16.gmra.mrb[0].mxu0 %v2323
      %v2458 = vpop.f32.mrb[0].mxu0
      %v2459 = vadd.f32 0.0, %v2458
      %v2460 = vpop.f32.mrb[0].mxu0
      %v2461 = vpop.f32.mrb[0].mxu0
      %v2462 = vadd.f32 0.0, %v2461
      %v2463 = vpop.f32.mrb[0].mxu0
      %2464 = vmatprep.mubr.bf16.mxu0 0
      %2465 = vmatmul.mubr.bf16.gmra.mrb[0].mxu0 %v2324
      %v2466 = vpop.f32.mrb[0].mxu0
      %v2467 = vadd.f32 0.0, %v2466
      %v2468 = vpop.f32.mrb[0].mxu0
      %v2469 = vpop.f32.mrb[0].mxu0
      %v2470 = vadd.f32 0.0, %v2469
      %v2471 = vpop.f32.mrb[0].mxu0
      %2472 = vmatprep.mubr.bf16.mxu0 0
      %2473 = vmatmul.mubr.bf16.gmra.mrb[0].mxu0 %v2325
      %v2474 = vpop.f32.mrb[0].mxu0
      %v2475 = vadd.f32 0.0, %v2474
      %v2476 = vpop.f32.mrb[0].mxu0
      %v2477 = vpop.f32.mrb[0].mxu0
      %v2478 = vadd.f32 0.0, %v2477
      %v2479 = vpop.f32.mrb[0].mxu0
      %2480 = vmatprep.mubr.bf16.mxu0 0
      %2481 = vmatmul.mubr.bf16.gmra.mrb[0].mxu0 %v2326
      %v2482 = vpop.f32.mrb[0].mxu0
      %v2483 = vadd.f32 0.0, %v2482
      %v2484 = vpop.f32.mrb[0].mxu0
      %v2485 = vpop.f32.mrb[0].mxu0
      %v2486 = vadd.f32 0.0, %v2485
      %v2487 = vpop.f32.mrb[0].mxu0
      %2488 = vmatprep.mubr.bf16.mxu0 0
      %2489 = vmatmul.mubr.bf16.gmra.mrb[0].mxu0 %v2327
      %v2490 = vpop.f32.mrb[0].mxu0
      %v2491 = vadd.f32 0.0, %v2490
      %v2492 = vpop.f32.mrb[0].mxu0
      %v2493 = vpop.f32.mrb[0].mxu0
      %v2494 = vadd.f32 0.0, %v2493
      %v2495 = vpop.f32.mrb[0].mxu0
      %2496 = vmatprep.mubr.bf16.mxu0 0
      %2497 = vmatmul.mubr.bf16.gmra.mrb[0].mxu0 %v2328
      %v2498 = vpop.f32.mrb[0].mxu0
      %v2499 = vadd.f32 0.0, %v2498
      %v2500 = vpop.f32.mrb[0].mxu0
      %v2501 = vpop.f32.mrb[0].mxu0
      %v2502 = vadd.f32 0.0, %v2501
      %v2503 = vpop.f32.mrb[0].mxu0
      %2504 = vmatprep.mubr.bf16.mxu0 0
      %2505 = vmatmul.mubr.bf16.gmra.mrb[0].mxu0 %v2329
      %v2506 = vpop.f32.mrb[0].mxu0
      %v2507 = vadd.f32 0.0, %v2506
      %v2508 = vpop.f32.mrb[0].mxu0
      %v2509 = vpop.f32.mrb[0].mxu0
      %v2510 = vadd.f32 0.0, %v2509
      %v2511 = vpop.f32.mrb[0].mxu0
      %2512 = vmatprep.mubr.bf16.mxu0 0
      %2513 = vmatmul.mubr.bf16.gmra.mrb[0].mxu0 %v2330
      %v2514 = vpop.f32.mrb[0].mxu0
      %v2515 = vadd.f32 0.0, %v2514
      %v2516 = vpop.f32.mrb[0].mxu0
      %v2517 = vpop.f32.mrb[0].mxu0
      %v2518 = vadd.f32 0.0, %v2517
      %v2519 = vpop.f32.mrb[0].mxu0
      %2520 = vmatprep.mubr.bf16.mxu0 0
      %2521 = vmatmul.mubr.bf16.gmra.mrb[0].mxu0 %v2331
      %v2522 = vpop.f32.mrb[0].mxu0
      %v2523 = vadd.f32 0.0, %v2522
      %v2524 = vpop.f32.mrb[0].mxu0
      %v2525 = vpop.f32.mrb[0].mxu0
      %v2526 = vadd.f32 0.0, %v2525
      %v2527 = vpop.f32.mrb[0].mxu0
      %2528 = vmatprep.mubr.bf16.mxu0 0
      %2529 = vmatmul.mubr.bf16.gmra.mrb[0].mxu0 %v2332
      %v2530 = vpop.f32.mrb[0].mxu0
      %v2531 = vadd.f32 0.0, %v2530
      %v2532 = vpop.f32.mrb[0].mxu0
      %v2533 = vpop.f32.mrb[0].mxu0
      %v2534 = vadd.f32 0.0, %v2533
      %v2535 = vpop.f32.mrb[0].mxu0
      %2536 = vmatprep.mubr.bf16.mxu0 0
      %2537 = vmatmul.mubr.bf16.gmra.mrb[0].mxu0 %v2333
      %v2538 = vpop.f32.mrb[0].mxu0
      %v2539 = vadd.f32 0.0, %v2538
      %v2540 = vpop.f32.mrb[0].mxu0
      %v2541 = vpop.f32.mrb[0].mxu0
      %v2542 = vadd.f32 0.0, %v2541
      %v2543 = vpop.f32.mrb[0].mxu0
      %2544 = vmatprep.mubr.bf16.mxu0 0
      %2545 = vmatmul.mubr.bf16.gmra.mrb[0].mxu0 %v2334
      %v2546 = vpop.f32.mrb[0].mxu0
      %v2547 = vadd.f32 0.0, %v2546
      %v2548 = vpop.f32.mrb[0].mxu0
      %v2549 = vpop.f32.mrb[0].mxu0
      %v2550 = vadd.f32 0.0, %v2549
      %v2551 = vpop.f32.mrb[0].mxu0
      %2552 = vmatprep.mubr.bf16.mxu0 0
      %2553 = vmatmul.mubr.bf16.gmra.mrb[0].mxu0 %v2335
      %v2554 = vpop.f32.mrb[0].mxu0
      %v2555 = vadd.f32 0.0, %v2554
      %v2556 = vpop.f32.mrb[0].mxu0
      %v2557 = vpop.f32.mrb[0].mxu0
      %v2558 = vadd.f32 0.0, %v2557
      %v2559 = vpop.f32.mrb[0].mxu0
      %2560 = vdwg.mxu0
      %v2561 = vadd.f32 %v1983, %v2435
      %v2562 = vadd.f32 %v1986, %v2438
      %v2563 = vadd.f32 %v1991, %v2443
      %v2564 = vadd.f32 %v1994, %v2446
      %v2565 = vadd.f32 %v1999, %v2451
      %v2566 = vadd.f32 %v2002, %v2454
      %v2567 = vadd.f32 %v2007, %v2459
      %v2568 = vadd.f32 %v2010, %v2462
      %v2569 = vadd.f32 %v2015, %v2467
      %v2570 = vadd.f32 %v2018, %v2470
      %v2571 = vadd.f32 %v2023, %v2475
      %v2572 = vadd.f32 %v2026, %v2478
      %v2573 = vadd.f32 %v2031, %v2483
      %v2574 = vadd.f32 %v2034, %v2486
      %v2575 = vadd.f32 %v2039, %v2491
      %v2576 = vadd.f32 %v2042, %v2494
      %v2577 = vadd.f32 %v2047, %v2499
      %v2578 = vadd.f32 %v2050, %v2502
      %v2579 = vadd.f32 %v2055, %v2507
      %v2580 = vadd.f32 %v2058, %v2510
      %v2581 = vadd.f32 %v2063, %v2515
      %v2582 = vadd.f32 %v2066, %v2518
      %v2583 = vadd.f32 %v2071, %v2523
      %v2584 = vadd.f32 %v2074, %v2526
      %v2585 = vadd.f32 %v2079, %v2531
      %v2586 = vadd.f32 %v2082, %v2534
      %v2587 = vadd.f32 %v2087, %v2539
      %v2588 = vadd.f32 %v2090, %v2542
      %v2589 = vadd.f32 %v2095, %v2547
      %v2590 = vadd.f32 %v2098, %v2550
      %v2591 = vadd.f32 %v2103, %v2555
      %v2592 = vadd.f32 %v2106, %v2558
      %v2593 = vld [vmem:[%s949] sm:$0xf]
      %v2594 = vld [vmem:[%s949 + $0x4] sm:$0xf]
      %v2595 = vld [vmem:[%s949 + $0xc] sm:$0xf]
      %v2596 = vld [vmem:[%s949 + $0x10] sm:$0xf]
      %v2597 = vld [vmem:[%s949 + $0x18] sm:$0xf]
      %v2598 = vld [vmem:[%s949 + $0x1c] sm:$0xf]
      %v2599 = vld [vmem:[%s949 + $0x24] sm:$0xf]
      %v2600 = vld [vmem:[%s949 + $0x28] sm:$0xf]
      %v2601 = vld [vmem:[%s949 + $0x30] sm:$0xf]
      %v2602 = vld [vmem:[%s949 + $0x34] sm:$0xf]
      %v2603 = vld [vmem:[%s949 + $0x3c] sm:$0xf]
      %v2604 = vld [vmem:[%s949 + $0x40] sm:$0xf]
      %v2605 = vld [vmem:[%s949 + $0x48] sm:$0xf]
      %v2606 = vld [vmem:[%s949 + $0x4c] sm:$0xf]
      %v2607 = vld [vmem:[%s949 + $0x54] sm:$0xf]
      %v2608 = vld [vmem:[%s949 + $0x58] sm:$0xf]
      %v2609 = vld [vmem:[%s949 + $0x60] sm:$0xf]
      %v2610 = vld [vmem:[%s949 + $0x64] sm:$0xf]
      %v2611 = vld [vmem:[%s949 + $0x6c] sm:$0xf]
      %v2612 = vld [vmem:[%s949 + $0x70] sm:$0xf]
      %v2613 = vld [vmem:[%s949 + $0x78] sm:$0xf]
      %v2614 = vld [vmem:[%s949 + $0x7c] sm:$0xf]
      %v2615 = vld [vmem:[%s949 + $0x84] sm:$0xf]
      %v2616 = vld [vmem:[%s949 + $0x88] sm:$0xf]
      %v2617 = vld [vmem:[%s949 + $0x90] sm:$0xf]
      %v2618 = vld [vmem:[%s949 + $0x94] sm:$0xf]
      %v2619 = vld [vmem:[%s949 + $0x9c] sm:$0xf]
      %v2620 = vld [vmem:[%s949 + $0xa0] sm:$0xf]
      %v2621 = vld [vmem:[%s949 + $0xa8] sm:$0xf]
      %v2622 = vld [vmem:[%s949 + $0xac] sm:$0xf]
      %v2623 = vld [vmem:[%s949 + $0xb4] sm:$0xf]
      %v2624 = vld [vmem:[%s949 + $0xb8] sm:$0xf]
      %v2625 = vld [vmem:[%s1 + $0xc0] sm:$0xf]
      %v2626 = vld [vmem:[%s1 + $0xc4] sm:$0xf]
      %v2627 = vld [vmem:[%s1 + $0xc8] sm:$0xf]
      %v2628 = vld [vmem:[%s1 + $0xcc] sm:$0xf]
      %v2629 = vld [vmem:[%s1 + $0xd0] sm:$0xf]
      %v2630 = vld [vmem:[%s1 + $0xd4] sm:$0xf]
      %v2631 = vld [vmem:[%s1 + $0xd8] sm:$0xf]
      %v2632 = vld [vmem:[%s1 + $0xdc] sm:$0xf]
      %v2633 = vld [vmem:[%s1 + $0xe0] sm:$0xf]
      %v2634 = vld [vmem:[%s1 + $0xe4] sm:$0xf]
      %v2635 = vld [vmem:[%s1 + $0xe8] sm:$0xf]
      %v2636 = vld [vmem:[%s1 + $0xec] sm:$0xf]
      %v2637 = vld [vmem:[%s1 + $0xf0] sm:$0xf]
      %v2638 = vld [vmem:[%s1 + $0xf4] sm:$0xf]
      %v2639 = vld [vmem:[%s1 + $0xf8] sm:$0xf]
      %v2640 = vld [vmem:[%s1 + $0xfc] sm:$0xf]
      %v2673 = vunpack.c.l.b16 %v2593
      %v2674 = vunpack.c.l.b16 %v2594
      %v2675 = vunpack.c.l.b16 %v2595
      %v2676 = vunpack.c.l.b16 %v2596
      %v2677 = vunpack.c.l.b16 %v2597
      %v2678 = vunpack.c.l.b16 %v2598
      %v2679 = vunpack.c.l.b16 %v2599
      %v2680 = vunpack.c.l.b16 %v2600
      %v2681 = vunpack.c.l.b16 %v2601
      %v2682 = vunpack.c.l.b16 %v2602
      %v2683 = vunpack.c.l.b16 %v2603
      %v2684 = vunpack.c.l.b16 %v2604
      %v2685 = vunpack.c.l.b16 %v2605
      %v2686 = vunpack.c.l.b16 %v2606
      %v2687 = vunpack.c.l.b16 %v2607
      %v2688 = vunpack.c.l.b16 %v2608
      %v2689 = vunpack.c.l.b16 %v2609
      %v2690 = vunpack.c.l.b16 %v2610
      %v2691 = vunpack.c.l.b16 %v2611
      %v2692 = vunpack.c.l.b16 %v2612
      %v2693 = vunpack.c.l.b16 %v2613
      %v2694 = vunpack.c.l.b16 %v2614
      %v2695 = vunpack.c.l.b16 %v2615
      %v2696 = vunpack.c.l.b16 %v2616
      %v2697 = vunpack.c.l.b16 %v2617
      %v2698 = vunpack.c.l.b16 %v2618
      %v2699 = vunpack.c.l.b16 %v2619
      %v2700 = vunpack.c.l.b16 %v2620
      %v2701 = vunpack.c.l.b16 %v2621
      %v2702 = vunpack.c.l.b16 %v2622
      %v2703 = vunpack.c.l.b16 %v2623
      %v2704 = vunpack.c.l.b16 %v2624
      %v2705 = vpack.c.b16 %v2674, %v2673
      %v2706 = vpack.c.b16 %v2676, %v2675
      %v2707 = vpack.c.b16 %v2678, %v2677
      %v2708 = vpack.c.b16 %v2680, %v2679
      %v2709 = vpack.c.b16 %v2682, %v2681
      %v2710 = vpack.c.b16 %v2684, %v2683
      %v2711 = vpack.c.b16 %v2686, %v2685
      %v2712 = vpack.c.b16 %v2688, %v2687
      %v2713 = vpack.c.b16 %v2690, %v2689
      %v2714 = vpack.c.b16 %v2692, %v2691
      %v2715 = vpack.c.b16 %v2694, %v2693
      %v2716 = vpack.c.b16 %v2696, %v2695
      %v2717 = vpack.c.b16 %v2698, %v2697
      %v2718 = vpack.c.b16 %v2700, %v2699
      %v2719 = vpack.c.b16 %v2702, %v2701
      %v2720 = vpack.c.b16 %v2704, %v2703
      %v2753 = vunpack.c.l.b16 %v2625
      %v2754 = vunpack.c.l.b16 %v2626
      %v2755 = vunpack.c.l.b16 %v2627
      %v2756 = vunpack.c.l.b16 %v2628
      %v2757 = vunpack.c.l.b16 %v2629
      %v2758 = vunpack.c.l.b16 %v2630
      %v2759 = vunpack.c.l.b16 %v2631
      %v2760 = vunpack.c.l.b16 %v2632
      %v2761 = vunpack.c.l.b16 %v2633
      %v2762 = vunpack.c.l.b16 %v2634
      %v2763 = vunpack.c.l.b16 %v2635
      %v2764 = vunpack.c.l.b16 %v2636
      %v2765 = vunpack.c.l.b16 %v2637
      %v2766 = vunpack.c.l.b16 %v2638
      %v2767 = vunpack.c.l.b16 %v2639
      %v2768 = vunpack.c.l.b16 %v2640
      %v2769 = vpack.c.b16 %v2754, %v2753
      %v2770 = vpack.c.b16 %v2756, %v2755
      %v2771 = vpack.c.b16 %v2758, %v2757
      %v2772 = vpack.c.b16 %v2760, %v2759
      %v2773 = vpack.c.b16 %v2762, %v2761
      %v2774 = vpack.c.b16 %v2764, %v2763
      %v2775 = vpack.c.b16 %v2766, %v2765
      %v2776 = vpack.c.b16 %v2768, %v2767
      %2785 = vmatprep.subr.bf16.mxu0 0
      %2786 = vmatpush1.bf16.msra.mxu0 %v2769
      %2787 = vmatprep.subr.bf16.mxu0 0
      %2788 = vmatpush1.bf16.msra.mxu0 %v2770
      %2789 = vmatprep.subr.bf16.mxu0 0
      %2790 = vmatpush1.bf16.msra.mxu0 %v2771
      %2791 = vmatprep.subr.bf16.mxu0 0
      %2792 = vmatpush1.bf16.msra.mxu0 %v2772
      %2793 = vmatprep.subr.bf16.mxu0 0
      %2794 = vmatpush1.bf16.msra.mxu0 %v2773
      %2795 = vmatprep.subr.bf16.mxu0 0
      %2796 = vmatpush1.bf16.msra.mxu0 %v2774
      %2797 = vmatprep.subr.bf16.mxu0 0
      %2798 = vmatpush1.bf16.msra.mxu0 %v2775
      %2799 = vmatprep.subr.bf16.mxu0 0
      %2800 = vmatpush1.bf16.msra.mxu0 %v2776
      %2801 = vmatprep.subr.bf16.mxu0 0
      %2802 = vmatpush1.bf16.msra.mxu0 0
      %2803 = vmatprep.subr.bf16.mxu0 0
      %2804 = vmatpush1.bf16.msra.mxu0 0
      %2805 = vmatprep.subr.bf16.mxu0 0
      %2806 = vmatpush1.bf16.msra.mxu0 0
      %2807 = vmatprep.subr.bf16.mxu0 0
      %2808 = vmatpush1.bf16.msra.mxu0 0
      %2809 = vmatprep.subr.bf16.mxu0 0
      %2810 = vmatpush1.bf16.msra.mxu0 0
      %2811 = vmatprep.subr.bf16.mxu0 0
      %2812 = vmatpush1.bf16.msra.mxu0 0
      %2813 = vmatprep.subr.bf16.mxu0 0
      %2814 = vmatpush1.bf16.msra.mxu0 0
      %2815 = vmatprep.subr.bf16.mxu0 0
      %2816 = vmatpush1.bf16.msra.mxu0 0
      %2817 = vmatprep.mubr.bf16.mxu0 0
      %2818 = vmatmul.mubr.bf16.gmra.mrb[0].mxu0 %v2705
      %v2819 = vpop.f32.mrb[0].mxu0
      %v2820 = vadd.f32 0.0, %v2819
      %v2821 = vpop.f32.mrb[0].mxu0
      %v2822 = vpop.f32.mrb[0].mxu0
      %v2823 = vadd.f32 0.0, %v2822
      %v2824 = vpop.f32.mrb[0].mxu0
      %2825 = vmatprep.mubr.bf16.mxu0 0
      %2826 = vmatmul.mubr.bf16.gmra.mrb[0].mxu0 %v2706
      %v2827 = vpop.f32.mrb[0].mxu0
      %v2828 = vadd.f32 0.0, %v2827
      %v2829 = vpop.f32.mrb[0].mxu0
      %v2830 = vpop.f32.mrb[0].mxu0
      %v2831 = vadd.f32 0.0, %v2830
      %v2832 = vpop.f32.mrb[0].mxu0
      %2833 = vmatprep.mubr.bf16.mxu0 0
      %2834 = vmatmul.mubr.bf16.gmra.mrb[0].mxu0 %v2707
      %v2835 = vpop.f32.mrb[0].mxu0
      %v2836 = vadd.f32 0.0, %v2835
      %v2837 = vpop.f32.mrb[0].mxu0
      %v2838 = vpop.f32.mrb[0].mxu0
      %v2839 = vadd.f32 0.0, %v2838
      %v2840 = vpop.f32.mrb[0].mxu0
      %2841 = vmatprep.mubr.bf16.mxu0 0
      %2842 = vmatmul.mubr.bf16.gmra.mrb[0].mxu0 %v2708
      %v2843 = vpop.f32.mrb[0].mxu0
      %v2844 = vadd.f32 0.0, %v2843
      %v2845 = vpop.f32.mrb[0].mxu0
      %v2846 = vpop.f32.mrb[0].mxu0
      %v2847 = vadd.f32 0.0, %v2846
      %v2848 = vpop.f32.mrb[0].mxu0
      %2849 = vmatprep.mubr.bf16.mxu0 0
      %2850 = vmatmul.mubr.bf16.gmra.mrb[0].mxu0 %v2709
      %v2851 = vpop.f32.mrb[0].mxu0
      %v2852 = vadd.f32 0.0, %v2851
      %v2853 = vpop.f32.mrb[0].mxu0
      %v2854 = vpop.f32.mrb[0].mxu0
      %v2855 = vadd.f32 0.0, %v2854
      %v2856 = vpop.f32.mrb[0].mxu0
      %2857 = vmatprep.mubr.bf16.mxu0 0
      %2858 = vmatmul.mubr.bf16.gmra.mrb[0].mxu0 %v2710
      %v2859 = vpop.f32.mrb[0].mxu0
      %v2860 = vadd.f32 0.0, %v2859
      %v2861 = vpop.f32.mrb[0].mxu0
      %v2862 = vpop.f32.mrb[0].mxu0
      %v2863 = vadd.f32 0.0, %v2862
      %v2864 = vpop.f32.mrb[0].mxu0
      %2865 = vmatprep.mubr.bf16.mxu0 0
      %2866 = vmatmul.mubr.bf16.gmra.mrb[0].mxu0 %v2711
      %v2867 = vpop.f32.mrb[0].mxu0
      %v2868 = vadd.f32 0.0, %v2867
      %v2869 = vpop.f32.mrb[0].mxu0
      %v2870 = vpop.f32.mrb[0].mxu0
      %v2871 = vadd.f32 0.0, %v2870
      %v2872 = vpop.f32.mrb[0].mxu0
      %2873 = vmatprep.mubr.bf16.mxu0 0
      %2874 = vmatmul.mubr.bf16.gmra.mrb[0].mxu0 %v2712
      %v2875 = vpop.f32.mrb[0].mxu0
      %v2876 = vadd.f32 0.0, %v2875
      %v2877 = vpop.f32.mrb[0].mxu0
      %v2878 = vpop.f32.mrb[0].mxu0
      %v2879 = vadd.f32 0.0, %v2878
      %v2880 = vpop.f32.mrb[0].mxu0
      %2881 = vmatprep.mubr.bf16.mxu0 0
      %2882 = vmatmul.mubr.bf16.gmra.mrb[0].mxu0 %v2713
      %v2883 = vpop.f32.mrb[0].mxu0
      %v2884 = vadd.f32 0.0, %v2883
      %v2885 = vpop.f32.mrb[0].mxu0
      %v2886 = vpop.f32.mrb[0].mxu0
      %v2887 = vadd.f32 0.0, %v2886
      %v2888 = vpop.f32.mrb[0].mxu0
      %2889 = vmatprep.mubr.bf16.mxu0 0
      %2890 = vmatmul.mubr.bf16.gmra.mrb[0].mxu0 %v2714
      %v2891 = vpop.f32.mrb[0].mxu0
      %v2892 = vadd.f32 0.0, %v2891
      %v2893 = vpop.f32.mrb[0].mxu0
      %v2894 = vpop.f32.mrb[0].mxu0
      %v2895 = vadd.f32 0.0, %v2894
      %v2896 = vpop.f32.mrb[0].mxu0
      %2897 = vmatprep.mubr.bf16.mxu0 0
      %2898 = vmatmul.mubr.bf16.gmra.mrb[0].mxu0 %v2715
      %v2899 = vpop.f32.mrb[0].mxu0
      %v2900 = vadd.f32 0.0, %v2899
      %v2901 = vpop.f32.mrb[0].mxu0
      %v2902 = vpop.f32.mrb[0].mxu0
      %v2903 = vadd.f32 0.0, %v2902
      %v2904 = vpop.f32.mrb[0].mxu0
      %2905 = vmatprep.mubr.bf16.mxu0 0
      %2906 = vmatmul.mubr.bf16.gmra.mrb[0].mxu0 %v2716
      %v2907 = vpop.f32.mrb[0].mxu0
      %v2908 = vadd.f32 0.0, %v2907
      %v2909 = vpop.f32.mrb[0].mxu0
      %v2910 = vpop.f32.mrb[0].mxu0
      %v2911 = vadd.f32 0.0, %v2910
      %v2912 = vpop.f32.mrb[0].mxu0
      %2913 = vmatprep.mubr.bf16.mxu0 0
      %2914 = vmatmul.mubr.bf16.gmra.mrb[0].mxu0 %v2717
      %v2915 = vpop.f32.mrb[0].mxu0
      %v2916 = vadd.f32 0.0, %v2915
      %v2917 = vpop.f32.mrb[0].mxu0
      %v2918 = vpop.f32.mrb[0].mxu0
      %v2919 = vadd.f32 0.0, %v2918
      %v2920 = vpop.f32.mrb[0].mxu0
      %2921 = vmatprep.mubr.bf16.mxu0 0
      %2922 = vmatmul.mubr.bf16.gmra.mrb[0].mxu0 %v2718
      %v2923 = vpop.f32.mrb[0].mxu0
      %v2924 = vadd.f32 0.0, %v2923
      %v2925 = vpop.f32.mrb[0].mxu0
      %v2926 = vpop.f32.mrb[0].mxu0
      %v2927 = vadd.f32 0.0, %v2926
      %v2928 = vpop.f32.mrb[0].mxu0
      %2929 = vmatprep.mubr.bf16.mxu0 0
      %2930 = vmatmul.mubr.bf16.gmra.mrb[0].mxu0 %v2719
      %v2931 = vpop.f32.mrb[0].mxu0
      %v2932 = vadd.f32 0.0, %v2931
      %v2933 = vpop.f32.mrb[0].mxu0
      %v2934 = vpop.f32.mrb[0].mxu0
      %v2935 = vadd.f32 0.0, %v2934
      %v2936 = vpop.f32.mrb[0].mxu0
      %2937 = vmatprep.mubr.bf16.mxu0 0
      %2938 = vmatmul.mubr.bf16.gmra.mrb[0].mxu0 %v2720
      %v2939 = vpop.f32.mrb[0].mxu0
      %v2940 = vadd.f32 0.0, %v2939
      %v2941 = vpop.f32.mrb[0].mxu0
      %v2942 = vpop.f32.mrb[0].mxu0
      %v2943 = vadd.f32 0.0, %v2942
      %v2944 = vpop.f32.mrb[0].mxu0
      %2945 = vdwg.mxu0
      %v2946 = vadd.f32 %v2561, %v2820
      %v2947 = vadd.f32 %v2562, %v2823
      %v2948 = vadd.f32 %v2563, %v2828
      %v2949 = vadd.f32 %v2564, %v2831
      %v2950 = vadd.f32 %v2565, %v2836
      %v2951 = vadd.f32 %v2566, %v2839
      %v2952 = vadd.f32 %v2567, %v2844
      %v2953 = vadd.f32 %v2568, %v2847
      %v2954 = vadd.f32 %v2569, %v2852
      %v2955 = vadd.f32 %v2570, %v2855
      %v2956 = vadd.f32 %v2571, %v2860
      %v2957 = vadd.f32 %v2572, %v2863
      %v2958 = vadd.f32 %v2573, %v2868
      %v2959 = vadd.f32 %v2574, %v2871
      %v2960 = vadd.f32 %v2575, %v2876
      %v2961 = vadd.f32 %v2576, %v2879
      %v2962 = vadd.f32 %v2577, %v2884
      %v2963 = vadd.f32 %v2578, %v2887
      %v2964 = vadd.f32 %v2579, %v2892
      %v2965 = vadd.f32 %v2580, %v2895
      %v2966 = vadd.f32 %v2581, %v2900
      %v2967 = vadd.f32 %v2582, %v2903
      %v2968 = vadd.f32 %v2583, %v2908
      %v2969 = vadd.f32 %v2584, %v2911
      %v2970 = vadd.f32 %v2585, %v2916
      %v2971 = vadd.f32 %v2586, %v2919
      %v2972 = vadd.f32 %v2587, %v2924
      %v2973 = vadd.f32 %v2588, %v2927
      %v2974 = vadd.f32 %v2589, %v2932
      %v2975 = vadd.f32 %v2590, %v2935
      %v2976 = vadd.f32 %v2591, %v2940
      %v2977 = vadd.f32 %v2592, %v2943
      %v2978 = vld [vmem:[%s949] sm:$0xf]
      %v2979 = vld [vmem:[%s949 + $0x4] sm:$0xf]
      %v2980 = vld [vmem:[%s949 + $0x8] sm:$0x1]
      %v2981 = vld [vmem:[%s949 + $0xc] sm:$0xf]
      %v2982 = vld [vmem:[%s949 + $0x10] sm:$0xf]
      %v2983 = vld [vmem:[%s949 + $0x14] sm:$0x1]
      %v2984 = vld [vmem:[%s949 + $0x18] sm:$0xf]
      %v2985 = vld [vmem:[%s949 + $0x1c] sm:$0xf]
      %v2986 = vld [vmem:[%s949 + $0x20] sm:$0x1]
      %v2987 = vld [vmem:[%s949 + $0x24] sm:$0xf]
      %v2988 = vld [vmem:[%s949 + $0x28] sm:$0xf]
      %v2989 = vld [vmem:[%s949 + $0x2c] sm:$0x1]
      %v2990 = vld [vmem:[%s949 + $0x30] sm:$0xf]
      %v2991 = vld [vmem:[%s949 + $0x34] sm:$0xf]
      %v2992 = vld [vmem:[%s949 + $0x38] sm:$0x1]
      %v2993 = vld [vmem:[%s949 + $0x3c] sm:$0xf]
      %v2994 = vld [vmem:[%s949 + $0x40] sm:$0xf]
      %v2995 = vld [vmem:[%s949 + $0x44] sm:$0x1]
      %v2996 = vld [vmem:[%s949 + $0x48] sm:$0xf]
      %v2997 = vld [vmem:[%s949 + $0x4c] sm:$0xf]
      %v2998 = vld [vmem:[%s949 + $0x50] sm:$0x1]
      %v2999 = vld [vmem:[%s949 + $0x54] sm:$0xf]
      %v3000 = vld [vmem:[%s949 + $0x58] sm:$0xf]
      %v3001 = vld [vmem:[%s949 + $0x5c] sm:$0x1]
      %v3002 = vld [vmem:[%s949 + $0x60] sm:$0xf]
      %v3003 = vld [vmem:[%s949 + $0x64] sm:$0xf]
      %v3004 = vld [vmem:[%s949 + $0x68] sm:$0x1]
      %v3005 = vld [vmem:[%s949 + $0x6c] sm:$0xf]
      %v3006 = vld [vmem:[%s949 + $0x70] sm:$0xf]
      %v3007 = vld [vmem:[%s949 + $0x74] sm:$0x1]
      %v3008 = vld [vmem:[%s949 + $0x78] sm:$0xf]
      %v3009 = vld [vmem:[%s949 + $0x7c] sm:$0xf]
      %v3010 = vld [vmem:[%s949 + $0x80] sm:$0x1]
      %v3011 = vld [vmem:[%s949 + $0x84] sm:$0xf]
      %v3012 = vld [vmem:[%s949 + $0x88] sm:$0xf]
      %v3013 = vld [vmem:[%s949 + $0x8c] sm:$0x1]
      %v3014 = vld [vmem:[%s949 + $0x90] sm:$0xf]
      %v3015 = vld [vmem:[%s949 + $0x94] sm:$0xf]
      %v3016 = vld [vmem:[%s949 + $0x98] sm:$0x1]
      %v3017 = vld [vmem:[%s949 + $0x9c] sm:$0xf]
      %v3018 = vld [vmem:[%s949 + $0xa0] sm:$0xf]
      %v3019 = vld [vmem:[%s949 + $0xa4] sm:$0x1]
      %v3020 = vld [vmem:[%s949 + $0xa8] sm:$0xf]
      %v3021 = vld [vmem:[%s949 + $0xac] sm:$0xf]
      %v3022 = vld [vmem:[%s949 + $0xb0] sm:$0x1]
      %v3023 = vld [vmem:[%s949 + $0xb4] sm:$0xf]
      %v3024 = vld [vmem:[%s949 + $0xb8] sm:$0xf]
      %v3025 = vld [vmem:[%s949 + $0xbc] sm:$0x1]
      %v3026 = vld [vmem:[%s1 + $0x100] sm:$0xf]
      %v3027 = vld [vmem:[%s1 + $0x104] sm:$0xf]
      %v3028 = vld [vmem:[%s1 + $0x108] sm:$0xf]
      %v3029 = vld [vmem:[%s1 + $0x10c] sm:$0xf]
      %v3030 = vld [vmem:[%s1 + $0x110] sm:$0xf]
      %v3031 = vld [vmem:[%s1 + $0x114] sm:$0xf]
      %v3032 = vld [vmem:[%s1 + $0x118] sm:$0xf]
      %v3033 = vld [vmem:[%s1 + $0x11c] sm:$0xf]
      %v3034 = vld [vmem:[%s1 + $0x120] sm:$0xf]
      %v3035 = vld [vmem:[%s1 + $0x124] sm:$0xf]
      %v3036 = vld [vmem:[%s1 + $0x128] sm:$0xf]
      %v3037 = vld [vmem:[%s1 + $0x12c] sm:$0xf]
      %v3038 = vld [vmem:[%s1 + $0x130] sm:$0xf]
      %v3039 = vld [vmem:[%s1 + $0x134] sm:$0xf]
      %v3040 = vld [vmem:[%s1 + $0x138] sm:$0xf]
      %v3041 = vld [vmem:[%s1 + $0x13c] sm:$0xf]
      %v3043 = vshrl.u32 %v2978, 16
      %v3045 = vrot.slane %v3043, 4
      %v3046 = vshll.u32 %v2978, 16
      %v3048 = vrot.slane %v3046, 5
      %v3049 = vor.u32 %v3045, %v3048
      %v3050 = vrot.slane %v3049, 4
      %v3052 = vshll.u32 %v2979, 16
      %v3054 = vrot.slane %v3052, 5
      %v3055 = vsel %vm1146, %v3050, %v3054
      %v3056 = vshrl.u32 %v2979, 16
      %v3058 = vrot.slane %v3056, 4
      %v3059 = vor.u32 %v3058, %v3054
      %v3060 = vrot.slane %v3059, 4
      %v3062 = vshll.u32 %v2980, 16
      %v3064 = vrot.slane %v3062, 5
      %v3065 = vsel %vm1146, %v3060, %v3064
      %v3067 = vshrl.u32 %v2981, 16
      %v3069 = vrot.slane %v3067, 4
      %v3070 = vshll.u32 %v2981, 16
      %v3072 = vrot.slane %v3070, 5
      %v3073 = vor.u32 %v3069, %v3072
      %v3074 = vrot.slane %v3073, 4
      %v3076 = vshll.u32 %v2982, 16
      %v3078 = vrot.slane %v3076, 5
      %v3079 = vsel %vm1146, %v3074, %v3078
      %v3080 = vshrl.u32 %v2982, 16
      %v3082 = vrot.slane %v3080, 4
      %v3083 = vor.u32 %v3082, %v3078
      %v3084 = vrot.slane %v3083, 4
      %v3086 = vshll.u32 %v2983, 16
      %v3088 = vrot.slane %v3086, 5
      %v3089 = vsel %vm1146, %v3084, %v3088
      %v3091 = vshrl.u32 %v2984, 16
      %v3093 = vrot.slane %v3091, 4
      %v3094 = vshll.u32 %v2984, 16
      %v3096 = vrot.slane %v3094, 5
      %v3097 = vor.u32 %v3093, %v3096
      %v3098 = vrot.slane %v3097, 4
      %v3100 = vshll.u32 %v2985, 16
      %v3102 = vrot.slane %v3100, 5
      %v3103 = vsel %vm1146, %v3098, %v3102
      %v3104 = vshrl.u32 %v2985, 16
      %v3106 = vrot.slane %v3104, 4
      %v3107 = vor.u32 %v3106, %v3102
      %v3108 = vrot.slane %v3107, 4
      %v3110 = vshll.u32 %v2986, 16
      %v3112 = vrot.slane %v3110, 5
      %v3113 = vsel %vm1146, %v3108, %v3112
      %v3115 = vshrl.u32 %v2987, 16
      %v3117 = vrot.slane %v3115, 4
      %v3118 = vshll.u32 %v2987, 16
      %v3120 = vrot.slane %v3118, 5
      %v3121 = vor.u32 %v3117, %v3120
      %v3122 = vrot.slane %v3121, 4
      %v3124 = vshll.u32 %v2988, 16
      %v3126 = vrot.slane %v3124, 5
      %v3127 = vsel %vm1146, %v3122, %v3126
      %v3128 = vshrl.u32 %v2988, 16
      %v3130 = vrot.slane %v3128, 4
      %v3131 = vor.u32 %v3130, %v3126
      %v3132 = vrot.slane %v3131, 4
      %v3134 = vshll.u32 %v2989, 16
      %v3136 = vrot.slane %v3134, 5
      %v3137 = vsel %vm1146, %v3132, %v3136
      %v3139 = vshrl.u32 %v2990, 16
      %v3141 = vrot.slane %v3139, 4
      %v3142 = vshll.u32 %v2990, 16
      %v3144 = vrot.slane %v3142, 5
      %v3145 = vor.u32 %v3141, %v3144
      %v3146 = vrot.slane %v3145, 4
      %v3148 = vshll.u32 %v2991, 16
      %v3150 = vrot.slane %v3148, 5
      %v3151 = vsel %vm1146, %v3146, %v3150
      %v3152 = vshrl.u32 %v2991, 16
      %v3154 = vrot.slane %v3152, 4
      %v3155 = vor.u32 %v3154, %v3150
      %v3156 = vrot.slane %v3155, 4
      %v3158 = vshll.u32 %v2992, 16
      %v3160 = vrot.slane %v3158, 5
      %v3161 = vsel %vm1146, %v3156, %v3160
      %v3163 = vshrl.u32 %v2993, 16
      %v3165 = vrot.slane %v3163, 4
      %v3166 = vshll.u32 %v2993, 16
      %v3168 = vrot.slane %v3166, 5
      %v3169 = vor.u32 %v3165, %v3168
      %v3170 = vrot.slane %v3169, 4
      %v3172 = vshll.u32 %v2994, 16
      %v3174 = vrot.slane %v3172, 5
      %v3175 = vsel %vm1146, %v3170, %v3174
      %v3176 = vshrl.u32 %v2994, 16
      %v3178 = vrot.slane %v3176, 4
      %v3179 = vor.u32 %v3178, %v3174
      %v3180 = vrot.slane %v3179, 4
      %v3182 = vshll.u32 %v2995, 16
      %v3184 = vrot.slane %v3182, 5
      %v3185 = vsel %vm1146, %v3180, %v3184
      %v3187 = vshrl.u32 %v2996, 16
      %v3189 = vrot.slane %v3187, 4
      %v3190 = vshll.u32 %v2996, 16
      %v3192 = vrot.slane %v3190, 5
      %v3193 = vor.u32 %v3189, %v3192
      %v3194 = vrot.slane %v3193, 4
      %v3196 = vshll.u32 %v2997, 16
      %v3198 = vrot.slane %v3196, 5
      %v3199 = vsel %vm1146, %v3194, %v3198
      %v3200 = vshrl.u32 %v2997, 16
      %v3202 = vrot.slane %v3200, 4
      %v3203 = vor.u32 %v3202, %v3198
      %v3204 = vrot.slane %v3203, 4
      %v3206 = vshll.u32 %v2998, 16
      %v3208 = vrot.slane %v3206, 5
      %v3209 = vsel %vm1146, %v3204, %v3208
      %v3211 = vshrl.u32 %v2999, 16
      %v3213 = vrot.slane %v3211, 4
      %v3214 = vshll.u32 %v2999, 16
      %v3216 = vrot.slane %v3214, 5
      %v3217 = vor.u32 %v3213, %v3216
      %v3218 = vrot.slane %v3217, 4
      %v3220 = vshll.u32 %v3000, 16
      %v3222 = vrot.slane %v3220, 5
      %v3223 = vsel %vm1146, %v3218, %v3222
      %v3224 = vshrl.u32 %v3000, 16
      %v3226 = vrot.slane %v3224, 4
      %v3227 = vor.u32 %v3226, %v3222
      %v3228 = vrot.slane %v3227, 4
      %v3230 = vshll.u32 %v3001, 16
      %v3232 = vrot.slane %v3230, 5
      %v3233 = vsel %vm1146, %v3228, %v3232
      %v3235 = vshrl.u32 %v3002, 16
      %v3237 = vrot.slane %v3235, 4
      %v3238 = vshll.u32 %v3002, 16
      %v3240 = vrot.slane %v3238, 5
      %v3241 = vor.u32 %v3237, %v3240
      %v3242 = vrot.slane %v3241, 4
      %v3244 = vshll.u32 %v3003, 16
      %v3246 = vrot.slane %v3244, 5
      %v3247 = vsel %vm1146, %v3242, %v3246
      %v3248 = vshrl.u32 %v3003, 16
      %v3250 = vrot.slane %v3248, 4
      %v3251 = vor.u32 %v3250, %v3246
      %v3252 = vrot.slane %v3251, 4
      %v3254 = vshll.u32 %v3004, 16
      %v3256 = vrot.slane %v3254, 5
      %v3257 = vsel %vm1146, %v3252, %v3256
      %v3259 = vshrl.u32 %v3005, 16
      %v3261 = vrot.slane %v3259, 4
      %v3262 = vshll.u32 %v3005, 16
      %v3264 = vrot.slane %v3262, 5
      %v3265 = vor.u32 %v3261, %v3264
      %v3266 = vrot.slane %v3265, 4
      %v3268 = vshll.u32 %v3006, 16
      %v3270 = vrot.slane %v3268, 5
      %v3271 = vsel %vm1146, %v3266, %v3270
      %v3272 = vshrl.u32 %v3006, 16
      %v3274 = vrot.slane %v3272, 4
      %v3275 = vor.u32 %v3274, %v3270
      %v3276 = vrot.slane %v3275, 4
      %v3278 = vshll.u32 %v3007, 16
      %v3280 = vrot.slane %v3278, 5
      %v3281 = vsel %vm1146, %v3276, %v3280
      %v3283 = vshrl.u32 %v3008, 16
      %v3285 = vrot.slane %v3283, 4
      %v3286 = vshll.u32 %v3008, 16
      %v3288 = vrot.slane %v3286, 5
      %v3289 = vor.u32 %v3285, %v3288
      %v3290 = vrot.slane %v3289, 4
      %v3292 = vshll.u32 %v3009, 16
      %v3294 = vrot.slane %v3292, 5
      %v3295 = vsel %vm1146, %v3290, %v3294
      %v3296 = vshrl.u32 %v3009, 16
      %v3298 = vrot.slane %v3296, 4
      %v3299 = vor.u32 %v3298, %v3294
      %v3300 = vrot.slane %v3299, 4
      %v3302 = vshll.u32 %v3010, 16
      %v3304 = vrot.slane %v3302, 5
      %v3305 = vsel %vm1146, %v3300, %v3304
      %v3307 = vshrl.u32 %v3011, 16
      %v3309 = vrot.slane %v3307, 4
      %v3310 = vshll.u32 %v3011, 16
      %v3312 = vrot.slane %v3310, 5
      %v3313 = vor.u32 %v3309, %v3312
      %v3314 = vrot.slane %v3313, 4
      %v3316 = vshll.u32 %v3012, 16
      %v3318 = vrot.slane %v3316, 5
      %v3319 = vsel %vm1146, %v3314, %v3318
      %v3320 = vshrl.u32 %v3012, 16
      %v3322 = vrot.slane %v3320, 4
      %v3323 = vor.u32 %v3322, %v3318
      %v3324 = vrot.slane %v3323, 4
      %v3326 = vshll.u32 %v3013, 16
      %v3328 = vrot.slane %v3326, 5
      %v3329 = vsel %vm1146, %v3324, %v3328
      %v3331 = vshrl.u32 %v3014, 16
      %v3333 = vrot.slane %v3331, 4
      %v3334 = vshll.u32 %v3014, 16
      %v3336 = vrot.slane %v3334, 5
      %v3337 = vor.u32 %v3333, %v3336
      %v3338 = vrot.slane %v3337, 4
      %v3340 = vshll.u32 %v3015, 16
      %v3342 = vrot.slane %v3340, 5
      %v3343 = vsel %vm1146, %v3338, %v3342
      %v3344 = vshrl.u32 %v3015, 16
      %v3346 = vrot.slane %v3344, 4
      %v3347 = vor.u32 %v3346, %v3342
      %v3348 = vrot.slane %v3347, 4
      %v3350 = vshll.u32 %v3016, 16
      %v3352 = vrot.slane %v3350, 5
      %v3353 = vsel %vm1146, %v3348, %v3352
      %v3355 = vshrl.u32 %v3017, 16
      %v3357 = vrot.slane %v3355, 4
      %v3358 = vshll.u32 %v3017, 16
      %v3360 = vrot.slane %v3358, 5
      %v3361 = vor.u32 %v3357, %v3360
      %v3362 = vrot.slane %v3361, 4
      %v3364 = vshll.u32 %v3018, 16
      %v3366 = vrot.slane %v3364, 5
      %v3367 = vsel %vm1146, %v3362, %v3366
      %v3368 = vshrl.u32 %v3018, 16
      %v3370 = vrot.slane %v3368, 4
      %v3371 = vor.u32 %v3370, %v3366
      %v3372 = vrot.slane %v3371, 4
      %v3374 = vshll.u32 %v3019, 16
      %v3376 = vrot.slane %v3374, 5
      %v3377 = vsel %vm1146, %v3372, %v3376
      %v3379 = vshrl.u32 %v3020, 16
      %v3381 = vrot.slane %v3379, 4
      %v3382 = vshll.u32 %v3020, 16
      %v3384 = vrot.slane %v3382, 5
      %v3385 = vor.u32 %v3381, %v3384
      %v3386 = vrot.slane %v3385, 4
      %v3388 = vshll.u32 %v3021, 16
      %v3390 = vrot.slane %v3388, 5
      %v3391 = vsel %vm1146, %v3386, %v3390
      %v3392 = vshrl.u32 %v3021, 16
      %v3394 = vrot.slane %v3392, 4
      %v3395 = vor.u32 %v3394, %v3390
      %v3396 = vrot.slane %v3395, 4
      %v3398 = vshll.u32 %v3022, 16
      %v3400 = vrot.slane %v3398, 5
      %v3401 = vsel %vm1146, %v3396, %v3400
      %v3403 = vshrl.u32 %v3023, 16
      %v3405 = vrot.slane %v3403, 4
      %v3406 = vshll.u32 %v3023, 16
      %v3408 = vrot.slane %v3406, 5
      %v3409 = vor.u32 %v3405, %v3408
      %v3410 = vrot.slane %v3409, 4
      %v3412 = vshll.u32 %v3024, 16
      %v3414 = vrot.slane %v3412, 5
      %v3415 = vsel %vm1146, %v3410, %v3414
      %v3416 = vshrl.u32 %v3024, 16
      %v3418 = vrot.slane %v3416, 4
      %v3419 = vor.u32 %v3418, %v3414
      %v3420 = vrot.slane %v3419, 4
      %v3422 = vshll.u32 %v3025, 16
      %v3424 = vrot.slane %v3422, 5
      %v3425 = vsel %vm1146, %v3420, %v3424
      %v3426 = vunpack.c.l.b16 %v3055
      %v3427 = vunpack.c.l.b16 %v3065
      %v3428 = vunpack.c.l.b16 %v3079
      %v3429 = vunpack.c.l.b16 %v3089
      %v3430 = vunpack.c.l.b16 %v3103
      %v3431 = vunpack.c.l.b16 %v3113
      %v3432 = vunpack.c.l.b16 %v3127
      %v3433 = vunpack.c.l.b16 %v3137
      %v3434 = vunpack.c.l.b16 %v3151
      %v3435 = vunpack.c.l.b16 %v3161
      %v3436 = vunpack.c.l.b16 %v3175
      %v3437 = vunpack.c.l.b16 %v3185
      %v3438 = vunpack.c.l.b16 %v3199
      %v3439 = vunpack.c.l.b16 %v3209
      %v3440 = vunpack.c.l.b16 %v3223
      %v3441 = vunpack.c.l.b16 %v3233
      %v3442 = vunpack.c.l.b16 %v3247
      %v3443 = vunpack.c.l.b16 %v3257
      %v3444 = vunpack.c.l.b16 %v3271
      %v3445 = vunpack.c.l.b16 %v3281
      %v3446 = vunpack.c.l.b16 %v3295
      %v3447 = vunpack.c.l.b16 %v3305
      %v3448 = vunpack.c.l.b16 %v3319
      %v3449 = vunpack.c.l.b16 %v3329
      %v3450 = vunpack.c.l.b16 %v3343
      %v3451 = vunpack.c.l.b16 %v3353
      %v3452 = vunpack.c.l.b16 %v3367
      %v3453 = vunpack.c.l.b16 %v3377
      %v3454 = vunpack.c.l.b16 %v3391
      %v3455 = vunpack.c.l.b16 %v3401
      %v3456 = vunpack.c.l.b16 %v3415
      %v3457 = vunpack.c.l.b16 %v3425
      %v3458 = vpack.c.b16 %v3427, %v3426
      %v3459 = vpack.c.b16 %v3429, %v3428
      %v3460 = vpack.c.b16 %v3431, %v3430
      %v3461 = vpack.c.b16 %v3433, %v3432
      %v3462 = vpack.c.b16 %v3435, %v3434
      %v3463 = vpack.c.b16 %v3437, %v3436
      %v3464 = vpack.c.b16 %v3439, %v3438
      %v3465 = vpack.c.b16 %v3441, %v3440
      %v3466 = vpack.c.b16 %v3443, %v3442
      %v3467 = vpack.c.b16 %v3445, %v3444
      %v3468 = vpack.c.b16 %v3447, %v3446
      %v3469 = vpack.c.b16 %v3449, %v3448
      %v3470 = vpack.c.b16 %v3451, %v3450
      %v3471 = vpack.c.b16 %v3453, %v3452
      %v3472 = vpack.c.b16 %v3455, %v3454
      %v3473 = vpack.c.b16 %v3457, %v3456
      %v3506 = vunpack.c.l.b16 %v3026
      %v3507 = vunpack.c.l.b16 %v3027
      %v3508 = vunpack.c.l.b16 %v3028
      %v3509 = vunpack.c.l.b16 %v3029
      %v3510 = vunpack.c.l.b16 %v3030
      %v3511 = vunpack.c.l.b16 %v3031
      %v3512 = vunpack.c.l.b16 %v3032
      %v3513 = vunpack.c.l.b16 %v3033
      %v3514 = vunpack.c.l.b16 %v3034
      %v3515 = vunpack.c.l.b16 %v3035
      %v3516 = vunpack.c.l.b16 %v3036
      %v3517 = vunpack.c.l.b16 %v3037
      %v3518 = vunpack.c.l.b16 %v3038
      %v3519 = vunpack.c.l.b16 %v3039
      %v3520 = vunpack.c.l.b16 %v3040
      %v3521 = vunpack.c.l.b16 %v3041
      %v3522 = vpack.c.b16 %v3507, %v3506
      %v3523 = vpack.c.b16 %v3509, %v3508
      %v3524 = vpack.c.b16 %v3511, %v3510
      %v3525 = vpack.c.b16 %v3513, %v3512
      %v3526 = vpack.c.b16 %v3515, %v3514
      %v3527 = vpack.c.b16 %v3517, %v3516
      %v3528 = vpack.c.b16 %v3519, %v3518
      %v3529 = vpack.c.b16 %v3521, %v3520
      %3538 = vmatprep.subr.bf16.mxu0 0
      %3539 = vmatpush1.bf16.msra.mxu0 %v3522
      %3540 = vmatprep.subr.bf16.mxu0 0
      %3541 = vmatpush1.bf16.msra.mxu0 %v3523
      %3542 = vmatprep.subr.bf16.mxu0 0
      %3543 = vmatpush1.bf16.msra.mxu0 %v3524
      %3544 = vmatprep.subr.bf16.mxu0 0
      %3545 = vmatpush1.bf16.msra.mxu0 %v3525
      %3546 = vmatprep.subr.bf16.mxu0 0
      %3547 = vmatpush1.bf16.msra.mxu0 %v3526
      %3548 = vmatprep.subr.bf16.mxu0 0
      %3549 = vmatpush1.bf16.msra.mxu0 %v3527
      %3550 = vmatprep.subr.bf16.mxu0 0
      %3551 = vmatpush1.bf16.msra.mxu0 %v3528
      %3552 = vmatprep.subr.bf16.mxu0 0
      %3553 = vmatpush1.bf16.msra.mxu0 %v3529
      %3554 = vmatprep.subr.bf16.mxu0 0
      %3555 = vmatpush1.bf16.msra.mxu0 0
      %3556 = vmatprep.subr.bf16.mxu0 0
      %3557 = vmatpush1.bf16.msra.mxu0 0
      %3558 = vmatprep.subr.bf16.mxu0 0
      %3559 = vmatpush1.bf16.msra.mxu0 0
      %3560 = vmatprep.subr.bf16.mxu0 0
      %3561 = vmatpush1.bf16.msra.mxu0 0
      %3562 = vmatprep.subr.bf16.mxu0 0
      %3563 = vmatpush1.bf16.msra.mxu0 0
      %3564 = vmatprep.subr.bf16.mxu0 0
      %3565 = vmatpush1.bf16.msra.mxu0 0
      %3566 = vmatprep.subr.bf16.mxu0 0
      %3567 = vmatpush1.bf16.msra.mxu0 0
      %3568 = vmatprep.subr.bf16.mxu0 0
      %3569 = vmatpush1.bf16.msra.mxu0 0
      %3570 = vmatprep.mubr.bf16.mxu0 0
      %3571 = vmatmul.mubr.bf16.gmra.mrb[0].mxu0 %v3458
      %v3572 = vpop.f32.mrb[0].mxu0
      %v3573 = vadd.f32 0.0, %v3572
      %v3574 = vpop.f32.mrb[0].mxu0
      %v3575 = vpop.f32.mrb[0].mxu0
      %v3576 = vadd.f32 0.0, %v3575
      %v3577 = vpop.f32.mrb[0].mxu0
      %3578 = vmatprep.mubr.bf16.mxu0 0
      %3579 = vmatmul.mubr.bf16.gmra.mrb[0].mxu0 %v3459
      %v3580 = vpop.f32.mrb[0].mxu0
      %v3581 = vadd.f32 0.0, %v3580
      %v3582 = vpop.f32.mrb[0].mxu0
      %v3583 = vpop.f32.mrb[0].mxu0
      %v3584 = vadd.f32 0.0, %v3583
      %v3585 = vpop.f32.mrb[0].mxu0
      %3586 = vmatprep.mubr.bf16.mxu0 0
      %3587 = vmatmul.mubr.bf16.gmra.mrb[0].mxu0 %v3460
      %v3588 = vpop.f32.mrb[0].mxu0
      %v3589 = vadd.f32 0.0, %v3588
      %v3590 = vpop.f32.mrb[0].mxu0
      %v3591 = vpop.f32.mrb[0].mxu0
      %v3592 = vadd.f32 0.0, %v3591
      %v3593 = vpop.f32.mrb[0].mxu0
      %3594 = vmatprep.mubr.bf16.mxu0 0
      %3595 = vmatmul.mubr.bf16.gmra.mrb[0].mxu0 %v3461
      %v3596 = vpop.f32.mrb[0].mxu0
      %v3597 = vadd.f32 0.0, %v3596
      %v3598 = vpop.f32.mrb[0].mxu0
      %v3599 = vpop.f32.mrb[0].mxu0
      %v3600 = vadd.f32 0.0, %v3599
      %v3601 = vpop.f32.mrb[0].mxu0
      %3602 = vmatprep.mubr.bf16.mxu0 0
      %3603 = vmatmul.mubr.bf16.gmra.mrb[0].mxu0 %v3462
      %v3604 = vpop.f32.mrb[0].mxu0
      %v3605 = vadd.f32 0.0, %v3604
      %v3606 = vpop.f32.mrb[0].mxu0
      %v3607 = vpop.f32.mrb[0].mxu0
      %v3608 = vadd.f32 0.0, %v3607
      %v3609 = vpop.f32.mrb[0].mxu0
      %3610 = vmatprep.mubr.bf16.mxu0 0
      %3611 = vmatmul.mubr.bf16.gmra.mrb[0].mxu0 %v3463
      %v3612 = vpop.f32.mrb[0].mxu0
      %v3613 = vadd.f32 0.0, %v3612
      %v3614 = vpop.f32.mrb[0].mxu0
      %v3615 = vpop.f32.mrb[0].mxu0
      %v3616 = vadd.f32 0.0, %v3615
      %v3617 = vpop.f32.mrb[0].mxu0
      %3618 = vmatprep.mubr.bf16.mxu0 0
      %3619 = vmatmul.mubr.bf16.gmra.mrb[0].mxu0 %v3464
      %v3620 = vpop.f32.mrb[0].mxu0
      %v3621 = vadd.f32 0.0, %v3620
      %v3622 = vpop.f32.mrb[0].mxu0
      %v3623 = vpop.f32.mrb[0].mxu0
      %v3624 = vadd.f32 0.0, %v3623
      %v3625 = vpop.f32.mrb[0].mxu0
      %3626 = vmatprep.mubr.bf16.mxu0 0
      %3627 = vmatmul.mubr.bf16.gmra.mrb[0].mxu0 %v3465
      %v3628 = vpop.f32.mrb[0].mxu0
      %v3629 = vadd.f32 0.0, %v3628
      %v3630 = vpop.f32.mrb[0].mxu0
      %v3631 = vpop.f32.mrb[0].mxu0
      %v3632 = vadd.f32 0.0, %v3631
      %v3633 = vpop.f32.mrb[0].mxu0
      %3634 = vmatprep.mubr.bf16.mxu0 0
      %3635 = vmatmul.mubr.bf16.gmra.mrb[0].mxu0 %v3466
      %v3636 = vpop.f32.mrb[0].mxu0
      %v3637 = vadd.f32 0.0, %v3636
      %v3638 = vpop.f32.mrb[0].mxu0
      %v3639 = vpop.f32.mrb[0].mxu0
      %v3640 = vadd.f32 0.0, %v3639
      %v3641 = vpop.f32.mrb[0].mxu0
      %3642 = vmatprep.mubr.bf16.mxu0 0
      %3643 = vmatmul.mubr.bf16.gmra.mrb[0].mxu0 %v3467
      %v3644 = vpop.f32.mrb[0].mxu0
      %v3645 = vadd.f32 0.0, %v3644
      %v3646 = vpop.f32.mrb[0].mxu0
      %v3647 = vpop.f32.mrb[0].mxu0
      %v3648 = vadd.f32 0.0, %v3647
      %v3649 = vpop.f32.mrb[0].mxu0
      %3650 = vmatprep.mubr.bf16.mxu0 0
      %3651 = vmatmul.mubr.bf16.gmra.mrb[0].mxu0 %v3468
      %v3652 = vpop.f32.mrb[0].mxu0
      %v3653 = vadd.f32 0.0, %v3652
      %v3654 = vpop.f32.mrb[0].mxu0
      %v3655 = vpop.f32.mrb[0].mxu0
      %v3656 = vadd.f32 0.0, %v3655
      %v3657 = vpop.f32.mrb[0].mxu0
      %3658 = vmatprep.mubr.bf16.mxu0 0
      %3659 = vmatmul.mubr.bf16.gmra.mrb[0].mxu0 %v3469
      %v3660 = vpop.f32.mrb[0].mxu0
      %v3661 = vadd.f32 0.0, %v3660
      %v3662 = vpop.f32.mrb[0].mxu0
      %v3663 = vpop.f32.mrb[0].mxu0
      %v3664 = vadd.f32 0.0, %v3663
      %v3665 = vpop.f32.mrb[0].mxu0
      %3666 = vmatprep.mubr.bf16.mxu0 0
      %3667 = vmatmul.mubr.bf16.gmra.mrb[0].mxu0 %v3470
      %v3668 = vpop.f32.mrb[0].mxu0
      %v3669 = vadd.f32 0.0, %v3668
      %v3670 = vpop.f32.mrb[0].mxu0
      %v3671 = vpop.f32.mrb[0].mxu0
      %v3672 = vadd.f32 0.0, %v3671
      %v3673 = vpop.f32.mrb[0].mxu0
      %3674 = vmatprep.mubr.bf16.mxu0 0
      %3675 = vmatmul.mubr.bf16.gmra.mrb[0].mxu0 %v3471
      %v3676 = vpop.f32.mrb[0].mxu0
      %v3677 = vadd.f32 0.0, %v3676
      %v3678 = vpop.f32.mrb[0].mxu0
      %v3679 = vpop.f32.mrb[0].mxu0
      %v3680 = vadd.f32 0.0, %v3679
      %v3681 = vpop.f32.mrb[0].mxu0
      %3682 = vmatprep.mubr.bf16.mxu0 0
      %3683 = vmatmul.mubr.bf16.gmra.mrb[0].mxu0 %v3472
      %v3684 = vpop.f32.mrb[0].mxu0
      %v3685 = vadd.f32 0.0, %v3684
      %v3686 = vpop.f32.mrb[0].mxu0
      %v3687 = vpop.f32.mrb[0].mxu0
      %v3688 = vadd.f32 0.0, %v3687
      %v3689 = vpop.f32.mrb[0].mxu0
      %3690 = vmatprep.mubr.bf16.mxu0 0
      %3691 = vmatmul.mubr.bf16.gmra.mrb[0].mxu0 %v3473
      %v3692 = vpop.f32.mrb[0].mxu0
      %v3693 = vadd.f32 0.0, %v3692
      %v3694 = vpop.f32.mrb[0].mxu0
      %v3695 = vpop.f32.mrb[0].mxu0
      %v3696 = vadd.f32 0.0, %v3695
      %v3697 = vpop.f32.mrb[0].mxu0
      %3698 = vdwg.mxu0
      %v3699 = vadd.f32 %v2946, %v3573
      %v3700 = vadd.f32 %v2947, %v3576
      %v3701 = vadd.f32 %v2948, %v3581
      %v3702 = vadd.f32 %v2949, %v3584
      %v3703 = vadd.f32 %v2950, %v3589
      %v3704 = vadd.f32 %v2951, %v3592
      %v3705 = vadd.f32 %v2952, %v3597
      %v3706 = vadd.f32 %v2953, %v3600
      %v3707 = vadd.f32 %v2954, %v3605
      %v3708 = vadd.f32 %v2955, %v3608
      %v3709 = vadd.f32 %v2956, %v3613
      %v3710 = vadd.f32 %v2957, %v3616
      %v3711 = vadd.f32 %v2958, %v3621
      %v3712 = vadd.f32 %v2959, %v3624
      %v3713 = vadd.f32 %v2960, %v3629
      %v3714 = vadd.f32 %v2961, %v3632
      %v3715 = vadd.f32 %v2962, %v3637
      %v3716 = vadd.f32 %v2963, %v3640
      %v3717 = vadd.f32 %v2964, %v3645
      %v3718 = vadd.f32 %v2965, %v3648
      %v3719 = vadd.f32 %v2966, %v3653
      %v3720 = vadd.f32 %v2967, %v3656
      %v3721 = vadd.f32 %v2968, %v3661
      %v3722 = vadd.f32 %v2969, %v3664
      %v3723 = vadd.f32 %v2970, %v3669
      %v3724 = vadd.f32 %v2971, %v3672
      %v3725 = vadd.f32 %v2972, %v3677
      %v3726 = vadd.f32 %v2973, %v3680
      %v3727 = vadd.f32 %v2974, %v3685
      %v3728 = vadd.f32 %v2975, %v3688
      %v3729 = vadd.f32 %v2976, %v3693
      %v3730 = vadd.f32 %v2977, %v3696
      %v3731 = vld [vmem:[%s949] sm:$0xe]
      %v3732 = vld [vmem:[%s949 + $0xc] sm:$0xe]
      %v3733 = vld [vmem:[%s949 + $0x18] sm:$0xe]
      %v3734 = vld [vmem:[%s949 + $0x24] sm:$0xe]
      %v3735 = vld [vmem:[%s949 + $0x30] sm:$0xe]
      %v3736 = vld [vmem:[%s949 + $0x3c] sm:$0xe]
      %v3737 = vld [vmem:[%s949 + $0x48] sm:$0xe]
      %v3738 = vld [vmem:[%s949 + $0x54] sm:$0xe]
      %v3739 = vld [vmem:[%s949 + $0x60] sm:$0xe]
      %v3740 = vld [vmem:[%s949 + $0x6c] sm:$0xe]
      %v3741 = vld [vmem:[%s949 + $0x78] sm:$0xe]
      %v3742 = vld [vmem:[%s949 + $0x84] sm:$0xe]
      %v3743 = vld [vmem:[%s949 + $0x90] sm:$0xe]
      %v3744 = vld [vmem:[%s949 + $0x9c] sm:$0xe]
      %v3745 = vld [vmem:[%s949 + $0xa8] sm:$0xe]
      %v3746 = vld [vmem:[%s949 + $0xb4] sm:$0xe]
      %v3747 = vld [vmem:[%s1 + $0x140] sm:$0xf]
      %v3748 = vld [vmem:[%s1 + $0x144] sm:$0xf]
      %v3749 = vld [vmem:[%s1 + $0x148] sm:$0xf]
      %v3750 = vld [vmem:[%s1 + $0x14c] sm:$0xf]
      %v3751 = vld [vmem:[%s1 + $0x150] sm:$0xf]
      %v3752 = vld [vmem:[%s1 + $0x154] sm:$0xf]
      %v3753 = vld [vmem:[%s1 + $0x158] sm:$0xf]
      %v3754 = vld [vmem:[%s1 + $0x15c] sm:$0xf]
      %v3755 = vld [vmem:[%s1 + $0x160] sm:$0xf]
      %v3756 = vld [vmem:[%s1 + $0x164] sm:$0xf]
      %v3757 = vld [vmem:[%s1 + $0x168] sm:$0xf]
      %v3758 = vld [vmem:[%s1 + $0x16c] sm:$0xf]
      %v3759 = vld [vmem:[%s1 + $0x170] sm:$0xf]
      %v3760 = vld [vmem:[%s1 + $0x174] sm:$0xf]
      %v3761 = vld [vmem:[%s1 + $0x178] sm:$0xf]
      %v3762 = vld [vmem:[%s1 + $0x17c] sm:$0xf]
      %v3811 = vrot.slane %v3731, 5
      %v3812 = vrot.slane %v3811, 4
      %v3813 = vrot.slane %v2979, 5
      %v3814 = vsel %vm2175, %v3812, %v3813
      %v3815 = vrot.slane %v3813, 4
      %v3816 = vrot.slane %v2980, 5
      %v3817 = vsel %vm2175, %v3815, %v3816
      %v3818 = vrot.slane %v3732, 5
      %v3819 = vrot.slane %v3818, 4
      %v3820 = vrot.slane %v2982, 5
      %v3821 = vsel %vm2175, %v3819, %v3820
      %v3822 = vrot.slane %v3820, 4
      %v3823 = vrot.slane %v2983, 5
      %v3824 = vsel %vm2175, %v3822, %v3823
      %v3825 = vrot.slane %v3733, 5
      %v3826 = vrot.slane %v3825, 4
      %v3827 = vrot.slane %v2985, 5
      %v3828 = vsel %vm2175, %v3826, %v3827
      %v3829 = vrot.slane %v3827, 4
      %v3830 = vrot.slane %v2986, 5
      %v3831 = vsel %vm2175, %v3829, %v3830
      %v3832 = vrot.slane %v3734, 5
      %v3833 = vrot.slane %v3832, 4
      %v3834 = vrot.slane %v2988, 5
      %v3835 = vsel %vm2175, %v3833, %v3834
      %v3836 = vrot.slane %v3834, 4
      %v3837 = vrot.slane %v2989, 5
      %v3838 = vsel %vm2175, %v3836, %v3837
      %v3839 = vrot.slane %v3735, 5
      %v3840 = vrot.slane %v3839, 4
      %v3841 = vrot.slane %v2991, 5
      %v3842 = vsel %vm2175, %v3840, %v3841
      %v3843 = vrot.slane %v3841, 4
      %v3844 = vrot.slane %v2992, 5
      %v3845 = vsel %vm2175, %v3843, %v3844
      %v3846 = vrot.slane %v3736, 5
      %v3847 = vrot.slane %v3846, 4
      %v3848 = vrot.slane %v2994, 5
      %v3849 = vsel %vm2175, %v3847, %v3848
      %v3850 = vrot.slane %v3848, 4
      %v3851 = vrot.slane %v2995, 5
      %v3852 = vsel %vm2175, %v3850, %v3851
      %v3853 = vrot.slane %v3737, 5
      %v3854 = vrot.slane %v3853, 4
      %v3855 = vrot.slane %v2997, 5
      %v3856 = vsel %vm2175, %v3854, %v3855
      %v3857 = vrot.slane %v3855, 4
      %v3858 = vrot.slane %v2998, 5
      %v3859 = vsel %vm2175, %v3857, %v3858
      %v3860 = vrot.slane %v3738, 5
      %v3861 = vrot.slane %v3860, 4
      %v3862 = vrot.slane %v3000, 5
      %v3863 = vsel %vm2175, %v3861, %v3862
      %v3864 = vrot.slane %v3862, 4
      %v3865 = vrot.slane %v3001, 5
      %v3866 = vsel %vm2175, %v3864, %v3865
      %v3867 = vrot.slane %v3739, 5
      %v3868 = vrot.slane %v3867, 4
      %v3869 = vrot.slane %v3003, 5
      %v3870 = vsel %vm2175, %v3868, %v3869
      %v3871 = vrot.slane %v3869, 4
      %v3872 = vrot.slane %v3004, 5
      %v3873 = vsel %vm2175, %v3871, %v3872
      %v3874 = vrot.slane %v3740, 5
      %v3875 = vrot.slane %v3874, 4
      %v3876 = vrot.slane %v3006, 5
      %v3877 = vsel %vm2175, %v3875, %v3876
      %v3878 = vrot.slane %v3876, 4
      %v3879 = vrot.slane %v3007, 5
      %v3880 = vsel %vm2175, %v3878, %v3879
      %v3881 = vrot.slane %v3741, 5
      %v3882 = vrot.slane %v3881, 4
      %v3883 = vrot.slane %v3009, 5
      %v3884 = vsel %vm2175, %v3882, %v3883
      %v3885 = vrot.slane %v3883, 4
      %v3886 = vrot.slane %v3010, 5
      %v3887 = vsel %vm2175, %v3885, %v3886
      %v3888 = vrot.slane %v3742, 5
      %v3889 = vrot.slane %v3888, 4
      %v3890 = vrot.slane %v3012, 5
      %v3891 = vsel %vm2175, %v3889, %v3890
      %v3892 = vrot.slane %v3890, 4
      %v3893 = vrot.slane %v3013, 5
      %v3894 = vsel %vm2175, %v3892, %v3893
      %v3895 = vrot.slane %v3743, 5
      %v3896 = vrot.slane %v3895, 4
      %v3897 = vrot.slane %v3015, 5
      %v3898 = vsel %vm2175, %v3896, %v3897
      %v3899 = vrot.slane %v3897, 4
      %v3900 = vrot.slane %v3016, 5
      %v3901 = vsel %vm2175, %v3899, %v3900
      %v3902 = vrot.slane %v3744, 5
      %v3903 = vrot.slane %v3902, 4
      %v3904 = vrot.slane %v3018, 5
      %v3905 = vsel %vm2175, %v3903, %v3904
      %v3906 = vrot.slane %v3904, 4
      %v3907 = vrot.slane %v3019, 5
      %v3908 = vsel %vm2175, %v3906, %v3907
      %v3909 = vrot.slane %v3745, 5
      %v3910 = vrot.slane %v3909, 4
      %v3911 = vrot.slane %v3021, 5
      %v3912 = vsel %vm2175, %v3910, %v3911
      %v3913 = vrot.slane %v3911, 4
      %v3914 = vrot.slane %v3022, 5
      %v3915 = vsel %vm2175, %v3913, %v3914
      %v3916 = vrot.slane %v3746, 5
      %v3917 = vrot.slane %v3916, 4
      %v3918 = vrot.slane %v3024, 5
      %v3919 = vsel %vm2175, %v3917, %v3918
      %v3920 = vrot.slane %v3918, 4
      %v3921 = vrot.slane %v3025, 5
      %v3922 = vsel %vm2175, %v3920, %v3921
      %v3923 = vunpack.c.l.b16 %v3814
      %v3924 = vunpack.c.l.b16 %v3817
      %v3925 = vunpack.c.l.b16 %v3821
      %v3926 = vunpack.c.l.b16 %v3824
      %v3927 = vunpack.c.l.b16 %v3828
      %v3928 = vunpack.c.l.b16 %v3831
      %v3929 = vunpack.c.l.b16 %v3835
      %v3930 = vunpack.c.l.b16 %v3838
      %v3931 = vunpack.c.l.b16 %v3842
      %v3932 = vunpack.c.l.b16 %v3845
      %v3933 = vunpack.c.l.b16 %v3849
      %v3934 = vunpack.c.l.b16 %v3852
      %v3935 = vunpack.c.l.b16 %v3856
      %v3936 = vunpack.c.l.b16 %v3859
      %v3937 = vunpack.c.l.b16 %v3863
      %v3938 = vunpack.c.l.b16 %v3866
      %v3939 = vunpack.c.l.b16 %v3870
      %v3940 = vunpack.c.l.b16 %v3873
      %v3941 = vunpack.c.l.b16 %v3877
      %v3942 = vunpack.c.l.b16 %v3880
      %v3943 = vunpack.c.l.b16 %v3884
      %v3944 = vunpack.c.l.b16 %v3887
      %v3945 = vunpack.c.l.b16 %v3891
      %v3946 = vunpack.c.l.b16 %v3894
      %v3947 = vunpack.c.l.b16 %v3898
      %v3948 = vunpack.c.l.b16 %v3901
      %v3949 = vunpack.c.l.b16 %v3905
      %v3950 = vunpack.c.l.b16 %v3908
      %v3951 = vunpack.c.l.b16 %v3912
      %v3952 = vunpack.c.l.b16 %v3915
      %v3953 = vunpack.c.l.b16 %v3919
      %v3954 = vunpack.c.l.b16 %v3922
      %v3955 = vpack.c.b16 %v3924, %v3923
      %v3956 = vpack.c.b16 %v3926, %v3925
      %v3957 = vpack.c.b16 %v3928, %v3927
      %v3958 = vpack.c.b16 %v3930, %v3929
      %v3959 = vpack.c.b16 %v3932, %v3931
      %v3960 = vpack.c.b16 %v3934, %v3933
      %v3961 = vpack.c.b16 %v3936, %v3935
      %v3962 = vpack.c.b16 %v3938, %v3937
      %v3963 = vpack.c.b16 %v3940, %v3939
      %v3964 = vpack.c.b16 %v3942, %v3941
      %v3965 = vpack.c.b16 %v3944, %v3943
      %v3966 = vpack.c.b16 %v3946, %v3945
      %v3967 = vpack.c.b16 %v3948, %v3947
      %v3968 = vpack.c.b16 %v3950, %v3949
      %v3969 = vpack.c.b16 %v3952, %v3951
      %v3970 = vpack.c.b16 %v3954, %v3953
      %v4003 = vunpack.c.l.b16 %v3747
      %v4004 = vunpack.c.l.b16 %v3748
      %v4005 = vunpack.c.l.b16 %v3749
      %v4006 = vunpack.c.l.b16 %v3750
      %v4007 = vunpack.c.l.b16 %v3751
      %v4008 = vunpack.c.l.b16 %v3752
      %v4009 = vunpack.c.l.b16 %v3753
      %v4010 = vunpack.c.l.b16 %v3754
      %v4011 = vunpack.c.l.b16 %v3755
      %v4012 = vunpack.c.l.b16 %v3756
      %v4013 = vunpack.c.l.b16 %v3757
      %v4014 = vunpack.c.l.b16 %v3758
      %v4015 = vunpack.c.l.b16 %v3759
      %v4016 = vunpack.c.l.b16 %v3760
      %v4017 = vunpack.c.l.b16 %v3761
      %v4018 = vunpack.c.l.b16 %v3762
      %v4019 = vpack.c.b16 %v4004, %v4003
      %v4020 = vpack.c.b16 %v4006, %v4005
      %v4021 = vpack.c.b16 %v4008, %v4007
      %v4022 = vpack.c.b16 %v4010, %v4009
      %v4023 = vpack.c.b16 %v4012, %v4011
      %v4024 = vpack.c.b16 %v4014, %v4013
      %v4025 = vpack.c.b16 %v4016, %v4015
      %v4026 = vpack.c.b16 %v4018, %v4017
      %4035 = vmatprep.subr.bf16.mxu0 0
      %4036 = vmatpush1.bf16.msra.mxu0 %v4019
      %4037 = vmatprep.subr.bf16.mxu0 0
      %4038 = vmatpush1.bf16.msra.mxu0 %v4020
      %4039 = vmatprep.subr.bf16.mxu0 0
      %4040 = vmatpush1.bf16.msra.mxu0 %v4021
      %4041 = vmatprep.subr.bf16.mxu0 0
      %4042 = vmatpush1.bf16.msra.mxu0 %v4022
      %4043 = vmatprep.subr.bf16.mxu0 0
      %4044 = vmatpush1.bf16.msra.mxu0 %v4023
      %4045 = vmatprep.subr.bf16.mxu0 0
      %4046 = vmatpush1.bf16.msra.mxu0 %v4024
      %4047 = vmatprep.subr.bf16.mxu0 0
      %4048 = vmatpush1.bf16.msra.mxu0 %v4025
      %4049 = vmatprep.subr.bf16.mxu0 0
      %4050 = vmatpush1.bf16.msra.mxu0 %v4026
      %4051 = vmatprep.subr.bf16.mxu0 0
      %4052 = vmatpush1.bf16.msra.mxu0 0
      %4053 = vmatprep.subr.bf16.mxu0 0
      %4054 = vmatpush1.bf16.msra.mxu0 0
      %4055 = vmatprep.subr.bf16.mxu0 0
      %4056 = vmatpush1.bf16.msra.mxu0 0
      %4057 = vmatprep.subr.bf16.mxu0 0
      %4058 = vmatpush1.bf16.msra.mxu0 0
      %4059 = vmatprep.subr.bf16.mxu0 0
      %4060 = vmatpush1.bf16.msra.mxu0 0
      %4061 = vmatprep.subr.bf16.mxu0 0
      %4062 = vmatpush1.bf16.msra.mxu0 0
      %4063 = vmatprep.subr.bf16.mxu0 0
      %4064 = vmatpush1.bf16.msra.mxu0 0
      %4065 = vmatprep.subr.bf16.mxu0 0
      %4066 = vmatpush1.bf16.msra.mxu0 0
      %4067 = vmatprep.mubr.bf16.mxu0 0
      %4068 = vmatmul.mubr.bf16.gmra.mrb[0].mxu0 %v3955
      %v4069 = vpop.f32.mrb[0].mxu0
      %v4070 = vadd.f32 0.0, %v4069
      %v4071 = vpop.f32.mrb[0].mxu0
      %v4072 = vpop.f32.mrb[0].mxu0
      %v4073 = vadd.f32 0.0, %v4072
      %v4074 = vpop.f32.mrb[0].mxu0
      %4075 = vmatprep.mubr.bf16.mxu0 0
      %4076 = vmatmul.mubr.bf16.gmra.mrb[0].mxu0 %v3956
      %v4077 = vpop.f32.mrb[0].mxu0
      %v4078 = vadd.f32 0.0, %v4077
      %v4079 = vpop.f32.mrb[0].mxu0
      %v4080 = vpop.f32.mrb[0].mxu0
      %v4081 = vadd.f32 0.0, %v4080
      %v4082 = vpop.f32.mrb[0].mxu0
      %4083 = vmatprep.mubr.bf16.mxu0 0
      %4084 = vmatmul.mubr.bf16.gmra.mrb[0].mxu0 %v3957
      %v4085 = vpop.f32.mrb[0].mxu0
      %v4086 = vadd.f32 0.0, %v4085
      %v4087 = vpop.f32.mrb[0].mxu0
      %v4088 = vpop.f32.mrb[0].mxu0
      %v4089 = vadd.f32 0.0, %v4088
      %v4090 = vpop.f32.mrb[0].mxu0
      %4091 = vmatprep.mubr.bf16.mxu0 0
      %4092 = vmatmul.mubr.bf16.gmra.mrb[0].mxu0 %v3958
      %v4093 = vpop.f32.mrb[0].mxu0
      %v4094 = vadd.f32 0.0, %v4093
      %v4095 = vpop.f32.mrb[0].mxu0
      %v4096 = vpop.f32.mrb[0].mxu0
      %v4097 = vadd.f32 0.0, %v4096
      %v4098 = vpop.f32.mrb[0].mxu0
      %4099 = vmatprep.mubr.bf16.mxu0 0
      %4100 = vmatmul.mubr.bf16.gmra.mrb[0].mxu0 %v3959
      %v4101 = vpop.f32.mrb[0].mxu0
      %v4102 = vadd.f32 0.0, %v4101
      %v4103 = vpop.f32.mrb[0].mxu0
      %v4104 = vpop.f32.mrb[0].mxu0
      %v4105 = vadd.f32 0.0, %v4104
      %v4106 = vpop.f32.mrb[0].mxu0
      %4107 = vmatprep.mubr.bf16.mxu0 0
      %4108 = vmatmul.mubr.bf16.gmra.mrb[0].mxu0 %v3960
      %v4109 = vpop.f32.mrb[0].mxu0
      %v4110 = vadd.f32 0.0, %v4109
      %v4111 = vpop.f32.mrb[0].mxu0
      %v4112 = vpop.f32.mrb[0].mxu0
      %v4113 = vadd.f32 0.0, %v4112
      %v4114 = vpop.f32.mrb[0].mxu0
      %4115 = vmatprep.mubr.bf16.mxu0 0
      %4116 = vmatmul.mubr.bf16.gmra.mrb[0].mxu0 %v3961
      %v4117 = vpop.f32.mrb[0].mxu0
      %v4118 = vadd.f32 0.0, %v4117
      %v4119 = vpop.f32.mrb[0].mxu0
      %v4120 = vpop.f32.mrb[0].mxu0
      %v4121 = vadd.f32 0.0, %v4120
      %v4122 = vpop.f32.mrb[0].mxu0
      %4123 = vmatprep.mubr.bf16.mxu0 0
      %4124 = vmatmul.mubr.bf16.gmra.mrb[0].mxu0 %v3962
      %v4125 = vpop.f32.mrb[0].mxu0
      %v4126 = vadd.f32 0.0, %v4125
      %v4127 = vpop.f32.mrb[0].mxu0
      %v4128 = vpop.f32.mrb[0].mxu0
      %v4129 = vadd.f32 0.0, %v4128
      %v4130 = vpop.f32.mrb[0].mxu0
      %4131 = vmatprep.mubr.bf16.mxu0 0
      %4132 = vmatmul.mubr.bf16.gmra.mrb[0].mxu0 %v3963
      %v4133 = vpop.f32.mrb[0].mxu0
      %v4134 = vadd.f32 0.0, %v4133
      %v4135 = vpop.f32.mrb[0].mxu0
      %v4136 = vpop.f32.mrb[0].mxu0
      %v4137 = vadd.f32 0.0, %v4136
      %v4138 = vpop.f32.mrb[0].mxu0
      %4139 = vmatprep.mubr.bf16.mxu0 0
      %4140 = vmatmul.mubr.bf16.gmra.mrb[0].mxu0 %v3964
      %v4141 = vpop.f32.mrb[0].mxu0
      %v4142 = vadd.f32 0.0, %v4141
      %v4143 = vpop.f32.mrb[0].mxu0
      %v4144 = vpop.f32.mrb[0].mxu0
      %v4145 = vadd.f32 0.0, %v4144
      %v4146 = vpop.f32.mrb[0].mxu0
      %4147 = vmatprep.mubr.bf16.mxu0 0
      %4148 = vmatmul.mubr.bf16.gmra.mrb[0].mxu0 %v3965
      %v4149 = vpop.f32.mrb[0].mxu0
      %v4150 = vadd.f32 0.0, %v4149
      %v4151 = vpop.f32.mrb[0].mxu0
      %v4152 = vpop.f32.mrb[0].mxu0
      %v4153 = vadd.f32 0.0, %v4152
      %v4154 = vpop.f32.mrb[0].mxu0
      %4155 = vmatprep.mubr.bf16.mxu0 0
      %4156 = vmatmul.mubr.bf16.gmra.mrb[0].mxu0 %v3966
      %v4157 = vpop.f32.mrb[0].mxu0
      %v4158 = vadd.f32 0.0, %v4157
      %v4159 = vpop.f32.mrb[0].mxu0
      %v4160 = vpop.f32.mrb[0].mxu0
      %v4161 = vadd.f32 0.0, %v4160
      %v4162 = vpop.f32.mrb[0].mxu0
      %4163 = vmatprep.mubr.bf16.mxu0 0
      %4164 = vmatmul.mubr.bf16.gmra.mrb[0].mxu0 %v3967
      %v4165 = vpop.f32.mrb[0].mxu0
      %v4166 = vadd.f32 0.0, %v4165
      %v4167 = vpop.f32.mrb[0].mxu0
      %v4168 = vpop.f32.mrb[0].mxu0
      %v4169 = vadd.f32 0.0, %v4168
      %v4170 = vpop.f32.mrb[0].mxu0
      %4171 = vmatprep.mubr.bf16.mxu0 0
      %4172 = vmatmul.mubr.bf16.gmra.mrb[0].mxu0 %v3968
      %v4173 = vpop.f32.mrb[0].mxu0
      %v4174 = vadd.f32 0.0, %v4173
      %v4175 = vpop.f32.mrb[0].mxu0
      %v4176 = vpop.f32.mrb[0].mxu0
      %v4177 = vadd.f32 0.0, %v4176
      %v4178 = vpop.f32.mrb[0].mxu0
      %4179 = vmatprep.mubr.bf16.mxu0 0
      %4180 = vmatmul.mubr.bf16.gmra.mrb[0].mxu0 %v3969
      %v4181 = vpop.f32.mrb[0].mxu0
      %v4182 = vadd.f32 0.0, %v4181
      %v4183 = vpop.f32.mrb[0].mxu0
      %v4184 = vpop.f32.mrb[0].mxu0
      %v4185 = vadd.f32 0.0, %v4184
      %v4186 = vpop.f32.mrb[0].mxu0
      %4187 = vmatprep.mubr.bf16.mxu0 0
      %4188 = vmatmul.mubr.bf16.gmra.mrb[0].mxu0 %v3970
      %v4189 = vpop.f32.mrb[0].mxu0
      %v4190 = vadd.f32 0.0, %v4189
      %v4191 = vpop.f32.mrb[0].mxu0
      %v4192 = vpop.f32.mrb[0].mxu0
      %v4193 = vadd.f32 0.0, %v4192
      %v4194 = vpop.f32.mrb[0].mxu0
      %4195 = vdwg.mxu0
      %v4196 = vadd.f32 %v3699, %v4070
      %v4197 = vadd.f32 %v3700, %v4073
      %v4198 = vadd.f32 %v3701, %v4078
      %v4199 = vadd.f32 %v3702, %v4081
      %v4200 = vadd.f32 %v3703, %v4086
      %v4201 = vadd.f32 %v3704, %v4089
      %v4202 = vadd.f32 %v3705, %v4094
      %v4203 = vadd.f32 %v3706, %v4097
      %v4204 = vadd.f32 %v3707, %v4102
      %v4205 = vadd.f32 %v3708, %v4105
      %v4206 = vadd.f32 %v3709, %v4110
      %v4207 = vadd.f32 %v3710, %v4113
      %v4208 = vadd.f32 %v3711, %v4118
      %v4209 = vadd.f32 %v3712, %v4121
      %v4210 = vadd.f32 %v3713, %v4126
      %v4211 = vadd.f32 %v3714, %v4129
      %v4212 = vadd.f32 %v3715, %v4134
      %v4213 = vadd.f32 %v3716, %v4137
      %v4214 = vadd.f32 %v3717, %v4142
      %v4215 = vadd.f32 %v3718, %v4145
      %v4216 = vadd.f32 %v3719, %v4150
      %v4217 = vadd.f32 %v3720, %v4153
      %v4218 = vadd.f32 %v3721, %v4158
      %v4219 = vadd.f32 %v3722, %v4161
      %v4220 = vadd.f32 %v3723, %v4166
      %v4221 = vadd.f32 %v3724, %v4169
      %v4222 = vadd.f32 %v3725, %v4174
      %v4223 = vadd.f32 %v3726, %v4177
      %v4224 = vadd.f32 %v3727, %v4182
      %v4225 = vadd.f32 %v3728, %v4185
      %v4226 = vadd.f32 %v3729, %v4190
      %v4227 = vadd.f32 %v3730, %v4193
      %s4228 = scalar_lea.vmem [#allocation2], 24
      %v4229 = vld [vmem:[%s4228] sm:$0xf]
      %v4230 = vld [vmem:[%s4228 + $0x4] sm:$0xf]
      %v4231 = vld [vmem:[%s4228 + $0xc] sm:$0xf]
      %v4232 = vld [vmem:[%s4228 + $0x10] sm:$0xf]
      %v4233 = vld [vmem:[%s4228 + $0x18] sm:$0xf]
      %v4234 = vld [vmem:[%s4228 + $0x1c] sm:$0xf]
      %v4235 = vld [vmem:[%s4228 + $0x24] sm:$0xf]
      %v4236 = vld [vmem:[%s4228 + $0x28] sm:$0xf]
      %v4237 = vld [vmem:[%s4228 + $0x30] sm:$0xf]
      %v4238 = vld [vmem:[%s4228 + $0x34] sm:$0xf]
      %v4239 = vld [vmem:[%s4228 + $0x3c] sm:$0xf]
      %v4240 = vld [vmem:[%s4228 + $0x40] sm:$0xf]
      %v4241 = vld [vmem:[%s4228 + $0x48] sm:$0xf]
      %v4242 = vld [vmem:[%s4228 + $0x4c] sm:$0xf]
      %v4243 = vld [vmem:[%s4228 + $0x54] sm:$0xf]
      %v4244 = vld [vmem:[%s4228 + $0x58] sm:$0xf]
      %v4245 = vld [vmem:[%s4228 + $0x60] sm:$0xf]
      %v4246 = vld [vmem:[%s4228 + $0x64] sm:$0xf]
      %v4247 = vld [vmem:[%s4228 + $0x6c] sm:$0xf]
      %v4248 = vld [vmem:[%s4228 + $0x70] sm:$0xf]
      %v4249 = vld [vmem:[%s4228 + $0x78] sm:$0xf]
      %v4250 = vld [vmem:[%s4228 + $0x7c] sm:$0xf]
      %v4251 = vld [vmem:[%s4228 + $0x84] sm:$0xf]
      %v4252 = vld [vmem:[%s4228 + $0x88] sm:$0xf]
      %v4253 = vld [vmem:[%s4228 + $0x90] sm:$0xf]
      %v4254 = vld [vmem:[%s4228 + $0x94] sm:$0xf]
      %v4255 = vld [vmem:[%s4228 + $0x9c] sm:$0xf]
      %v4256 = vld [vmem:[%s4228 + $0xa0] sm:$0xf]
      %v4257 = vld [vmem:[%s4228 + $0xa8] sm:$0xf]
      %v4258 = vld [vmem:[%s4228 + $0xac] sm:$0xf]
      %v4259 = vld [vmem:[%s4228 + $0xb4] sm:$0xf]
      %v4260 = vld [vmem:[%s4228 + $0xb8] sm:$0xf]
      %v4261 = vld [vmem:[%s1 + $0x180] sm:$0xf]
      %v4262 = vld [vmem:[%s1 + $0x184] sm:$0xf]
      %v4263 = vld [vmem:[%s1 + $0x188] sm:$0xf]
      %v4264 = vld [vmem:[%s1 + $0x18c] sm:$0xf]
      %v4265 = vld [vmem:[%s1 + $0x190] sm:$0xf]
      %v4266 = vld [vmem:[%s1 + $0x194] sm:$0xf]
      %v4267 = vld [vmem:[%s1 + $0x198] sm:$0xf]
      %v4268 = vld [vmem:[%s1 + $0x19c] sm:$0xf]
      %v4269 = vld [vmem:[%s1 + $0x1a0] sm:$0xf]
      %v4270 = vld [vmem:[%s1 + $0x1a4] sm:$0xf]
      %v4271 = vld [vmem:[%s1 + $0x1a8] sm:$0xf]
      %v4272 = vld [vmem:[%s1 + $0x1ac] sm:$0xf]
      %v4273 = vld [vmem:[%s1 + $0x1b0] sm:$0xf]
      %v4274 = vld [vmem:[%s1 + $0x1b4] sm:$0xf]
      %v4275 = vld [vmem:[%s1 + $0x1b8] sm:$0xf]
      %v4276 = vld [vmem:[%s1 + $0x1bc] sm:$0xf]
      %v4309 = vunpack.c.l.b16 %v4229
      %v4310 = vunpack.c.l.b16 %v4230
      %v4311 = vunpack.c.l.b16 %v4231
      %v4312 = vunpack.c.l.b16 %v4232
      %v4313 = vunpack.c.l.b16 %v4233
      %v4314 = vunpack.c.l.b16 %v4234
      %v4315 = vunpack.c.l.b16 %v4235
      %v4316 = vunpack.c.l.b16 %v4236
      %v4317 = vunpack.c.l.b16 %v4237
      %v4318 = vunpack.c.l.b16 %v4238
      %v4319 = vunpack.c.l.b16 %v4239
      %v4320 = vunpack.c.l.b16 %v4240
      %v4321 = vunpack.c.l.b16 %v4241
      %v4322 = vunpack.c.l.b16 %v4242
      %v4323 = vunpack.c.l.b16 %v4243
      %v4324 = vunpack.c.l.b16 %v4244
      %v4325 = vunpack.c.l.b16 %v4245
      %v4326 = vunpack.c.l.b16 %v4246
      %v4327 = vunpack.c.l.b16 %v4247
      %v4328 = vunpack.c.l.b16 %v4248
      %v4329 = vunpack.c.l.b16 %v4249
      %v4330 = vunpack.c.l.b16 %v4250
      %v4331 = vunpack.c.l.b16 %v4251
      %v4332 = vunpack.c.l.b16 %v4252
      %v4333 = vunpack.c.l.b16 %v4253
      %v4334 = vunpack.c.l.b16 %v4254
      %v4335 = vunpack.c.l.b16 %v4255
      %v4336 = vunpack.c.l.b16 %v4256
      %v4337 = vunpack.c.l.b16 %v4257
      %v4338 = vunpack.c.l.b16 %v4258
      %v4339 = vunpack.c.l.b16 %v4259
      %v4340 = vunpack.c.l.b16 %v4260
      %v4341 = vpack.c.b16 %v4310, %v4309
      %v4342 = vpack.c.b16 %v4312, %v4311
      %v4343 = vpack.c.b16 %v4314, %v4313
      %v4344 = vpack.c.b16 %v4316, %v4315
      %v4345 = vpack.c.b16 %v4318, %v4317
      %v4346 = vpack.c.b16 %v4320, %v4319
      %v4347 = vpack.c.b16 %v4322, %v4321
      %v4348 = vpack.c.b16 %v4324, %v4323
      %v4349 = vpack.c.b16 %v4326, %v4325
      %v4350 = vpack.c.b16 %v4328, %v4327
      %v4351 = vpack.c.b16 %v4330, %v4329
      %v4352 = vpack.c.b16 %v4332, %v4331
      %v4353 = vpack.c.b16 %v4334, %v4333
      %v4354 = vpack.c.b16 %v4336, %v4335
      %v4355 = vpack.c.b16 %v4338, %v4337
      %v4356 = vpack.c.b16 %v4340, %v4339
      %v4389 = vunpack.c.l.b16 %v4261
      %v4390 = vunpack.c.l.b16 %v4262
      %v4391 = vunpack.c.l.b16 %v4263
      %v4392 = vunpack.c.l.b16 %v4264
      %v4393 = vunpack.c.l.b16 %v4265
      %v4394 = vunpack.c.l.b16 %v4266
      %v4395 = vunpack.c.l.b16 %v4267
      %v4396 = vunpack.c.l.b16 %v4268
      %v4397 = vunpack.c.l.b16 %v4269
      %v4398 = vunpack.c.l.b16 %v4270
      %v4399 = vunpack.c.l.b16 %v4271
      %v4400 = vunpack.c.l.b16 %v4272
      %v4401 = vunpack.c.l.b16 %v4273
      %v4402 = vunpack.c.l.b16 %v4274
      %v4403 = vunpack.c.l.b16 %v4275
      %v4404 = vunpack.c.l.b16 %v4276
      %v4405 = vpack.c.b16 %v4390, %v4389
      %v4406 = vpack.c.b16 %v4392, %v4391
      %v4407 = vpack.c.b16 %v4394, %v4393
      %v4408 = vpack.c.b16 %v4396, %v4395
      %v4409 = vpack.c.b16 %v4398, %v4397
      %v4410 = vpack.c.b16 %v4400, %v4399
      %v4411 = vpack.c.b16 %v4402, %v4401
      %v4412 = vpack.c.b16 %v4404, %v4403
      %4421 = vmatprep.subr.bf16.mxu0 0
      %4422 = vmatpush1.bf16.msra.mxu0 %v4405
      %4423 = vmatprep.subr.bf16.mxu0 0
      %4424 = vmatpush1.bf16.msra.mxu0 %v4406
      %4425 = vmatprep.subr.bf16.mxu0 0
      %4426 = vmatpush1.bf16.msra.mxu0 %v4407
      %4427 = vmatprep.subr.bf16.mxu0 0
      %4428 = vmatpush1.bf16.msra.mxu0 %v4408
      %4429 = vmatprep.subr.bf16.mxu0 0
      %4430 = vmatpush1.bf16.msra.mxu0 %v4409
      %4431 = vmatprep.subr.bf16.mxu0 0
      %4432 = vmatpush1.bf16.msra.mxu0 %v4410
      %4433 = vmatprep.subr.bf16.mxu0 0
      %4434 = vmatpush1.bf16.msra.mxu0 %v4411
      %4435 = vmatprep.subr.bf16.mxu0 0
      %4436 = vmatpush1.bf16.msra.mxu0 %v4412
      %4437 = vmatprep.subr.bf16.mxu0 0
      %4438 = vmatpush1.bf16.msra.mxu0 0
      %4439 = vmatprep.subr.bf16.mxu0 0
      %4440 = vmatpush1.bf16.msra.mxu0 0
      %4441 = vmatprep.subr.bf16.mxu0 0
      %4442 = vmatpush1.bf16.msra.mxu0 0
      %4443 = vmatprep.subr.bf16.mxu0 0
      %4444 = vmatpush1.bf16.msra.mxu0 0
      %4445 = vmatprep.subr.bf16.mxu0 0
      %4446 = vmatpush1.bf16.msra.mxu0 0
      %4447 = vmatprep.subr.bf16.mxu0 0
      %4448 = vmatpush1.bf16.msra.mxu0 0
      %4449 = vmatprep.subr.bf16.mxu0 0
      %4450 = vmatpush1.bf16.msra.mxu0 0
      %4451 = vmatprep.subr.bf16.mxu0 0
      %4452 = vmatpush1.bf16.msra.mxu0 0
      %4453 = vmatprep.mubr.bf16.mxu0 0
      %4454 = vmatmul.mubr.bf16.gmra.mrb[0].mxu0 %v4341
      %v4455 = vpop.f32.mrb[0].mxu0
      %v4456 = vadd.f32 0.0, %v4455
      %v4457 = vpop.f32.mrb[0].mxu0
      %v4458 = vpop.f32.mrb[0].mxu0
      %v4459 = vadd.f32 0.0, %v4458
      %v4460 = vpop.f32.mrb[0].mxu0
      %4461 = vmatprep.mubr.bf16.mxu0 0
      %4462 = vmatmul.mubr.bf16.gmra.mrb[0].mxu0 %v4342
      %v4463 = vpop.f32.mrb[0].mxu0
      %v4464 = vadd.f32 0.0, %v4463
      %v4465 = vpop.f32.mrb[0].mxu0
      %v4466 = vpop.f32.mrb[0].mxu0
      %v4467 = vadd.f32 0.0, %v4466
      %v4468 = vpop.f32.mrb[0].mxu0
      %4469 = vmatprep.mubr.bf16.mxu0 0
      %4470 = vmatmul.mubr.bf16.gmra.mrb[0].mxu0 %v4343
      %v4471 = vpop.f32.mrb[0].mxu0
      %v4472 = vadd.f32 0.0, %v4471
      %v4473 = vpop.f32.mrb[0].mxu0
      %v4474 = vpop.f32.mrb[0].mxu0
      %v4475 = vadd.f32 0.0, %v4474
      %v4476 = vpop.f32.mrb[0].mxu0
      %4477 = vmatprep.mubr.bf16.mxu0 0
      %4478 = vmatmul.mubr.bf16.gmra.mrb[0].mxu0 %v4344
      %v4479 = vpop.f32.mrb[0].mxu0
      %v4480 = vadd.f32 0.0, %v4479
      %v4481 = vpop.f32.mrb[0].mxu0
      %v4482 = vpop.f32.mrb[0].mxu0
      %v4483 = vadd.f32 0.0, %v4482
      %v4484 = vpop.f32.mrb[0].mxu0
      %4485 = vmatprep.mubr.bf16.mxu0 0
      %4486 = vmatmul.mubr.bf16.gmra.mrb[0].mxu0 %v4345
      %v4487 = vpop.f32.mrb[0].mxu0
      %v4488 = vadd.f32 0.0, %v4487
      %v4489 = vpop.f32.mrb[0].mxu0
      %v4490 = vpop.f32.mrb[0].mxu0
      %v4491 = vadd.f32 0.0, %v4490
      %v4492 = vpop.f32.mrb[0].mxu0
      %4493 = vmatprep.mubr.bf16.mxu0 0
      %4494 = vmatmul.mubr.bf16.gmra.mrb[0].mxu0 %v4346
      %v4495 = vpop.f32.mrb[0].mxu0
      %v4496 = vadd.f32 0.0, %v4495
      %v4497 = vpop.f32.mrb[0].mxu0
      %v4498 = vpop.f32.mrb[0].mxu0
      %v4499 = vadd.f32 0.0, %v4498
      %v4500 = vpop.f32.mrb[0].mxu0
      %4501 = vmatprep.mubr.bf16.mxu0 0
      %4502 = vmatmul.mubr.bf16.gmra.mrb[0].mxu0 %v4347
      %v4503 = vpop.f32.mrb[0].mxu0
      %v4504 = vadd.f32 0.0, %v4503
      %v4505 = vpop.f32.mrb[0].mxu0
      %v4506 = vpop.f32.mrb[0].mxu0
      %v4507 = vadd.f32 0.0, %v4506
      %v4508 = vpop.f32.mrb[0].mxu0
      %4509 = vmatprep.mubr.bf16.mxu0 0
      %4510 = vmatmul.mubr.bf16.gmra.mrb[0].mxu0 %v4348
      %v4511 = vpop.f32.mrb[0].mxu0
      %v4512 = vadd.f32 0.0, %v4511
      %v4513 = vpop.f32.mrb[0].mxu0
      %v4514 = vpop.f32.mrb[0].mxu0
      %v4515 = vadd.f32 0.0, %v4514
      %v4516 = vpop.f32.mrb[0].mxu0
      %4517 = vmatprep.mubr.bf16.mxu0 0
      %4518 = vmatmul.mubr.bf16.gmra.mrb[0].mxu0 %v4349
      %v4519 = vpop.f32.mrb[0].mxu0
      %v4520 = vadd.f32 0.0, %v4519
      %v4521 = vpop.f32.mrb[0].mxu0
      %v4522 = vpop.f32.mrb[0].mxu0
      %v4523 = vadd.f32 0.0, %v4522
      %v4524 = vpop.f32.mrb[0].mxu0
      %4525 = vmatprep.mubr.bf16.mxu0 0
      %4526 = vmatmul.mubr.bf16.gmra.mrb[0].mxu0 %v4350
      %v4527 = vpop.f32.mrb[0].mxu0
      %v4528 = vadd.f32 0.0, %v4527
      %v4529 = vpop.f32.mrb[0].mxu0
      %v4530 = vpop.f32.mrb[0].mxu0
      %v4531 = vadd.f32 0.0, %v4530
      %v4532 = vpop.f32.mrb[0].mxu0
      %4533 = vmatprep.mubr.bf16.mxu0 0
      %4534 = vmatmul.mubr.bf16.gmra.mrb[0].mxu0 %v4351
      %v4535 = vpop.f32.mrb[0].mxu0
      %v4536 = vadd.f32 0.0, %v4535
      %v4537 = vpop.f32.mrb[0].mxu0
      %v4538 = vpop.f32.mrb[0].mxu0
      %v4539 = vadd.f32 0.0, %v4538
      %v4540 = vpop.f32.mrb[0].mxu0
      %4541 = vmatprep.mubr.bf16.mxu0 0
      %4542 = vmatmul.mubr.bf16.gmra.mrb[0].mxu0 %v4352
      %v4543 = vpop.f32.mrb[0].mxu0
      %v4544 = vadd.f32 0.0, %v4543
      %v4545 = vpop.f32.mrb[0].mxu0
      %v4546 = vpop.f32.mrb[0].mxu0
      %v4547 = vadd.f32 0.0, %v4546
      %v4548 = vpop.f32.mrb[0].mxu0
      %4549 = vmatprep.mubr.bf16.mxu0 0
      %4550 = vmatmul.mubr.bf16.gmra.mrb[0].mxu0 %v4353
      %v4551 = vpop.f32.mrb[0].mxu0
      %v4552 = vadd.f32 0.0, %v4551
      %v4553 = vpop.f32.mrb[0].mxu0
      %v4554 = vpop.f32.mrb[0].mxu0
      %v4555 = vadd.f32 0.0, %v4554
      %v4556 = vpop.f32.mrb[0].mxu0
      %4557 = vmatprep.mubr.bf16.mxu0 0
      %4558 = vmatmul.mubr.bf16.gmra.mrb[0].mxu0 %v4354
      %v4559 = vpop.f32.mrb[0].mxu0
      %v4560 = vadd.f32 0.0, %v4559
      %v4561 = vpop.f32.mrb[0].mxu0
      %v4562 = vpop.f32.mrb[0].mxu0
      %v4563 = vadd.f32 0.0, %v4562
      %v4564 = vpop.f32.mrb[0].mxu0
      %4565 = vmatprep.mubr.bf16.mxu0 0
      %4566 = vmatmul.mubr.bf16.gmra.mrb[0].mxu0 %v4355
      %v4567 = vpop.f32.mrb[0].mxu0
      %v4568 = vadd.f32 0.0, %v4567
      %v4569 = vpop.f32.mrb[0].mxu0
      %v4570 = vpop.f32.mrb[0].mxu0
      %v4571 = vadd.f32 0.0, %v4570
      %v4572 = vpop.f32.mrb[0].mxu0
      %4573 = vmatprep.mubr.bf16.mxu0 0
      %4574 = vmatmul.mubr.bf16.gmra.mrb[0].mxu0 %v4356
      %v4575 = vpop.f32.mrb[0].mxu0
      %v4576 = vadd.f32 0.0, %v4575
      %v4577 = vpop.f32.mrb[0].mxu0
      %v4578 = vpop.f32.mrb[0].mxu0
      %v4579 = vadd.f32 0.0, %v4578
      %v4580 = vpop.f32.mrb[0].mxu0
      %4581 = vdwg.mxu0
      %v4582 = vadd.f32 %v4196, %v4456
      %v4583 = vadd.f32 %v4197, %v4459
      %v4584 = vadd.f32 %v4198, %v4464
      %v4585 = vadd.f32 %v4199, %v4467
      %v4586 = vadd.f32 %v4200, %v4472
      %v4587 = vadd.f32 %v4201, %v4475
      %v4588 = vadd.f32 %v4202, %v4480
      %v4589 = vadd.f32 %v4203, %v4483
      %v4590 = vadd.f32 %v4204, %v4488
      %v4591 = vadd.f32 %v4205, %v4491
      %v4592 = vadd.f32 %v4206, %v4496
      %v4593 = vadd.f32 %v4207, %v4499
      %v4594 = vadd.f32 %v4208, %v4504
      %v4595 = vadd.f32 %v4209, %v4507
      %v4596 = vadd.f32 %v4210, %v4512
      %v4597 = vadd.f32 %v4211, %v4515
      %v4598 = vadd.f32 %v4212, %v4520
      %v4599 = vadd.f32 %v4213, %v4523
      %v4600 = vadd.f32 %v4214, %v4528
      %v4601 = vadd.f32 %v4215, %v4531
      %v4602 = vadd.f32 %v4216, %v4536
      %v4603 = vadd.f32 %v4217, %v4539
      %v4604 = vadd.f32 %v4218, %v4544
      %v4605 = vadd.f32 %v4219, %v4547
      %v4606 = vadd.f32 %v4220, %v4552
      %v4607 = vadd.f32 %v4221, %v4555
      %v4608 = vadd.f32 %v4222, %v4560
      %v4609 = vadd.f32 %v4223, %v4563
      %v4610 = vadd.f32 %v4224, %v4568
      %v4611 = vadd.f32 %v4225, %v4571
      %v4612 = vadd.f32 %v4226, %v4576
      %v4613 = vadd.f32 %v4227, %v4579
      %v4614 = vld [vmem:[%s4228] sm:$0xf]
      %v4615 = vld [vmem:[%s4228 + $0x4] sm:$0xf]
      %v4616 = vld [vmem:[%s4228 + $0x8] sm:$0x1]
      %v4617 = vld [vmem:[%s4228 + $0xc] sm:$0xf]
      %v4618 = vld [vmem:[%s4228 + $0x10] sm:$0xf]
      %v4619 = vld [vmem:[%s4228 + $0x14] sm:$0x1]
      %v4620 = vld [vmem:[%s4228 + $0x18] sm:$0xf]
      %v4621 = vld [vmem:[%s4228 + $0x1c] sm:$0xf]
      %v4622 = vld [vmem:[%s4228 + $0x20] sm:$0x1]
      %v4623 = vld [vmem:[%s4228 + $0x24] sm:$0xf]
      %v4624 = vld [vmem:[%s4228 + $0x28] sm:$0xf]
      %v4625 = vld [vmem:[%s4228 + $0x2c] sm:$0x1]
      %v4626 = vld [vmem:[%s4228 + $0x30] sm:$0xf]
      %v4627 = vld [vmem:[%s4228 + $0x34] sm:$0xf]
      %v4628 = vld [vmem:[%s4228 + $0x38] sm:$0x1]
      %v4629 = vld [vmem:[%s4228 + $0x3c] sm:$0xf]
      %v4630 = vld [vmem:[%s4228 + $0x40] sm:$0xf]
      %v4631 = vld [vmem:[%s4228 + $0x44] sm:$0x1]
      %v4632 = vld [vmem:[%s4228 + $0x48] sm:$0xf]
      %v4633 = vld [vmem:[%s4228 + $0x4c] sm:$0xf]
      %v4634 = vld [vmem:[%s4228 + $0x50] sm:$0x1]
      %v4635 = vld [vmem:[%s4228 + $0x54] sm:$0xf]
      %v4636 = vld [vmem:[%s4228 + $0x58] sm:$0xf]
      %v4637 = vld [vmem:[%s4228 + $0x5c] sm:$0x1]
      %v4638 = vld [vmem:[%s4228 + $0x60] sm:$0xf]
      %v4639 = vld [vmem:[%s4228 + $0x64] sm:$0xf]
      %v4640 = vld [vmem:[%s4228 + $0x68] sm:$0x1]
      %v4641 = vld [vmem:[%s4228 + $0x6c] sm:$0xf]
      %v4642 = vld [vmem:[%s4228 + $0x70] sm:$0xf]
      %v4643 = vld [vmem:[%s4228 + $0x74] sm:$0x1]
      %v4644 = vld [vmem:[%s4228 + $0x78] sm:$0xf]
      %v4645 = vld [vmem:[%s4228 + $0x7c] sm:$0xf]
      %v4646 = vld [vmem:[%s4228 + $0x80] sm:$0x1]
      %v4647 = vld [vmem:[%s4228 + $0x84] sm:$0xf]
      %v4648 = vld [vmem:[%s4228 + $0x88] sm:$0xf]
      %v4649 = vld [vmem:[%s4228 + $0x8c] sm:$0x1]
      %v4650 = vld [vmem:[%s4228 + $0x90] sm:$0xf]
      %v4651 = vld [vmem:[%s4228 + $0x94] sm:$0xf]
      %v4652 = vld [vmem:[%s4228 + $0x98] sm:$0x1]
      %v4653 = vld [vmem:[%s4228 + $0x9c] sm:$0xf]
      %v4654 = vld [vmem:[%s4228 + $0xa0] sm:$0xf]
      %v4655 = vld [vmem:[%s4228 + $0xa4] sm:$0x1]
      %v4656 = vld [vmem:[%s4228 + $0xa8] sm:$0xf]
      %v4657 = vld [vmem:[%s4228 + $0xac] sm:$0xf]
      %v4658 = vld [vmem:[%s4228 + $0xb0] sm:$0x1]
      %v4659 = vld [vmem:[%s4228 + $0xb4] sm:$0xf]
      %v4660 = vld [vmem:[%s4228 + $0xb8] sm:$0xf]
      %v4661 = vld [vmem:[%s4228 + $0xbc] sm:$0x1]
      %v4662 = vld [vmem:[%s1 + $0x1c0] sm:$0xf]
      %v4663 = vld [vmem:[%s1 + $0x1c4] sm:$0xf]
      %v4664 = vld [vmem:[%s1 + $0x1c8] sm:$0xf]
      %v4665 = vld [vmem:[%s1 + $0x1cc] sm:$0xf]
      %v4666 = vld [vmem:[%s1 + $0x1d0] sm:$0xf]
      %v4667 = vld [vmem:[%s1 + $0x1d4] sm:$0xf]
      %v4668 = vld [vmem:[%s1 + $0x1d8] sm:$0xf]
      %v4669 = vld [vmem:[%s1 + $0x1dc] sm:$0xf]
      %v4670 = vld [vmem:[%s1 + $0x1e0] sm:$0xf]
      %v4671 = vld [vmem:[%s1 + $0x1e4] sm:$0xf]
      %v4672 = vld [vmem:[%s1 + $0x1e8] sm:$0xf]
      %v4673 = vld [vmem:[%s1 + $0x1ec] sm:$0xf]
      %v4674 = vld [vmem:[%s1 + $0x1f0] sm:$0xf]
      %v4675 = vld [vmem:[%s1 + $0x1f4] sm:$0xf]
      %v4676 = vld [vmem:[%s1 + $0x1f8] sm:$0xf]
      %v4677 = vld [vmem:[%s1 + $0x1fc] sm:$0xf]
      %v4679 = vshrl.u32 %v4614, 16
      %v4681 = vrot.slane %v4679, 4
      %v4682 = vshll.u32 %v4614, 16
      %v4684 = vrot.slane %v4682, 5
      %v4685 = vor.u32 %v4681, %v4684
      %v4686 = vrot.slane %v4685, 4
      %v4688 = vshll.u32 %v4615, 16
      %v4690 = vrot.slane %v4688, 5
      %v4691 = vsel %vm1146, %v4686, %v4690
      %v4692 = vshrl.u32 %v4615, 16
      %v4694 = vrot.slane %v4692, 4
      %v4695 = vor.u32 %v4694, %v4690
      %v4696 = vrot.slane %v4695, 4
      %v4698 = vshll.u32 %v4616, 16
      %v4700 = vrot.slane %v4698, 5
      %v4701 = vsel %vm1146, %v4696, %v4700
      %v4703 = vshrl.u32 %v4617, 16
      %v4705 = vrot.slane %v4703, 4
      %v4706 = vshll.u32 %v4617, 16
      %v4708 = vrot.slane %v4706, 5
      %v4709 = vor.u32 %v4705, %v4708
      %v4710 = vrot.slane %v4709, 4
      %v4712 = vshll.u32 %v4618, 16
      %v4714 = vrot.slane %v4712, 5
      %v4715 = vsel %vm1146, %v4710, %v4714
      %v4716 = vshrl.u32 %v4618, 16
      %v4718 = vrot.slane %v4716, 4
      %v4719 = vor.u32 %v4718, %v4714
      %v4720 = vrot.slane %v4719, 4
      %v4722 = vshll.u32 %v4619, 16
      %v4724 = vrot.slane %v4722, 5
      %v4725 = vsel %vm1146, %v4720, %v4724
      %v4727 = vshrl.u32 %v4620, 16
      %v4729 = vrot.slane %v4727, 4
      %v4730 = vshll.u32 %v4620, 16
      %v4732 = vrot.slane %v4730, 5
      %v4733 = vor.u32 %v4729, %v4732
      %v4734 = vrot.slane %v4733, 4
      %v4736 = vshll.u32 %v4621, 16
      %v4738 = vrot.slane %v4736, 5
      %v4739 = vsel %vm1146, %v4734, %v4738
      %v4740 = vshrl.u32 %v4621, 16
      %v4742 = vrot.slane %v4740, 4
      %v4743 = vor.u32 %v4742, %v4738
      %v4744 = vrot.slane %v4743, 4
      %v4746 = vshll.u32 %v4622, 16
      %v4748 = vrot.slane %v4746, 5
      %v4749 = vsel %vm1146, %v4744, %v4748
      %v4751 = vshrl.u32 %v4623, 16
      %v4753 = vrot.slane %v4751, 4
      %v4754 = vshll.u32 %v4623, 16
      %v4756 = vrot.slane %v4754, 5
      %v4757 = vor.u32 %v4753, %v4756
      %v4758 = vrot.slane %v4757, 4
      %v4760 = vshll.u32 %v4624, 16
      %v4762 = vrot.slane %v4760, 5
      %v4763 = vsel %vm1146, %v4758, %v4762
      %v4764 = vshrl.u32 %v4624, 16
      %v4766 = vrot.slane %v4764, 4
      %v4767 = vor.u32 %v4766, %v4762
      %v4768 = vrot.slane %v4767, 4
      %v4770 = vshll.u32 %v4625, 16
      %v4772 = vrot.slane %v4770, 5
      %v4773 = vsel %vm1146, %v4768, %v4772
      %v4775 = vshrl.u32 %v4626, 16
      %v4777 = vrot.slane %v4775, 4
      %v4778 = vshll.u32 %v4626, 16
      %v4780 = vrot.slane %v4778, 5
      %v4781 = vor.u32 %v4777, %v4780
      %v4782 = vrot.slane %v4781, 4
      %v4784 = vshll.u32 %v4627, 16
      %v4786 = vrot.slane %v4784, 5
      %v4787 = vsel %vm1146, %v4782, %v4786
      %v4788 = vshrl.u32 %v4627, 16
      %v4790 = vrot.slane %v4788, 4
      %v4791 = vor.u32 %v4790, %v4786
      %v4792 = vrot.slane %v4791, 4
      %v4794 = vshll.u32 %v4628, 16
      %v4796 = vrot.slane %v4794, 5
      %v4797 = vsel %vm1146, %v4792, %v4796
      %v4799 = vshrl.u32 %v4629, 16
      %v4801 = vrot.slane %v4799, 4
      %v4802 = vshll.u32 %v4629, 16
      %v4804 = vrot.slane %v4802, 5
      %v4805 = vor.u32 %v4801, %v4804
      %v4806 = vrot.slane %v4805, 4
      %v4808 = vshll.u32 %v4630, 16
      %v4810 = vrot.slane %v4808, 5
      %v4811 = vsel %vm1146, %v4806, %v4810
      %v4812 = vshrl.u32 %v4630, 16
      %v4814 = vrot.slane %v4812, 4
      %v4815 = vor.u32 %v4814, %v4810
      %v4816 = vrot.slane %v4815, 4
      %v4818 = vshll.u32 %v4631, 16
      %v4820 = vrot.slane %v4818, 5
      %v4821 = vsel %vm1146, %v4816, %v4820
      %v4823 = vshrl.u32 %v4632, 16
      %v4825 = vrot.slane %v4823, 4
      %v4826 = vshll.u32 %v4632, 16
      %v4828 = vrot.slane %v4826, 5
      %v4829 = vor.u32 %v4825, %v4828
      %v4830 = vrot.slane %v4829, 4
      %v4832 = vshll.u32 %v4633, 16
      %v4834 = vrot.slane %v4832, 5
      %v4835 = vsel %vm1146, %v4830, %v4834
      %v4836 = vshrl.u32 %v4633, 16
      %v4838 = vrot.slane %v4836, 4
      %v4839 = vor.u32 %v4838, %v4834
      %v4840 = vrot.slane %v4839, 4
      %v4842 = vshll.u32 %v4634, 16
      %v4844 = vrot.slane %v4842, 5
      %v4845 = vsel %vm1146, %v4840, %v4844
      %v4847 = vshrl.u32 %v4635, 16
      %v4849 = vrot.slane %v4847, 4
      %v4850 = vshll.u32 %v4635, 16
      %v4852 = vrot.slane %v4850, 5
      %v4853 = vor.u32 %v4849, %v4852
      %v4854 = vrot.slane %v4853, 4
      %v4856 = vshll.u32 %v4636, 16
      %v4858 = vrot.slane %v4856, 5
      %v4859 = vsel %vm1146, %v4854, %v4858
      %v4860 = vshrl.u32 %v4636, 16
      %v4862 = vrot.slane %v4860, 4
      %v4863 = vor.u32 %v4862, %v4858
      %v4864 = vrot.slane %v4863, 4
      %v4866 = vshll.u32 %v4637, 16
      %v4868 = vrot.slane %v4866, 5
      %v4869 = vsel %vm1146, %v4864, %v4868
      %v4871 = vshrl.u32 %v4638, 16
      %v4873 = vrot.slane %v4871, 4
      %v4874 = vshll.u32 %v4638, 16
      %v4876 = vrot.slane %v4874, 5
      %v4877 = vor.u32 %v4873, %v4876
      %v4878 = vrot.slane %v4877, 4
      %v4880 = vshll.u32 %v4639, 16
      %v4882 = vrot.slane %v4880, 5
      %v4883 = vsel %vm1146, %v4878, %v4882
      %v4884 = vshrl.u32 %v4639, 16
      %v4886 = vrot.slane %v4884, 4
      %v4887 = vor.u32 %v4886, %v4882
      %v4888 = vrot.slane %v4887, 4
      %v4890 = vshll.u32 %v4640, 16
      %v4892 = vrot.slane %v4890, 5
      %v4893 = vsel %vm1146, %v4888, %v4892
      %v4895 = vshrl.u32 %v4641, 16
      %v4897 = vrot.slane %v4895, 4
      %v4898 = vshll.u32 %v4641, 16
      %v4900 = vrot.slane %v4898, 5
      %v4901 = vor.u32 %v4897, %v4900
      %v4902 = vrot.slane %v4901, 4
      %v4904 = vshll.u32 %v4642, 16
      %v4906 = vrot.slane %v4904, 5
      %v4907 = vsel %vm1146, %v4902, %v4906
      %v4908 = vshrl.u32 %v4642, 16
      %v4910 = vrot.slane %v4908, 4
      %v4911 = vor.u32 %v4910, %v4906
      %v4912 = vrot.slane %v4911, 4
      %v4914 = vshll.u32 %v4643, 16
      %v4916 = vrot.slane %v4914, 5
      %v4917 = vsel %vm1146, %v4912, %v4916
      %v4919 = vshrl.u32 %v4644, 16
      %v4921 = vrot.slane %v4919, 4
      %v4922 = vshll.u32 %v4644, 16
      %v4924 = vrot.slane %v4922, 5
      %v4925 = vor.u32 %v4921, %v4924
      %v4926 = vrot.slane %v4925, 4
      %v4928 = vshll.u32 %v4645, 16
      %v4930 = vrot.slane %v4928, 5
      %v4931 = vsel %vm1146, %v4926, %v4930
      %v4932 = vshrl.u32 %v4645, 16
      %v4934 = vrot.slane %v4932, 4
      %v4935 = vor.u32 %v4934, %v4930
      %v4936 = vrot.slane %v4935, 4
      %v4938 = vshll.u32 %v4646, 16
      %v4940 = vrot.slane %v4938, 5
      %v4941 = vsel %vm1146, %v4936, %v4940
      %v4943 = vshrl.u32 %v4647, 16
      %v4945 = vrot.slane %v4943, 4
      %v4946 = vshll.u32 %v4647, 16
      %v4948 = vrot.slane %v4946, 5
      %v4949 = vor.u32 %v4945, %v4948
      %v4950 = vrot.slane %v4949, 4
      %v4952 = vshll.u32 %v4648, 16
      %v4954 = vrot.slane %v4952, 5
      %v4955 = vsel %vm1146, %v4950, %v4954
      %v4956 = vshrl.u32 %v4648, 16
      %v4958 = vrot.slane %v4956, 4
      %v4959 = vor.u32 %v4958, %v4954
      %v4960 = vrot.slane %v4959, 4
      %v4962 = vshll.u32 %v4649, 16
      %v4964 = vrot.slane %v4962, 5
      %v4965 = vsel %vm1146, %v4960, %v4964
      %v4967 = vshrl.u32 %v4650, 16
      %v4969 = vrot.slane %v4967, 4
      %v4970 = vshll.u32 %v4650, 16
      %v4972 = vrot.slane %v4970, 5
      %v4973 = vor.u32 %v4969, %v4972
      %v4974 = vrot.slane %v4973, 4
      %v4976 = vshll.u32 %v4651, 16
      %v4978 = vrot.slane %v4976, 5
      %v4979 = vsel %vm1146, %v4974, %v4978
      %v4980 = vshrl.u32 %v4651, 16
      %v4982 = vrot.slane %v4980, 4
      %v4983 = vor.u32 %v4982, %v4978
      %v4984 = vrot.slane %v4983, 4
      %v4986 = vshll.u32 %v4652, 16
      %v4988 = vrot.slane %v4986, 5
      %v4989 = vsel %vm1146, %v4984, %v4988
      %v4991 = vshrl.u32 %v4653, 16
      %v4993 = vrot.slane %v4991, 4
      %v4994 = vshll.u32 %v4653, 16
      %v4996 = vrot.slane %v4994, 5
      %v4997 = vor.u32 %v4993, %v4996
      %v4998 = vrot.slane %v4997, 4
      %v5000 = vshll.u32 %v4654, 16
      %v5002 = vrot.slane %v5000, 5
      %v5003 = vsel %vm1146, %v4998, %v5002
      %v5004 = vshrl.u32 %v4654, 16
      %v5006 = vrot.slane %v5004, 4
      %v5007 = vor.u32 %v5006, %v5002
      %v5008 = vrot.slane %v5007, 4
      %v5010 = vshll.u32 %v4655, 16
      %v5012 = vrot.slane %v5010, 5
      %v5013 = vsel %vm1146, %v5008, %v5012
      %v5015 = vshrl.u32 %v4656, 16
      %v5017 = vrot.slane %v5015, 4
      %v5018 = vshll.u32 %v4656, 16
      %v5020 = vrot.slane %v5018, 5
      %v5021 = vor.u32 %v5017, %v5020
      %v5022 = vrot.slane %v5021, 4
      %v5024 = vshll.u32 %v4657, 16
      %v5026 = vrot.slane %v5024, 5
      %v5027 = vsel %vm1146, %v5022, %v5026
      %v5028 = vshrl.u32 %v4657, 16
      %v5030 = vrot.slane %v5028, 4
      %v5031 = vor.u32 %v5030, %v5026
      %v5032 = vrot.slane %v5031, 4
      %v5034 = vshll.u32 %v4658, 16
      %v5036 = vrot.slane %v5034, 5
      %v5037 = vsel %vm1146, %v5032, %v5036
      %v5039 = vshrl.u32 %v4659, 16
      %v5041 = vrot.slane %v5039, 4
      %v5042 = vshll.u32 %v4659, 16
      %v5044 = vrot.slane %v5042, 5
      %v5045 = vor.u32 %v5041, %v5044
      %v5046 = vrot.slane %v5045, 4
      %v5048 = vshll.u32 %v4660, 16
      %v5050 = vrot.slane %v5048, 5
      %v5051 = vsel %vm1146, %v5046, %v5050
      %v5052 = vshrl.u32 %v4660, 16
      %v5054 = vrot.slane %v5052, 4
      %v5055 = vor.u32 %v5054, %v5050
      %v5056 = vrot.slane %v5055, 4
      %v5058 = vshll.u32 %v4661, 16
      %v5060 = vrot.slane %v5058, 5
      %v5061 = vsel %vm1146, %v5056, %v5060
      %v5062 = vunpack.c.l.b16 %v4691
      %v5063 = vunpack.c.l.b16 %v4701
      %v5064 = vunpack.c.l.b16 %v4715
      %v5065 = vunpack.c.l.b16 %v4725
      %v5066 = vunpack.c.l.b16 %v4739
      %v5067 = vunpack.c.l.b16 %v4749
      %v5068 = vunpack.c.l.b16 %v4763
      %v5069 = vunpack.c.l.b16 %v4773
      %v5070 = vunpack.c.l.b16 %v4787
      %v5071 = vunpack.c.l.b16 %v4797
      %v5072 = vunpack.c.l.b16 %v4811
      %v5073 = vunpack.c.l.b16 %v4821
      %v5074 = vunpack.c.l.b16 %v4835
      %v5075 = vunpack.c.l.b16 %v4845
      %v5076 = vunpack.c.l.b16 %v4859
      %v5077 = vunpack.c.l.b16 %v4869
      %v5078 = vunpack.c.l.b16 %v4883
      %v5079 = vunpack.c.l.b16 %v4893
      %v5080 = vunpack.c.l.b16 %v4907
      %v5081 = vunpack.c.l.b16 %v4917
      %v5082 = vunpack.c.l.b16 %v4931
      %v5083 = vunpack.c.l.b16 %v4941
      %v5084 = vunpack.c.l.b16 %v4955
      %v5085 = vunpack.c.l.b16 %v4965
      %v5086 = vunpack.c.l.b16 %v4979
      %v5087 = vunpack.c.l.b16 %v4989
      %v5088 = vunpack.c.l.b16 %v5003
      %v5089 = vunpack.c.l.b16 %v5013
      %v5090 = vunpack.c.l.b16 %v5027
      %v5091 = vunpack.c.l.b16 %v5037
      %v5092 = vunpack.c.l.b16 %v5051
      %v5093 = vunpack.c.l.b16 %v5061
      %v5094 = vpack.c.b16 %v5063, %v5062
      %v5095 = vpack.c.b16 %v5065, %v5064
      %v5096 = vpack.c.b16 %v5067, %v5066
      %v5097 = vpack.c.b16 %v5069, %v5068
      %v5098 = vpack.c.b16 %v5071, %v5070
      %v5099 = vpack.c.b16 %v5073, %v5072
      %v5100 = vpack.c.b16 %v5075, %v5074
      %v5101 = vpack.c.b16 %v5077, %v5076
      %v5102 = vpack.c.b16 %v5079, %v5078
      %v5103 = vpack.c.b16 %v5081, %v5080
      %v5104 = vpack.c.b16 %v5083, %v5082
      %v5105 = vpack.c.b16 %v5085, %v5084
      %v5106 = vpack.c.b16 %v5087, %v5086
      %v5107 = vpack.c.b16 %v5089, %v5088
      %v5108 = vpack.c.b16 %v5091, %v5090
      %v5109 = vpack.c.b16 %v5093, %v5092
      %v5142 = vunpack.c.l.b16 %v4662
      %v5143 = vunpack.c.l.b16 %v4663
      %v5144 = vunpack.c.l.b16 %v4664
      %v5145 = vunpack.c.l.b16 %v4665
      %v5146 = vunpack.c.l.b16 %v4666
      %v5147 = vunpack.c.l.b16 %v4667
      %v5148 = vunpack.c.l.b16 %v4668
      %v5149 = vunpack.c.l.b16 %v4669
      %v5150 = vunpack.c.l.b16 %v4670
      %v5151 = vunpack.c.l.b16 %v4671
      %v5152 = vunpack.c.l.b16 %v4672
      %v5153 = vunpack.c.l.b16 %v4673
      %v5154 = vunpack.c.l.b16 %v4674
      %v5155 = vunpack.c.l.b16 %v4675
      %v5156 = vunpack.c.l.b16 %v4676
      %v5157 = vunpack.c.l.b16 %v4677
      %v5158 = vpack.c.b16 %v5143, %v5142
      %v5159 = vpack.c.b16 %v5145, %v5144
      %v5160 = vpack.c.b16 %v5147, %v5146
      %v5161 = vpack.c.b16 %v5149, %v5148
      %v5162 = vpack.c.b16 %v5151, %v5150
      %v5163 = vpack.c.b16 %v5153, %v5152
      %v5164 = vpack.c.b16 %v5155, %v5154
      %v5165 = vpack.c.b16 %v5157, %v5156
      %5174 = vmatprep.subr.bf16.mxu0 0
      %5175 = vmatpush1.bf16.msra.mxu0 %v5158
      %5176 = vmatprep.subr.bf16.mxu0 0
      %5177 = vmatpush1.bf16.msra.mxu0 %v5159
      %5178 = vmatprep.subr.bf16.mxu0 0
      %5179 = vmatpush1.bf16.msra.mxu0 %v5160
      %5180 = vmatprep.subr.bf16.mxu0 0
      %5181 = vmatpush1.bf16.msra.mxu0 %v5161
      %5182 = vmatprep.subr.bf16.mxu0 0
      %5183 = vmatpush1.bf16.msra.mxu0 %v5162
      %5184 = vmatprep.subr.bf16.mxu0 0
      %5185 = vmatpush1.bf16.msra.mxu0 %v5163
      %5186 = vmatprep.subr.bf16.mxu0 0
      %5187 = vmatpush1.bf16.msra.mxu0 %v5164
      %5188 = vmatprep.subr.bf16.mxu0 0
      %5189 = vmatpush1.bf16.msra.mxu0 %v5165
      %5190 = vmatprep.subr.bf16.mxu0 0
      %5191 = vmatpush1.bf16.msra.mxu0 0
      %5192 = vmatprep.subr.bf16.mxu0 0
      %5193 = vmatpush1.bf16.msra.mxu0 0
      %5194 = vmatprep.subr.bf16.mxu0 0
      %5195 = vmatpush1.bf16.msra.mxu0 0
      %5196 = vmatprep.subr.bf16.mxu0 0
      %5197 = vmatpush1.bf16.msra.mxu0 0
      %5198 = vmatprep.subr.bf16.mxu0 0
      %5199 = vmatpush1.bf16.msra.mxu0 0
      %5200 = vmatprep.subr.bf16.mxu0 0
      %5201 = vmatpush1.bf16.msra.mxu0 0
      %5202 = vmatprep.subr.bf16.mxu0 0
      %5203 = vmatpush1.bf16.msra.mxu0 0
      %5204 = vmatprep.subr.bf16.mxu0 0
      %5205 = vmatpush1.bf16.msra.mxu0 0
      %5206 = vmatprep.mubr.bf16.mxu0 0
      %5207 = vmatmul.mubr.bf16.gmra.mrb[0].mxu0 %v5094
      %v5208 = vpop.f32.mrb[0].mxu0
      %v5209 = vadd.f32 0.0, %v5208
      %v5210 = vpop.f32.mrb[0].mxu0
      %v5211 = vpop.f32.mrb[0].mxu0
      %v5212 = vadd.f32 0.0, %v5211
      %v5213 = vpop.f32.mrb[0].mxu0
      %5214 = vmatprep.mubr.bf16.mxu0 0
      %5215 = vmatmul.mubr.bf16.gmra.mrb[0].mxu0 %v5095
      %v5216 = vpop.f32.mrb[0].mxu0
      %v5217 = vadd.f32 0.0, %v5216
      %v5218 = vpop.f32.mrb[0].mxu0
      %v5219 = vpop.f32.mrb[0].mxu0
      %v5220 = vadd.f32 0.0, %v5219
      %v5221 = vpop.f32.mrb[0].mxu0
      %5222 = vmatprep.mubr.bf16.mxu0 0
      %5223 = vmatmul.mubr.bf16.gmra.mrb[0].mxu0 %v5096
      %v5224 = vpop.f32.mrb[0].mxu0
      %v5225 = vadd.f32 0.0, %v5224
      %v5226 = vpop.f32.mrb[0].mxu0
      %v5227 = vpop.f32.mrb[0].mxu0
      %v5228 = vadd.f32 0.0, %v5227
      %v5229 = vpop.f32.mrb[0].mxu0
      %5230 = vmatprep.mubr.bf16.mxu0 0
      %5231 = vmatmul.mubr.bf16.gmra.mrb[0].mxu0 %v5097
      %v5232 = vpop.f32.mrb[0].mxu0
      %v5233 = vadd.f32 0.0, %v5232
      %v5234 = vpop.f32.mrb[0].mxu0
      %v5235 = vpop.f32.mrb[0].mxu0
      %v5236 = vadd.f32 0.0, %v5235
      %v5237 = vpop.f32.mrb[0].mxu0
      %5238 = vmatprep.mubr.bf16.mxu0 0
      %5239 = vmatmul.mubr.bf16.gmra.mrb[0].mxu0 %v5098
      %v5240 = vpop.f32.mrb[0].mxu0
      %v5241 = vadd.f32 0.0, %v5240
      %v5242 = vpop.f32.mrb[0].mxu0
      %v5243 = vpop.f32.mrb[0].mxu0
      %v5244 = vadd.f32 0.0, %v5243
      %v5245 = vpop.f32.mrb[0].mxu0
      %5246 = vmatprep.mubr.bf16.mxu0 0
      %5247 = vmatmul.mubr.bf16.gmra.mrb[0].mxu0 %v5099
      %v5248 = vpop.f32.mrb[0].mxu0
      %v5249 = vadd.f32 0.0, %v5248
      %v5250 = vpop.f32.mrb[0].mxu0
      %v5251 = vpop.f32.mrb[0].mxu0
      %v5252 = vadd.f32 0.0, %v5251
      %v5253 = vpop.f32.mrb[0].mxu0
      %5254 = vmatprep.mubr.bf16.mxu0 0
      %5255 = vmatmul.mubr.bf16.gmra.mrb[0].mxu0 %v5100
      %v5256 = vpop.f32.mrb[0].mxu0
      %v5257 = vadd.f32 0.0, %v5256
      %v5258 = vpop.f32.mrb[0].mxu0
      %v5259 = vpop.f32.mrb[0].mxu0
      %v5260 = vadd.f32 0.0, %v5259
      %v5261 = vpop.f32.mrb[0].mxu0
      %5262 = vmatprep.mubr.bf16.mxu0 0
      %5263 = vmatmul.mubr.bf16.gmra.mrb[0].mxu0 %v5101
      %v5264 = vpop.f32.mrb[0].mxu0
      %v5265 = vadd.f32 0.0, %v5264
      %v5266 = vpop.f32.mrb[0].mxu0
      %v5267 = vpop.f32.mrb[0].mxu0
      %v5268 = vadd.f32 0.0, %v5267
      %v5269 = vpop.f32.mrb[0].mxu0
      %5270 = vmatprep.mubr.bf16.mxu0 0
      %5271 = vmatmul.mubr.bf16.gmra.mrb[0].mxu0 %v5102
      %v5272 = vpop.f32.mrb[0].mxu0
      %v5273 = vadd.f32 0.0, %v5272
      %v5274 = vpop.f32.mrb[0].mxu0
      %v5275 = vpop.f32.mrb[0].mxu0
      %v5276 = vadd.f32 0.0, %v5275
      %v5277 = vpop.f32.mrb[0].mxu0
      %5278 = vmatprep.mubr.bf16.mxu0 0
      %5279 = vmatmul.mubr.bf16.gmra.mrb[0].mxu0 %v5103
      %v5280 = vpop.f32.mrb[0].mxu0
      %v5281 = vadd.f32 0.0, %v5280
      %v5282 = vpop.f32.mrb[0].mxu0
      %v5283 = vpop.f32.mrb[0].mxu0
      %v5284 = vadd.f32 0.0, %v5283
      %v5285 = vpop.f32.mrb[0].mxu0
      %5286 = vmatprep.mubr.bf16.mxu0 0
      %5287 = vmatmul.mubr.bf16.gmra.mrb[0].mxu0 %v5104
      %v5288 = vpop.f32.mrb[0].mxu0
      %v5289 = vadd.f32 0.0, %v5288
      %v5290 = vpop.f32.mrb[0].mxu0
      %v5291 = vpop.f32.mrb[0].mxu0
      %v5292 = vadd.f32 0.0, %v5291
      %v5293 = vpop.f32.mrb[0].mxu0
      %5294 = vmatprep.mubr.bf16.mxu0 0
      %5295 = vmatmul.mubr.bf16.gmra.mrb[0].mxu0 %v5105
      %v5296 = vpop.f32.mrb[0].mxu0
      %v5297 = vadd.f32 0.0, %v5296
      %v5298 = vpop.f32.mrb[0].mxu0
      %v5299 = vpop.f32.mrb[0].mxu0
      %v5300 = vadd.f32 0.0, %v5299
      %v5301 = vpop.f32.mrb[0].mxu0
      %5302 = vmatprep.mubr.bf16.mxu0 0
      %5303 = vmatmul.mubr.bf16.gmra.mrb[0].mxu0 %v5106
      %v5304 = vpop.f32.mrb[0].mxu0
      %v5305 = vadd.f32 0.0, %v5304
      %v5306 = vpop.f32.mrb[0].mxu0
      %v5307 = vpop.f32.mrb[0].mxu0
      %v5308 = vadd.f32 0.0, %v5307
      %v5309 = vpop.f32.mrb[0].mxu0
      %5310 = vmatprep.mubr.bf16.mxu0 0
      %5311 = vmatmul.mubr.bf16.gmra.mrb[0].mxu0 %v5107
      %v5312 = vpop.f32.mrb[0].mxu0
      %v5313 = vadd.f32 0.0, %v5312
      %v5314 = vpop.f32.mrb[0].mxu0
      %v5315 = vpop.f32.mrb[0].mxu0
      %v5316 = vadd.f32 0.0, %v5315
      %v5317 = vpop.f32.mrb[0].mxu0
      %5318 = vmatprep.mubr.bf16.mxu0 0
      %5319 = vmatmul.mubr.bf16.gmra.mrb[0].mxu0 %v5108
      %v5320 = vpop.f32.mrb[0].mxu0
      %v5321 = vadd.f32 0.0, %v5320
      %v5322 = vpop.f32.mrb[0].mxu0
      %v5323 = vpop.f32.mrb[0].mxu0
      %v5324 = vadd.f32 0.0, %v5323
      %v5325 = vpop.f32.mrb[0].mxu0
      %5326 = vmatprep.mubr.bf16.mxu0 0
      %5327 = vmatmul.mubr.bf16.gmra.mrb[0].mxu0 %v5109
      %v5328 = vpop.f32.mrb[0].mxu0
      %v5329 = vadd.f32 0.0, %v5328
      %v5330 = vpop.f32.mrb[0].mxu0
      %v5331 = vpop.f32.mrb[0].mxu0
      %v5332 = vadd.f32 0.0, %v5331
      %v5333 = vpop.f32.mrb[0].mxu0
      %5334 = vdwg.mxu0
      %v5335 = vadd.f32 %v4582, %v5209
      %v5336 = vadd.f32 %v4583, %v5212
      %v5337 = vadd.f32 %v4584, %v5217
      %v5338 = vadd.f32 %v4585, %v5220
      %v5339 = vadd.f32 %v4586, %v5225
      %v5340 = vadd.f32 %v4587, %v5228
      %v5341 = vadd.f32 %v4588, %v5233
      %v5342 = vadd.f32 %v4589, %v5236
      %v5343 = vadd.f32 %v4590, %v5241
      %v5344 = vadd.f32 %v4591, %v5244
      %v5345 = vadd.f32 %v4592, %v5249
      %v5346 = vadd.f32 %v4593, %v5252
      %v5347 = vadd.f32 %v4594, %v5257
      %v5348 = vadd.f32 %v4595, %v5260
      %v5349 = vadd.f32 %v4596, %v5265
      %v5350 = vadd.f32 %v4597, %v5268
      %v5351 = vadd.f32 %v4598, %v5273
      %v5352 = vadd.f32 %v4599, %v5276
      %v5353 = vadd.f32 %v4600, %v5281
      %v5354 = vadd.f32 %v4601, %v5284
      %v5355 = vadd.f32 %v4602, %v5289
      %v5356 = vadd.f32 %v4603, %v5292
      %v5357 = vadd.f32 %v4604, %v5297
      %v5358 = vadd.f32 %v4605, %v5300
      %v5359 = vadd.f32 %v4606, %v5305
      %v5360 = vadd.f32 %v4607, %v5308
      %v5361 = vadd.f32 %v4608, %v5313
      %v5362 = vadd.f32 %v4609, %v5316
      %v5363 = vadd.f32 %v4610, %v5321
      %v5364 = vadd.f32 %v4611, %v5324
      %v5365 = vadd.f32 %v4612, %v5329
      %v5366 = vadd.f32 %v4613, %v5332
      %v5367 = vld [vmem:[%s4228] sm:$0xe]
      %v5368 = vld [vmem:[%s4228 + $0xc] sm:$0xe]
      %v5369 = vld [vmem:[%s4228 + $0x18] sm:$0xe]
      %v5370 = vld [vmem:[%s4228 + $0x24] sm:$0xe]
      %v5371 = vld [vmem:[%s4228 + $0x30] sm:$0xe]
      %v5372 = vld [vmem:[%s4228 + $0x3c] sm:$0xe]
      %v5373 = vld [vmem:[%s4228 + $0x48] sm:$0xe]
      %v5374 = vld [vmem:[%s4228 + $0x54] sm:$0xe]
      %v5375 = vld [vmem:[%s4228 + $0x60] sm:$0xe]
      %v5376 = vld [vmem:[%s4228 + $0x6c] sm:$0xe]
      %v5377 = vld [vmem:[%s4228 + $0x78] sm:$0xe]
      %v5378 = vld [vmem:[%s4228 + $0x84] sm:$0xe]
      %v5379 = vld [vmem:[%s4228 + $0x90] sm:$0xe]
      %v5380 = vld [vmem:[%s4228 + $0x9c] sm:$0xe]
      %v5381 = vld [vmem:[%s4228 + $0xa8] sm:$0xe]
      %v5382 = vld [vmem:[%s4228 + $0xb4] sm:$0xe]
      %v5383 = vld [vmem:[%s1 + $0x200] sm:$0xf]
      %v5384 = vld [vmem:[%s1 + $0x204] sm:$0xf]
      %v5385 = vld [vmem:[%s1 + $0x208] sm:$0xf]
      %v5386 = vld [vmem:[%s1 + $0x20c] sm:$0xf]
      %v5387 = vld [vmem:[%s1 + $0x210] sm:$0xf]
      %v5388 = vld [vmem:[%s1 + $0x214] sm:$0xf]
      %v5389 = vld [vmem:[%s1 + $0x218] sm:$0xf]
      %v5390 = vld [vmem:[%s1 + $0x21c] sm:$0xf]
      %v5391 = vld [vmem:[%s1 + $0x220] sm:$0xf]
      %v5392 = vld [vmem:[%s1 + $0x224] sm:$0xf]
      %v5393 = vld [vmem:[%s1 + $0x228] sm:$0xf]
      %v5394 = vld [vmem:[%s1 + $0x22c] sm:$0xf]
      %v5395 = vld [vmem:[%s1 + $0x230] sm:$0xf]
      %v5396 = vld [vmem:[%s1 + $0x234] sm:$0xf]
      %v5397 = vld [vmem:[%s1 + $0x238] sm:$0xf]
      %v5398 = vld [vmem:[%s1 + $0x23c] sm:$0xf]
      %v5447 = vrot.slane %v5367, 5
      %v5448 = vrot.slane %v5447, 4
      %v5449 = vrot.slane %v4615, 5
      %v5450 = vsel %vm2175, %v5448, %v5449
      %v5451 = vrot.slane %v5449, 4
      %v5452 = vrot.slane %v4616, 5
      %v5453 = vsel %vm2175, %v5451, %v5452
      %v5454 = vrot.slane %v5368, 5
      %v5455 = vrot.slane %v5454, 4
      %v5456 = vrot.slane %v4618, 5
      %v5457 = vsel %vm2175, %v5455, %v5456
      %v5458 = vrot.slane %v5456, 4
      %v5459 = vrot.slane %v4619, 5
      %v5460 = vsel %vm2175, %v5458, %v5459
      %v5461 = vrot.slane %v5369, 5
      %v5462 = vrot.slane %v5461, 4
      %v5463 = vrot.slane %v4621, 5
      %v5464 = vsel %vm2175, %v5462, %v5463
      %v5465 = vrot.slane %v5463, 4
      %v5466 = vrot.slane %v4622, 5
      %v5467 = vsel %vm2175, %v5465, %v5466
      %v5468 = vrot.slane %v5370, 5
      %v5469 = vrot.slane %v5468, 4
      %v5470 = vrot.slane %v4624, 5
      %v5471 = vsel %vm2175, %v5469, %v5470
      %v5472 = vrot.slane %v5470, 4
      %v5473 = vrot.slane %v4625, 5
      %v5474 = vsel %vm2175, %v5472, %v5473
      %v5475 = vrot.slane %v5371, 5
      %v5476 = vrot.slane %v5475, 4
      %v5477 = vrot.slane %v4627, 5
      %v5478 = vsel %vm2175, %v5476, %v5477
      %v5479 = vrot.slane %v5477, 4
      %v5480 = vrot.slane %v4628, 5
      %v5481 = vsel %vm2175, %v5479, %v5480
      %v5482 = vrot.slane %v5372, 5
      %v5483 = vrot.slane %v5482, 4
      %v5484 = vrot.slane %v4630, 5
      %v5485 = vsel %vm2175, %v5483, %v5484
      %v5486 = vrot.slane %v5484, 4
      %v5487 = vrot.slane %v4631, 5
      %v5488 = vsel %vm2175, %v5486, %v5487
      %v5489 = vrot.slane %v5373, 5
      %v5490 = vrot.slane %v5489, 4
      %v5491 = vrot.slane %v4633, 5
      %v5492 = vsel %vm2175, %v5490, %v5491
      %v5493 = vrot.slane %v5491, 4
      %v5494 = vrot.slane %v4634, 5
      %v5495 = vsel %vm2175, %v5493, %v5494
      %v5496 = vrot.slane %v5374, 5
      %v5497 = vrot.slane %v5496, 4
      %v5498 = vrot.slane %v4636, 5
      %v5499 = vsel %vm2175, %v5497, %v5498
      %v5500 = vrot.slane %v5498, 4
      %v5501 = vrot.slane %v4637, 5
      %v5502 = vsel %vm2175, %v5500, %v5501
      %v5503 = vrot.slane %v5375, 5
      %v5504 = vrot.slane %v5503, 4
      %v5505 = vrot.slane %v4639, 5
      %v5506 = vsel %vm2175, %v5504, %v5505
      %v5507 = vrot.slane %v5505, 4
      %v5508 = vrot.slane %v4640, 5
      %v5509 = vsel %vm2175, %v5507, %v5508
      %v5510 = vrot.slane %v5376, 5
      %v5511 = vrot.slane %v5510, 4
      %v5512 = vrot.slane %v4642, 5
      %v5513 = vsel %vm2175, %v5511, %v5512
      %v5514 = vrot.slane %v5512, 4
      %v5515 = vrot.slane %v4643, 5
      %v5516 = vsel %vm2175, %v5514, %v5515
      %v5517 = vrot.slane %v5377, 5
      %v5518 = vrot.slane %v5517, 4
      %v5519 = vrot.slane %v4645, 5
      %v5520 = vsel %vm2175, %v5518, %v5519
      %v5521 = vrot.slane %v5519, 4
      %v5522 = vrot.slane %v4646, 5
      %v5523 = vsel %vm2175, %v5521, %v5522
      %v5524 = vrot.slane %v5378, 5
      %v5525 = vrot.slane %v5524, 4
      %v5526 = vrot.slane %v4648, 5
      %v5527 = vsel %vm2175, %v5525, %v5526
      %v5528 = vrot.slane %v5526, 4
      %v5529 = vrot.slane %v4649, 5
      %v5530 = vsel %vm2175, %v5528, %v5529
      %v5531 = vrot.slane %v5379, 5
      %v5532 = vrot.slane %v5531, 4
      %v5533 = vrot.slane %v4651, 5
      %v5534 = vsel %vm2175, %v5532, %v5533
      %v5535 = vrot.slane %v5533, 4
      %v5536 = vrot.slane %v4652, 5
      %v5537 = vsel %vm2175, %v5535, %v5536
      %v5538 = vrot.slane %v5380, 5
      %v5539 = vrot.slane %v5538, 4
      %v5540 = vrot.slane %v4654, 5
      %v5541 = vsel %vm2175, %v5539, %v5540
      %v5542 = vrot.slane %v5540, 4
      %v5543 = vrot.slane %v4655, 5
      %v5544 = vsel %vm2175, %v5542, %v5543
      %v5545 = vrot.slane %v5381, 5
      %v5546 = vrot.slane %v5545, 4
      %v5547 = vrot.slane %v4657, 5
      %v5548 = vsel %vm2175, %v5546, %v5547
      %v5549 = vrot.slane %v5547, 4
      %v5550 = vrot.slane %v4658, 5
      %v5551 = vsel %vm2175, %v5549, %v5550
      %v5552 = vrot.slane %v5382, 5
      %v5553 = vrot.slane %v5552, 4
      %v5554 = vrot.slane %v4660, 5
      %v5555 = vsel %vm2175, %v5553, %v5554
      %v5556 = vrot.slane %v5554, 4
      %v5557 = vrot.slane %v4661, 5
      %v5558 = vsel %vm2175, %v5556, %v5557
      %v5559 = vunpack.c.l.b16 %v5450
      %v5560 = vunpack.c.l.b16 %v5453
      %v5561 = vunpack.c.l.b16 %v5457
      %v5562 = vunpack.c.l.b16 %v5460
      %v5563 = vunpack.c.l.b16 %v5464
      %v5564 = vunpack.c.l.b16 %v5467
      %v5565 = vunpack.c.l.b16 %v5471
      %v5566 = vunpack.c.l.b16 %v5474
      %v5567 = vunpack.c.l.b16 %v5478
      %v5568 = vunpack.c.l.b16 %v5481
      %v5569 = vunpack.c.l.b16 %v5485
      %v5570 = vunpack.c.l.b16 %v5488
      %v5571 = vunpack.c.l.b16 %v5492
      %v5572 = vunpack.c.l.b16 %v5495
      %v5573 = vunpack.c.l.b16 %v5499
      %v5574 = vunpack.c.l.b16 %v5502
      %v5575 = vunpack.c.l.b16 %v5506
      %v5576 = vunpack.c.l.b16 %v5509
      %v5577 = vunpack.c.l.b16 %v5513
      %v5578 = vunpack.c.l.b16 %v5516
      %v5579 = vunpack.c.l.b16 %v5520
      %v5580 = vunpack.c.l.b16 %v5523
      %v5581 = vunpack.c.l.b16 %v5527
      %v5582 = vunpack.c.l.b16 %v5530
      %v5583 = vunpack.c.l.b16 %v5534
      %v5584 = vunpack.c.l.b16 %v5537
      %v5585 = vunpack.c.l.b16 %v5541
      %v5586 = vunpack.c.l.b16 %v5544
      %v5587 = vunpack.c.l.b16 %v5548
      %v5588 = vunpack.c.l.b16 %v5551
      %v5589 = vunpack.c.l.b16 %v5555
      %v5590 = vunpack.c.l.b16 %v5558
      %v5591 = vpack.c.b16 %v5560, %v5559
      %v5592 = vpack.c.b16 %v5562, %v5561
      %v5593 = vpack.c.b16 %v5564, %v5563
      %v5594 = vpack.c.b16 %v5566, %v5565
      %v5595 = vpack.c.b16 %v5568, %v5567
      %v5596 = vpack.c.b16 %v5570, %v5569
      %v5597 = vpack.c.b16 %v5572, %v5571
      %v5598 = vpack.c.b16 %v5574, %v5573
      %v5599 = vpack.c.b16 %v5576, %v5575
      %v5600 = vpack.c.b16 %v5578, %v5577
      %v5601 = vpack.c.b16 %v5580, %v5579
      %v5602 = vpack.c.b16 %v5582, %v5581
      %v5603 = vpack.c.b16 %v5584, %v5583
      %v5604 = vpack.c.b16 %v5586, %v5585
      %v5605 = vpack.c.b16 %v5588, %v5587
      %v5606 = vpack.c.b16 %v5590, %v5589
      %v5639 = vunpack.c.l.b16 %v5383
      %v5640 = vunpack.c.l.b16 %v5384
      %v5641 = vunpack.c.l.b16 %v5385
      %v5642 = vunpack.c.l.b16 %v5386
      %v5643 = vunpack.c.l.b16 %v5387
      %v5644 = vunpack.c.l.b16 %v5388
      %v5645 = vunpack.c.l.b16 %v5389
      %v5646 = vunpack.c.l.b16 %v5390
      %v5647 = vunpack.c.l.b16 %v5391
      %v5648 = vunpack.c.l.b16 %v5392
      %v5649 = vunpack.c.l.b16 %v5393
      %v5650 = vunpack.c.l.b16 %v5394
      %v5651 = vunpack.c.l.b16 %v5395
      %v5652 = vunpack.c.l.b16 %v5396
      %v5653 = vunpack.c.l.b16 %v5397
      %v5654 = vunpack.c.l.b16 %v5398
      %v5655 = vpack.c.b16 %v5640, %v5639
      %v5656 = vpack.c.b16 %v5642, %v5641
      %v5657 = vpack.c.b16 %v5644, %v5643
      %v5658 = vpack.c.b16 %v5646, %v5645
      %v5659 = vpack.c.b16 %v5648, %v5647
      %v5660 = vpack.c.b16 %v5650, %v5649
      %v5661 = vpack.c.b16 %v5652, %v5651
      %v5662 = vpack.c.b16 %v5654, %v5653
      %5671 = vmatprep.subr.bf16.mxu0 0
      %5672 = vmatpush1.bf16.msra.mxu0 %v5655
      %5673 = vmatprep.subr.bf16.mxu0 0
      %5674 = vmatpush1.bf16.msra.mxu0 %v5656
      %5675 = vmatprep.subr.bf16.mxu0 0
      %5676 = vmatpush1.bf16.msra.mxu0 %v5657
      %5677 = vmatprep.subr.bf16.mxu0 0
      %5678 = vmatpush1.bf16.msra.mxu0 %v5658
      %5679 = vmatprep.subr.bf16.mxu0 0
      %5680 = vmatpush1.bf16.msra.mxu0 %v5659
      %5681 = vmatprep.subr.bf16.mxu0 0
      %5682 = vmatpush1.bf16.msra.mxu0 %v5660
      %5683 = vmatprep.subr.bf16.mxu0 0
      %5684 = vmatpush1.bf16.msra.mxu0 %v5661
      %5685 = vmatprep.subr.bf16.mxu0 0
      %5686 = vmatpush1.bf16.msra.mxu0 %v5662
      %5687 = vmatprep.subr.bf16.mxu0 0
      %5688 = vmatpush1.bf16.msra.mxu0 0
      %5689 = vmatprep.subr.bf16.mxu0 0
      %5690 = vmatpush1.bf16.msra.mxu0 0
      %5691 = vmatprep.subr.bf16.mxu0 0
      %5692 = vmatpush1.bf16.msra.mxu0 0
      %5693 = vmatprep.subr.bf16.mxu0 0
      %5694 = vmatpush1.bf16.msra.mxu0 0
      %5695 = vmatprep.subr.bf16.mxu0 0
      %5696 = vmatpush1.bf16.msra.mxu0 0
      %5697 = vmatprep.subr.bf16.mxu0 0
      %5698 = vmatpush1.bf16.msra.mxu0 0
      %5699 = vmatprep.subr.bf16.mxu0 0
      %5700 = vmatpush1.bf16.msra.mxu0 0
      %5701 = vmatprep.subr.bf16.mxu0 0
      %5702 = vmatpush1.bf16.msra.mxu0 0
      %5703 = vmatprep.mubr.bf16.mxu0 0
      %5704 = vmatmul.mubr.bf16.gmra.mrb[0].mxu0 %v5591
      %v5705 = vpop.f32.mrb[0].mxu0
      %v5706 = vadd.f32 0.0, %v5705
      %v5707 = vpop.f32.mrb[0].mxu0
      %v5708 = vpop.f32.mrb[0].mxu0
      %v5709 = vadd.f32 0.0, %v5708
      %v5710 = vpop.f32.mrb[0].mxu0
      %5711 = vmatprep.mubr.bf16.mxu0 0
      %5712 = vmatmul.mubr.bf16.gmra.mrb[0].mxu0 %v5592
      %v5713 = vpop.f32.mrb[0].mxu0
      %v5714 = vadd.f32 0.0, %v5713
      %v5715 = vpop.f32.mrb[0].mxu0
      %v5716 = vpop.f32.mrb[0].mxu0
      %v5717 = vadd.f32 0.0, %v5716
      %v5718 = vpop.f32.mrb[0].mxu0
      %5719 = vmatprep.mubr.bf16.mxu0 0
      %5720 = vmatmul.mubr.bf16.gmra.mrb[0].mxu0 %v5593
      %v5721 = vpop.f32.mrb[0].mxu0
      %v5722 = vadd.f32 0.0, %v5721
      %v5723 = vpop.f32.mrb[0].mxu0
      %v5724 = vpop.f32.mrb[0].mxu0
      %v5725 = vadd.f32 0.0, %v5724
      %v5726 = vpop.f32.mrb[0].mxu0
      %5727 = vmatprep.mubr.bf16.mxu0 0
      %5728 = vmatmul.mubr.bf16.gmra.mrb[0].mxu0 %v5594
      %v5729 = vpop.f32.mrb[0].mxu0
      %v5730 = vadd.f32 0.0, %v5729
      %v5731 = vpop.f32.mrb[0].mxu0
      %v5732 = vpop.f32.mrb[0].mxu0
      %v5733 = vadd.f32 0.0, %v5732
      %v5734 = vpop.f32.mrb[0].mxu0
      %5735 = vmatprep.mubr.bf16.mxu0 0
      %5736 = vmatmul.mubr.bf16.gmra.mrb[0].mxu0 %v5595
      %v5737 = vpop.f32.mrb[0].mxu0
      %v5738 = vadd.f32 0.0, %v5737
      %v5739 = vpop.f32.mrb[0].mxu0
      %v5740 = vpop.f32.mrb[0].mxu0
      %v5741 = vadd.f32 0.0, %v5740
      %v5742 = vpop.f32.mrb[0].mxu0
      %5743 = vmatprep.mubr.bf16.mxu0 0
      %5744 = vmatmul.mubr.bf16.gmra.mrb[0].mxu0 %v5596
      %v5745 = vpop.f32.mrb[0].mxu0
      %v5746 = vadd.f32 0.0, %v5745
      %v5747 = vpop.f32.mrb[0].mxu0
      %v5748 = vpop.f32.mrb[0].mxu0
      %v5749 = vadd.f32 0.0, %v5748
      %v5750 = vpop.f32.mrb[0].mxu0
      %5751 = vmatprep.mubr.bf16.mxu0 0
      %5752 = vmatmul.mubr.bf16.gmra.mrb[0].mxu0 %v5597
      %v5753 = vpop.f32.mrb[0].mxu0
      %v5754 = vadd.f32 0.0, %v5753
      %v5755 = vpop.f32.mrb[0].mxu0
      %v5756 = vpop.f32.mrb[0].mxu0
      %v5757 = vadd.f32 0.0, %v5756
      %v5758 = vpop.f32.mrb[0].mxu0
      %5759 = vmatprep.mubr.bf16.mxu0 0
      %5760 = vmatmul.mubr.bf16.gmra.mrb[0].mxu0 %v5598
      %v5761 = vpop.f32.mrb[0].mxu0
      %v5762 = vadd.f32 0.0, %v5761
      %v5763 = vpop.f32.mrb[0].mxu0
      %v5764 = vpop.f32.mrb[0].mxu0
      %v5765 = vadd.f32 0.0, %v5764
      %v5766 = vpop.f32.mrb[0].mxu0
      %5767 = vmatprep.mubr.bf16.mxu0 0
      %5768 = vmatmul.mubr.bf16.gmra.mrb[0].mxu0 %v5599
      %v5769 = vpop.f32.mrb[0].mxu0
      %v5770 = vadd.f32 0.0, %v5769
      %v5771 = vpop.f32.mrb[0].mxu0
      %v5772 = vpop.f32.mrb[0].mxu0
      %v5773 = vadd.f32 0.0, %v5772
      %v5774 = vpop.f32.mrb[0].mxu0
      %5775 = vmatprep.mubr.bf16.mxu0 0
      %5776 = vmatmul.mubr.bf16.gmra.mrb[0].mxu0 %v5600
      %v5777 = vpop.f32.mrb[0].mxu0
      %v5778 = vadd.f32 0.0, %v5777
      %v5779 = vpop.f32.mrb[0].mxu0
      %v5780 = vpop.f32.mrb[0].mxu0
      %v5781 = vadd.f32 0.0, %v5780
      %v5782 = vpop.f32.mrb[0].mxu0
      %5783 = vmatprep.mubr.bf16.mxu0 0
      %5784 = vmatmul.mubr.bf16.gmra.mrb[0].mxu0 %v5601
      %v5785 = vpop.f32.mrb[0].mxu0
      %v5786 = vadd.f32 0.0, %v5785
      %v5787 = vpop.f32.mrb[0].mxu0
      %v5788 = vpop.f32.mrb[0].mxu0
      %v5789 = vadd.f32 0.0, %v5788
      %v5790 = vpop.f32.mrb[0].mxu0
      %5791 = vmatprep.mubr.bf16.mxu0 0
      %5792 = vmatmul.mubr.bf16.gmra.mrb[0].mxu0 %v5602
      %v5793 = vpop.f32.mrb[0].mxu0
      %v5794 = vadd.f32 0.0, %v5793
      %v5795 = vpop.f32.mrb[0].mxu0
      %v5796 = vpop.f32.mrb[0].mxu0
      %v5797 = vadd.f32 0.0, %v5796
      %v5798 = vpop.f32.mrb[0].mxu0
      %5799 = vmatprep.mubr.bf16.mxu0 0
      %5800 = vmatmul.mubr.bf16.gmra.mrb[0].mxu0 %v5603
      %v5801 = vpop.f32.mrb[0].mxu0
      %v5802 = vadd.f32 0.0, %v5801
      %v5803 = vpop.f32.mrb[0].mxu0
      %v5804 = vpop.f32.mrb[0].mxu0
      %v5805 = vadd.f32 0.0, %v5804
      %v5806 = vpop.f32.mrb[0].mxu0
      %5807 = vmatprep.mubr.bf16.mxu0 0
      %5808 = vmatmul.mubr.bf16.gmra.mrb[0].mxu0 %v5604
      %v5809 = vpop.f32.mrb[0].mxu0
      %v5810 = vadd.f32 0.0, %v5809
      %v5811 = vpop.f32.mrb[0].mxu0
      %v5812 = vpop.f32.mrb[0].mxu0
      %v5813 = vadd.f32 0.0, %v5812
      %v5814 = vpop.f32.mrb[0].mxu0
      %5815 = vmatprep.mubr.bf16.mxu0 0
      %5816 = vmatmul.mubr.bf16.gmra.mrb[0].mxu0 %v5605
      %v5817 = vpop.f32.mrb[0].mxu0
      %v5818 = vadd.f32 0.0, %v5817
      %v5819 = vpop.f32.mrb[0].mxu0
      %v5820 = vpop.f32.mrb[0].mxu0
      %v5821 = vadd.f32 0.0, %v5820
      %v5822 = vpop.f32.mrb[0].mxu0
      %5823 = vmatprep.mubr.bf16.mxu0 0
      %5824 = vmatmul.mubr.bf16.gmra.mrb[0].mxu0 %v5606
      %v5825 = vpop.f32.mrb[0].mxu0
      %v5826 = vadd.f32 0.0, %v5825
      %v5827 = vpop.f32.mrb[0].mxu0
      %v5828 = vpop.f32.mrb[0].mxu0
      %v5829 = vadd.f32 0.0, %v5828
      %v5830 = vpop.f32.mrb[0].mxu0
      %5831 = vdwg.mxu0
      %v5832 = vadd.f32 %v5335, %v5706
      %v5833 = vadd.f32 %v5336, %v5709
      %v5834 = vadd.f32 %v5337, %v5714
      %v5835 = vadd.f32 %v5338, %v5717
      %v5836 = vadd.f32 %v5339, %v5722
      %v5837 = vadd.f32 %v5340, %v5725
      %v5838 = vadd.f32 %v5341, %v5730
      %v5839 = vadd.f32 %v5342, %v5733
      %v5840 = vadd.f32 %v5343, %v5738
      %v5841 = vadd.f32 %v5344, %v5741
      %v5842 = vadd.f32 %v5345, %v5746
      %v5843 = vadd.f32 %v5346, %v5749
      %v5844 = vadd.f32 %v5347, %v5754
      %v5845 = vadd.f32 %v5348, %v5757
      %v5846 = vadd.f32 %v5349, %v5762
      %v5847 = vadd.f32 %v5350, %v5765
      %v5848 = vadd.f32 %v5351, %v5770
      %v5849 = vadd.f32 %v5352, %v5773
      %v5850 = vadd.f32 %v5353, %v5778
      %v5851 = vadd.f32 %v5354, %v5781
      %v5852 = vadd.f32 %v5355, %v5786
      %v5853 = vadd.f32 %v5356, %v5789
      %v5854 = vadd.f32 %v5357, %v5794
      %v5855 = vadd.f32 %v5358, %v5797
      %v5856 = vadd.f32 %v5359, %v5802
      %v5857 = vadd.f32 %v5360, %v5805
      %v5858 = vadd.f32 %v5361, %v5810
      %v5859 = vadd.f32 %v5362, %v5813
      %v5860 = vadd.f32 %v5363, %v5818
      %v5861 = vadd.f32 %v5364, %v5821
      %v5862 = vadd.f32 %v5365, %v5826
      %v5863 = vadd.f32 %v5366, %v5829
      %v5864 = vpack.c.bf16 %v5833, %v5832
      %v5865 = vpack.c.bf16 %v5835, %v5834
      %v5866 = vpack.c.bf16 %v5837, %v5836
      %v5867 = vpack.c.bf16 %v5839, %v5838
      %v5868 = vpack.c.bf16 %v5841, %v5840
      %v5869 = vpack.c.bf16 %v5843, %v5842
      %v5870 = vpack.c.bf16 %v5845, %v5844
      %v5871 = vpack.c.bf16 %v5847, %v5846
      %v5872 = vpack.c.bf16 %v5849, %v5848
      %v5873 = vpack.c.bf16 %v5851, %v5850
      %v5874 = vpack.c.bf16 %v5853, %v5852
      %v5875 = vpack.c.bf16 %v5855, %v5854
      %v5876 = vpack.c.bf16 %v5857, %v5856
      %v5877 = vpack.c.bf16 %v5859, %v5858
      %v5878 = vpack.c.bf16 %v5861, %v5860
      %v5879 = vpack.c.bf16 %v5863, %v5862
      %v5896 = vunpack.c.l.b16 %v5864
      %v5897 = vunpack.c.h.b16 %v5864
      %v5898 = vunpack.c.l.b16 %v5865
      %v5899 = vunpack.c.h.b16 %v5865
      %v5900 = vunpack.c.l.b16 %v5866
      %v5901 = vunpack.c.h.b16 %v5866
      %v5902 = vunpack.c.l.b16 %v5867
      %v5903 = vunpack.c.h.b16 %v5867
      %v5904 = vunpack.c.l.b16 %v5868
      %v5905 = vunpack.c.h.b16 %v5868
      %v5906 = vunpack.c.l.b16 %v5869
      %v5907 = vunpack.c.h.b16 %v5869
      %v5908 = vunpack.c.l.b16 %v5870
      %v5909 = vunpack.c.h.b16 %v5870
      %v5910 = vunpack.c.l.b16 %v5871
      %v5911 = vunpack.c.h.b16 %v5871
      %v5912 = vunpack.c.l.b16 %v5872
      %v5913 = vunpack.c.h.b16 %v5872
      %v5914 = vunpack.c.l.b16 %v5873
      %v5915 = vunpack.c.h.b16 %v5873
      %v5916 = vunpack.c.l.b16 %v5874
      %v5917 = vunpack.c.h.b16 %v5874
      %v5918 = vunpack.c.l.b16 %v5875
      %v5919 = vunpack.c.h.b16 %v5875
      %v5920 = vunpack.c.l.b16 %v5876
      %v5921 = vunpack.c.h.b16 %v5876
      %v5922 = vunpack.c.l.b16 %v5877
      %v5923 = vunpack.c.h.b16 %v5877
      %v5924 = vunpack.c.l.b16 %v5878
      %v5925 = vunpack.c.h.b16 %v5878
      %v5926 = vunpack.c.l.b16 %v5879
      %v5927 = vunpack.c.h.b16 %v5879
      %v5928 = vpack.c.b16 %v5896, %v5896
      %v5929 = vpack.c.b16 %v5897, %v5897
      %v5930 = vpack.c.b16 %v5898, %v5898
      %v5931 = vpack.c.b16 %v5899, %v5899
      %v5932 = vpack.c.b16 %v5900, %v5900
      %v5933 = vpack.c.b16 %v5901, %v5901
      %v5934 = vpack.c.b16 %v5902, %v5902
      %v5935 = vpack.c.b16 %v5903, %v5903
      %v5936 = vpack.c.b16 %v5904, %v5904
      %v5937 = vpack.c.b16 %v5905, %v5905
      %v5938 = vpack.c.b16 %v5906, %v5906
      %v5939 = vpack.c.b16 %v5907, %v5907
      %v5940 = vpack.c.b16 %v5908, %v5908
      %v5941 = vpack.c.b16 %v5909, %v5909
      %v5942 = vpack.c.b16 %v5910, %v5910
      %v5943 = vpack.c.b16 %v5911, %v5911
      %v5944 = vpack.c.b16 %v5912, %v5912
      %v5945 = vpack.c.b16 %v5913, %v5913
      %v5946 = vpack.c.b16 %v5914, %v5914
      %v5947 = vpack.c.b16 %v5915, %v5915
      %v5948 = vpack.c.b16 %v5916, %v5916
      %v5949 = vpack.c.b16 %v5917, %v5917
      %v5950 = vpack.c.b16 %v5918, %v5918
      %v5951 = vpack.c.b16 %v5919, %v5919
      %v5952 = vpack.c.b16 %v5920, %v5920
      %v5953 = vpack.c.b16 %v5921, %v5921
      %v5954 = vpack.c.b16 %v5922, %v5922
      %v5955 = vpack.c.b16 %v5923, %v5923
      %v5956 = vpack.c.b16 %v5924, %v5924
      %v5957 = vpack.c.b16 %v5925, %v5925
      %v5958 = vpack.c.b16 %v5926, %v5926
      %v5959 = vpack.c.b16 %v5927, %v5927
      %5992 = vst [vmem:[%s231] sm:$0xf] %v5928
      %5993 = vst [vmem:[%s231 + $0x4] sm:$0xf] %v5929
      %5994 = vst [vmem:[%s231 + $0x8] sm:$0xf] %v5930
      %5995 = vst [vmem:[%s231 + $0xc] sm:$0xf] %v5931
      %5996 = vst [vmem:[%s231 + $0x10] sm:$0xf] %v5932
      %5997 = vst [vmem:[%s231 + $0x14] sm:$0xf] %v5933
      %5998 = vst [vmem:[%s231 + $0x18] sm:$0xf] %v5934
      %5999 = vst [vmem:[%s231 + $0x1c] sm:$0xf] %v5935
      %6000 = vst [vmem:[%s231 + $0x20] sm:$0xf] %v5936
      %6001 = vst [vmem:[%s231 + $0x24] sm:$0xf] %v5937
      %6002 = vst [vmem:[%s231 + $0x28] sm:$0xf] %v5938
      %6003 = vst [vmem:[%s231 + $0x2c] sm:$0xf] %v5939
      %6004 = vst [vmem:[%s231 + $0x30] sm:$0xf] %v5940
      %6005 = vst [vmem:[%s231 + $0x34] sm:$0xf] %v5941
      %6006 = vst [vmem:[%s231 + $0x38] sm:$0xf] %v5942
      %6007 = vst [vmem:[%s231 + $0x3c] sm:$0xf] %v5943
      %6008 = vst [vmem:[%s231 + $0x40] sm:$0xf] %v5944
      %6009 = vst [vmem:[%s231 + $0x44] sm:$0xf] %v5945
      %6010 = vst [vmem:[%s231 + $0x48] sm:$0xf] %v5946
      %6011 = vst [vmem:[%s231 + $0x4c] sm:$0xf] %v5947
      %6012 = vst [vmem:[%s231 + $0x50] sm:$0xf] %v5948
      %6013 = vst [vmem:[%s231 + $0x54] sm:$0xf] %v5949
      %6014 = vst [vmem:[%s231 + $0x58] sm:$0xf] %v5950
      %6015 = vst [vmem:[%s231 + $0x5c] sm:$0xf] %v5951
      %6016 = vst [vmem:[%s231 + $0x60] sm:$0xf] %v5952
      %6017 = vst [vmem:[%s231 + $0x64] sm:$0xf] %v5953
      %6018 = vst [vmem:[%s231 + $0x68] sm:$0xf] %v5954
      %6019 = vst [vmem:[%s231 + $0x6c] sm:$0xf] %v5955
      %6020 = vst [vmem:[%s231 + $0x70] sm:$0xf] %v5956
      %6021 = vst [vmem:[%s231 + $0x74] sm:$0xf] %v5957
      %6022 = vst [vmem:[%s231 + $0x78] sm:$0xf] %v5958
      %6023 = vst [vmem:[%s231 + $0x7c] sm:$0xf] %v5959
      %v6024 = vadd.f32 %v5832, %v5833
      %v6025 = vadd.f32 %v6024, %v5834
      %v6026 = vadd.f32 %v6025, %v5835
      %v6027 = vadd.f32 %v6026, %v5836
      %v6028 = vadd.f32 %v6027, %v5837
      %v6029 = vadd.f32 %v6028, %v5838
      %v6030 = vadd.f32 %v6029, %v5839
      %v6031 = vadd.f32 %v6030, %v5840
      %v6032 = vadd.f32 %v6031, %v5841
      %v6033 = vadd.f32 %v6032, %v5842
      %v6034 = vadd.f32 %v6033, %v5843
      %v6035 = vadd.f32 %v6034, %v5844
      %v6036 = vadd.f32 %v6035, %v5845
      %v6037 = vadd.f32 %v6036, %v5846
      %v6038 = vadd.f32 %v6037, %v5847
      %v6039 = vadd.f32 %v6038, %v5848
      %v6040 = vadd.f32 %v6039, %v5849
      %v6041 = vadd.f32 %v6040, %v5850
      %v6042 = vadd.f32 %v6041, %v5851
      %v6043 = vadd.f32 %v6042, %v5852
      %v6044 = vadd.f32 %v6043, %v5853
      %v6045 = vadd.f32 %v6044, %v5854
      %v6046 = vadd.f32 %v6045, %v5855
      %v6047 = vadd.f32 %v6046, %v5856
      %v6048 = vadd.f32 %v6047, %v5857
      %v6049 = vadd.f32 %v6048, %v5858
      %v6050 = vadd.f32 %v6049, %v5859
      %v6051 = vadd.f32 %v6050, %v5860
      %v6052 = vadd.f32 %v6051, %v5861
      %v6053 = vadd.f32 %v6052, %v5862
      %v6054 = vadd.f32 %v6053, %v5863
      %v6055 = vrot.slane %v6054, 4
      %v6056 = vadd.f32 %v6054, %v6055
      %v6057 = vrot.slane %v6056, 2
      %v6058 = vadd.f32 %v6056, %v6057
      %v6059 = vrot.slane %v6058, 1
      %v6060 = vadd.f32 %v6058, %v6059
      %v6061 = vadd.f32 %v6060, 0.0
      %v6062 = vmul.f32 %v5832, %v5832
      %v6063 = vmul.f32 %v5833, %v5833
      %v6064 = vmul.f32 %v5834, %v5834
      %v6065 = vmul.f32 %v5835, %v5835
      %v6066 = vmul.f32 %v5836, %v5836
      %v6067 = vmul.f32 %v5837, %v5837
      %v6068 = vmul.f32 %v5838, %v5838
      %v6069 = vmul.f32 %v5839, %v5839
      %v6070 = vmul.f32 %v5840, %v5840
      %v6071 = vmul.f32 %v5841, %v5841
      %v6072 = vmul.f32 %v5842, %v5842
      %v6073 = vmul.f32 %v5843, %v5843
      %v6074 = vmul.f32 %v5844, %v5844
      %v6075 = vmul.f32 %v5845, %v5845
      %v6076 = vmul.f32 %v5846, %v5846
      %v6077 = vmul.f32 %v5847, %v5847
      %v6078 = vmul.f32 %v5848, %v5848
      %v6079 = vmul.f32 %v5849, %v5849
      %v6080 = vmul.f32 %v5850, %v5850
      %v6081 = vmul.f32 %v5851, %v5851
      %v6082 = vmul.f32 %v5852, %v5852
      %v6083 = vmul.f32 %v5853, %v5853
      %v6084 = vmul.f32 %v5854, %v5854
      %v6085 = vmul.f32 %v5855, %v5855
      %v6086 = vmul.f32 %v5856, %v5856
      %v6087 = vmul.f32 %v5857, %v5857
      %v6088 = vmul.f32 %v5858, %v5858
      %v6089 = vmul.f32 %v5859, %v5859
      %v6090 = vmul.f32 %v5860, %v5860
      %v6091 = vmul.f32 %v5861, %v5861
      %v6092 = vmul.f32 %v5862, %v5862
      %v6093 = vmul.f32 %v5863, %v5863
      %v6094 = vadd.f32 %v6062, %v6063
      %v6095 = vadd.f32 %v6094, %v6064
      %v6096 = vadd.f32 %v6095, %v6065
      %v6097 = vadd.f32 %v6096, %v6066
      %v6098 = vadd.f32 %v6097, %v6067
      %v6099 = vadd.f32 %v6098, %v6068
      %v6100 = vadd.f32 %v6099, %v6069
      %v6101 = vadd.f32 %v6100, %v6070
      %v6102 = vadd.f32 %v6101, %v6071
      %v6103 = vadd.f32 %v6102, %v6072
      %v6104 = vadd.f32 %v6103, %v6073
      %v6105 = vadd.f32 %v6104, %v6074
      %v6106 = vadd.f32 %v6105, %v6075
      %v6107 = vadd.f32 %v6106, %v6076
      %v6108 = vadd.f32 %v6107, %v6077
      %v6109 = vadd.f32 %v6108, %v6078
      %v6110 = vadd.f32 %v6109, %v6079
      %v6111 = vadd.f32 %v6110, %v6080
      %v6112 = vadd.f32 %v6111, %v6081
      %v6113 = vadd.f32 %v6112, %v6082
      %v6114 = vadd.f32 %v6113, %v6083
      %v6115 = vadd.f32 %v6114, %v6084
      %v6116 = vadd.f32 %v6115, %v6085
      %v6117 = vadd.f32 %v6116, %v6086
      %v6118 = vadd.f32 %v6117, %v6087
      %v6119 = vadd.f32 %v6118, %v6088
      %v6120 = vadd.f32 %v6119, %v6089
      %v6121 = vadd.f32 %v6120, %v6090
      %v6122 = vadd.f32 %v6121, %v6091
      %v6123 = vadd.f32 %v6122, %v6092
      %v6124 = vadd.f32 %v6123, %v6093
      %v6125 = vrot.slane %v6124, 4
      %v6126 = vadd.f32 %v6124, %v6125
      %v6127 = vrot.slane %v6126, 2
      %v6128 = vadd.f32 %v6126, %v6127
      %v6129 = vrot.slane %v6128, 1
      %v6130 = vadd.f32 %v6128, %v6129
      %v6131 = vadd.f32 %v6130, 0.0
      %vm6132 = vcmask 1040384
      %v6133 = vsel %vm6132, %v6061, %v6131
      %6134 = vst [vmem:[%s235] sm:$0x3] %v6133
      %p6135 = scmp.lt.s32.totalorder %s17, 1
      %s6136 = scalar_select %p6135, %s17, 1
      %s6137 = smul.addr %s6136, 32
      %s6138 = smul.addr %s6137, 4
      %s6139 = scalar_lea.vmem %s4, %s6138
      %p6140 = scmp.lt.s32.totalorder %s17, 1
      %s6141 = scalar_select %p6140, %s17, 1
      %s6142 = smul.addr %s6141, 2
      %s6143 = scalar_lea.vmem %s5, %s6142
      // Predicated region
      $region37: #{pt_block_forward.4} parent=35 // pred_check
        %p6144 = pneg %p124
      $region38: #{pt_block_forward.4} parent=35 // pred_check_branch
        %6146 = sbr.rel (%p6144) target = $region40
      $region39: #{pt_block_forward.4} parent=35 // pred_region
        _
      $region40: #{pt_block_forward.4} parent=35 // pred_fallthru
        _
      // Predicated region
      $region41: #{pt_block_forward.4} parent=35 // pred_check
        %p6147 = pneg %p150
      $region42: #{pt_block_forward.4} parent=35 // pred_check_branch
        %6149 = sbr.rel (%p6147) target = $region44
      $region43: #{pt_block_forward.4} parent=35 // pred_region
        _
      $region44: #{pt_block_forward.4} parent=35 // pred_fallthru
        _
    $region36: #{pt_block_forward.4} parent=5 // pred_fallthru
      _
    %p6150 = scmp.le.s32.totalorder 2, %s12
    // Predicated region
    $region45: #{pt_block_forward.4} parent=5 // pred_check
      %p6151 = pneg %p6150
    $region46: #{pt_block_forward.4} parent=5 // pred_check_branch
      %6153 = sbr.rel (%p6151) target = $region48
    $region47: #{pt_block_forward.4} parent=5 // pred_region
      %s6154 = ssub.s32 %s12, 2
      // Predicated region
      $region49: #{pt_block_forward.4} parent=47 // pred_check
        %p6155 = pneg %p130
      $region50: #{pt_block_forward.4} parent=47 // pred_check_branch
        %6157 = sbr.rel (%p6155) target = $region52
      $region51: #{pt_block_forward.4} parent=47 // pred_region
        %p6158 = scmp.lt.s32.totalorder %s18, 1
        %s6159 = scalar_select %p6158, %s18, 1
        %s6160 = smul.addr %s6159, 32
        %s6161 = smul.addr %s6160, 4
        %s6162 = scalar_lea.vmem %s4, %s6161
      $region52: #{pt_block_forward.4} parent=47 // pred_fallthru
        _
      // Predicated region
      $region53: #{pt_block_forward.4} parent=47 // pred_check
        %p6163 = pneg %p156
      $region54: #{pt_block_forward.4} parent=47 // pred_check_branch
        %6165 = sbr.rel (%p6163) target = $region56
      $region55: #{pt_block_forward.4} parent=47 // pred_region
        %p6166 = scmp.lt.s32.totalorder %s18, 1
        %s6167 = scalar_select %p6166, %s18, 1
        %s6168 = smul.addr %s6167, 2
        %s6169 = scalar_lea.vmem %s5, %s6168
      $region56: #{pt_block_forward.4} parent=47 // pred_fallthru
        _
    $region48: #{pt_block_forward.4} parent=5 // pred_fallthru
      _
  $region6: #{pt_block_forward.4} parent=0 // loop_footer
    %s16 = sadd.s32 1, %s12
  $region7: #{pt_block_forward.4} parent=0 // loop_footer_branch
    %11 = sbr.rel target = $region3
  $region8: #{pt_block_forward.4} parent=0 // loop_exit
    _

</llo_original>
